<compile_context>
chip_gen: v7x
topology: tpu7x:2x2x1
jax: 0.10.0
libtpu: 0.0.40
codegen_flags: <defaults>
</compile_context>

<pallas_src>
import math

import jax
import jax.numpy as jnp
from jax.experimental import pallas as pl
from jax.experimental.pallas import tpu as pltpu  # noqa: F401  (TPU backend assumed)

# ---------------- small synthetic BERT config ----------------
VOCAB = 128
MAX_POS = 64
TYPE_VOCAB = 2
HIDDEN = 32
NUM_HEADS = 4
HEAD_DIM = HIDDEN // NUM_HEADS
FFN = 64
NUM_LAYERS = 2
LN_EPS = 1e-12


# ---------------- fused encoder kernel ----------------
def _nerd_encoder_kernel(
    emb_ref, bcol_ref, brow_ref, kmask_ref,
    emb_ln_g_ref, emb_ln_b_ref,
    wq_ref, bq_ref, wk_ref, bk_ref, wv_ref, bv_ref,
    wo_ref, bo_ref,
    ln1_g_ref, ln1_b_ref,
    wi_ref, bi_ref, wf_ref, bf_ref,
    ln2_g_ref, ln2_b_ref,
    cls_sel_ref, pool_w_ref, pool_b_ref,
    embs_ref, pooled_ref,
):
    def layernorm(x, g, b):
        mu = jnp.mean(x, axis=-1, keepdims=True)
        d = x - mu
        var = jnp.mean(d * d, axis=-1, keepdims=True)
        return d * jax.lax.rsqrt(var + LN_EPS) * g + b

    # embedding LayerNorm (applied directly, no fake zero residual)
    x = layernorm(emb_ref[...], emb_ln_g_ref[...], emb_ln_b_ref[...])

    # Additive attention bias over the flattened [B*S] token axis, built ONCE
    # from O(tok) inputs and reused by every head / layer:
    #   allowed(query i, key j)  <=>  same batch AND key j is not padding.
    same_batch = bcol_ref[...] == brow_ref[...]          # [tok,1] vs [1,tok] -> [tok,tok]
    key_ok = kmask_ref[...] > 0.0                        # [1,tok] -> broadcast over queries
    bias = jnp.where(same_batch & key_ok, 0.0, -1e9).astype(jnp.float32)

    scale = 1.0 / math.sqrt(HEAD_DIM)
    gelu_c = math.sqrt(2.0 / math.pi)

    for l in range(NUM_LAYERS):
        # ---- self-attention (head split folded into the weight layout) ----
        attn = None
        for h in range(NUM_HEADS):
            # fold the 1/sqrt(dH) scale into Q ([tok,dH] mul instead of [tok,tok])
            q = (jnp.dot(x, wq_ref[l, h], preferred_element_type=jnp.float32)
                 + bq_ref[l, h]) * scale
            k = jnp.dot(x, wk_ref[l, h], preferred_element_type=jnp.float32) + bk_ref[l, h]
            v = jnp.dot(x, wv_ref[l, h], preferred_element_type=jnp.float32) + bv_ref[l, h]
            # scores over the flattened token axis; cross-batch / padded keys masked out
            s = jax.lax.dot_general(
                q, k, (((1,), (1,)), ((), ())),
                preferred_element_type=jnp.float32) + bias
            m = jnp.max(s, axis=-1, keepdims=True)
            p = jnp.exp(s - m)
            p = p * pl.reciprocal(jnp.sum(p, axis=-1, keepdims=True), approx=True)
            ctx = jnp.dot(p, v, preferred_element_type=jnp.float32)          # [tok, dH]
            part = jnp.dot(ctx, wo_ref[l, h],
                           preferred_element_type=jnp.float32)               # merge heads
            attn = part if attn is None else attn + part
        attn = attn + bo_ref[l]
        x = layernorm(attn + x, ln1_g_ref[l], ln1_b_ref[l])

        # ---- feed-forward (intermediate never leaves VMEM/vregs) ----
        hmid = jnp.dot(x, wi_ref[l], preferred_element_type=jnp.float32) + bi_ref[l]
        # gelu (tanh approximation; HF BERT uses erf-gelu — numerically very close)
        hmid = 0.5 * hmid * (1.0 + jnp.tanh(gelu_c * (hmid + 0.044715 * hmid * hmid * hmid)))
        ffn = jnp.dot(hmid, wf_ref[l], preferred_element_type=jnp.float32) + bf_ref[l]
        x = layernorm(ffn + x, ln2_g_ref[l], ln2_b_ref[l])

    # last_hidden_state
    embs_ref[...] = x

    # BERT pooler: gather the CLS rows via a one-hot matmul (MXU gather), then tanh dense
    cls = jnp.dot(cls_sel_ref[...], x, preferred_element_type=jnp.float32)   # [B, H]
    pooled_ref[...] = jnp.tanh(
        jnp.dot(cls, pool_w_ref[...], preferred_element_type=jnp.float32) + pool_b_ref[...])


# ---------------- parameters (per-head weight layout) ----------------
def init_params(key):
    keys = iter(jax.random.split(key, 64))

    def nrm(shape):
        return jax.random.normal(next(keys), shape, jnp.float32) * 0.02

    L, H, nH, dH, F = NUM_LAYERS, HIDDEN, NUM_HEADS, HEAD_DIM, FFN
    return {
        "word_emb": nrm((VOCAB, H)),
        "pos_emb": nrm((MAX_POS, H)),
        "type_emb": nrm((TYPE_VOCAB, H)),
        "emb_ln_g": jnp.ones((1, H), jnp.float32),
        "emb_ln_b": jnp.zeros((1, H), jnp.float32),
        # per-head Q/K/V projections (split_heads folded into the weight layout)
        "wq": nrm((L, nH, H, dH)), "bq": jnp.zeros((L, nH, 1, dH), jnp.float32),
        "wk": nrm((L, nH, H, dH)), "bk": jnp.zeros((L, nH, 1, dH), jnp.float32),
        "wv": nrm((L, nH, H, dH)), "bv": jnp.zeros((L, nH, 1, dH), jnp.float32),
        # attention output projection, split per head along its input rows
        "wo": nrm((L, nH, dH, H)), "bo": jnp.zeros((L, 1, H), jnp.float32),
        "ln1_g": jnp.ones((L, 1, H), jnp.float32),
        "ln1_b": jnp.zeros((L, 1, H), jnp.float32),
        "wi": nrm((L, H, F)), "bi": jnp.zeros((L, 1, F), jnp.float32),
        "wf": nrm((L, F, H)), "bf": jnp.zeros((L, 1, H), jnp.float32),
        "ln2_g": jnp.ones((L, 1, H), jnp.float32),
        "ln2_b": jnp.zeros((L, 1, H), jnp.float32),
        "pool_w": nrm((H, H)),
        "pool_b": jnp.zeros((1, H), jnp.float32),
    }


# ---------------- model forward ----------------
def nerd_model_forward(params, sent, sent_mask, entity_id, entity_pos,
                       entity_mask, token_type=None):
    B, S = sent.shape
    tok = B * S
    if token_type is None:
        token_type = jnp.zeros_like(sent)

    # embeddings (table gathers are plain-JAX glue; everything after is fused)
    emb = (params["word_emb"][sent]
           + params["pos_emb"][jnp.arange(S)][None, :, :]
           + params["type_emb"][token_type]).astype(jnp.float32).reshape(tok, HIDDEN)

    # O(tok) ingredients for the in-kernel block-diagonal attention mask
    batch_ids = jnp.repeat(jnp.arange(B), S).astype(jnp.float32)
    bcol = batch_ids.reshape(tok, 1)                      # query-side batch id
    brow = batch_ids.reshape(1, tok)                      # key-side batch id
    kmask = sent_mask.reshape(1, tok).astype(jnp.float32)  # key-not-padding

    # one-hot selector for the CLS row of each batch element (gather via MXU)
    cls_sel = jax.nn.one_hot(jnp.arange(B) * S, tok, dtype=jnp.float32)

    embs_flat, cls_pooled = pl.pallas_call(
        _nerd_encoder_kernel,
        out_shape=(jax.ShapeDtypeStruct((tok, HIDDEN), jnp.float32),
                   jax.ShapeDtypeStruct((B, HIDDEN), jnp.float32)),
    )(emb, bcol, brow, kmask,
      params["emb_ln_g"], params["emb_ln_b"],
      params["wq"], params["bq"], params["wk"], params["bk"],
      params["wv"], params["bv"], params["wo"], params["bo"],
      params["ln1_g"], params["ln1_b"],
      params["wi"], params["bi"], params["wf"], params["bf"],
      params["ln2_g"], params["ln2_b"],
      cls_sel, params["pool_w"], params["pool_b"])

    embs = embs_flat.reshape(B, S, HIDDEN)

    # TODO(synk): NerdHead(config) definition was not provided in the reference;
    # entity_id / entity_pos / entity_mask are accepted but the classification
    # head is not implemented — returning the encoder outputs it would consume.
    del entity_id, entity_pos, entity_mask
    return embs, cls_pooled


# ---------------- demo ----------------
if __name__ == "__main__":
    B, S, E = 2, 8, 2
    key = jax.random.PRNGKey(0)
    k_param, k_sent, k_eid, k_epos = jax.random.split(key, 4)

    params = init_params(k_param)

    sent = jax.random.randint(k_sent, (B, S), 0, VOCAB, dtype=jnp.int32)
    sent_mask = jnp.concatenate(
        [jnp.ones((B, S - 2), jnp.int32), jnp.zeros((B, 2), jnp.int32)], axis=1)
    token_type = jnp.zeros((B, S), jnp.int32)
    entity_id = jax.random.randint(k_eid, (B, E), 0, 100, dtype=jnp.int32)
    entity_pos = jax.random.randint(k_epos, (B, E), 0, S - 2, dtype=jnp.int32)
    entity_mask = jnp.ones((B, E), jnp.int32)

    fwd = jax.jit(nerd_model_forward)
    embs, cls_pooled = fwd(params, sent, sent_mask, entity_id, entity_pos,
                           entity_mask, token_type)

    jax.block_until_ready(embs)
    jax.block_until_ready(cls_pooled)
    assert embs.shape == (B, S, HIDDEN)
    assert cls_pooled.shape == (B, HIDDEN)
    print("KERNEL_OK")
</pallas_src>

<mosaic_0001>
module attributes {stable_mosaic.version = 11 : i64} {
  func.func @_nerd_encoder_kernel(%arg0: memref<16x32xf32, #tpu.memory_space<vmem>>, %arg1: memref<16x1xf32, #tpu.memory_space<vmem>>, %arg2: memref<1x16xf32, #tpu.memory_space<vmem>>, %arg3: memref<1x16xf32, #tpu.memory_space<vmem>>, %arg4: memref<1x32xf32, #tpu.memory_space<vmem>>, %arg5: memref<1x32xf32, #tpu.memory_space<vmem>>, %arg6: memref<2x4x32x8xf32, #tpu.memory_space<vmem>>, %arg7: memref<2x4x1x8xf32, #tpu.memory_space<vmem>>, %arg8: memref<2x4x32x8xf32, #tpu.memory_space<vmem>>, %arg9: memref<2x4x1x8xf32, #tpu.memory_space<vmem>>, %arg10: memref<2x4x32x8xf32, #tpu.memory_space<vmem>>, %arg11: memref<2x4x1x8xf32, #tpu.memory_space<vmem>>, %arg12: memref<2x4x8x32xf32, #tpu.memory_space<vmem>>, %arg13: memref<2x1x32xf32, #tpu.memory_space<vmem>>, %arg14: memref<2x1x32xf32, #tpu.memory_space<vmem>>, %arg15: memref<2x1x32xf32, #tpu.memory_space<vmem>>, %arg16: memref<2x32x64xf32, #tpu.memory_space<vmem>>, %arg17: memref<2x1x64xf32, #tpu.memory_space<vmem>>, %arg18: memref<2x64x32xf32, #tpu.memory_space<vmem>>, %arg19: memref<2x1x32xf32, #tpu.memory_space<vmem>>, %arg20: memref<2x1x32xf32, #tpu.memory_space<vmem>>, %arg21: memref<2x1x32xf32, #tpu.memory_space<vmem>>, %arg22: memref<2x16xf32, #tpu.memory_space<vmem>>, %arg23: memref<32x32xf32, #tpu.memory_space<vmem>>, %arg24: memref<1x32xf32, #tpu.memory_space<vmem>>, %arg25: memref<16x32xf32, #tpu.memory_space<vmem>>, %arg26: memref<2x32xf32, #tpu.memory_space<vmem>>) attributes {dimension_semantics = [], scalar_prefetch = 0 : i64, scratch_operands = 0 : i64, tpu.core_type = #tpu.core_type<tc>} {
    %c0 = arith.constant 0 : index
    %c0_0 = arith.constant 0 : index
    %0 = vector.load %arg0[%c0, %c0_0] : memref<16x32xf32, #tpu.memory_space<vmem>>, vector<16x32xf32>
    %c0_1 = arith.constant 0 : index
    %c0_2 = arith.constant 0 : index
    %1 = vector.load %arg4[%c0_1, %c0_2] : memref<1x32xf32, #tpu.memory_space<vmem>>, vector<1x32xf32>
    %c0_3 = arith.constant 0 : index
    %c0_4 = arith.constant 0 : index
    %2 = vector.load %arg5[%c0_3, %c0_4] : memref<1x32xf32, #tpu.memory_space<vmem>>, vector<1x32xf32>
    %cst = arith.constant dense<0.000000e+00> : vector<16xf32>
    %3 = vector.multi_reduction <add>, %0, %cst [1] : vector<16x32xf32> to vector<16xf32>
    %4 = vector.shape_cast %3 : vector<16xf32> to vector<16x1xf32>
    %cst_5 = arith.constant 3.200000e+01 : f32
    %5 = vector.broadcast %cst_5 : f32 to vector<16x1xf32>
    %6 = arith.divf %4, %5 : vector<16x1xf32>
    %7 = vector.broadcast %6 : vector<16x1xf32> to vector<16x32xf32>
    %8 = arith.subf %0, %7 : vector<16x32xf32>
    %9 = arith.mulf %8, %8 : vector<16x32xf32>
    %cst_6 = arith.constant dense<0.000000e+00> : vector<16xf32>
    %10 = vector.multi_reduction <add>, %9, %cst_6 [1] : vector<16x32xf32> to vector<16xf32>
    %11 = vector.shape_cast %10 : vector<16xf32> to vector<16x1xf32>
    %cst_7 = arith.constant 3.200000e+01 : f32
    %12 = vector.broadcast %cst_7 : f32 to vector<16x1xf32>
    %13 = arith.divf %11, %12 : vector<16x1xf32>
    %cst_8 = arith.constant 9.99999996E-13 : f32
    %14 = vector.broadcast %cst_8 : f32 to vector<16x1xf32>
    %15 = arith.addf %13, %14 : vector<16x1xf32>
    %16 = math.rsqrt %15 : vector<16x1xf32>
    %17 = vector.broadcast %16 : vector<16x1xf32> to vector<16x32xf32>
    %18 = arith.mulf %8, %17 : vector<16x32xf32>
    %19 = vector.broadcast %1 : vector<1x32xf32> to vector<16x32xf32>
    %20 = arith.mulf %18, %19 : vector<16x32xf32>
    %21 = vector.broadcast %2 : vector<1x32xf32> to vector<16x32xf32>
    %22 = arith.addf %20, %21 : vector<16x32xf32>
    %c0_9 = arith.constant 0 : index
    %c0_10 = arith.constant 0 : index
    %23 = vector.load %arg1[%c0_9, %c0_10] : memref<16x1xf32, #tpu.memory_space<vmem>>, vector<16x1xf32>
    %c0_11 = arith.constant 0 : index
    %c0_12 = arith.constant 0 : index
    %24 = vector.load %arg2[%c0_11, %c0_12] : memref<1x16xf32, #tpu.memory_space<vmem>>, vector<1x16xf32>
    %25 = vector.broadcast %23 : vector<16x1xf32> to vector<16x16xf32>
    %26 = vector.broadcast %24 : vector<1x16xf32> to vector<16x16xf32>
    %27 = arith.cmpf oeq, %25, %26 : vector<16x16xf32>
    %c0_13 = arith.constant 0 : index
    %c0_14 = arith.constant 0 : index
    %28 = vector.load %arg3[%c0_13, %c0_14] : memref<1x16xf32, #tpu.memory_space<vmem>>, vector<1x16xf32>
    %cst_15 = arith.constant 0.000000e+00 : f32
    %29 = vector.broadcast %cst_15 : f32 to vector<1x16xf32>
    %30 = arith.cmpf ogt, %28, %29 : vector<1x16xf32>
    %31 = vector.broadcast %30 : vector<1x16xi1> to vector<16x16xi1>
    %32 = arith.andi %27, %31 : vector<16x16xi1>
    %cst_16 = arith.constant 0.000000e+00 : f32
    %cst_17 = arith.constant -1.000000e+09 : f32
    %33 = vector.broadcast %cst_16 : f32 to vector<16x16xf32>
    %34 = vector.broadcast %cst_17 : f32 to vector<16x16xf32>
    %35 = arith.select %32, %33, %34 : vector<16x16xi1>, vector<16x16xf32>
    %c0_18 = arith.constant 0 : index
    %c0_19 = arith.constant 0 : index
    %c0_20 = arith.constant 0 : index
    %c0_21 = arith.constant 0 : index
    %36 = vector.load %arg6[%c0_18, %c0_19, %c0_20, %c0_21] : memref<2x4x32x8xf32, #tpu.memory_space<vmem>>, vector<1x1x32x8xf32>
    %37 = vector.shape_cast %36 : vector<1x1x32x8xf32> to vector<32x8xf32>
    %cst_22 = arith.constant dense<0.000000e+00> : vector<16x8xf32>
    %38 = tpu.matmul %22, %37, %cst_22 {dimension_numbers = #tpu.dot_dimension_numbers<[1], [0], [0], [1], [0, 0, 1, 1], [], []>} : vector<16x32xf32>, vector<32x8xf32>, vector<16x8xf32> -> vector<16x8xf32>
    %c0_23 = arith.constant 0 : index
    %c0_24 = arith.constant 0 : index
    %c0_25 = arith.constant 0 : index
    %c0_26 = arith.constant 0 : index
    %39 = vector.load %arg7[%c0_23, %c0_24, %c0_25, %c0_26] : memref<2x4x1x8xf32, #tpu.memory_space<vmem>>, vector<1x1x1x8xf32>
    %40 = vector.shape_cast %39 : vector<1x1x1x8xf32> to vector<1x8xf32>
    %41 = vector.broadcast %40 : vector<1x8xf32> to vector<16x8xf32>
    %42 = arith.addf %38, %41 : vector<16x8xf32>
    %cst_27 = arith.constant 0.353553385 : f32
    %43 = vector.broadcast %cst_27 : f32 to vector<16x8xf32>
    %44 = arith.mulf %42, %43 : vector<16x8xf32>
    %c0_28 = arith.constant 0 : index
    %c0_29 = arith.constant 0 : index
    %c0_30 = arith.constant 0 : index
    %c0_31 = arith.constant 0 : index
    %45 = vector.load %arg8[%c0_28, %c0_29, %c0_30, %c0_31] : memref<2x4x32x8xf32, #tpu.memory_space<vmem>>, vector<1x1x32x8xf32>
    %46 = vector.shape_cast %45 : vector<1x1x32x8xf32> to vector<32x8xf32>
    %cst_32 = arith.constant dense<0.000000e+00> : vector<16x8xf32>
    %47 = tpu.matmul %22, %46, %cst_32 {dimension_numbers = #tpu.dot_dimension_numbers<[1], [0], [0], [1], [0, 0, 1, 1], [], []>} : vector<16x32xf32>, vector<32x8xf32>, vector<16x8xf32> -> vector<16x8xf32>
    %c0_33 = arith.constant 0 : index
    %c0_34 = arith.constant 0 : index
    %c0_35 = arith.constant 0 : index
    %c0_36 = arith.constant 0 : index
    %48 = vector.load %arg9[%c0_33, %c0_34, %c0_35, %c0_36] : memref<2x4x1x8xf32, #tpu.memory_space<vmem>>, vector<1x1x1x8xf32>
    %49 = vector.shape_cast %48 : vector<1x1x1x8xf32> to vector<1x8xf32>
    %50 = vector.broadcast %49 : vector<1x8xf32> to vector<16x8xf32>
    %51 = arith.addf %47, %50 : vector<16x8xf32>
    %c0_37 = arith.constant 0 : index
    %c0_38 = arith.constant 0 : index
    %c0_39 = arith.constant 0 : index
    %c0_40 = arith.constant 0 : index
    %52 = vector.load %arg10[%c0_37, %c0_38, %c0_39, %c0_40] : memref<2x4x32x8xf32, #tpu.memory_space<vmem>>, vector<1x1x32x8xf32>
    %53 = vector.shape_cast %52 : vector<1x1x32x8xf32> to vector<32x8xf32>
    %cst_41 = arith.constant dense<0.000000e+00> : vector<16x8xf32>
    %54 = tpu.matmul %22, %53, %cst_41 {dimension_numbers = #tpu.dot_dimension_numbers<[1], [0], [0], [1], [0, 0, 1, 1], [], []>} : vector<16x32xf32>, vector<32x8xf32>, vector<16x8xf32> -> vector<16x8xf32>
    %c0_42 = arith.constant 0 : index
    %c0_43 = arith.constant 0 : index
    %c0_44 = arith.constant 0 : index
    %c0_45 = arith.constant 0 : index
    %55 = vector.load %arg11[%c0_42, %c0_43, %c0_44, %c0_45] : memref<2x4x1x8xf32, #tpu.memory_space<vmem>>, vector<1x1x1x8xf32>
    %56 = vector.shape_cast %55 : vector<1x1x1x8xf32> to vector<1x8xf32>
    %57 = vector.broadcast %56 : vector<1x8xf32> to vector<16x8xf32>
    %58 = arith.addf %54, %57 : vector<16x8xf32>
    %cst_46 = arith.constant dense<0.000000e+00> : vector<16x16xf32>
    %59 = tpu.matmul %44, %51, %cst_46 {dimension_numbers = #tpu.dot_dimension_numbers<[1], [1], [0], [0], [0, 0, 1, 0], [], []>} : vector<16x8xf32>, vector<16x8xf32>, vector<16x16xf32> -> vector<16x16xf32>
    %60 = arith.addf %59, %35 : vector<16x16xf32>
    %cst_47 = arith.constant dense<0xFF800000> : vector<16xf32>
    %61 = vector.multi_reduction <maximumf>, %60, %cst_47 [1] : vector<16x16xf32> to vector<16xf32>
    %62 = vector.shape_cast %61 : vector<16xf32> to vector<16x1xf32>
    %63 = vector.broadcast %62 : vector<16x1xf32> to vector<16x16xf32>
    %64 = arith.subf %60, %63 : vector<16x16xf32>
    %65 = math.exp %64 : vector<16x16xf32>
    %cst_48 = arith.constant dense<0.000000e+00> : vector<16xf32>
    %66 = vector.multi_reduction <add>, %65, %cst_48 [1] : vector<16x16xf32> to vector<16xf32>
    %67 = vector.shape_cast %66 : vector<16xf32> to vector<16x1xf32>
    %68 = tpu.reciprocal %67 {approx = true} : vector<16x1xf32> -> vector<16x1xf32>
    %69 = vector.broadcast %68 : vector<16x1xf32> to vector<16x16xf32>
    %70 = arith.mulf %65, %69 : vector<16x16xf32>
    %cst_49 = arith.constant dense<0.000000e+00> : vector<16x8xf32>
    %71 = tpu.matmul %70, %58, %cst_49 {dimension_numbers = #tpu.dot_dimension_numbers<[1], [0], [0], [1], [0, 0, 1, 1], [], []>} : vector<16x16xf32>, vector<16x8xf32>, vector<16x8xf32> -> vector<16x8xf32>
    %c0_50 = arith.constant 0 : index
    %c0_51 = arith.constant 0 : index
    %c0_52 = arith.constant 0 : index
    %c0_53 = arith.constant 0 : index
    %72 = vector.load %arg12[%c0_50, %c0_51, %c0_52, %c0_53] : memref<2x4x8x32xf32, #tpu.memory_space<vmem>>, vector<1x1x8x32xf32>
    %73 = vector.shape_cast %72 : vector<1x1x8x32xf32> to vector<8x32xf32>
    %cst_54 = arith.constant dense<0.000000e+00> : vector<16x32xf32>
    %74 = tpu.matmul %71, %73, %cst_54 {dimension_numbers = #tpu.dot_dimension_numbers<[1], [0], [0], [1], [0, 0, 1, 1], [], []>} : vector<16x8xf32>, vector<8x32xf32>, vector<16x32xf32> -> vector<16x32xf32>
    %c0_55 = arith.constant 0 : index
    %c1 = arith.constant 1 : index
    %c0_56 = arith.constant 0 : index
    %c0_57 = arith.constant 0 : index
    %75 = vector.load %arg6[%c0_55, %c1, %c0_56, %c0_57] : memref<2x4x32x8xf32, #tpu.memory_space<vmem>>, vector<1x1x32x8xf32>
    %76 = vector.shape_cast %75 : vector<1x1x32x8xf32> to vector<32x8xf32>
    %cst_58 = arith.constant dense<0.000000e+00> : vector<16x8xf32>
    %77 = tpu.matmul %22, %76, %cst_58 {dimension_numbers = #tpu.dot_dimension_numbers<[1], [0], [0], [1], [0, 0, 1, 1], [], []>} : vector<16x32xf32>, vector<32x8xf32>, vector<16x8xf32> -> vector<16x8xf32>
    %c0_59 = arith.constant 0 : index
    %c1_60 = arith.constant 1 : index
    %c0_61 = arith.constant 0 : index
    %c0_62 = arith.constant 0 : index
    %78 = vector.load %arg7[%c0_59, %c1_60, %c0_61, %c0_62] : memref<2x4x1x8xf32, #tpu.memory_space<vmem>>, vector<1x1x1x8xf32>
    %79 = vector.shape_cast %78 : vector<1x1x1x8xf32> to vector<1x8xf32>
    %80 = vector.broadcast %79 : vector<1x8xf32> to vector<16x8xf32>
    %81 = arith.addf %77, %80 : vector<16x8xf32>
    %cst_63 = arith.constant 0.353553385 : f32
    %82 = vector.broadcast %cst_63 : f32 to vector<16x8xf32>
    %83 = arith.mulf %81, %82 : vector<16x8xf32>
    %c0_64 = arith.constant 0 : index
    %c1_65 = arith.constant 1 : index
    %c0_66 = arith.constant 0 : index
    %c0_67 = arith.constant 0 : index
    %84 = vector.load %arg8[%c0_64, %c1_65, %c0_66, %c0_67] : memref<2x4x32x8xf32, #tpu.memory_space<vmem>>, vector<1x1x32x8xf32>
    %85 = vector.shape_cast %84 : vector<1x1x32x8xf32> to vector<32x8xf32>
    %cst_68 = arith.constant dense<0.000000e+00> : vector<16x8xf32>
    %86 = tpu.matmul %22, %85, %cst_68 {dimension_numbers = #tpu.dot_dimension_numbers<[1], [0], [0], [1], [0, 0, 1, 1], [], []>} : vector<16x32xf32>, vector<32x8xf32>, vector<16x8xf32> -> vector<16x8xf32>
    %c0_69 = arith.constant 0 : index
    %c1_70 = arith.constant 1 : index
    %c0_71 = arith.constant 0 : index
    %c0_72 = arith.constant 0 : index
    %87 = vector.load %arg9[%c0_69, %c1_70, %c0_71, %c0_72] : memref<2x4x1x8xf32, #tpu.memory_space<vmem>>, vector<1x1x1x8xf32>
    %88 = vector.shape_cast %87 : vector<1x1x1x8xf32> to vector<1x8xf32>
    %89 = vector.broadcast %88 : vector<1x8xf32> to vector<16x8xf32>
    %90 = arith.addf %86, %89 : vector<16x8xf32>
    %c0_73 = arith.constant 0 : index
    %c1_74 = arith.constant 1 : index
    %c0_75 = arith.constant 0 : index
    %c0_76 = arith.constant 0 : index
    %91 = vector.load %arg10[%c0_73, %c1_74, %c0_75, %c0_76] : memref<2x4x32x8xf32, #tpu.memory_space<vmem>>, vector<1x1x32x8xf32>
    %92 = vector.shape_cast %91 : vector<1x1x32x8xf32> to vector<32x8xf32>
    %cst_77 = arith.constant dense<0.000000e+00> : vector<16x8xf32>
    %93 = tpu.matmul %22, %92, %cst_77 {dimension_numbers = #tpu.dot_dimension_numbers<[1], [0], [0], [1], [0, 0, 1, 1], [], []>} : vector<16x32xf32>, vector<32x8xf32>, vector<16x8xf32> -> vector<16x8xf32>
    %c0_78 = arith.constant 0 : index
    %c1_79 = arith.constant 1 : index
    %c0_80 = arith.constant 0 : index
    %c0_81 = arith.constant 0 : index
    %94 = vector.load %arg11[%c0_78, %c1_79, %c0_80, %c0_81] : memref<2x4x1x8xf32, #tpu.memory_space<vmem>>, vector<1x1x1x8xf32>
    %95 = vector.shape_cast %94 : vector<1x1x1x8xf32> to vector<1x8xf32>
    %96 = vector.broadcast %95 : vector<1x8xf32> to vector<16x8xf32>
    %97 = arith.addf %93, %96 : vector<16x8xf32>
    %cst_82 = arith.constant dense<0.000000e+00> : vector<16x16xf32>
    %98 = tpu.matmul %83, %90, %cst_82 {dimension_numbers = #tpu.dot_dimension_numbers<[1], [1], [0], [0], [0, 0, 1, 0], [], []>} : vector<16x8xf32>, vector<16x8xf32>, vector<16x16xf32> -> vector<16x16xf32>
    %99 = arith.addf %98, %35 : vector<16x16xf32>
    %cst_83 = arith.constant dense<0xFF800000> : vector<16xf32>
    %100 = vector.multi_reduction <maximumf>, %99, %cst_83 [1] : vector<16x16xf32> to vector<16xf32>
    %101 = vector.shape_cast %100 : vector<16xf32> to vector<16x1xf32>
    %102 = vector.broadcast %101 : vector<16x1xf32> to vector<16x16xf32>
    %103 = arith.subf %99, %102 : vector<16x16xf32>
    %104 = math.exp %103 : vector<16x16xf32>
    %cst_84 = arith.constant dense<0.000000e+00> : vector<16xf32>
    %105 = vector.multi_reduction <add>, %104, %cst_84 [1] : vector<16x16xf32> to vector<16xf32>
    %106 = vector.shape_cast %105 : vector<16xf32> to vector<16x1xf32>
    %107 = tpu.reciprocal %106 {approx = true} : vector<16x1xf32> -> vector<16x1xf32>
    %108 = vector.broadcast %107 : vector<16x1xf32> to vector<16x16xf32>
    %109 = arith.mulf %104, %108 : vector<16x16xf32>
    %cst_85 = arith.constant dense<0.000000e+00> : vector<16x8xf32>
    %110 = tpu.matmul %109, %97, %cst_85 {dimension_numbers = #tpu.dot_dimension_numbers<[1], [0], [0], [1], [0, 0, 1, 1], [], []>} : vector<16x16xf32>, vector<16x8xf32>, vector<16x8xf32> -> vector<16x8xf32>
    %c0_86 = arith.constant 0 : index
    %c1_87 = arith.constant 1 : index
    %c0_88 = arith.constant 0 : index
    %c0_89 = arith.constant 0 : index
    %111 = vector.load %arg12[%c0_86, %c1_87, %c0_88, %c0_89] : memref<2x4x8x32xf32, #tpu.memory_space<vmem>>, vector<1x1x8x32xf32>
    %112 = vector.shape_cast %111 : vector<1x1x8x32xf32> to vector<8x32xf32>
    %cst_90 = arith.constant dense<0.000000e+00> : vector<16x32xf32>
    %113 = tpu.matmul %110, %112, %cst_90 {dimension_numbers = #tpu.dot_dimension_numbers<[1], [0], [0], [1], [0, 0, 1, 1], [], []>} : vector<16x8xf32>, vector<8x32xf32>, vector<16x32xf32> -> vector<16x32xf32>
    %114 = arith.addf %74, %113 : vector<16x32xf32>
    %c0_91 = arith.constant 0 : index
    %c2 = arith.constant 2 : index
    %c0_92 = arith.constant 0 : index
    %c0_93 = arith.constant 0 : index
    %115 = vector.load %arg6[%c0_91, %c2, %c0_92, %c0_93] : memref<2x4x32x8xf32, #tpu.memory_space<vmem>>, vector<1x1x32x8xf32>
    %116 = vector.shape_cast %115 : vector<1x1x32x8xf32> to vector<32x8xf32>
    %cst_94 = arith.constant dense<0.000000e+00> : vector<16x8xf32>
    %117 = tpu.matmul %22, %116, %cst_94 {dimension_numbers = #tpu.dot_dimension_numbers<[1], [0], [0], [1], [0, 0, 1, 1], [], []>} : vector<16x32xf32>, vector<32x8xf32>, vector<16x8xf32> -> vector<16x8xf32>
    %c0_95 = arith.constant 0 : index
    %c2_96 = arith.constant 2 : index
    %c0_97 = arith.constant 0 : index
    %c0_98 = arith.constant 0 : index
    %118 = vector.load %arg7[%c0_95, %c2_96, %c0_97, %c0_98] : memref<2x4x1x8xf32, #tpu.memory_space<vmem>>, vector<1x1x1x8xf32>
    %119 = vector.shape_cast %118 : vector<1x1x1x8xf32> to vector<1x8xf32>
    %120 = vector.broadcast %119 : vector<1x8xf32> to vector<16x8xf32>
    %121 = arith.addf %117, %120 : vector<16x8xf32>
    %cst_99 = arith.constant 0.353553385 : f32
    %122 = vector.broadcast %cst_99 : f32 to vector<16x8xf32>
    %123 = arith.mulf %121, %122 : vector<16x8xf32>
    %c0_100 = arith.constant 0 : index
    %c2_101 = arith.constant 2 : index
    %c0_102 = arith.constant 0 : index
    %c0_103 = arith.constant 0 : index
    %124 = vector.load %arg8[%c0_100, %c2_101, %c0_102, %c0_103] : memref<2x4x32x8xf32, #tpu.memory_space<vmem>>, vector<1x1x32x8xf32>
    %125 = vector.shape_cast %124 : vector<1x1x32x8xf32> to vector<32x8xf32>
    %cst_104 = arith.constant dense<0.000000e+00> : vector<16x8xf32>
    %126 = tpu.matmul %22, %125, %cst_104 {dimension_numbers = #tpu.dot_dimension_numbers<[1], [0], [0], [1], [0, 0, 1, 1], [], []>} : vector<16x32xf32>, vector<32x8xf32>, vector<16x8xf32> -> vector<16x8xf32>
    %c0_105 = arith.constant 0 : index
    %c2_106 = arith.constant 2 : index
    %c0_107 = arith.constant 0 : index
    %c0_108 = arith.constant 0 : index
    %127 = vector.load %arg9[%c0_105, %c2_106, %c0_107, %c0_108] : memref<2x4x1x8xf32, #tpu.memory_space<vmem>>, vector<1x1x1x8xf32>
    %128 = vector.shape_cast %127 : vector<1x1x1x8xf32> to vector<1x8xf32>
    %129 = vector.broadcast %128 : vector<1x8xf32> to vector<16x8xf32>
    %130 = arith.addf %126, %129 : vector<16x8xf32>
    %c0_109 = arith.constant 0 : index
    %c2_110 = arith.constant 2 : index
    %c0_111 = arith.constant 0 : index
    %c0_112 = arith.constant 0 : index
    %131 = vector.load %arg10[%c0_109, %c2_110, %c0_111, %c0_112] : memref<2x4x32x8xf32, #tpu.memory_space<vmem>>, vector<1x1x32x8xf32>
    %132 = vector.shape_cast %131 : vector<1x1x32x8xf32> to vector<32x8xf32>
    %cst_113 = arith.constant dense<0.000000e+00> : vector<16x8xf32>
    %133 = tpu.matmul %22, %132, %cst_113 {dimension_numbers = #tpu.dot_dimension_numbers<[1], [0], [0], [1], [0, 0, 1, 1], [], []>} : vector<16x32xf32>, vector<32x8xf32>, vector<16x8xf32> -> vector<16x8xf32>
    %c0_114 = arith.constant 0 : index
    %c2_115 = arith.constant 2 : index
    %c0_116 = arith.constant 0 : index
    %c0_117 = arith.constant 0 : index
    %134 = vector.load %arg11[%c0_114, %c2_115, %c0_116, %c0_117] : memref<2x4x1x8xf32, #tpu.memory_space<vmem>>, vector<1x1x1x8xf32>
    %135 = vector.shape_cast %134 : vector<1x1x1x8xf32> to vector<1x8xf32>
    %136 = vector.broadcast %135 : vector<1x8xf32> to vector<16x8xf32>
    %137 = arith.addf %133, %136 : vector<16x8xf32>
    %cst_118 = arith.constant dense<0.000000e+00> : vector<16x16xf32>
    %138 = tpu.matmul %123, %130, %cst_118 {dimension_numbers = #tpu.dot_dimension_numbers<[1], [1], [0], [0], [0, 0, 1, 0], [], []>} : vector<16x8xf32>, vector<16x8xf32>, vector<16x16xf32> -> vector<16x16xf32>
    %139 = arith.addf %138, %35 : vector<16x16xf32>
    %cst_119 = arith.constant dense<0xFF800000> : vector<16xf32>
    %140 = vector.multi_reduction <maximumf>, %139, %cst_119 [1] : vector<16x16xf32> to vector<16xf32>
    %141 = vector.shape_cast %140 : vector<16xf32> to vector<16x1xf32>
    %142 = vector.broadcast %141 : vector<16x1xf32> to vector<16x16xf32>
    %143 = arith.subf %139, %142 : vector<16x16xf32>
    %144 = math.exp %143 : vector<16x16xf32>
    %cst_120 = arith.constant dense<0.000000e+00> : vector<16xf32>
    %145 = vector.multi_reduction <add>, %144, %cst_120 [1] : vector<16x16xf32> to vector<16xf32>
    %146 = vector.shape_cast %145 : vector<16xf32> to vector<16x1xf32>
    %147 = tpu.reciprocal %146 {approx = true} : vector<16x1xf32> -> vector<16x1xf32>
    %148 = vector.broadcast %147 : vector<16x1xf32> to vector<16x16xf32>
    %149 = arith.mulf %144, %148 : vector<16x16xf32>
    %cst_121 = arith.constant dense<0.000000e+00> : vector<16x8xf32>
    %150 = tpu.matmul %149, %137, %cst_121 {dimension_numbers = #tpu.dot_dimension_numbers<[1], [0], [0], [1], [0, 0, 1, 1], [], []>} : vector<16x16xf32>, vector<16x8xf32>, vector<16x8xf32> -> vector<16x8xf32>
    %c0_122 = arith.constant 0 : index
    %c2_123 = arith.constant 2 : index
    %c0_124 = arith.constant 0 : index
    %c0_125 = arith.constant 0 : index
    %151 = vector.load %arg12[%c0_122, %c2_123, %c0_124, %c0_125] : memref<2x4x8x32xf32, #tpu.memory_space<vmem>>, vector<1x1x8x32xf32>
    %152 = vector.shape_cast %151 : vector<1x1x8x32xf32> to vector<8x32xf32>
    %cst_126 = arith.constant dense<0.000000e+00> : vector<16x32xf32>
    %153 = tpu.matmul %150, %152, %cst_126 {dimension_numbers = #tpu.dot_dimension_numbers<[1], [0], [0], [1], [0, 0, 1, 1], [], []>} : vector<16x8xf32>, vector<8x32xf32>, vector<16x32xf32> -> vector<16x32xf32>
    %154 = arith.addf %114, %153 : vector<16x32xf32>
    %c0_127 = arith.constant 0 : index
    %c3 = arith.constant 3 : index
    %c0_128 = arith.constant 0 : index
    %c0_129 = arith.constant 0 : index
    %155 = vector.load %arg6[%c0_127, %c3, %c0_128, %c0_129] : memref<2x4x32x8xf32, #tpu.memory_space<vmem>>, vector<1x1x32x8xf32>
    %156 = vector.shape_cast %155 : vector<1x1x32x8xf32> to vector<32x8xf32>
    %cst_130 = arith.constant dense<0.000000e+00> : vector<16x8xf32>
    %157 = tpu.matmul %22, %156, %cst_130 {dimension_numbers = #tpu.dot_dimension_numbers<[1], [0], [0], [1], [0, 0, 1, 1], [], []>} : vector<16x32xf32>, vector<32x8xf32>, vector<16x8xf32> -> vector<16x8xf32>
    %c0_131 = arith.constant 0 : index
    %c3_132 = arith.constant 3 : index
    %c0_133 = arith.constant 0 : index
    %c0_134 = arith.constant 0 : index
    %158 = vector.load %arg7[%c0_131, %c3_132, %c0_133, %c0_134] : memref<2x4x1x8xf32, #tpu.memory_space<vmem>>, vector<1x1x1x8xf32>
    %159 = vector.shape_cast %158 : vector<1x1x1x8xf32> to vector<1x8xf32>
    %160 = vector.broadcast %159 : vector<1x8xf32> to vector<16x8xf32>
    %161 = arith.addf %157, %160 : vector<16x8xf32>
    %cst_135 = arith.constant 0.353553385 : f32
    %162 = vector.broadcast %cst_135 : f32 to vector<16x8xf32>
    %163 = arith.mulf %161, %162 : vector<16x8xf32>
    %c0_136 = arith.constant 0 : index
    %c3_137 = arith.constant 3 : index
    %c0_138 = arith.constant 0 : index
    %c0_139 = arith.constant 0 : index
    %164 = vector.load %arg8[%c0_136, %c3_137, %c0_138, %c0_139] : memref<2x4x32x8xf32, #tpu.memory_space<vmem>>, vector<1x1x32x8xf32>
    %165 = vector.shape_cast %164 : vector<1x1x32x8xf32> to vector<32x8xf32>
    %cst_140 = arith.constant dense<0.000000e+00> : vector<16x8xf32>
    %166 = tpu.matmul %22, %165, %cst_140 {dimension_numbers = #tpu.dot_dimension_numbers<[1], [0], [0], [1], [0, 0, 1, 1], [], []>} : vector<16x32xf32>, vector<32x8xf32>, vector<16x8xf32> -> vector<16x8xf32>
    %c0_141 = arith.constant 0 : index
    %c3_142 = arith.constant 3 : index
    %c0_143 = arith.constant 0 : index
    %c0_144 = arith.constant 0 : index
    %167 = vector.load %arg9[%c0_141, %c3_142, %c0_143, %c0_144] : memref<2x4x1x8xf32, #tpu.memory_space<vmem>>, vector<1x1x1x8xf32>
    %168 = vector.shape_cast %167 : vector<1x1x1x8xf32> to vector<1x8xf32>
    %169 = vector.broadcast %168 : vector<1x8xf32> to vector<16x8xf32>
    %170 = arith.addf %166, %169 : vector<16x8xf32>
    %c0_145 = arith.constant 0 : index
    %c3_146 = arith.constant 3 : index
    %c0_147 = arith.constant 0 : index
    %c0_148 = arith.constant 0 : index
    %171 = vector.load %arg10[%c0_145, %c3_146, %c0_147, %c0_148] : memref<2x4x32x8xf32, #tpu.memory_space<vmem>>, vector<1x1x32x8xf32>
    %172 = vector.shape_cast %171 : vector<1x1x32x8xf32> to vector<32x8xf32>
    %cst_149 = arith.constant dense<0.000000e+00> : vector<16x8xf32>
    %173 = tpu.matmul %22, %172, %cst_149 {dimension_numbers = #tpu.dot_dimension_numbers<[1], [0], [0], [1], [0, 0, 1, 1], [], []>} : vector<16x32xf32>, vector<32x8xf32>, vector<16x8xf32> -> vector<16x8xf32>
    %c0_150 = arith.constant 0 : index
    %c3_151 = arith.constant 3 : index
    %c0_152 = arith.constant 0 : index
    %c0_153 = arith.constant 0 : index
    %174 = vector.load %arg11[%c0_150, %c3_151, %c0_152, %c0_153] : memref<2x4x1x8xf32, #tpu.memory_space<vmem>>, vector<1x1x1x8xf32>
    %175 = vector.shape_cast %174 : vector<1x1x1x8xf32> to vector<1x8xf32>
    %176 = vector.broadcast %175 : vector<1x8xf32> to vector<16x8xf32>
    %177 = arith.addf %173, %176 : vector<16x8xf32>
    %cst_154 = arith.constant dense<0.000000e+00> : vector<16x16xf32>
    %178 = tpu.matmul %163, %170, %cst_154 {dimension_numbers = #tpu.dot_dimension_numbers<[1], [1], [0], [0], [0, 0, 1, 0], [], []>} : vector<16x8xf32>, vector<16x8xf32>, vector<16x16xf32> -> vector<16x16xf32>
    %179 = arith.addf %178, %35 : vector<16x16xf32>
    %cst_155 = arith.constant dense<0xFF800000> : vector<16xf32>
    %180 = vector.multi_reduction <maximumf>, %179, %cst_155 [1] : vector<16x16xf32> to vector<16xf32>
    %181 = vector.shape_cast %180 : vector<16xf32> to vector<16x1xf32>
    %182 = vector.broadcast %181 : vector<16x1xf32> to vector<16x16xf32>
    %183 = arith.subf %179, %182 : vector<16x16xf32>
    %184 = math.exp %183 : vector<16x16xf32>
    %cst_156 = arith.constant dense<0.000000e+00> : vector<16xf32>
    %185 = vector.multi_reduction <add>, %184, %cst_156 [1] : vector<16x16xf32> to vector<16xf32>
    %186 = vector.shape_cast %185 : vector<16xf32> to vector<16x1xf32>
    %187 = tpu.reciprocal %186 {approx = true} : vector<16x1xf32> -> vector<16x1xf32>
    %188 = vector.broadcast %187 : vector<16x1xf32> to vector<16x16xf32>
    %189 = arith.mulf %184, %188 : vector<16x16xf32>
    %cst_157 = arith.constant dense<0.000000e+00> : vector<16x8xf32>
    %190 = tpu.matmul %189, %177, %cst_157 {dimension_numbers = #tpu.dot_dimension_numbers<[1], [0], [0], [1], [0, 0, 1, 1], [], []>} : vector<16x16xf32>, vector<16x8xf32>, vector<16x8xf32> -> vector<16x8xf32>
    %c0_158 = arith.constant 0 : index
    %c3_159 = arith.constant 3 : index
    %c0_160 = arith.constant 0 : index
    %c0_161 = arith.constant 0 : index
    %191 = vector.load %arg12[%c0_158, %c3_159, %c0_160, %c0_161] : memref<2x4x8x32xf32, #tpu.memory_space<vmem>>, vector<1x1x8x32xf32>
    %192 = vector.shape_cast %191 : vector<1x1x8x32xf32> to vector<8x32xf32>
    %cst_162 = arith.constant dense<0.000000e+00> : vector<16x32xf32>
    %193 = tpu.matmul %190, %192, %cst_162 {dimension_numbers = #tpu.dot_dimension_numbers<[1], [0], [0], [1], [0, 0, 1, 1], [], []>} : vector<16x8xf32>, vector<8x32xf32>, vector<16x32xf32> -> vector<16x32xf32>
    %194 = arith.addf %154, %193 : vector<16x32xf32>
    %c0_163 = arith.constant 0 : index
    %c0_164 = arith.constant 0 : index
    %c0_165 = arith.constant 0 : index
    %195 = vector.load %arg13[%c0_163, %c0_164, %c0_165] : memref<2x1x32xf32, #tpu.memory_space<vmem>>, vector<1x1x32xf32>
    %196 = vector.shape_cast %195 : vector<1x1x32xf32> to vector<1x32xf32>
    %197 = vector.broadcast %196 : vector<1x32xf32> to vector<16x32xf32>
    %198 = arith.addf %194, %197 : vector<16x32xf32>
    %199 = arith.addf %198, %22 : vector<16x32xf32>
    %c0_166 = arith.constant 0 : index
    %c0_167 = arith.constant 0 : index
    %c0_168 = arith.constant 0 : index
    %200 = vector.load %arg14[%c0_166, %c0_167, %c0_168] : memref<2x1x32xf32, #tpu.memory_space<vmem>>, vector<1x1x32xf32>
    %201 = vector.shape_cast %200 : vector<1x1x32xf32> to vector<1x32xf32>
    %c0_169 = arith.constant 0 : index
    %c0_170 = arith.constant 0 : index
    %c0_171 = arith.constant 0 : index
    %202 = vector.load %arg15[%c0_169, %c0_170, %c0_171] : memref<2x1x32xf32, #tpu.memory_space<vmem>>, vector<1x1x32xf32>
    %203 = vector.shape_cast %202 : vector<1x1x32xf32> to vector<1x32xf32>
    %cst_172 = arith.constant dense<0.000000e+00> : vector<16xf32>
    %204 = vector.multi_reduction <add>, %199, %cst_172 [1] : vector<16x32xf32> to vector<16xf32>
    %205 = vector.shape_cast %204 : vector<16xf32> to vector<16x1xf32>
    %cst_173 = arith.constant 3.200000e+01 : f32
    %206 = vector.broadcast %cst_173 : f32 to vector<16x1xf32>
    %207 = arith.divf %205, %206 : vector<16x1xf32>
    %208 = vector.broadcast %207 : vector<16x1xf32> to vector<16x32xf32>
    %209 = arith.subf %199, %208 : vector<16x32xf32>
    %210 = arith.mulf %209, %209 : vector<16x32xf32>
    %cst_174 = arith.constant dense<0.000000e+00> : vector<16xf32>
    %211 = vector.multi_reduction <add>, %210, %cst_174 [1] : vector<16x32xf32> to vector<16xf32>
    %212 = vector.shape_cast %211 : vector<16xf32> to vector<16x1xf32>
    %cst_175 = arith.constant 3.200000e+01 : f32
    %213 = vector.broadcast %cst_175 : f32 to vector<16x1xf32>
    %214 = arith.divf %212, %213 : vector<16x1xf32>
    %cst_176 = arith.constant 9.99999996E-13 : f32
    %215 = vector.broadcast %cst_176 : f32 to vector<16x1xf32>
    %216 = arith.addf %214, %215 : vector<16x1xf32>
    %217 = math.rsqrt %216 : vector<16x1xf32>
    %218 = vector.broadcast %217 : vector<16x1xf32> to vector<16x32xf32>
    %219 = arith.mulf %209, %218 : vector<16x32xf32>
    %220 = vector.broadcast %201 : vector<1x32xf32> to vector<16x32xf32>
    %221 = arith.mulf %219, %220 : vector<16x32xf32>
    %222 = vector.broadcast %203 : vector<1x32xf32> to vector<16x32xf32>
    %223 = arith.addf %221, %222 : vector<16x32xf32>
    %c0_177 = arith.constant 0 : index
    %c0_178 = arith.constant 0 : index
    %c0_179 = arith.constant 0 : index
    %224 = vector.load %arg16[%c0_177, %c0_178, %c0_179] : memref<2x32x64xf32, #tpu.memory_space<vmem>>, vector<1x32x64xf32>
    %225 = vector.shape_cast %224 : vector<1x32x64xf32> to vector<32x64xf32>
    %cst_180 = arith.constant dense<0.000000e+00> : vector<16x64xf32>
    %226 = tpu.matmul %223, %225, %cst_180 {dimension_numbers = #tpu.dot_dimension_numbers<[1], [0], [0], [1], [0, 0, 1, 1], [], []>} : vector<16x32xf32>, vector<32x64xf32>, vector<16x64xf32> -> vector<16x64xf32>
    %c0_181 = arith.constant 0 : index
    %c0_182 = arith.constant 0 : index
    %c0_183 = arith.constant 0 : index
    %227 = vector.load %arg17[%c0_181, %c0_182, %c0_183] : memref<2x1x64xf32, #tpu.memory_space<vmem>>, vector<1x1x64xf32>
    %228 = vector.shape_cast %227 : vector<1x1x64xf32> to vector<1x64xf32>
    %229 = vector.broadcast %228 : vector<1x64xf32> to vector<16x64xf32>
    %230 = arith.addf %226, %229 : vector<16x64xf32>
    %cst_184 = arith.constant 5.000000e-01 : f32
    %231 = vector.broadcast %cst_184 : f32 to vector<16x64xf32>
    %232 = arith.mulf %231, %230 : vector<16x64xf32>
    %cst_185 = arith.constant 4.471500e-02 : f32
    %233 = vector.broadcast %cst_185 : f32 to vector<16x64xf32>
    %234 = arith.mulf %233, %230 : vector<16x64xf32>
    %235 = arith.mulf %234, %230 : vector<16x64xf32>
    %236 = arith.mulf %235, %230 : vector<16x64xf32>
    %237 = arith.addf %230, %236 : vector<16x64xf32>
    %cst_186 = arith.constant 0.797884583 : f32
    %238 = vector.broadcast %cst_186 : f32 to vector<16x64xf32>
    %239 = arith.mulf %238, %237 : vector<16x64xf32>
    %240 = math.tanh %239 : vector<16x64xf32>
    %cst_187 = arith.constant 1.000000e+00 : f32
    %241 = vector.broadcast %cst_187 : f32 to vector<16x64xf32>
    %242 = arith.addf %241, %240 : vector<16x64xf32>
    %243 = arith.mulf %232, %242 : vector<16x64xf32>
    %c0_188 = arith.constant 0 : index
    %c0_189 = arith.constant 0 : index
    %c0_190 = arith.constant 0 : index
    %244 = vector.load %arg18[%c0_188, %c0_189, %c0_190] : memref<2x64x32xf32, #tpu.memory_space<vmem>>, vector<1x64x32xf32>
    %245 = vector.shape_cast %244 : vector<1x64x32xf32> to vector<64x32xf32>
    %cst_191 = arith.constant dense<0.000000e+00> : vector<16x32xf32>
    %246 = tpu.matmul %243, %245, %cst_191 {dimension_numbers = #tpu.dot_dimension_numbers<[1], [0], [0], [1], [0, 0, 1, 1], [], []>} : vector<16x64xf32>, vector<64x32xf32>, vector<16x32xf32> -> vector<16x32xf32>
    %c0_192 = arith.constant 0 : index
    %c0_193 = arith.constant 0 : index
    %c0_194 = arith.constant 0 : index
    %247 = vector.load %arg19[%c0_192, %c0_193, %c0_194] : memref<2x1x32xf32, #tpu.memory_space<vmem>>, vector<1x1x32xf32>
    %248 = vector.shape_cast %247 : vector<1x1x32xf32> to vector<1x32xf32>
    %249 = vector.broadcast %248 : vector<1x32xf32> to vector<16x32xf32>
    %250 = arith.addf %246, %249 : vector<16x32xf32>
    %251 = arith.addf %250, %223 : vector<16x32xf32>
    %c0_195 = arith.constant 0 : index
    %c0_196 = arith.constant 0 : index
    %c0_197 = arith.constant 0 : index
    %252 = vector.load %arg20[%c0_195, %c0_196, %c0_197] : memref<2x1x32xf32, #tpu.memory_space<vmem>>, vector<1x1x32xf32>
    %253 = vector.shape_cast %252 : vector<1x1x32xf32> to vector<1x32xf32>
    %c0_198 = arith.constant 0 : index
    %c0_199 = arith.constant 0 : index
    %c0_200 = arith.constant 0 : index
    %254 = vector.load %arg21[%c0_198, %c0_199, %c0_200] : memref<2x1x32xf32, #tpu.memory_space<vmem>>, vector<1x1x32xf32>
    %255 = vector.shape_cast %254 : vector<1x1x32xf32> to vector<1x32xf32>
    %cst_201 = arith.constant dense<0.000000e+00> : vector<16xf32>
    %256 = vector.multi_reduction <add>, %251, %cst_201 [1] : vector<16x32xf32> to vector<16xf32>
    %257 = vector.shape_cast %256 : vector<16xf32> to vector<16x1xf32>
    %cst_202 = arith.constant 3.200000e+01 : f32
    %258 = vector.broadcast %cst_202 : f32 to vector<16x1xf32>
    %259 = arith.divf %257, %258 : vector<16x1xf32>
    %260 = vector.broadcast %259 : vector<16x1xf32> to vector<16x32xf32>
    %261 = arith.subf %251, %260 : vector<16x32xf32>
    %262 = arith.mulf %261, %261 : vector<16x32xf32>
    %cst_203 = arith.constant dense<0.000000e+00> : vector<16xf32>
    %263 = vector.multi_reduction <add>, %262, %cst_203 [1] : vector<16x32xf32> to vector<16xf32>
    %264 = vector.shape_cast %263 : vector<16xf32> to vector<16x1xf32>
    %cst_204 = arith.constant 3.200000e+01 : f32
    %265 = vector.broadcast %cst_204 : f32 to vector<16x1xf32>
    %266 = arith.divf %264, %265 : vector<16x1xf32>
    %cst_205 = arith.constant 9.99999996E-13 : f32
    %267 = vector.broadcast %cst_205 : f32 to vector<16x1xf32>
    %268 = arith.addf %266, %267 : vector<16x1xf32>
    %269 = math.rsqrt %268 : vector<16x1xf32>
    %270 = vector.broadcast %269 : vector<16x1xf32> to vector<16x32xf32>
    %271 = arith.mulf %261, %270 : vector<16x32xf32>
    %272 = vector.broadcast %253 : vector<1x32xf32> to vector<16x32xf32>
    %273 = arith.mulf %271, %272 : vector<16x32xf32>
    %274 = vector.broadcast %255 : vector<1x32xf32> to vector<16x32xf32>
    %275 = arith.addf %273, %274 : vector<16x32xf32>
    %c1_206 = arith.constant 1 : index
    %c0_207 = arith.constant 0 : index
    %c0_208 = arith.constant 0 : index
    %c0_209 = arith.constant 0 : index
    %276 = vector.load %arg6[%c1_206, %c0_207, %c0_208, %c0_209] : memref<2x4x32x8xf32, #tpu.memory_space<vmem>>, vector<1x1x32x8xf32>
    %277 = vector.shape_cast %276 : vector<1x1x32x8xf32> to vector<32x8xf32>
    %cst_210 = arith.constant dense<0.000000e+00> : vector<16x8xf32>
    %278 = tpu.matmul %275, %277, %cst_210 {dimension_numbers = #tpu.dot_dimension_numbers<[1], [0], [0], [1], [0, 0, 1, 1], [], []>} : vector<16x32xf32>, vector<32x8xf32>, vector<16x8xf32> -> vector<16x8xf32>
    %c1_211 = arith.constant 1 : index
    %c0_212 = arith.constant 0 : index
    %c0_213 = arith.constant 0 : index
    %c0_214 = arith.constant 0 : index
    %279 = vector.load %arg7[%c1_211, %c0_212, %c0_213, %c0_214] : memref<2x4x1x8xf32, #tpu.memory_space<vmem>>, vector<1x1x1x8xf32>
    %280 = vector.shape_cast %279 : vector<1x1x1x8xf32> to vector<1x8xf32>
    %281 = vector.broadcast %280 : vector<1x8xf32> to vector<16x8xf32>
    %282 = arith.addf %278, %281 : vector<16x8xf32>
    %cst_215 = arith.constant 0.353553385 : f32
    %283 = vector.broadcast %cst_215 : f32 to vector<16x8xf32>
    %284 = arith.mulf %282, %283 : vector<16x8xf32>
    %c1_216 = arith.constant 1 : index
    %c0_217 = arith.constant 0 : index
    %c0_218 = arith.constant 0 : index
    %c0_219 = arith.constant 0 : index
    %285 = vector.load %arg8[%c1_216, %c0_217, %c0_218, %c0_219] : memref<2x4x32x8xf32, #tpu.memory_space<vmem>>, vector<1x1x32x8xf32>
    %286 = vector.shape_cast %285 : vector<1x1x32x8xf32> to vector<32x8xf32>
    %cst_220 = arith.constant dense<0.000000e+00> : vector<16x8xf32>
    %287 = tpu.matmul %275, %286, %cst_220 {dimension_numbers = #tpu.dot_dimension_numbers<[1], [0], [0], [1], [0, 0, 1, 1], [], []>} : vector<16x32xf32>, vector<32x8xf32>, vector<16x8xf32> -> vector<16x8xf32>
    %c1_221 = arith.constant 1 : index
    %c0_222 = arith.constant 0 : index
    %c0_223 = arith.constant 0 : index
    %c0_224 = arith.constant 0 : index
    %288 = vector.load %arg9[%c1_221, %c0_222, %c0_223, %c0_224] : memref<2x4x1x8xf32, #tpu.memory_space<vmem>>, vector<1x1x1x8xf32>
    %289 = vector.shape_cast %288 : vector<1x1x1x8xf32> to vector<1x8xf32>
    %290 = vector.broadcast %289 : vector<1x8xf32> to vector<16x8xf32>
    %291 = arith.addf %287, %290 : vector<16x8xf32>
    %c1_225 = arith.constant 1 : index
    %c0_226 = arith.constant 0 : index
    %c0_227 = arith.constant 0 : index
    %c0_228 = arith.constant 0 : index
    %292 = vector.load %arg10[%c1_225, %c0_226, %c0_227, %c0_228] : memref<2x4x32x8xf32, #tpu.memory_space<vmem>>, vector<1x1x32x8xf32>
    %293 = vector.shape_cast %292 : vector<1x1x32x8xf32> to vector<32x8xf32>
    %cst_229 = arith.constant dense<0.000000e+00> : vector<16x8xf32>
    %294 = tpu.matmul %275, %293, %cst_229 {dimension_numbers = #tpu.dot_dimension_numbers<[1], [0], [0], [1], [0, 0, 1, 1], [], []>} : vector<16x32xf32>, vector<32x8xf32>, vector<16x8xf32> -> vector<16x8xf32>
    %c1_230 = arith.constant 1 : index
    %c0_231 = arith.constant 0 : index
    %c0_232 = arith.constant 0 : index
    %c0_233 = arith.constant 0 : index
    %295 = vector.load %arg11[%c1_230, %c0_231, %c0_232, %c0_233] : memref<2x4x1x8xf32, #tpu.memory_space<vmem>>, vector<1x1x1x8xf32>
    %296 = vector.shape_cast %295 : vector<1x1x1x8xf32> to vector<1x8xf32>
    %297 = vector.broadcast %296 : vector<1x8xf32> to vector<16x8xf32>
    %298 = arith.addf %294, %297 : vector<16x8xf32>
    %cst_234 = arith.constant dense<0.000000e+00> : vector<16x16xf32>
    %299 = tpu.matmul %284, %291, %cst_234 {dimension_numbers = #tpu.dot_dimension_numbers<[1], [1], [0], [0], [0, 0, 1, 0], [], []>} : vector<16x8xf32>, vector<16x8xf32>, vector<16x16xf32> -> vector<16x16xf32>
    %300 = arith.addf %299, %35 : vector<16x16xf32>
    %cst_235 = arith.constant dense<0xFF800000> : vector<16xf32>
    %301 = vector.multi_reduction <maximumf>, %300, %cst_235 [1] : vector<16x16xf32> to vector<16xf32>
    %302 = vector.shape_cast %301 : vector<16xf32> to vector<16x1xf32>
    %303 = vector.broadcast %302 : vector<16x1xf32> to vector<16x16xf32>
    %304 = arith.subf %300, %303 : vector<16x16xf32>
    %305 = math.exp %304 : vector<16x16xf32>
    %cst_236 = arith.constant dense<0.000000e+00> : vector<16xf32>
    %306 = vector.multi_reduction <add>, %305, %cst_236 [1] : vector<16x16xf32> to vector<16xf32>
    %307 = vector.shape_cast %306 : vector<16xf32> to vector<16x1xf32>
    %308 = tpu.reciprocal %307 {approx = true} : vector<16x1xf32> -> vector<16x1xf32>
    %309 = vector.broadcast %308 : vector<16x1xf32> to vector<16x16xf32>
    %310 = arith.mulf %305, %309 : vector<16x16xf32>
    %cst_237 = arith.constant dense<0.000000e+00> : vector<16x8xf32>
    %311 = tpu.matmul %310, %298, %cst_237 {dimension_numbers = #tpu.dot_dimension_numbers<[1], [0], [0], [1], [0, 0, 1, 1], [], []>} : vector<16x16xf32>, vector<16x8xf32>, vector<16x8xf32> -> vector<16x8xf32>
    %c1_238 = arith.constant 1 : index
    %c0_239 = arith.constant 0 : index
    %c0_240 = arith.constant 0 : index
    %c0_241 = arith.constant 0 : index
    %312 = vector.load %arg12[%c1_238, %c0_239, %c0_240, %c0_241] : memref<2x4x8x32xf32, #tpu.memory_space<vmem>>, vector<1x1x8x32xf32>
    %313 = vector.shape_cast %312 : vector<1x1x8x32xf32> to vector<8x32xf32>
    %cst_242 = arith.constant dense<0.000000e+00> : vector<16x32xf32>
    %314 = tpu.matmul %311, %313, %cst_242 {dimension_numbers = #tpu.dot_dimension_numbers<[1], [0], [0], [1], [0, 0, 1, 1], [], []>} : vector<16x8xf32>, vector<8x32xf32>, vector<16x32xf32> -> vector<16x32xf32>
    %c1_243 = arith.constant 1 : index
    %c1_244 = arith.constant 1 : index
    %c0_245 = arith.constant 0 : index
    %c0_246 = arith.constant 0 : index
    %315 = vector.load %arg6[%c1_243, %c1_244, %c0_245, %c0_246] : memref<2x4x32x8xf32, #tpu.memory_space<vmem>>, vector<1x1x32x8xf32>
    %316 = vector.shape_cast %315 : vector<1x1x32x8xf32> to vector<32x8xf32>
    %cst_247 = arith.constant dense<0.000000e+00> : vector<16x8xf32>
    %317 = tpu.matmul %275, %316, %cst_247 {dimension_numbers = #tpu.dot_dimension_numbers<[1], [0], [0], [1], [0, 0, 1, 1], [], []>} : vector<16x32xf32>, vector<32x8xf32>, vector<16x8xf32> -> vector<16x8xf32>
    %c1_248 = arith.constant 1 : index
    %c1_249 = arith.constant 1 : index
    %c0_250 = arith.constant 0 : index
    %c0_251 = arith.constant 0 : index
    %318 = vector.load %arg7[%c1_248, %c1_249, %c0_250, %c0_251] : memref<2x4x1x8xf32, #tpu.memory_space<vmem>>, vector<1x1x1x8xf32>
    %319 = vector.shape_cast %318 : vector<1x1x1x8xf32> to vector<1x8xf32>
    %320 = vector.broadcast %319 : vector<1x8xf32> to vector<16x8xf32>
    %321 = arith.addf %317, %320 : vector<16x8xf32>
    %cst_252 = arith.constant 0.353553385 : f32
    %322 = vector.broadcast %cst_252 : f32 to vector<16x8xf32>
    %323 = arith.mulf %321, %322 : vector<16x8xf32>
    %c1_253 = arith.constant 1 : index
    %c1_254 = arith.constant 1 : index
    %c0_255 = arith.constant 0 : index
    %c0_256 = arith.constant 0 : index
    %324 = vector.load %arg8[%c1_253, %c1_254, %c0_255, %c0_256] : memref<2x4x32x8xf32, #tpu.memory_space<vmem>>, vector<1x1x32x8xf32>
    %325 = vector.shape_cast %324 : vector<1x1x32x8xf32> to vector<32x8xf32>
    %cst_257 = arith.constant dense<0.000000e+00> : vector<16x8xf32>
    %326 = tpu.matmul %275, %325, %cst_257 {dimension_numbers = #tpu.dot_dimension_numbers<[1], [0], [0], [1], [0, 0, 1, 1], [], []>} : vector<16x32xf32>, vector<32x8xf32>, vector<16x8xf32> -> vector<16x8xf32>
    %c1_258 = arith.constant 1 : index
    %c1_259 = arith.constant 1 : index
    %c0_260 = arith.constant 0 : index
    %c0_261 = arith.constant 0 : index
    %327 = vector.load %arg9[%c1_258, %c1_259, %c0_260, %c0_261] : memref<2x4x1x8xf32, #tpu.memory_space<vmem>>, vector<1x1x1x8xf32>
    %328 = vector.shape_cast %327 : vector<1x1x1x8xf32> to vector<1x8xf32>
    %329 = vector.broadcast %328 : vector<1x8xf32> to vector<16x8xf32>
    %330 = arith.addf %326, %329 : vector<16x8xf32>
    %c1_262 = arith.constant 1 : index
    %c1_263 = arith.constant 1 : index
    %c0_264 = arith.constant 0 : index
    %c0_265 = arith.constant 0 : index
    %331 = vector.load %arg10[%c1_262, %c1_263, %c0_264, %c0_265] : memref<2x4x32x8xf32, #tpu.memory_space<vmem>>, vector<1x1x32x8xf32>
    %332 = vector.shape_cast %331 : vector<1x1x32x8xf32> to vector<32x8xf32>
    %cst_266 = arith.constant dense<0.000000e+00> : vector<16x8xf32>
    %333 = tpu.matmul %275, %332, %cst_266 {dimension_numbers = #tpu.dot_dimension_numbers<[1], [0], [0], [1], [0, 0, 1, 1], [], []>} : vector<16x32xf32>, vector<32x8xf32>, vector<16x8xf32> -> vector<16x8xf32>
    %c1_267 = arith.constant 1 : index
    %c1_268 = arith.constant 1 : index
    %c0_269 = arith.constant 0 : index
    %c0_270 = arith.constant 0 : index
    %334 = vector.load %arg11[%c1_267, %c1_268, %c0_269, %c0_270] : memref<2x4x1x8xf32, #tpu.memory_space<vmem>>, vector<1x1x1x8xf32>
    %335 = vector.shape_cast %334 : vector<1x1x1x8xf32> to vector<1x8xf32>
    %336 = vector.broadcast %335 : vector<1x8xf32> to vector<16x8xf32>
    %337 = arith.addf %333, %336 : vector<16x8xf32>
    %cst_271 = arith.constant dense<0.000000e+00> : vector<16x16xf32>
    %338 = tpu.matmul %323, %330, %cst_271 {dimension_numbers = #tpu.dot_dimension_numbers<[1], [1], [0], [0], [0, 0, 1, 0], [], []>} : vector<16x8xf32>, vector<16x8xf32>, vector<16x16xf32> -> vector<16x16xf32>
    %339 = arith.addf %338, %35 : vector<16x16xf32>
    %cst_272 = arith.constant dense<0xFF800000> : vector<16xf32>
    %340 = vector.multi_reduction <maximumf>, %339, %cst_272 [1] : vector<16x16xf32> to vector<16xf32>
    %341 = vector.shape_cast %340 : vector<16xf32> to vector<16x1xf32>
    %342 = vector.broadcast %341 : vector<16x1xf32> to vector<16x16xf32>
    %343 = arith.subf %339, %342 : vector<16x16xf32>
    %344 = math.exp %343 : vector<16x16xf32>
    %cst_273 = arith.constant dense<0.000000e+00> : vector<16xf32>
    %345 = vector.multi_reduction <add>, %344, %cst_273 [1] : vector<16x16xf32> to vector<16xf32>
    %346 = vector.shape_cast %345 : vector<16xf32> to vector<16x1xf32>
    %347 = tpu.reciprocal %346 {approx = true} : vector<16x1xf32> -> vector<16x1xf32>
    %348 = vector.broadcast %347 : vector<16x1xf32> to vector<16x16xf32>
    %349 = arith.mulf %344, %348 : vector<16x16xf32>
    %cst_274 = arith.constant dense<0.000000e+00> : vector<16x8xf32>
    %350 = tpu.matmul %349, %337, %cst_274 {dimension_numbers = #tpu.dot_dimension_numbers<[1], [0], [0], [1], [0, 0, 1, 1], [], []>} : vector<16x16xf32>, vector<16x8xf32>, vector<16x8xf32> -> vector<16x8xf32>
    %c1_275 = arith.constant 1 : index
    %c1_276 = arith.constant 1 : index
    %c0_277 = arith.constant 0 : index
    %c0_278 = arith.constant 0 : index
    %351 = vector.load %arg12[%c1_275, %c1_276, %c0_277, %c0_278] : memref<2x4x8x32xf32, #tpu.memory_space<vmem>>, vector<1x1x8x32xf32>
    %352 = vector.shape_cast %351 : vector<1x1x8x32xf32> to vector<8x32xf32>
    %cst_279 = arith.constant dense<0.000000e+00> : vector<16x32xf32>
    %353 = tpu.matmul %350, %352, %cst_279 {dimension_numbers = #tpu.dot_dimension_numbers<[1], [0], [0], [1], [0, 0, 1, 1], [], []>} : vector<16x8xf32>, vector<8x32xf32>, vector<16x32xf32> -> vector<16x32xf32>
    %354 = arith.addf %314, %353 : vector<16x32xf32>
    %c1_280 = arith.constant 1 : index
    %c2_281 = arith.constant 2 : index
    %c0_282 = arith.constant 0 : index
    %c0_283 = arith.constant 0 : index
    %355 = vector.load %arg6[%c1_280, %c2_281, %c0_282, %c0_283] : memref<2x4x32x8xf32, #tpu.memory_space<vmem>>, vector<1x1x32x8xf32>
    %356 = vector.shape_cast %355 : vector<1x1x32x8xf32> to vector<32x8xf32>
    %cst_284 = arith.constant dense<0.000000e+00> : vector<16x8xf32>
    %357 = tpu.matmul %275, %356, %cst_284 {dimension_numbers = #tpu.dot_dimension_numbers<[1], [0], [0], [1], [0, 0, 1, 1], [], []>} : vector<16x32xf32>, vector<32x8xf32>, vector<16x8xf32> -> vector<16x8xf32>
    %c1_285 = arith.constant 1 : index
    %c2_286 = arith.constant 2 : index
    %c0_287 = arith.constant 0 : index
    %c0_288 = arith.constant 0 : index
    %358 = vector.load %arg7[%c1_285, %c2_286, %c0_287, %c0_288] : memref<2x4x1x8xf32, #tpu.memory_space<vmem>>, vector<1x1x1x8xf32>
    %359 = vector.shape_cast %358 : vector<1x1x1x8xf32> to vector<1x8xf32>
    %360 = vector.broadcast %359 : vector<1x8xf32> to vector<16x8xf32>
    %361 = arith.addf %357, %360 : vector<16x8xf32>
    %cst_289 = arith.constant 0.353553385 : f32
    %362 = vector.broadcast %cst_289 : f32 to vector<16x8xf32>
    %363 = arith.mulf %361, %362 : vector<16x8xf32>
    %c1_290 = arith.constant 1 : index
    %c2_291 = arith.constant 2 : index
    %c0_292 = arith.constant 0 : index
    %c0_293 = arith.constant 0 : index
    %364 = vector.load %arg8[%c1_290, %c2_291, %c0_292, %c0_293] : memref<2x4x32x8xf32, #tpu.memory_space<vmem>>, vector<1x1x32x8xf32>
    %365 = vector.shape_cast %364 : vector<1x1x32x8xf32> to vector<32x8xf32>
    %cst_294 = arith.constant dense<0.000000e+00> : vector<16x8xf32>
    %366 = tpu.matmul %275, %365, %cst_294 {dimension_numbers = #tpu.dot_dimension_numbers<[1], [0], [0], [1], [0, 0, 1, 1], [], []>} : vector<16x32xf32>, vector<32x8xf32>, vector<16x8xf32> -> vector<16x8xf32>
    %c1_295 = arith.constant 1 : index
    %c2_296 = arith.constant 2 : index
    %c0_297 = arith.constant 0 : index
    %c0_298 = arith.constant 0 : index
    %367 = vector.load %arg9[%c1_295, %c2_296, %c0_297, %c0_298] : memref<2x4x1x8xf32, #tpu.memory_space<vmem>>, vector<1x1x1x8xf32>
    %368 = vector.shape_cast %367 : vector<1x1x1x8xf32> to vector<1x8xf32>
    %369 = vector.broadcast %368 : vector<1x8xf32> to vector<16x8xf32>
    %370 = arith.addf %366, %369 : vector<16x8xf32>
    %c1_299 = arith.constant 1 : index
    %c2_300 = arith.constant 2 : index
    %c0_301 = arith.constant 0 : index
    %c0_302 = arith.constant 0 : index
    %371 = vector.load %arg10[%c1_299, %c2_300, %c0_301, %c0_302] : memref<2x4x32x8xf32, #tpu.memory_space<vmem>>, vector<1x1x32x8xf32>
    %372 = vector.shape_cast %371 : vector<1x1x32x8xf32> to vector<32x8xf32>
    %cst_303 = arith.constant dense<0.000000e+00> : vector<16x8xf32>
    %373 = tpu.matmul %275, %372, %cst_303 {dimension_numbers = #tpu.dot_dimension_numbers<[1], [0], [0], [1], [0, 0, 1, 1], [], []>} : vector<16x32xf32>, vector<32x8xf32>, vector<16x8xf32> -> vector<16x8xf32>
    %c1_304 = arith.constant 1 : index
    %c2_305 = arith.constant 2 : index
    %c0_306 = arith.constant 0 : index
    %c0_307 = arith.constant 0 : index
    %374 = vector.load %arg11[%c1_304, %c2_305, %c0_306, %c0_307] : memref<2x4x1x8xf32, #tpu.memory_space<vmem>>, vector<1x1x1x8xf32>
    %375 = vector.shape_cast %374 : vector<1x1x1x8xf32> to vector<1x8xf32>
    %376 = vector.broadcast %375 : vector<1x8xf32> to vector<16x8xf32>
    %377 = arith.addf %373, %376 : vector<16x8xf32>
    %cst_308 = arith.constant dense<0.000000e+00> : vector<16x16xf32>
    %378 = tpu.matmul %363, %370, %cst_308 {dimension_numbers = #tpu.dot_dimension_numbers<[1], [1], [0], [0], [0, 0, 1, 0], [], []>} : vector<16x8xf32>, vector<16x8xf32>, vector<16x16xf32> -> vector<16x16xf32>
    %379 = arith.addf %378, %35 : vector<16x16xf32>
    %cst_309 = arith.constant dense<0xFF800000> : vector<16xf32>
    %380 = vector.multi_reduction <maximumf>, %379, %cst_309 [1] : vector<16x16xf32> to vector<16xf32>
    %381 = vector.shape_cast %380 : vector<16xf32> to vector<16x1xf32>
    %382 = vector.broadcast %381 : vector<16x1xf32> to vector<16x16xf32>
    %383 = arith.subf %379, %382 : vector<16x16xf32>
    %384 = math.exp %383 : vector<16x16xf32>
    %cst_310 = arith.constant dense<0.000000e+00> : vector<16xf32>
    %385 = vector.multi_reduction <add>, %384, %cst_310 [1] : vector<16x16xf32> to vector<16xf32>
    %386 = vector.shape_cast %385 : vector<16xf32> to vector<16x1xf32>
    %387 = tpu.reciprocal %386 {approx = true} : vector<16x1xf32> -> vector<16x1xf32>
    %388 = vector.broadcast %387 : vector<16x1xf32> to vector<16x16xf32>
    %389 = arith.mulf %384, %388 : vector<16x16xf32>
    %cst_311 = arith.constant dense<0.000000e+00> : vector<16x8xf32>
    %390 = tpu.matmul %389, %377, %cst_311 {dimension_numbers = #tpu.dot_dimension_numbers<[1], [0], [0], [1], [0, 0, 1, 1], [], []>} : vector<16x16xf32>, vector<16x8xf32>, vector<16x8xf32> -> vector<16x8xf32>
    %c1_312 = arith.constant 1 : index
    %c2_313 = arith.constant 2 : index
    %c0_314 = arith.constant 0 : index
    %c0_315 = arith.constant 0 : index
    %391 = vector.load %arg12[%c1_312, %c2_313, %c0_314, %c0_315] : memref<2x4x8x32xf32, #tpu.memory_space<vmem>>, vector<1x1x8x32xf32>
    %392 = vector.shape_cast %391 : vector<1x1x8x32xf32> to vector<8x32xf32>
    %cst_316 = arith.constant dense<0.000000e+00> : vector<16x32xf32>
    %393 = tpu.matmul %390, %392, %cst_316 {dimension_numbers = #tpu.dot_dimension_numbers<[1], [0], [0], [1], [0, 0, 1, 1], [], []>} : vector<16x8xf32>, vector<8x32xf32>, vector<16x32xf32> -> vector<16x32xf32>
    %394 = arith.addf %354, %393 : vector<16x32xf32>
    %c1_317 = arith.constant 1 : index
    %c3_318 = arith.constant 3 : index
    %c0_319 = arith.constant 0 : index
    %c0_320 = arith.constant 0 : index
    %395 = vector.load %arg6[%c1_317, %c3_318, %c0_319, %c0_320] : memref<2x4x32x8xf32, #tpu.memory_space<vmem>>, vector<1x1x32x8xf32>
    %396 = vector.shape_cast %395 : vector<1x1x32x8xf32> to vector<32x8xf32>
    %cst_321 = arith.constant dense<0.000000e+00> : vector<16x8xf32>
    %397 = tpu.matmul %275, %396, %cst_321 {dimension_numbers = #tpu.dot_dimension_numbers<[1], [0], [0], [1], [0, 0, 1, 1], [], []>} : vector<16x32xf32>, vector<32x8xf32>, vector<16x8xf32> -> vector<16x8xf32>
    %c1_322 = arith.constant 1 : index
    %c3_323 = arith.constant 3 : index
    %c0_324 = arith.constant 0 : index
    %c0_325 = arith.constant 0 : index
    %398 = vector.load %arg7[%c1_322, %c3_323, %c0_324, %c0_325] : memref<2x4x1x8xf32, #tpu.memory_space<vmem>>, vector<1x1x1x8xf32>
    %399 = vector.shape_cast %398 : vector<1x1x1x8xf32> to vector<1x8xf32>
    %400 = vector.broadcast %399 : vector<1x8xf32> to vector<16x8xf32>
    %401 = arith.addf %397, %400 : vector<16x8xf32>
    %cst_326 = arith.constant 0.353553385 : f32
    %402 = vector.broadcast %cst_326 : f32 to vector<16x8xf32>
    %403 = arith.mulf %401, %402 : vector<16x8xf32>
    %c1_327 = arith.constant 1 : index
    %c3_328 = arith.constant 3 : index
    %c0_329 = arith.constant 0 : index
    %c0_330 = arith.constant 0 : index
    %404 = vector.load %arg8[%c1_327, %c3_328, %c0_329, %c0_330] : memref<2x4x32x8xf32, #tpu.memory_space<vmem>>, vector<1x1x32x8xf32>
    %405 = vector.shape_cast %404 : vector<1x1x32x8xf32> to vector<32x8xf32>
    %cst_331 = arith.constant dense<0.000000e+00> : vector<16x8xf32>
    %406 = tpu.matmul %275, %405, %cst_331 {dimension_numbers = #tpu.dot_dimension_numbers<[1], [0], [0], [1], [0, 0, 1, 1], [], []>} : vector<16x32xf32>, vector<32x8xf32>, vector<16x8xf32> -> vector<16x8xf32>
    %c1_332 = arith.constant 1 : index
    %c3_333 = arith.constant 3 : index
    %c0_334 = arith.constant 0 : index
    %c0_335 = arith.constant 0 : index
    %407 = vector.load %arg9[%c1_332, %c3_333, %c0_334, %c0_335] : memref<2x4x1x8xf32, #tpu.memory_space<vmem>>, vector<1x1x1x8xf32>
    %408 = vector.shape_cast %407 : vector<1x1x1x8xf32> to vector<1x8xf32>
    %409 = vector.broadcast %408 : vector<1x8xf32> to vector<16x8xf32>
    %410 = arith.addf %406, %409 : vector<16x8xf32>
    %c1_336 = arith.constant 1 : index
    %c3_337 = arith.constant 3 : index
    %c0_338 = arith.constant 0 : index
    %c0_339 = arith.constant 0 : index
    %411 = vector.load %arg10[%c1_336, %c3_337, %c0_338, %c0_339] : memref<2x4x32x8xf32, #tpu.memory_space<vmem>>, vector<1x1x32x8xf32>
    %412 = vector.shape_cast %411 : vector<1x1x32x8xf32> to vector<32x8xf32>
    %cst_340 = arith.constant dense<0.000000e+00> : vector<16x8xf32>
    %413 = tpu.matmul %275, %412, %cst_340 {dimension_numbers = #tpu.dot_dimension_numbers<[1], [0], [0], [1], [0, 0, 1, 1], [], []>} : vector<16x32xf32>, vector<32x8xf32>, vector<16x8xf32> -> vector<16x8xf32>
    %c1_341 = arith.constant 1 : index
    %c3_342 = arith.constant 3 : index
    %c0_343 = arith.constant 0 : index
    %c0_344 = arith.constant 0 : index
    %414 = vector.load %arg11[%c1_341, %c3_342, %c0_343, %c0_344] : memref<2x4x1x8xf32, #tpu.memory_space<vmem>>, vector<1x1x1x8xf32>
    %415 = vector.shape_cast %414 : vector<1x1x1x8xf32> to vector<1x8xf32>
    %416 = vector.broadcast %415 : vector<1x8xf32> to vector<16x8xf32>
    %417 = arith.addf %413, %416 : vector<16x8xf32>
    %cst_345 = arith.constant dense<0.000000e+00> : vector<16x16xf32>
    %418 = tpu.matmul %403, %410, %cst_345 {dimension_numbers = #tpu.dot_dimension_numbers<[1], [1], [0], [0], [0, 0, 1, 0], [], []>} : vector<16x8xf32>, vector<16x8xf32>, vector<16x16xf32> -> vector<16x16xf32>
    %419 = arith.addf %418, %35 : vector<16x16xf32>
    %cst_346 = arith.constant dense<0xFF800000> : vector<16xf32>
    %420 = vector.multi_reduction <maximumf>, %419, %cst_346 [1] : vector<16x16xf32> to vector<16xf32>
    %421 = vector.shape_cast %420 : vector<16xf32> to vector<16x1xf32>
    %422 = vector.broadcast %421 : vector<16x1xf32> to vector<16x16xf32>
    %423 = arith.subf %419, %422 : vector<16x16xf32>
    %424 = math.exp %423 : vector<16x16xf32>
    %cst_347 = arith.constant dense<0.000000e+00> : vector<16xf32>
    %425 = vector.multi_reduction <add>, %424, %cst_347 [1] : vector<16x16xf32> to vector<16xf32>
    %426 = vector.shape_cast %425 : vector<16xf32> to vector<16x1xf32>
    %427 = tpu.reciprocal %426 {approx = true} : vector<16x1xf32> -> vector<16x1xf32>
    %428 = vector.broadcast %427 : vector<16x1xf32> to vector<16x16xf32>
    %429 = arith.mulf %424, %428 : vector<16x16xf32>
    %cst_348 = arith.constant dense<0.000000e+00> : vector<16x8xf32>
    %430 = tpu.matmul %429, %417, %cst_348 {dimension_numbers = #tpu.dot_dimension_numbers<[1], [0], [0], [1], [0, 0, 1, 1], [], []>} : vector<16x16xf32>, vector<16x8xf32>, vector<16x8xf32> -> vector<16x8xf32>
    %c1_349 = arith.constant 1 : index
    %c3_350 = arith.constant 3 : index
    %c0_351 = arith.constant 0 : index
    %c0_352 = arith.constant 0 : index
    %431 = vector.load %arg12[%c1_349, %c3_350, %c0_351, %c0_352] : memref<2x4x8x32xf32, #tpu.memory_space<vmem>>, vector<1x1x8x32xf32>
    %432 = vector.shape_cast %431 : vector<1x1x8x32xf32> to vector<8x32xf32>
    %cst_353 = arith.constant dense<0.000000e+00> : vector<16x32xf32>
    %433 = tpu.matmul %430, %432, %cst_353 {dimension_numbers = #tpu.dot_dimension_numbers<[1], [0], [0], [1], [0, 0, 1, 1], [], []>} : vector<16x8xf32>, vector<8x32xf32>, vector<16x32xf32> -> vector<16x32xf32>
    %434 = arith.addf %394, %433 : vector<16x32xf32>
    %c1_354 = arith.constant 1 : index
    %c0_355 = arith.constant 0 : index
    %c0_356 = arith.constant 0 : index
    %435 = vector.load %arg13[%c1_354, %c0_355, %c0_356] : memref<2x1x32xf32, #tpu.memory_space<vmem>>, vector<1x1x32xf32>
    %436 = vector.shape_cast %435 : vector<1x1x32xf32> to vector<1x32xf32>
    %437 = vector.broadcast %436 : vector<1x32xf32> to vector<16x32xf32>
    %438 = arith.addf %434, %437 : vector<16x32xf32>
    %439 = arith.addf %438, %275 : vector<16x32xf32>
    %c1_357 = arith.constant 1 : index
    %c0_358 = arith.constant 0 : index
    %c0_359 = arith.constant 0 : index
    %440 = vector.load %arg14[%c1_357, %c0_358, %c0_359] : memref<2x1x32xf32, #tpu.memory_space<vmem>>, vector<1x1x32xf32>
    %441 = vector.shape_cast %440 : vector<1x1x32xf32> to vector<1x32xf32>
    %c1_360 = arith.constant 1 : index
    %c0_361 = arith.constant 0 : index
    %c0_362 = arith.constant 0 : index
    %442 = vector.load %arg15[%c1_360, %c0_361, %c0_362] : memref<2x1x32xf32, #tpu.memory_space<vmem>>, vector<1x1x32xf32>
    %443 = vector.shape_cast %442 : vector<1x1x32xf32> to vector<1x32xf32>
    %cst_363 = arith.constant dense<0.000000e+00> : vector<16xf32>
    %444 = vector.multi_reduction <add>, %439, %cst_363 [1] : vector<16x32xf32> to vector<16xf32>
    %445 = vector.shape_cast %444 : vector<16xf32> to vector<16x1xf32>
    %cst_364 = arith.constant 3.200000e+01 : f32
    %446 = vector.broadcast %cst_364 : f32 to vector<16x1xf32>
    %447 = arith.divf %445, %446 : vector<16x1xf32>
    %448 = vector.broadcast %447 : vector<16x1xf32> to vector<16x32xf32>
    %449 = arith.subf %439, %448 : vector<16x32xf32>
    %450 = arith.mulf %449, %449 : vector<16x32xf32>
    %cst_365 = arith.constant dense<0.000000e+00> : vector<16xf32>
    %451 = vector.multi_reduction <add>, %450, %cst_365 [1] : vector<16x32xf32> to vector<16xf32>
    %452 = vector.shape_cast %451 : vector<16xf32> to vector<16x1xf32>
    %cst_366 = arith.constant 3.200000e+01 : f32
    %453 = vector.broadcast %cst_366 : f32 to vector<16x1xf32>
    %454 = arith.divf %452, %453 : vector<16x1xf32>
    %cst_367 = arith.constant 9.99999996E-13 : f32
    %455 = vector.broadcast %cst_367 : f32 to vector<16x1xf32>
    %456 = arith.addf %454, %455 : vector<16x1xf32>
    %457 = math.rsqrt %456 : vector<16x1xf32>
    %458 = vector.broadcast %457 : vector<16x1xf32> to vector<16x32xf32>
    %459 = arith.mulf %449, %458 : vector<16x32xf32>
    %460 = vector.broadcast %441 : vector<1x32xf32> to vector<16x32xf32>
    %461 = arith.mulf %459, %460 : vector<16x32xf32>
    %462 = vector.broadcast %443 : vector<1x32xf32> to vector<16x32xf32>
    %463 = arith.addf %461, %462 : vector<16x32xf32>
    %c1_368 = arith.constant 1 : index
    %c0_369 = arith.constant 0 : index
    %c0_370 = arith.constant 0 : index
    %464 = vector.load %arg16[%c1_368, %c0_369, %c0_370] : memref<2x32x64xf32, #tpu.memory_space<vmem>>, vector<1x32x64xf32>
    %465 = vector.shape_cast %464 : vector<1x32x64xf32> to vector<32x64xf32>
    %cst_371 = arith.constant dense<0.000000e+00> : vector<16x64xf32>
    %466 = tpu.matmul %463, %465, %cst_371 {dimension_numbers = #tpu.dot_dimension_numbers<[1], [0], [0], [1], [0, 0, 1, 1], [], []>} : vector<16x32xf32>, vector<32x64xf32>, vector<16x64xf32> -> vector<16x64xf32>
    %c1_372 = arith.constant 1 : index
    %c0_373 = arith.constant 0 : index
    %c0_374 = arith.constant 0 : index
    %467 = vector.load %arg17[%c1_372, %c0_373, %c0_374] : memref<2x1x64xf32, #tpu.memory_space<vmem>>, vector<1x1x64xf32>
    %468 = vector.shape_cast %467 : vector<1x1x64xf32> to vector<1x64xf32>
    %469 = vector.broadcast %468 : vector<1x64xf32> to vector<16x64xf32>
    %470 = arith.addf %466, %469 : vector<16x64xf32>
    %cst_375 = arith.constant 5.000000e-01 : f32
    %471 = vector.broadcast %cst_375 : f32 to vector<16x64xf32>
    %472 = arith.mulf %471, %470 : vector<16x64xf32>
    %cst_376 = arith.constant 4.471500e-02 : f32
    %473 = vector.broadcast %cst_376 : f32 to vector<16x64xf32>
    %474 = arith.mulf %473, %470 : vector<16x64xf32>
    %475 = arith.mulf %474, %470 : vector<16x64xf32>
    %476 = arith.mulf %475, %470 : vector<16x64xf32>
    %477 = arith.addf %470, %476 : vector<16x64xf32>
    %cst_377 = arith.constant 0.797884583 : f32
    %478 = vector.broadcast %cst_377 : f32 to vector<16x64xf32>
    %479 = arith.mulf %478, %477 : vector<16x64xf32>
    %480 = math.tanh %479 : vector<16x64xf32>
    %cst_378 = arith.constant 1.000000e+00 : f32
    %481 = vector.broadcast %cst_378 : f32 to vector<16x64xf32>
    %482 = arith.addf %481, %480 : vector<16x64xf32>
    %483 = arith.mulf %472, %482 : vector<16x64xf32>
    %c1_379 = arith.constant 1 : index
    %c0_380 = arith.constant 0 : index
    %c0_381 = arith.constant 0 : index
    %484 = vector.load %arg18[%c1_379, %c0_380, %c0_381] : memref<2x64x32xf32, #tpu.memory_space<vmem>>, vector<1x64x32xf32>
    %485 = vector.shape_cast %484 : vector<1x64x32xf32> to vector<64x32xf32>
    %cst_382 = arith.constant dense<0.000000e+00> : vector<16x32xf32>
    %486 = tpu.matmul %483, %485, %cst_382 {dimension_numbers = #tpu.dot_dimension_numbers<[1], [0], [0], [1], [0, 0, 1, 1], [], []>} : vector<16x64xf32>, vector<64x32xf32>, vector<16x32xf32> -> vector<16x32xf32>
    %c1_383 = arith.constant 1 : index
    %c0_384 = arith.constant 0 : index
    %c0_385 = arith.constant 0 : index
    %487 = vector.load %arg19[%c1_383, %c0_384, %c0_385] : memref<2x1x32xf32, #tpu.memory_space<vmem>>, vector<1x1x32xf32>
    %488 = vector.shape_cast %487 : vector<1x1x32xf32> to vector<1x32xf32>
    %489 = vector.broadcast %488 : vector<1x32xf32> to vector<16x32xf32>
    %490 = arith.addf %486, %489 : vector<16x32xf32>
    %491 = arith.addf %490, %463 : vector<16x32xf32>
    %c1_386 = arith.constant 1 : index
    %c0_387 = arith.constant 0 : index
    %c0_388 = arith.constant 0 : index
    %492 = vector.load %arg20[%c1_386, %c0_387, %c0_388] : memref<2x1x32xf32, #tpu.memory_space<vmem>>, vector<1x1x32xf32>
    %493 = vector.shape_cast %492 : vector<1x1x32xf32> to vector<1x32xf32>
    %c1_389 = arith.constant 1 : index
    %c0_390 = arith.constant 0 : index
    %c0_391 = arith.constant 0 : index
    %494 = vector.load %arg21[%c1_389, %c0_390, %c0_391] : memref<2x1x32xf32, #tpu.memory_space<vmem>>, vector<1x1x32xf32>
    %495 = vector.shape_cast %494 : vector<1x1x32xf32> to vector<1x32xf32>
    %cst_392 = arith.constant dense<0.000000e+00> : vector<16xf32>
    %496 = vector.multi_reduction <add>, %491, %cst_392 [1] : vector<16x32xf32> to vector<16xf32>
    %497 = vector.shape_cast %496 : vector<16xf32> to vector<16x1xf32>
    %cst_393 = arith.constant 3.200000e+01 : f32
    %498 = vector.broadcast %cst_393 : f32 to vector<16x1xf32>
    %499 = arith.divf %497, %498 : vector<16x1xf32>
    %500 = vector.broadcast %499 : vector<16x1xf32> to vector<16x32xf32>
    %501 = arith.subf %491, %500 : vector<16x32xf32>
    %502 = arith.mulf %501, %501 : vector<16x32xf32>
    %cst_394 = arith.constant dense<0.000000e+00> : vector<16xf32>
    %503 = vector.multi_reduction <add>, %502, %cst_394 [1] : vector<16x32xf32> to vector<16xf32>
    %504 = vector.shape_cast %503 : vector<16xf32> to vector<16x1xf32>
    %cst_395 = arith.constant 3.200000e+01 : f32
    %505 = vector.broadcast %cst_395 : f32 to vector<16x1xf32>
    %506 = arith.divf %504, %505 : vector<16x1xf32>
    %cst_396 = arith.constant 9.99999996E-13 : f32
    %507 = vector.broadcast %cst_396 : f32 to vector<16x1xf32>
    %508 = arith.addf %506, %507 : vector<16x1xf32>
    %509 = math.rsqrt %508 : vector<16x1xf32>
    %510 = vector.broadcast %509 : vector<16x1xf32> to vector<16x32xf32>
    %511 = arith.mulf %501, %510 : vector<16x32xf32>
    %512 = vector.broadcast %493 : vector<1x32xf32> to vector<16x32xf32>
    %513 = arith.mulf %511, %512 : vector<16x32xf32>
    %514 = vector.broadcast %495 : vector<1x32xf32> to vector<16x32xf32>
    %515 = arith.addf %513, %514 : vector<16x32xf32>
    %c0_397 = arith.constant 0 : index
    %c0_398 = arith.constant 0 : index
    %516 = vector.load %arg25[%c0_397, %c0_398] : memref<16x32xf32, #tpu.memory_space<vmem>>, vector<16x32xf32>
    tpu.vector_store %arg25[%c0_397, %c0_398], %515 {strides = array<i32>} : memref<16x32xf32, #tpu.memory_space<vmem>>, vector<16x32xf32>,
    %c0_399 = arith.constant 0 : index
    %c0_400 = arith.constant 0 : index
    %517 = vector.load %arg22[%c0_399, %c0_400] : memref<2x16xf32, #tpu.memory_space<vmem>>, vector<2x16xf32>
    %cst_401 = arith.constant dense<0.000000e+00> : vector<2x32xf32>
    %518 = tpu.matmul %517, %515, %cst_401 {dimension_numbers = #tpu.dot_dimension_numbers<[1], [0], [0], [1], [0, 0, 1, 1], [], []>} : vector<2x16xf32>, vector<16x32xf32>, vector<2x32xf32> -> vector<2x32xf32>
    %c0_402 = arith.constant 0 : index
    %c0_403 = arith.constant 0 : index
    %519 = vector.load %arg23[%c0_402, %c0_403] : memref<32x32xf32, #tpu.memory_space<vmem>>, vector<32x32xf32>
    %cst_404 = arith.constant dense<0.000000e+00> : vector<2x32xf32>
    %520 = tpu.matmul %518, %519, %cst_404 {dimension_numbers = #tpu.dot_dimension_numbers<[1], [0], [0], [1], [0, 0, 1, 1], [], []>} : vector<2x32xf32>, vector<32x32xf32>, vector<2x32xf32> -> vector<2x32xf32>
    %c0_405 = arith.constant 0 : index
    %c0_406 = arith.constant 0 : index
    %521 = vector.load %arg24[%c0_405, %c0_406] : memref<1x32xf32, #tpu.memory_space<vmem>>, vector<1x32xf32>
    %522 = vector.broadcast %521 : vector<1x32xf32> to vector<2x32xf32>
    %523 = arith.addf %520, %522 : vector<2x32xf32>
    %524 = math.tanh %523 : vector<2x32xf32>
    %c0_407 = arith.constant 0 : index
    %c0_408 = arith.constant 0 : index
    %525 = vector.load %arg26[%c0_407, %c0_408] : memref<2x32xf32, #tpu.memory_space<vmem>>, vector<2x32xf32>
    tpu.vector_store %arg26[%c0_407, %c0_408], %524 {strides = array<i32>} : memref<2x32xf32, #tpu.memory_space<vmem>>, vector<2x32xf32>,
    return
  }
}

</mosaic_0001>

<llo_original>
// kernel: nerd_model_forward.1
$region0: #{nerd_model_forward.1}
  #allocation0 [shape = 'u32[]', space=smem, size = 0x4, offset = 0x4, fixed_abs, tag = 'smem constant byte address 0x4 - core index']
  #allocation1 [shape = 'u32[144,128]{1,0:T(1,128)}', space=vmem, size = 0x12000, scoped, tag = 'internal scratch']
  %s0 = inlined_call_operand.vmem [shape: f32[16,32], index: 0, kind: input, shape index: {}]
  %s1 = inlined_call_operand.vmem [shape: f32[16,1], index: 1, kind: input, shape index: {}]
  %s2 = inlined_call_operand.vmem [shape: f32[1,16], index: 2, kind: input, shape index: {}]
  %s3 = inlined_call_operand.vmem [shape: f32[1,16], index: 3, kind: input, shape index: {}]
  %s4 = inlined_call_operand.vmem [shape: f32[1,32], index: 4, kind: input, shape index: {}]
  %s5 = inlined_call_operand.vmem [shape: f32[1,32], index: 5, kind: input, shape index: {}]
  %s6 = inlined_call_operand.vmem [shape: f32[2,4,32,8], index: 6, kind: input, shape index: {}]
  %s7 = inlined_call_operand.vmem [shape: f32[2,4,1,8], index: 7, kind: input, shape index: {}]
  %s8 = inlined_call_operand.vmem [shape: f32[2,4,32,8], index: 8, kind: input, shape index: {}]
  %s9 = inlined_call_operand.vmem [shape: f32[2,4,1,8], index: 9, kind: input, shape index: {}]
  %s10 = inlined_call_operand.vmem [shape: f32[2,4,32,8], index: 10, kind: input, shape index: {}]
  %s11 = inlined_call_operand.vmem [shape: f32[2,4,1,8], index: 11, kind: input, shape index: {}]
  %s12 = inlined_call_operand.vmem [shape: f32[2,4,8,32], index: 12, kind: input, shape index: {}]
  %s13 = inlined_call_operand.vmem [shape: f32[2,1,32], index: 13, kind: input, shape index: {}]
  %s14 = inlined_call_operand.vmem [shape: f32[2,1,32], index: 14, kind: input, shape index: {}]
  %s15 = inlined_call_operand.vmem [shape: f32[2,1,32], index: 15, kind: input, shape index: {}]
  %s16 = inlined_call_operand.vmem [shape: f32[2,32,64], index: 16, kind: input, shape index: {}]
  %s17 = inlined_call_operand.vmem [shape: f32[2,1,64], index: 17, kind: input, shape index: {}]
  %s18 = inlined_call_operand.vmem [shape: f32[2,64,32], index: 18, kind: input, shape index: {}]
  %s19 = inlined_call_operand.vmem [shape: f32[2,1,32], index: 19, kind: input, shape index: {}]
  %s20 = inlined_call_operand.vmem [shape: f32[2,1,32], index: 20, kind: input, shape index: {}]
  %s21 = inlined_call_operand.vmem [shape: f32[2,1,32], index: 21, kind: input, shape index: {}]
  %s22 = inlined_call_operand.vmem [shape: f32[2,16], index: 22, kind: input, shape index: {}]
  %s23 = inlined_call_operand.vmem [shape: f32[32,32], index: 23, kind: input, shape index: {}]
  %s24 = inlined_call_operand.vmem [shape: f32[1,32], index: 24, kind: input, shape index: {}]
  %s25 = inlined_call_operand.hbm [shape: f32[16,32], index: 25, kind: output, shape index: {0}]
  %s26 = inlined_call_operand.hbm [shape: f32[2,32], index: 26, kind: output, shape index: {1}]
  %27 = xla_tuple %s25, %s26
  %s28 = sld [smem:[#allocation0]]
  $region118: #{nerd_model_forward.1} parent=0
    _
  %s30 = ssub.s32 1, %s28
  %s31 = scalar_select 0, %s30, %s28
  $region1: #{nerd_model_forward.1} parent=0
    #allocation2 [shape = 'u8[8192]{0}', space=vmem, size = 0x2000, scoped, tag = 'output window, operand 0, single buffered']
    #allocation3 [shape = 's32[1]{0}', space=sflag, size = 0x4, scoped, tag = 'scoped memory for nerd_model_forward.1']
    #allocation4 [shape = 'u8[1024]{0}', space=vmem, size = 0x400, scoped, tag = 'output window, operand 1, single buffered']
    #allocation5 [shape = 's32[1]{0}', space=sflag, size = 0x4, scoped, tag = 'scoped memory for nerd_model_forward.1']
    %32 = vsyncpa [#allocation3], 0
    %33 = vsyncpa [#allocation5], 0
    // Predicated region
    $region2: #{nerd_model_forward.1} parent=1 // pred_check
      _
    $region3: #{nerd_model_forward.1} parent=1 // pred_check_branch
      %35 = sbr.rel (0) target = $region5
    $region4: #{nerd_model_forward.1} parent=1 // pred_region
      _
    $region5: #{nerd_model_forward.1} parent=1 // pred_fallthru
      _
    // Predicated region
    $region6: #{nerd_model_forward.1} parent=1 // pred_check
      _
    $region7: #{nerd_model_forward.1} parent=1 // pred_check_branch
      %37 = sbr.rel (0) target = $region9
    $region8: #{nerd_model_forward.1} parent=1 // pred_region
      _
    $region9: #{nerd_model_forward.1} parent=1 // pred_fallthru
      _
    // Predicated region
    $region10: #{nerd_model_forward.1} parent=1 // pred_check
      _
    $region11: #{nerd_model_forward.1} parent=1 // pred_check_branch
      %39 = sbr.rel (0) target = $region13
    $region12: #{nerd_model_forward.1} parent=1 // pred_region
      _
    $region13: #{nerd_model_forward.1} parent=1 // pred_fallthru
      _
    // Predicated region
    $region14: #{nerd_model_forward.1} parent=1 // pred_check
      _
    $region15: #{nerd_model_forward.1} parent=1 // pred_check_branch
      %41 = sbr.rel (0) target = $region17
    $region16: #{nerd_model_forward.1} parent=1 // pred_region
      _
    $region17: #{nerd_model_forward.1} parent=1 // pred_fallthru
      _
    // Predicated region
    $region18: #{nerd_model_forward.1} parent=1 // pred_check
      _
    $region19: #{nerd_model_forward.1} parent=1 // pred_check_branch
      %43 = sbr.rel (0) target = $region21
    $region20: #{nerd_model_forward.1} parent=1 // pred_region
      _
    $region21: #{nerd_model_forward.1} parent=1 // pred_fallthru
      _
    // Predicated region
    $region22: #{nerd_model_forward.1} parent=1 // pred_check
      _
    $region23: #{nerd_model_forward.1} parent=1 // pred_check_branch
      %45 = sbr.rel (0) target = $region25
    $region24: #{nerd_model_forward.1} parent=1 // pred_region
      _
    $region25: #{nerd_model_forward.1} parent=1 // pred_fallthru
      _
    // Predicated region
    $region26: #{nerd_model_forward.1} parent=1 // pred_check
      _
    $region27: #{nerd_model_forward.1} parent=1 // pred_check_branch
      %47 = sbr.rel (0) target = $region29
    $region28: #{nerd_model_forward.1} parent=1 // pred_region
      _
    $region29: #{nerd_model_forward.1} parent=1 // pred_fallthru
      _
    // Predicated region
    $region30: #{nerd_model_forward.1} parent=1 // pred_check
      _
    $region31: #{nerd_model_forward.1} parent=1 // pred_check_branch
      %49 = sbr.rel (0) target = $region33
    $region32: #{nerd_model_forward.1} parent=1 // pred_region
      _
    $region33: #{nerd_model_forward.1} parent=1 // pred_fallthru
      _
    // Predicated region
    $region34: #{nerd_model_forward.1} parent=1 // pred_check
      _
    $region35: #{nerd_model_forward.1} parent=1 // pred_check_branch
      %51 = sbr.rel (0) target = $region37
    $region36: #{nerd_model_forward.1} parent=1 // pred_region
      _
    $region37: #{nerd_model_forward.1} parent=1 // pred_fallthru
      _
    // Predicated region
    $region38: #{nerd_model_forward.1} parent=1 // pred_check
      _
    $region39: #{nerd_model_forward.1} parent=1 // pred_check_branch
      %53 = sbr.rel (0) target = $region41
    $region40: #{nerd_model_forward.1} parent=1 // pred_region
      _
    $region41: #{nerd_model_forward.1} parent=1 // pred_fallthru
      _
    // Predicated region
    $region42: #{nerd_model_forward.1} parent=1 // pred_check
      _
    $region43: #{nerd_model_forward.1} parent=1 // pred_check_branch
      %55 = sbr.rel (0) target = $region45
    $region44: #{nerd_model_forward.1} parent=1 // pred_region
      _
    $region45: #{nerd_model_forward.1} parent=1 // pred_fallthru
      _
    // Predicated region
    $region46: #{nerd_model_forward.1} parent=1 // pred_check
      _
    $region47: #{nerd_model_forward.1} parent=1 // pred_check_branch
      %57 = sbr.rel (0) target = $region49
    $region48: #{nerd_model_forward.1} parent=1 // pred_region
      _
    $region49: #{nerd_model_forward.1} parent=1 // pred_fallthru
      _
    // Predicated region
    $region50: #{nerd_model_forward.1} parent=1 // pred_check
      _
    $region51: #{nerd_model_forward.1} parent=1 // pred_check_branch
      %59 = sbr.rel (0) target = $region53
    $region52: #{nerd_model_forward.1} parent=1 // pred_region
      _
    $region53: #{nerd_model_forward.1} parent=1 // pred_fallthru
      _
    // Predicated region
    $region54: #{nerd_model_forward.1} parent=1 // pred_check
      _
    $region55: #{nerd_model_forward.1} parent=1 // pred_check_branch
      %61 = sbr.rel (0) target = $region57
    $region56: #{nerd_model_forward.1} parent=1 // pred_region
      _
    $region57: #{nerd_model_forward.1} parent=1 // pred_fallthru
      _
    // Predicated region
    $region58: #{nerd_model_forward.1} parent=1 // pred_check
      _
    $region59: #{nerd_model_forward.1} parent=1 // pred_check_branch
      %63 = sbr.rel (0) target = $region61
    $region60: #{nerd_model_forward.1} parent=1 // pred_region
      _
    $region61: #{nerd_model_forward.1} parent=1 // pred_fallthru
      _
    // Predicated region
    $region62: #{nerd_model_forward.1} parent=1 // pred_check
      _
    $region63: #{nerd_model_forward.1} parent=1 // pred_check_branch
      %65 = sbr.rel (0) target = $region65
    $region64: #{nerd_model_forward.1} parent=1 // pred_region
      _
    $region65: #{nerd_model_forward.1} parent=1 // pred_fallthru
      _
    // Predicated region
    $region66: #{nerd_model_forward.1} parent=1 // pred_check
      _
    $region67: #{nerd_model_forward.1} parent=1 // pred_check_branch
      %67 = sbr.rel (0) target = $region69
    $region68: #{nerd_model_forward.1} parent=1 // pred_region
      _
    $region69: #{nerd_model_forward.1} parent=1 // pred_fallthru
      _
    // Predicated region
    $region70: #{nerd_model_forward.1} parent=1 // pred_check
      _
    $region71: #{nerd_model_forward.1} parent=1 // pred_check_branch
      %69 = sbr.rel (0) target = $region73
    $region72: #{nerd_model_forward.1} parent=1 // pred_region
      _
    $region73: #{nerd_model_forward.1} parent=1 // pred_fallthru
      _
    // Predicated region
    $region74: #{nerd_model_forward.1} parent=1 // pred_check
      _
    $region75: #{nerd_model_forward.1} parent=1 // pred_check_branch
      %71 = sbr.rel (0) target = $region77
    $region76: #{nerd_model_forward.1} parent=1 // pred_region
      _
    $region77: #{nerd_model_forward.1} parent=1 // pred_fallthru
      _
    // Predicated region
    $region78: #{nerd_model_forward.1} parent=1 // pred_check
      _
    $region79: #{nerd_model_forward.1} parent=1 // pred_check_branch
      %73 = sbr.rel (0) target = $region81
    $region80: #{nerd_model_forward.1} parent=1 // pred_region
      _
    $region81: #{nerd_model_forward.1} parent=1 // pred_fallthru
      _
    // Predicated region
    $region82: #{nerd_model_forward.1} parent=1 // pred_check
      _
    $region83: #{nerd_model_forward.1} parent=1 // pred_check_branch
      %75 = sbr.rel (0) target = $region85
    $region84: #{nerd_model_forward.1} parent=1 // pred_region
      _
    $region85: #{nerd_model_forward.1} parent=1 // pred_fallthru
      _
    // Predicated region
    $region86: #{nerd_model_forward.1} parent=1 // pred_check
      _
    $region87: #{nerd_model_forward.1} parent=1 // pred_check_branch
      %77 = sbr.rel (0) target = $region89
    $region88: #{nerd_model_forward.1} parent=1 // pred_region
      _
    $region89: #{nerd_model_forward.1} parent=1 // pred_fallthru
      _
    // Predicated region
    $region90: #{nerd_model_forward.1} parent=1 // pred_check
      _
    $region91: #{nerd_model_forward.1} parent=1 // pred_check_branch
      %79 = sbr.rel (0) target = $region93
    $region92: #{nerd_model_forward.1} parent=1 // pred_region
      _
    $region93: #{nerd_model_forward.1} parent=1 // pred_fallthru
      _
    // Predicated region
    $region94: #{nerd_model_forward.1} parent=1 // pred_check
      _
    $region95: #{nerd_model_forward.1} parent=1 // pred_check_branch
      %81 = sbr.rel (0) target = $region97
    $region96: #{nerd_model_forward.1} parent=1 // pred_region
      _
    $region97: #{nerd_model_forward.1} parent=1 // pred_fallthru
      _
    // Predicated region
    $region98: #{nerd_model_forward.1} parent=1 // pred_check
      _
    $region99: #{nerd_model_forward.1} parent=1 // pred_check_branch
      %83 = sbr.rel (0) target = $region101
    $region100: #{nerd_model_forward.1} parent=1 // pred_region
      _
    $region101: #{nerd_model_forward.1} parent=1 // pred_fallthru
      _
    %v84 = vld [vmem:[%s0] sm:$0xff]
    %v85 = vld [vmem:[%s0 + $0x8] sm:$0xff]
    %v86 = vld [vmem:[%s4] sm:$0x1]
    %v87 = vld [vmem:[%s5] sm:$0x1]
    %vm88 = vcmask 261120
    %v89 = vsel %vm88, %v84, 0.0
    %90 = vadd.xlane.f32.xlu0 %v89
    %v91 = vpop.xlane.xlu0 %90
    %v92 = vsel %vm88, %v85, 0.0
    %93 = vadd.xlane.f32.xlu0 %v92
    %v94 = vpop.xlane.xlu0 %93
    %v95 = vrcp.pop 32.0
    %v96 = vmul.f32 %v91, %v95
    %v97 = vmul.f32 %v94, %v95
    %v98 = vsub.f32 %v84, %v96
    %v99 = vsub.f32 %v85, %v97
    %v100 = vmul.f32 %v98, %v98
    %v101 = vmul.f32 %v99, %v99
    %v102 = vsel %vm88, %v100, 0.0
    %103 = vadd.xlane.f32.xlu0 %v102
    %v104 = vpop.xlane.xlu0 %103
    %v105 = vsel %vm88, %v101, 0.0
    %106 = vadd.xlane.f32.xlu0 %v105
    %v107 = vpop.xlane.xlu0 %106
    %v108 = vmul.f32 %v104, %v95
    %v109 = vmul.f32 %v107, %v95
    %v110 = vadd.f32 %v108, 1e-12
    %v111 = vadd.f32 %v109, 1e-12
    %v112 = vrsqrt.pop %v110
    %v113 = vrsqrt.pop %v111
    %v114 = vmul.f32 %v98, %v112
    %v115 = vmul.f32 %v99, %v113
    %v117 = vlaneseq
    %v118 = vshrl.u32 %v117, 7
    %v119 = vsub.s32 0, %v118
    %v120 = vrot.slane %v86, %v119
    %v122 = vmul.f32 %v114, %v120
    %v123 = vmul.f32 %v115, %v120
    %v125 = vlaneseq
    %v126 = vshrl.u32 %v125, 7
    %v127 = vsub.s32 0, %v126
    %v128 = vrot.slane %v87, %v127
    %v130 = vadd.f32 %v122, %v128
    %v131 = vadd.f32 %v123, %v128
    %v132 = vld [vmem:[%s1] sm:$0xff]
    %v133 = vld [vmem:[%s1 + $0x8] sm:$0xff]
    %v134 = vld [vmem:[%s2] sm:$0x1]
    %136 = vset.pattern.permute.xlu0 0
    %137 = vperm.xlu0 %136, %v132
    %v138 = vpop.permute.xlu0 %137
    %141 = vset.pattern.permute.xlu0 0
    %142 = vperm.xlu0 %141, %v133
    %v143 = vpop.permute.xlu0 %142
    %v146 = vlaneseq
    %v147 = vshrl.u32 %v146, 7
    %v148 = vsub.s32 0, %v147
    %v149 = vrot.slane %v134, %v148
    %vm151 = vcmp.eq.f32.partialorder %v138, %v149
    %vm152 = vcmp.eq.f32.partialorder %v143, %v149
    %v153 = vld [vmem:[%s3] sm:$0x1]
    %vm154 = vcmp.gt.f32.partialorder %v153, 0.0
    %v155 = vsel %vm154, 1, 0
    %v156 = vlaneseq
    %v157 = vshrl.u32 %v156, 7
    %v158 = vsub.s32 0, %v157
    %v159 = vrot.slane %v155, %v158
    %vm160 = vcmp.eq.s32.totalorder %v159, 1
    %vm161 = vmand %vm151, %vm160
    %vm162 = vmand %vm152, %vm160
    %v163 = vsel %vm161, 0.0, -1e+09
    %v164 = vsel %vm162, 0.0, -1e+09
    %v165 = vld [vmem:[%s6] sm:$0xff]
    %v166 = vld [vmem:[%s6 + $0x8] sm:$0xff]
    %v167 = vld [vmem:[%s6 + $0x10] sm:$0xff]
    %v168 = vld [vmem:[%s6 + $0x18] sm:$0xff]
    %v169 = vld [vmem:[%s7] sm:$0x1]
    %v171 = vlaneseq
    %v172 = vshrl.u32 %v171, 7
    %v173 = vsub.s32 0, %v172
    %v174 = vrot.slane %v169, %v173
    %v177 = vsel %vm88, %v130, 0
    %v180 = vsel %vm88, %v131, 0
    %182 = vmatprep.subr.mxu0 0.0
    %183 = vmatpush1.msra.mxu0 %v165
    %184 = vmatprep.subr.mxu0 0.0
    %185 = vmatpush1.msra.mxu0 %v166
    %186 = vmatprep.subr.mxu0 0.0
    %187 = vmatpush1.msra.mxu0 %v167
    %188 = vmatprep.subr.mxu0 0.0
    %189 = vmatpush1.msra.mxu0 %v168
    %190 = vmatprep.subr.mxu0 0.0
    %191 = vmatpush1.msra.mxu0 0.0
    %192 = vmatprep.subr.mxu0 0.0
    %193 = vmatpush1.msra.mxu0 0.0
    %194 = vmatprep.subr.mxu0 0.0
    %195 = vmatpush1.msra.mxu0 0.0
    %196 = vmatprep.subr.mxu0 0.0
    %197 = vmatpush1.msra.mxu0 0.0
    %198 = vmatprep.subr.mxu0 0.0
    %199 = vmatpush1.msra.mxu0 0.0
    %200 = vmatprep.subr.mxu0 0.0
    %201 = vmatpush1.msra.mxu0 0.0
    %202 = vmatprep.subr.mxu0 0.0
    %203 = vmatpush1.msra.mxu0 0.0
    %204 = vmatprep.subr.mxu0 0.0
    %205 = vmatpush1.msra.mxu0 0.0
    %206 = vmatprep.subr.mxu0 0.0
    %207 = vmatpush1.msra.mxu0 0.0
    %208 = vmatprep.subr.mxu0 0.0
    %209 = vmatpush1.msra.mxu0 0.0
    %210 = vmatprep.subr.mxu0 0.0
    %211 = vmatpush1.msra.mxu0 0.0
    %212 = vmatprep.subr.mxu0 0.0
    %213 = vmatpush1.msra.mxu0 0.0
    %214 = vmatprep.subr.mxu0 0.0
    %215 = vmatpush1.msra.mxu0 0.0
    %216 = vmatprep.subr.mxu0 0.0
    %217 = vmatpush1.msra.mxu0 0.0
    %218 = vmatprep.subr.mxu0 0.0
    %219 = vmatpush1.msra.mxu0 0.0
    %220 = vmatprep.subr.mxu0 0.0
    %221 = vmatpush1.msra.mxu0 0.0
    %222 = vmatprep.subr.mxu0 0.0
    %223 = vmatpush1.msra.mxu0 0.0
    %224 = vmatprep.subr.mxu0 0.0
    %225 = vmatpush1.msra.mxu0 0.0
    %226 = vmatprep.subr.mxu0 0.0
    %227 = vmatpush1.msra.mxu0 0.0
    %228 = vmatprep.subr.mxu0 0.0
    %229 = vmatpush1.msra.mxu0 0.0
    %230 = vmatprep.subr.mxu0 0.0
    %231 = vmatpush1.msra.mxu0 0.0
    %232 = vmatprep.subr.mxu0 0.0
    %233 = vmatpush1.msra.mxu0 0.0
    %234 = vmatprep.subr.mxu0 0.0
    %235 = vmatpush1.msra.mxu0 0.0
    %236 = vmatprep.subr.mxu0 0.0
    %237 = vmatpush1.msra.mxu0 0.0
    %238 = vmatprep.subr.mxu0 0.0
    %239 = vmatpush1.msra.mxu0 0.0
    %240 = vmatprep.subr.mxu0 0.0
    %241 = vmatpush1.msra.mxu0 0.0
    %242 = vmatprep.subr.mxu0 0.0
    %243 = vmatpush1.msra.mxu0 0.0
    %244 = vmatprep.subr.mxu0 0.0
    %245 = vmatpush1.msra.mxu0 0.0
    %246 = vmatprep.mubr.f32.mxu0 0.0
    %247 = vmatmul.mubr.f32.gmra.mrb[0].mxu0 %v177
    %v248 = vpop.f32.mrb[0].mxu0
    %v249 = vadd.f32 %v174, %v248
    %v250 = vpop.f32.mrb[0].mxu0
    %251 = vmatprep.mubr.f32.mxu0 0.0
    %252 = vmatmul.mubr.f32.gmra.mrb[0].mxu0 %v180
    %v253 = vpop.f32.mrb[0].mxu0
    %v254 = vadd.f32 %v174, %v253
    %v255 = vpop.f32.mrb[0].mxu0
    %256 = vdwg.mxu0
    %v257 = vmul.f32 %v249, 0.35355338
    %v258 = vmul.f32 %v254, 0.35355338
    %v259 = vld [vmem:[%s8] sm:$0xff]
    %v260 = vld [vmem:[%s8 + $0x8] sm:$0xff]
    %v261 = vld [vmem:[%s8 + $0x10] sm:$0xff]
    %v262 = vld [vmem:[%s8 + $0x18] sm:$0xff]
    %v263 = vld [vmem:[%s9] sm:$0x1]
    %v265 = vlaneseq
    %v266 = vshrl.u32 %v265, 7
    %v267 = vsub.s32 0, %v266
    %v268 = vrot.slane %v263, %v267
    %270 = vmatprep.subr.mxu0 0.0
    %271 = vmatpush1.msra.mxu0 %v259
    %272 = vmatprep.subr.mxu0 0.0
    %273 = vmatpush1.msra.mxu0 %v260
    %274 = vmatprep.subr.mxu0 0.0
    %275 = vmatpush1.msra.mxu0 %v261
    %276 = vmatprep.subr.mxu0 0.0
    %277 = vmatpush1.msra.mxu0 %v262
    %278 = vmatprep.subr.mxu0 0.0
    %279 = vmatpush1.msra.mxu0 0.0
    %280 = vmatprep.subr.mxu0 0.0
    %281 = vmatpush1.msra.mxu0 0.0
    %282 = vmatprep.subr.mxu0 0.0
    %283 = vmatpush1.msra.mxu0 0.0
    %284 = vmatprep.subr.mxu0 0.0
    %285 = vmatpush1.msra.mxu0 0.0
    %286 = vmatprep.subr.mxu0 0.0
    %287 = vmatpush1.msra.mxu0 0.0
    %288 = vmatprep.subr.mxu0 0.0
    %289 = vmatpush1.msra.mxu0 0.0
    %290 = vmatprep.subr.mxu0 0.0
    %291 = vmatpush1.msra.mxu0 0.0
    %292 = vmatprep.subr.mxu0 0.0
    %293 = vmatpush1.msra.mxu0 0.0
    %294 = vmatprep.subr.mxu0 0.0
    %295 = vmatpush1.msra.mxu0 0.0
    %296 = vmatprep.subr.mxu0 0.0
    %297 = vmatpush1.msra.mxu0 0.0
    %298 = vmatprep.subr.mxu0 0.0
    %299 = vmatpush1.msra.mxu0 0.0
    %300 = vmatprep.subr.mxu0 0.0
    %301 = vmatpush1.msra.mxu0 0.0
    %302 = vmatprep.subr.mxu0 0.0
    %303 = vmatpush1.msra.mxu0 0.0
    %304 = vmatprep.subr.mxu0 0.0
    %305 = vmatpush1.msra.mxu0 0.0
    %306 = vmatprep.subr.mxu0 0.0
    %307 = vmatpush1.msra.mxu0 0.0
    %308 = vmatprep.subr.mxu0 0.0
    %309 = vmatpush1.msra.mxu0 0.0
    %310 = vmatprep.subr.mxu0 0.0
    %311 = vmatpush1.msra.mxu0 0.0
    %312 = vmatprep.subr.mxu0 0.0
    %313 = vmatpush1.msra.mxu0 0.0
    %314 = vmatprep.subr.mxu0 0.0
    %315 = vmatpush1.msra.mxu0 0.0
    %316 = vmatprep.subr.mxu0 0.0
    %317 = vmatpush1.msra.mxu0 0.0
    %318 = vmatprep.subr.mxu0 0.0
    %319 = vmatpush1.msra.mxu0 0.0
    %320 = vmatprep.subr.mxu0 0.0
    %321 = vmatpush1.msra.mxu0 0.0
    %322 = vmatprep.subr.mxu0 0.0
    %323 = vmatpush1.msra.mxu0 0.0
    %324 = vmatprep.subr.mxu0 0.0
    %325 = vmatpush1.msra.mxu0 0.0
    %326 = vmatprep.subr.mxu0 0.0
    %327 = vmatpush1.msra.mxu0 0.0
    %328 = vmatprep.subr.mxu0 0.0
    %329 = vmatpush1.msra.mxu0 0.0
    %330 = vmatprep.subr.mxu0 0.0
    %331 = vmatpush1.msra.mxu0 0.0
    %332 = vmatprep.subr.mxu0 0.0
    %333 = vmatpush1.msra.mxu0 0.0
    %334 = vmatprep.mubr.f32.mxu0 0.0
    %335 = vmatmul.mubr.f32.gmra.mrb[0].mxu0 %v177
    %v336 = vpop.f32.mrb[0].mxu0
    %v337 = vadd.f32 %v268, %v336
    %v338 = vpop.f32.mrb[0].mxu0
    %339 = vmatprep.mubr.f32.mxu0 0.0
    %340 = vmatmul.mubr.f32.gmra.mrb[0].mxu0 %v180
    %v341 = vpop.f32.mrb[0].mxu0
    %v342 = vadd.f32 %v268, %v341
    %v343 = vpop.f32.mrb[0].mxu0
    %344 = vdwg.mxu0
    %v345 = vld [vmem:[%s10] sm:$0xff]
    %v346 = vld [vmem:[%s10 + $0x8] sm:$0xff]
    %v347 = vld [vmem:[%s10 + $0x10] sm:$0xff]
    %v348 = vld [vmem:[%s10 + $0x18] sm:$0xff]
    %v349 = vld [vmem:[%s11] sm:$0x1]
    %v351 = vlaneseq
    %v352 = vshrl.u32 %v351, 7
    %v353 = vsub.s32 0, %v352
    %v354 = vrot.slane %v349, %v353
    %356 = vmatprep.subr.mxu0 0.0
    %357 = vmatpush1.msra.mxu0 %v345
    %358 = vmatprep.subr.mxu0 0.0
    %359 = vmatpush1.msra.mxu0 %v346
    %360 = vmatprep.subr.mxu0 0.0
    %361 = vmatpush1.msra.mxu0 %v347
    %362 = vmatprep.subr.mxu0 0.0
    %363 = vmatpush1.msra.mxu0 %v348
    %364 = vmatprep.subr.mxu0 0.0
    %365 = vmatpush1.msra.mxu0 0.0
    %366 = vmatprep.subr.mxu0 0.0
    %367 = vmatpush1.msra.mxu0 0.0
    %368 = vmatprep.subr.mxu0 0.0
    %369 = vmatpush1.msra.mxu0 0.0
    %370 = vmatprep.subr.mxu0 0.0
    %371 = vmatpush1.msra.mxu0 0.0
    %372 = vmatprep.subr.mxu0 0.0
    %373 = vmatpush1.msra.mxu0 0.0
    %374 = vmatprep.subr.mxu0 0.0
    %375 = vmatpush1.msra.mxu0 0.0
    %376 = vmatprep.subr.mxu0 0.0
    %377 = vmatpush1.msra.mxu0 0.0
    %378 = vmatprep.subr.mxu0 0.0
    %379 = vmatpush1.msra.mxu0 0.0
    %380 = vmatprep.subr.mxu0 0.0
    %381 = vmatpush1.msra.mxu0 0.0
    %382 = vmatprep.subr.mxu0 0.0
    %383 = vmatpush1.msra.mxu0 0.0
    %384 = vmatprep.subr.mxu0 0.0
    %385 = vmatpush1.msra.mxu0 0.0
    %386 = vmatprep.subr.mxu0 0.0
    %387 = vmatpush1.msra.mxu0 0.0
    %388 = vmatprep.subr.mxu0 0.0
    %389 = vmatpush1.msra.mxu0 0.0
    %390 = vmatprep.subr.mxu0 0.0
    %391 = vmatpush1.msra.mxu0 0.0
    %392 = vmatprep.subr.mxu0 0.0
    %393 = vmatpush1.msra.mxu0 0.0
    %394 = vmatprep.subr.mxu0 0.0
    %395 = vmatpush1.msra.mxu0 0.0
    %396 = vmatprep.subr.mxu0 0.0
    %397 = vmatpush1.msra.mxu0 0.0
    %398 = vmatprep.subr.mxu0 0.0
    %399 = vmatpush1.msra.mxu0 0.0
    %400 = vmatprep.subr.mxu0 0.0
    %401 = vmatpush1.msra.mxu0 0.0
    %402 = vmatprep.subr.mxu0 0.0
    %403 = vmatpush1.msra.mxu0 0.0
    %404 = vmatprep.subr.mxu0 0.0
    %405 = vmatpush1.msra.mxu0 0.0
    %406 = vmatprep.subr.mxu0 0.0
    %407 = vmatpush1.msra.mxu0 0.0
    %408 = vmatprep.subr.mxu0 0.0
    %409 = vmatpush1.msra.mxu0 0.0
    %410 = vmatprep.subr.mxu0 0.0
    %411 = vmatpush1.msra.mxu0 0.0
    %412 = vmatprep.subr.mxu0 0.0
    %413 = vmatpush1.msra.mxu0 0.0
    %414 = vmatprep.subr.mxu0 0.0
    %415 = vmatpush1.msra.mxu0 0.0
    %416 = vmatprep.subr.mxu0 0.0
    %417 = vmatpush1.msra.mxu0 0.0
    %418 = vmatprep.subr.mxu0 0.0
    %419 = vmatpush1.msra.mxu0 0.0
    %420 = vmatprep.mubr.f32.mxu0 0.0
    %421 = vmatmul.mubr.f32.gmra.mrb[0].mxu0 %v177
    %v422 = vpop.f32.mrb[0].mxu0
    %v423 = vadd.f32 %v354, %v422
    %v424 = vpop.f32.mrb[0].mxu0
    %425 = vmatprep.mubr.f32.mxu0 0.0
    %426 = vmatmul.mubr.f32.gmra.mrb[0].mxu0 %v180
    %v427 = vpop.f32.mrb[0].mxu0
    %v428 = vadd.f32 %v354, %v427
    %v429 = vpop.f32.mrb[0].mxu0
    %430 = vdwg.mxu0
    %vm431 = vcmask 64512
    %v433 = vsel %vm431, %v257, 0
    %v436 = vsel %vm431, %v258, 0
    %v439 = vsel %vm431, %v337, 0
    %v442 = vsel %vm431, %v342, 0
    %444 = vmatprep.subr.mxu0 0.0
    %445 = vmatpush1.xpose.msra.mxu0 %v439
    %446 = vmatprep.subr.mxu0 0.0
    %447 = vmatpush1.xpose.msra.mxu0 %v442
    %448 = vmatprep.subr.mxu0 0.0
    %449 = vmatpush1.xpose.msra.mxu0 0.0
    %450 = vmatprep.subr.mxu0 0.0
    %451 = vmatpush1.xpose.msra.mxu0 0.0
    %452 = vmatprep.subr.mxu0 0.0
    %453 = vmatpush1.xpose.msra.mxu0 0.0
    %454 = vmatprep.subr.mxu0 0.0
    %455 = vmatpush1.xpose.msra.mxu0 0.0
    %456 = vmatprep.subr.mxu0 0.0
    %457 = vmatpush1.xpose.msra.mxu0 0.0
    %458 = vmatprep.subr.mxu0 0.0
    %459 = vmatpush1.xpose.msra.mxu0 0.0
    %460 = vmatprep.subr.mxu0 0.0
    %461 = vmatpush1.xpose.msra.mxu0 0.0
    %462 = vmatprep.subr.mxu0 0.0
    %463 = vmatpush1.xpose.msra.mxu0 0.0
    %464 = vmatprep.subr.mxu0 0.0
    %465 = vmatpush1.xpose.msra.mxu0 0.0
    %466 = vmatprep.subr.mxu0 0.0
    %467 = vmatpush1.xpose.msra.mxu0 0.0
    %468 = vmatprep.subr.mxu0 0.0
    %469 = vmatpush1.xpose.msra.mxu0 0.0
    %470 = vmatprep.subr.mxu0 0.0
    %471 = vmatpush1.xpose.msra.mxu0 0.0
    %472 = vmatprep.subr.mxu0 0.0
    %473 = vmatpush1.xpose.msra.mxu0 0.0
    %474 = vmatprep.subr.mxu0 0.0
    %475 = vmatpush1.xpose.msra.mxu0 0.0
    %476 = vmatprep.subr.mxu0 0.0
    %477 = vmatpush1.xpose.msra.mxu0 0.0
    %478 = vmatprep.subr.mxu0 0.0
    %479 = vmatpush1.xpose.msra.mxu0 0.0
    %480 = vmatprep.subr.mxu0 0.0
    %481 = vmatpush1.xpose.msra.mxu0 0.0
    %482 = vmatprep.subr.mxu0 0.0
    %483 = vmatpush1.xpose.msra.mxu0 0.0
    %484 = vmatprep.subr.mxu0 0.0
    %485 = vmatpush1.xpose.msra.mxu0 0.0
    %486 = vmatprep.subr.mxu0 0.0
    %487 = vmatpush1.xpose.msra.mxu0 0.0
    %488 = vmatprep.subr.mxu0 0.0
    %489 = vmatpush1.xpose.msra.mxu0 0.0
    %490 = vmatprep.subr.mxu0 0.0
    %491 = vmatpush1.xpose.msra.mxu0 0.0
    %492 = vmatprep.subr.mxu0 0.0
    %493 = vmatpush1.xpose.msra.mxu0 0.0
    %494 = vmatprep.subr.mxu0 0.0
    %495 = vmatpush1.xpose.msra.mxu0 0.0
    %496 = vmatprep.subr.mxu0 0.0
    %497 = vmatpush1.xpose.msra.mxu0 0.0
    %498 = vmatprep.subr.mxu0 0.0
    %499 = vmatpush1.xpose.msra.mxu0 0.0
    %500 = vmatprep.subr.mxu0 0.0
    %501 = vmatpush1.xpose.msra.mxu0 0.0
    %502 = vmatprep.subr.mxu0 0.0
    %503 = vmatpush1.xpose.msra.mxu0 0.0
    %504 = vmatprep.subr.mxu0 0.0
    %505 = vmatpush1.xpose.msra.mxu0 0.0
    %506 = vmatprep.subr.mxu0 0.0
    %507 = vmatpush1.xpose.msra.mxu0 0.0
    %508 = vmatprep.mubr.f32.mxu0 0.0
    %509 = vmatmul.mubr.f32.gmra.mrb[0].mxu0 %v433
    %v510 = vpop.f32.mrb[0].mxu0
    %v511 = vadd.f32 %v163, %v510
    %v512 = vpop.f32.mrb[0].mxu0
    %513 = vmatprep.mubr.f32.mxu0 0.0
    %514 = vmatmul.mubr.f32.gmra.mrb[0].mxu0 %v436
    %v515 = vpop.f32.mrb[0].mxu0
    %v516 = vadd.f32 %v164, %v515
    %v517 = vpop.f32.mrb[0].mxu0
    %518 = vdwg.mxu0
    %vm519 = vcmask 130048
    %v520 = vsel %vm519, %v511, -inf
    %521 = vmax.xlane.f32.xlu0 %v520
    %v522 = vpop.xlane.xlu0 %521
    %v523 = vsel %vm519, %v516, -inf
    %524 = vmax.xlane.f32.xlu0 %v523
    %v525 = vpop.xlane.xlu0 %524
    %v526 = vsub.f32 %v511, %v522
    %v527 = vsub.f32 %v516, %v525
    %v528 = vmul.f32 %v526, 1.442695
    %v529 = vpow.pop %v528
    %v530 = vmul.f32 %v527, 1.442695
    %v531 = vpow.pop %v530
    %v532 = vsel %vm519, %v529, 0.0
    %533 = vadd.xlane.f32.xlu0 %v532
    %v534 = vpop.xlane.xlu0 %533
    %v535 = vsel %vm519, %v531, 0.0
    %536 = vadd.xlane.f32.xlu0 %v535
    %v537 = vpop.xlane.xlu0 %536
    %v538 = vrcp.pop %v534
    %v539 = vrcp.pop %v537
    %v540 = vmul.f32 %v529, %v538
    %v541 = vmul.f32 %v531, %v539
    %v543 = vsel %vm519, %v540, 0
    %v546 = vsel %vm519, %v541, 0
    %548 = vmatprep.subr.mxu0 0.0
    %549 = vmatpush1.msra.mxu0 %v423
    %550 = vmatprep.subr.mxu0 0.0
    %551 = vmatpush1.msra.mxu0 %v428
    %552 = vmatprep.subr.mxu0 0.0
    %553 = vmatpush1.msra.mxu0 0.0
    %554 = vmatprep.subr.mxu0 0.0
    %555 = vmatpush1.msra.mxu0 0.0
    %556 = vmatprep.subr.mxu0 0.0
    %557 = vmatpush1.msra.mxu0 0.0
    %558 = vmatprep.subr.mxu0 0.0
    %559 = vmatpush1.msra.mxu0 0.0
    %560 = vmatprep.subr.mxu0 0.0
    %561 = vmatpush1.msra.mxu0 0.0
    %562 = vmatprep.subr.mxu0 0.0
    %563 = vmatpush1.msra.mxu0 0.0
    %564 = vmatprep.subr.mxu0 0.0
    %565 = vmatpush1.msra.mxu0 0.0
    %566 = vmatprep.subr.mxu0 0.0
    %567 = vmatpush1.msra.mxu0 0.0
    %568 = vmatprep.subr.mxu0 0.0
    %569 = vmatpush1.msra.mxu0 0.0
    %570 = vmatprep.subr.mxu0 0.0
    %571 = vmatpush1.msra.mxu0 0.0
    %572 = vmatprep.subr.mxu0 0.0
    %573 = vmatpush1.msra.mxu0 0.0
    %574 = vmatprep.subr.mxu0 0.0
    %575 = vmatpush1.msra.mxu0 0.0
    %576 = vmatprep.subr.mxu0 0.0
    %577 = vmatpush1.msra.mxu0 0.0
    %578 = vmatprep.subr.mxu0 0.0
    %579 = vmatpush1.msra.mxu0 0.0
    %580 = vmatprep.subr.mxu0 0.0
    %581 = vmatpush1.msra.mxu0 0.0
    %582 = vmatprep.subr.mxu0 0.0
    %583 = vmatpush1.msra.mxu0 0.0
    %584 = vmatprep.subr.mxu0 0.0
    %585 = vmatpush1.msra.mxu0 0.0
    %586 = vmatprep.subr.mxu0 0.0
    %587 = vmatpush1.msra.mxu0 0.0
    %588 = vmatprep.subr.mxu0 0.0
    %589 = vmatpush1.msra.mxu0 0.0
    %590 = vmatprep.subr.mxu0 0.0
    %591 = vmatpush1.msra.mxu0 0.0
    %592 = vmatprep.subr.mxu0 0.0
    %593 = vmatpush1.msra.mxu0 0.0
    %594 = vmatprep.subr.mxu0 0.0
    %595 = vmatpush1.msra.mxu0 0.0
    %596 = vmatprep.subr.mxu0 0.0
    %597 = vmatpush1.msra.mxu0 0.0
    %598 = vmatprep.subr.mxu0 0.0
    %599 = vmatpush1.msra.mxu0 0.0
    %600 = vmatprep.subr.mxu0 0.0
    %601 = vmatpush1.msra.mxu0 0.0
    %602 = vmatprep.subr.mxu0 0.0
    %603 = vmatpush1.msra.mxu0 0.0
    %604 = vmatprep.subr.mxu0 0.0
    %605 = vmatpush1.msra.mxu0 0.0
    %606 = vmatprep.subr.mxu0 0.0
    %607 = vmatpush1.msra.mxu0 0.0
    %608 = vmatprep.subr.mxu0 0.0
    %609 = vmatpush1.msra.mxu0 0.0
    %610 = vmatprep.subr.mxu0 0.0
    %611 = vmatpush1.msra.mxu0 0.0
    %612 = vmatprep.mubr.f32.mxu0 0.0
    %613 = vmatmul.mubr.f32.gmra.mrb[0].mxu0 %v543
    %v614 = vpop.f32.mrb[0].mxu0
    %v615 = vadd.f32 0.0, %v614
    %v616 = vpop.f32.mrb[0].mxu0
    %617 = vmatprep.mubr.f32.mxu0 0.0
    %618 = vmatmul.mubr.f32.gmra.mrb[0].mxu0 %v546
    %v619 = vpop.f32.mrb[0].mxu0
    %v620 = vadd.f32 0.0, %v619
    %v621 = vpop.f32.mrb[0].mxu0
    %622 = vdwg.mxu0
    %v623 = vld [vmem:[%s12] sm:$0xff]
    %s624 = scalar_lea.vmem %s6, 32
    %v625 = vld [vmem:[%s624] sm:$0xff]
    %v626 = vld [vmem:[%s624 + $0x8] sm:$0xff]
    %v627 = vld [vmem:[%s624 + $0x10] sm:$0xff]
    %v628 = vld [vmem:[%s624 + $0x18] sm:$0xff]
    %s629 = scalar_lea.vmem %s7, 1
    %v630 = vld [vmem:[%s629] sm:$0x1]
    %v632 = vlaneseq
    %v633 = vshrl.u32 %v632, 7
    %v634 = vsub.s32 0, %v633
    %v635 = vrot.slane %v630, %v634
    %637 = vmatprep.subr.mxu0 0.0
    %638 = vmatpush1.msra.mxu0 %v625
    %639 = vmatprep.subr.mxu0 0.0
    %640 = vmatpush1.msra.mxu0 %v626
    %641 = vmatprep.subr.mxu0 0.0
    %642 = vmatpush1.msra.mxu0 %v627
    %643 = vmatprep.subr.mxu0 0.0
    %644 = vmatpush1.msra.mxu0 %v628
    %645 = vmatprep.subr.mxu0 0.0
    %646 = vmatpush1.msra.mxu0 0.0
    %647 = vmatprep.subr.mxu0 0.0
    %648 = vmatpush1.msra.mxu0 0.0
    %649 = vmatprep.subr.mxu0 0.0
    %650 = vmatpush1.msra.mxu0 0.0
    %651 = vmatprep.subr.mxu0 0.0
    %652 = vmatpush1.msra.mxu0 0.0
    %653 = vmatprep.subr.mxu0 0.0
    %654 = vmatpush1.msra.mxu0 0.0
    %655 = vmatprep.subr.mxu0 0.0
    %656 = vmatpush1.msra.mxu0 0.0
    %657 = vmatprep.subr.mxu0 0.0
    %658 = vmatpush1.msra.mxu0 0.0
    %659 = vmatprep.subr.mxu0 0.0
    %660 = vmatpush1.msra.mxu0 0.0
    %661 = vmatprep.subr.mxu0 0.0
    %662 = vmatpush1.msra.mxu0 0.0
    %663 = vmatprep.subr.mxu0 0.0
    %664 = vmatpush1.msra.mxu0 0.0
    %665 = vmatprep.subr.mxu0 0.0
    %666 = vmatpush1.msra.mxu0 0.0
    %667 = vmatprep.subr.mxu0 0.0
    %668 = vmatpush1.msra.mxu0 0.0
    %669 = vmatprep.subr.mxu0 0.0
    %670 = vmatpush1.msra.mxu0 0.0
    %671 = vmatprep.subr.mxu0 0.0
    %672 = vmatpush1.msra.mxu0 0.0
    %673 = vmatprep.subr.mxu0 0.0
    %674 = vmatpush1.msra.mxu0 0.0
    %675 = vmatprep.subr.mxu0 0.0
    %676 = vmatpush1.msra.mxu0 0.0
    %677 = vmatprep.subr.mxu0 0.0
    %678 = vmatpush1.msra.mxu0 0.0
    %679 = vmatprep.subr.mxu0 0.0
    %680 = vmatpush1.msra.mxu0 0.0
    %681 = vmatprep.subr.mxu0 0.0
    %682 = vmatpush1.msra.mxu0 0.0
    %683 = vmatprep.subr.mxu0 0.0
    %684 = vmatpush1.msra.mxu0 0.0
    %685 = vmatprep.subr.mxu0 0.0
    %686 = vmatpush1.msra.mxu0 0.0
    %687 = vmatprep.subr.mxu0 0.0
    %688 = vmatpush1.msra.mxu0 0.0
    %689 = vmatprep.subr.mxu0 0.0
    %690 = vmatpush1.msra.mxu0 0.0
    %691 = vmatprep.subr.mxu0 0.0
    %692 = vmatpush1.msra.mxu0 0.0
    %693 = vmatprep.subr.mxu0 0.0
    %694 = vmatpush1.msra.mxu0 0.0
    %695 = vmatprep.subr.mxu0 0.0
    %696 = vmatpush1.msra.mxu0 0.0
    %697 = vmatprep.subr.mxu0 0.0
    %698 = vmatpush1.msra.mxu0 0.0
    %699 = vmatprep.subr.mxu0 0.0
    %700 = vmatpush1.msra.mxu0 0.0
    %701 = vmatprep.mubr.f32.mxu0 0.0
    %702 = vmatmul.mubr.f32.gmra.mrb[0].mxu0 %v177
    %v703 = vpop.f32.mrb[0].mxu0
    %v704 = vadd.f32 %v635, %v703
    %v705 = vpop.f32.mrb[0].mxu0
    %706 = vmatprep.mubr.f32.mxu0 0.0
    %707 = vmatmul.mubr.f32.gmra.mrb[0].mxu0 %v180
    %v708 = vpop.f32.mrb[0].mxu0
    %v709 = vadd.f32 %v635, %v708
    %v710 = vpop.f32.mrb[0].mxu0
    %711 = vdwg.mxu0
    %v712 = vmul.f32 %v704, 0.35355338
    %v713 = vmul.f32 %v709, 0.35355338
    %s714 = scalar_lea.vmem %s8, 32
    %v715 = vld [vmem:[%s714] sm:$0xff]
    %v716 = vld [vmem:[%s714 + $0x8] sm:$0xff]
    %v717 = vld [vmem:[%s714 + $0x10] sm:$0xff]
    %v718 = vld [vmem:[%s714 + $0x18] sm:$0xff]
    %s719 = scalar_lea.vmem %s9, 1
    %v720 = vld [vmem:[%s719] sm:$0x1]
    %v722 = vlaneseq
    %v723 = vshrl.u32 %v722, 7
    %v724 = vsub.s32 0, %v723
    %v725 = vrot.slane %v720, %v724
    %727 = vmatprep.subr.mxu0 0.0
    %728 = vmatpush1.msra.mxu0 %v715
    %729 = vmatprep.subr.mxu0 0.0
    %730 = vmatpush1.msra.mxu0 %v716
    %731 = vmatprep.subr.mxu0 0.0
    %732 = vmatpush1.msra.mxu0 %v717
    %733 = vmatprep.subr.mxu0 0.0
    %734 = vmatpush1.msra.mxu0 %v718
    %735 = vmatprep.subr.mxu0 0.0
    %736 = vmatpush1.msra.mxu0 0.0
    %737 = vmatprep.subr.mxu0 0.0
    %738 = vmatpush1.msra.mxu0 0.0
    %739 = vmatprep.subr.mxu0 0.0
    %740 = vmatpush1.msra.mxu0 0.0
    %741 = vmatprep.subr.mxu0 0.0
    %742 = vmatpush1.msra.mxu0 0.0
    %743 = vmatprep.subr.mxu0 0.0
    %744 = vmatpush1.msra.mxu0 0.0
    %745 = vmatprep.subr.mxu0 0.0
    %746 = vmatpush1.msra.mxu0 0.0
    %747 = vmatprep.subr.mxu0 0.0
    %748 = vmatpush1.msra.mxu0 0.0
    %749 = vmatprep.subr.mxu0 0.0
    %750 = vmatpush1.msra.mxu0 0.0
    %751 = vmatprep.subr.mxu0 0.0
    %752 = vmatpush1.msra.mxu0 0.0
    %753 = vmatprep.subr.mxu0 0.0
    %754 = vmatpush1.msra.mxu0 0.0
    %755 = vmatprep.subr.mxu0 0.0
    %756 = vmatpush1.msra.mxu0 0.0
    %757 = vmatprep.subr.mxu0 0.0
    %758 = vmatpush1.msra.mxu0 0.0
    %759 = vmatprep.subr.mxu0 0.0
    %760 = vmatpush1.msra.mxu0 0.0
    %761 = vmatprep.subr.mxu0 0.0
    %762 = vmatpush1.msra.mxu0 0.0
    %763 = vmatprep.subr.mxu0 0.0
    %764 = vmatpush1.msra.mxu0 0.0
    %765 = vmatprep.subr.mxu0 0.0
    %766 = vmatpush1.msra.mxu0 0.0
    %767 = vmatprep.subr.mxu0 0.0
    %768 = vmatpush1.msra.mxu0 0.0
    %769 = vmatprep.subr.mxu0 0.0
    %770 = vmatpush1.msra.mxu0 0.0
    %771 = vmatprep.subr.mxu0 0.0
    %772 = vmatpush1.msra.mxu0 0.0
    %773 = vmatprep.subr.mxu0 0.0
    %774 = vmatpush1.msra.mxu0 0.0
    %775 = vmatprep.subr.mxu0 0.0
    %776 = vmatpush1.msra.mxu0 0.0
    %777 = vmatprep.subr.mxu0 0.0
    %778 = vmatpush1.msra.mxu0 0.0
    %779 = vmatprep.subr.mxu0 0.0
    %780 = vmatpush1.msra.mxu0 0.0
    %781 = vmatprep.subr.mxu0 0.0
    %782 = vmatpush1.msra.mxu0 0.0
    %783 = vmatprep.subr.mxu0 0.0
    %784 = vmatpush1.msra.mxu0 0.0
    %785 = vmatprep.subr.mxu0 0.0
    %786 = vmatpush1.msra.mxu0 0.0
    %787 = vmatprep.subr.mxu0 0.0
    %788 = vmatpush1.msra.mxu0 0.0
    %789 = vmatprep.subr.mxu0 0.0
    %790 = vmatpush1.msra.mxu0 0.0
    %791 = vmatprep.mubr.f32.mxu0 0.0
    %792 = vmatmul.mubr.f32.gmra.mrb[0].mxu0 %v177
    %v793 = vpop.f32.mrb[0].mxu0
    %v794 = vadd.f32 %v725, %v793
    %v795 = vpop.f32.mrb[0].mxu0
    %796 = vmatprep.mubr.f32.mxu0 0.0
    %797 = vmatmul.mubr.f32.gmra.mrb[0].mxu0 %v180
    %v798 = vpop.f32.mrb[0].mxu0
    %v799 = vadd.f32 %v725, %v798
    %v800 = vpop.f32.mrb[0].mxu0
    %801 = vdwg.mxu0
    %s802 = scalar_lea.vmem %s10, 32
    %v803 = vld [vmem:[%s802] sm:$0xff]
    %v804 = vld [vmem:[%s802 + $0x8] sm:$0xff]
    %v805 = vld [vmem:[%s802 + $0x10] sm:$0xff]
    %v806 = vld [vmem:[%s802 + $0x18] sm:$0xff]
    %s807 = scalar_lea.vmem %s11, 1
    %v808 = vld [vmem:[%s807] sm:$0x1]
    %v810 = vlaneseq
    %v811 = vshrl.u32 %v810, 7
    %v812 = vsub.s32 0, %v811
    %v813 = vrot.slane %v808, %v812
    %815 = vmatprep.subr.mxu0 0.0
    %816 = vmatpush1.msra.mxu0 %v803
    %817 = vmatprep.subr.mxu0 0.0
    %818 = vmatpush1.msra.mxu0 %v804
    %819 = vmatprep.subr.mxu0 0.0
    %820 = vmatpush1.msra.mxu0 %v805
    %821 = vmatprep.subr.mxu0 0.0
    %822 = vmatpush1.msra.mxu0 %v806
    %823 = vmatprep.subr.mxu0 0.0
    %824 = vmatpush1.msra.mxu0 0.0
    %825 = vmatprep.subr.mxu0 0.0
    %826 = vmatpush1.msra.mxu0 0.0
    %827 = vmatprep.subr.mxu0 0.0
    %828 = vmatpush1.msra.mxu0 0.0
    %829 = vmatprep.subr.mxu0 0.0
    %830 = vmatpush1.msra.mxu0 0.0
    %831 = vmatprep.subr.mxu0 0.0
    %832 = vmatpush1.msra.mxu0 0.0
    %833 = vmatprep.subr.mxu0 0.0
    %834 = vmatpush1.msra.mxu0 0.0
    %835 = vmatprep.subr.mxu0 0.0
    %836 = vmatpush1.msra.mxu0 0.0
    %837 = vmatprep.subr.mxu0 0.0
    %838 = vmatpush1.msra.mxu0 0.0
    %839 = vmatprep.subr.mxu0 0.0
    %840 = vmatpush1.msra.mxu0 0.0
    %841 = vmatprep.subr.mxu0 0.0
    %842 = vmatpush1.msra.mxu0 0.0
    %843 = vmatprep.subr.mxu0 0.0
    %844 = vmatpush1.msra.mxu0 0.0
    %845 = vmatprep.subr.mxu0 0.0
    %846 = vmatpush1.msra.mxu0 0.0
    %847 = vmatprep.subr.mxu0 0.0
    %848 = vmatpush1.msra.mxu0 0.0
    %849 = vmatprep.subr.mxu0 0.0
    %850 = vmatpush1.msra.mxu0 0.0
    %851 = vmatprep.subr.mxu0 0.0
    %852 = vmatpush1.msra.mxu0 0.0
    %853 = vmatprep.subr.mxu0 0.0
    %854 = vmatpush1.msra.mxu0 0.0
    %855 = vmatprep.subr.mxu0 0.0
    %856 = vmatpush1.msra.mxu0 0.0
    %857 = vmatprep.subr.mxu0 0.0
    %858 = vmatpush1.msra.mxu0 0.0
    %859 = vmatprep.subr.mxu0 0.0
    %860 = vmatpush1.msra.mxu0 0.0
    %861 = vmatprep.subr.mxu0 0.0
    %862 = vmatpush1.msra.mxu0 0.0
    %863 = vmatprep.subr.mxu0 0.0
    %864 = vmatpush1.msra.mxu0 0.0
    %865 = vmatprep.subr.mxu0 0.0
    %866 = vmatpush1.msra.mxu0 0.0
    %867 = vmatprep.subr.mxu0 0.0
    %868 = vmatpush1.msra.mxu0 0.0
    %869 = vmatprep.subr.mxu0 0.0
    %870 = vmatpush1.msra.mxu0 0.0
    %871 = vmatprep.subr.mxu0 0.0
    %872 = vmatpush1.msra.mxu0 0.0
    %873 = vmatprep.subr.mxu0 0.0
    %874 = vmatpush1.msra.mxu0 0.0
    %875 = vmatprep.subr.mxu0 0.0
    %876 = vmatpush1.msra.mxu0 0.0
    %877 = vmatprep.subr.mxu0 0.0
    %878 = vmatpush1.msra.mxu0 0.0
    %879 = vmatprep.mubr.f32.mxu0 0.0
    %880 = vmatmul.mubr.f32.gmra.mrb[0].mxu0 %v177
    %v881 = vpop.f32.mrb[0].mxu0
    %v882 = vadd.f32 %v813, %v881
    %v883 = vpop.f32.mrb[0].mxu0
    %884 = vmatprep.mubr.f32.mxu0 0.0
    %885 = vmatmul.mubr.f32.gmra.mrb[0].mxu0 %v180
    %v886 = vpop.f32.mrb[0].mxu0
    %v887 = vadd.f32 %v813, %v886
    %v888 = vpop.f32.mrb[0].mxu0
    %889 = vdwg.mxu0
    %v891 = vsel %vm431, %v712, 0
    %v894 = vsel %vm431, %v713, 0
    %v897 = vsel %vm431, %v794, 0
    %v900 = vsel %vm431, %v799, 0
    %902 = vmatprep.subr.mxu0 0.0
    %903 = vmatpush1.xpose.msra.mxu0 %v897
    %904 = vmatprep.subr.mxu0 0.0
    %905 = vmatpush1.xpose.msra.mxu0 %v900
    %906 = vmatprep.subr.mxu0 0.0
    %907 = vmatpush1.xpose.msra.mxu0 0.0
    %908 = vmatprep.subr.mxu0 0.0
    %909 = vmatpush1.xpose.msra.mxu0 0.0
    %910 = vmatprep.subr.mxu0 0.0
    %911 = vmatpush1.xpose.msra.mxu0 0.0
    %912 = vmatprep.subr.mxu0 0.0
    %913 = vmatpush1.xpose.msra.mxu0 0.0
    %914 = vmatprep.subr.mxu0 0.0
    %915 = vmatpush1.xpose.msra.mxu0 0.0
    %916 = vmatprep.subr.mxu0 0.0
    %917 = vmatpush1.xpose.msra.mxu0 0.0
    %918 = vmatprep.subr.mxu0 0.0
    %919 = vmatpush1.xpose.msra.mxu0 0.0
    %920 = vmatprep.subr.mxu0 0.0
    %921 = vmatpush1.xpose.msra.mxu0 0.0
    %922 = vmatprep.subr.mxu0 0.0
    %923 = vmatpush1.xpose.msra.mxu0 0.0
    %924 = vmatprep.subr.mxu0 0.0
    %925 = vmatpush1.xpose.msra.mxu0 0.0
    %926 = vmatprep.subr.mxu0 0.0
    %927 = vmatpush1.xpose.msra.mxu0 0.0
    %928 = vmatprep.subr.mxu0 0.0
    %929 = vmatpush1.xpose.msra.mxu0 0.0
    %930 = vmatprep.subr.mxu0 0.0
    %931 = vmatpush1.xpose.msra.mxu0 0.0
    %932 = vmatprep.subr.mxu0 0.0
    %933 = vmatpush1.xpose.msra.mxu0 0.0
    %934 = vmatprep.subr.mxu0 0.0
    %935 = vmatpush1.xpose.msra.mxu0 0.0
    %936 = vmatprep.subr.mxu0 0.0
    %937 = vmatpush1.xpose.msra.mxu0 0.0
    %938 = vmatprep.subr.mxu0 0.0
    %939 = vmatpush1.xpose.msra.mxu0 0.0
    %940 = vmatprep.subr.mxu0 0.0
    %941 = vmatpush1.xpose.msra.mxu0 0.0
    %942 = vmatprep.subr.mxu0 0.0
    %943 = vmatpush1.xpose.msra.mxu0 0.0
    %944 = vmatprep.subr.mxu0 0.0
    %945 = vmatpush1.xpose.msra.mxu0 0.0
    %946 = vmatprep.subr.mxu0 0.0
    %947 = vmatpush1.xpose.msra.mxu0 0.0
    %948 = vmatprep.subr.mxu0 0.0
    %949 = vmatpush1.xpose.msra.mxu0 0.0
    %950 = vmatprep.subr.mxu0 0.0
    %951 = vmatpush1.xpose.msra.mxu0 0.0
    %952 = vmatprep.subr.mxu0 0.0
    %953 = vmatpush1.xpose.msra.mxu0 0.0
    %954 = vmatprep.subr.mxu0 0.0
    %955 = vmatpush1.xpose.msra.mxu0 0.0
    %956 = vmatprep.subr.mxu0 0.0
    %957 = vmatpush1.xpose.msra.mxu0 0.0
    %958 = vmatprep.subr.mxu0 0.0
    %959 = vmatpush1.xpose.msra.mxu0 0.0
    %960 = vmatprep.subr.mxu0 0.0
    %961 = vmatpush1.xpose.msra.mxu0 0.0
    %962 = vmatprep.subr.mxu0 0.0
    %963 = vmatpush1.xpose.msra.mxu0 0.0
    %964 = vmatprep.subr.mxu0 0.0
    %965 = vmatpush1.xpose.msra.mxu0 0.0
    %966 = vmatprep.mubr.f32.mxu0 0.0
    %967 = vmatmul.mubr.f32.gmra.mrb[0].mxu0 %v891
    %v968 = vpop.f32.mrb[0].mxu0
    %v969 = vadd.f32 %v163, %v968
    %v970 = vpop.f32.mrb[0].mxu0
    %971 = vmatprep.mubr.f32.mxu0 0.0
    %972 = vmatmul.mubr.f32.gmra.mrb[0].mxu0 %v894
    %v973 = vpop.f32.mrb[0].mxu0
    %v974 = vadd.f32 %v164, %v973
    %v975 = vpop.f32.mrb[0].mxu0
    %976 = vdwg.mxu0
    %v977 = vsel %vm519, %v969, -inf
    %978 = vmax.xlane.f32.xlu0 %v977
    %v979 = vpop.xlane.xlu0 %978
    %v980 = vsel %vm519, %v974, -inf
    %981 = vmax.xlane.f32.xlu0 %v980
    %v982 = vpop.xlane.xlu0 %981
    %v983 = vsub.f32 %v969, %v979
    %v984 = vsub.f32 %v974, %v982
    %v985 = vmul.f32 %v983, 1.442695
    %v986 = vpow.pop %v985
    %v987 = vmul.f32 %v984, 1.442695
    %v988 = vpow.pop %v987
    %v989 = vsel %vm519, %v986, 0.0
    %990 = vadd.xlane.f32.xlu0 %v989
    %v991 = vpop.xlane.xlu0 %990
    %v992 = vsel %vm519, %v988, 0.0
    %993 = vadd.xlane.f32.xlu0 %v992
    %v994 = vpop.xlane.xlu0 %993
    %v995 = vrcp.pop %v991
    %v996 = vrcp.pop %v994
    %v997 = vmul.f32 %v986, %v995
    %v998 = vmul.f32 %v988, %v996
    %v1000 = vsel %vm519, %v997, 0
    %v1003 = vsel %vm519, %v998, 0
    %1005 = vmatprep.subr.mxu0 0.0
    %1006 = vmatpush1.msra.mxu0 %v882
    %1007 = vmatprep.subr.mxu0 0.0
    %1008 = vmatpush1.msra.mxu0 %v887
    %1009 = vmatprep.subr.mxu0 0.0
    %1010 = vmatpush1.msra.mxu0 0.0
    %1011 = vmatprep.subr.mxu0 0.0
    %1012 = vmatpush1.msra.mxu0 0.0
    %1013 = vmatprep.subr.mxu0 0.0
    %1014 = vmatpush1.msra.mxu0 0.0
    %1015 = vmatprep.subr.mxu0 0.0
    %1016 = vmatpush1.msra.mxu0 0.0
    %1017 = vmatprep.subr.mxu0 0.0
    %1018 = vmatpush1.msra.mxu0 0.0
    %1019 = vmatprep.subr.mxu0 0.0
    %1020 = vmatpush1.msra.mxu0 0.0
    %1021 = vmatprep.subr.mxu0 0.0
    %1022 = vmatpush1.msra.mxu0 0.0
    %1023 = vmatprep.subr.mxu0 0.0
    %1024 = vmatpush1.msra.mxu0 0.0
    %1025 = vmatprep.subr.mxu0 0.0
    %1026 = vmatpush1.msra.mxu0 0.0
    %1027 = vmatprep.subr.mxu0 0.0
    %1028 = vmatpush1.msra.mxu0 0.0
    %1029 = vmatprep.subr.mxu0 0.0
    %1030 = vmatpush1.msra.mxu0 0.0
    %1031 = vmatprep.subr.mxu0 0.0
    %1032 = vmatpush1.msra.mxu0 0.0
    %1033 = vmatprep.subr.mxu0 0.0
    %1034 = vmatpush1.msra.mxu0 0.0
    %1035 = vmatprep.subr.mxu0 0.0
    %1036 = vmatpush1.msra.mxu0 0.0
    %1037 = vmatprep.subr.mxu0 0.0
    %1038 = vmatpush1.msra.mxu0 0.0
    %1039 = vmatprep.subr.mxu0 0.0
    %1040 = vmatpush1.msra.mxu0 0.0
    %1041 = vmatprep.subr.mxu0 0.0
    %1042 = vmatpush1.msra.mxu0 0.0
    %1043 = vmatprep.subr.mxu0 0.0
    %1044 = vmatpush1.msra.mxu0 0.0
    %1045 = vmatprep.subr.mxu0 0.0
    %1046 = vmatpush1.msra.mxu0 0.0
    %1047 = vmatprep.subr.mxu0 0.0
    %1048 = vmatpush1.msra.mxu0 0.0
    %1049 = vmatprep.subr.mxu0 0.0
    %1050 = vmatpush1.msra.mxu0 0.0
    %1051 = vmatprep.subr.mxu0 0.0
    %1052 = vmatpush1.msra.mxu0 0.0
    %1053 = vmatprep.subr.mxu0 0.0
    %1054 = vmatpush1.msra.mxu0 0.0
    %1055 = vmatprep.subr.mxu0 0.0
    %1056 = vmatpush1.msra.mxu0 0.0
    %1057 = vmatprep.subr.mxu0 0.0
    %1058 = vmatpush1.msra.mxu0 0.0
    %1059 = vmatprep.subr.mxu0 0.0
    %1060 = vmatpush1.msra.mxu0 0.0
    %1061 = vmatprep.subr.mxu0 0.0
    %1062 = vmatpush1.msra.mxu0 0.0
    %1063 = vmatprep.subr.mxu0 0.0
    %1064 = vmatpush1.msra.mxu0 0.0
    %1065 = vmatprep.subr.mxu0 0.0
    %1066 = vmatpush1.msra.mxu0 0.0
    %1067 = vmatprep.subr.mxu0 0.0
    %1068 = vmatpush1.msra.mxu0 0.0
    %1069 = vmatprep.mubr.f32.mxu0 0.0
    %1070 = vmatmul.mubr.f32.gmra.mrb[0].mxu0 %v1000
    %v1071 = vpop.f32.mrb[0].mxu0
    %v1072 = vadd.f32 0.0, %v1071
    %v1073 = vpop.f32.mrb[0].mxu0
    %1074 = vmatprep.mubr.f32.mxu0 0.0
    %1075 = vmatmul.mubr.f32.gmra.mrb[0].mxu0 %v1003
    %v1076 = vpop.f32.mrb[0].mxu0
    %v1077 = vadd.f32 0.0, %v1076
    %v1078 = vpop.f32.mrb[0].mxu0
    %1079 = vdwg.mxu0
    %s1080 = scalar_lea.vmem %s12, 8
    %v1081 = vld [vmem:[%s1080] sm:$0xff]
    %v1083 = vsel %vm431, %v1072, 0
    %v1086 = vsel %vm431, %v1077, 0
    %1088 = vmatprep.subr.mxu0 0.0
    %1089 = vmatpush1.msra.mxu0 %v1081
    %1090 = vmatprep.subr.mxu0 0.0
    %1091 = vmatpush1.msra.mxu0 0.0
    %1092 = vmatprep.subr.mxu0 0.0
    %1093 = vmatpush1.msra.mxu0 0.0
    %1094 = vmatprep.subr.mxu0 0.0
    %1095 = vmatpush1.msra.mxu0 0.0
    %1096 = vmatprep.subr.mxu0 0.0
    %1097 = vmatpush1.msra.mxu0 0.0
    %1098 = vmatprep.subr.mxu0 0.0
    %1099 = vmatpush1.msra.mxu0 0.0
    %1100 = vmatprep.subr.mxu0 0.0
    %1101 = vmatpush1.msra.mxu0 0.0
    %1102 = vmatprep.subr.mxu0 0.0
    %1103 = vmatpush1.msra.mxu0 0.0
    %1104 = vmatprep.subr.mxu0 0.0
    %1105 = vmatpush1.msra.mxu0 0.0
    %1106 = vmatprep.subr.mxu0 0.0
    %1107 = vmatpush1.msra.mxu0 0.0
    %1108 = vmatprep.subr.mxu0 0.0
    %1109 = vmatpush1.msra.mxu0 0.0
    %1110 = vmatprep.subr.mxu0 0.0
    %1111 = vmatpush1.msra.mxu0 0.0
    %1112 = vmatprep.subr.mxu0 0.0
    %1113 = vmatpush1.msra.mxu0 0.0
    %1114 = vmatprep.subr.mxu0 0.0
    %1115 = vmatpush1.msra.mxu0 0.0
    %1116 = vmatprep.subr.mxu0 0.0
    %1117 = vmatpush1.msra.mxu0 0.0
    %1118 = vmatprep.subr.mxu0 0.0
    %1119 = vmatpush1.msra.mxu0 0.0
    %1120 = vmatprep.subr.mxu0 0.0
    %1121 = vmatpush1.msra.mxu0 0.0
    %1122 = vmatprep.subr.mxu0 0.0
    %1123 = vmatpush1.msra.mxu0 0.0
    %1124 = vmatprep.subr.mxu0 0.0
    %1125 = vmatpush1.msra.mxu0 0.0
    %1126 = vmatprep.subr.mxu0 0.0
    %1127 = vmatpush1.msra.mxu0 0.0
    %1128 = vmatprep.subr.mxu0 0.0
    %1129 = vmatpush1.msra.mxu0 0.0
    %1130 = vmatprep.subr.mxu0 0.0
    %1131 = vmatpush1.msra.mxu0 0.0
    %1132 = vmatprep.subr.mxu0 0.0
    %1133 = vmatpush1.msra.mxu0 0.0
    %1134 = vmatprep.subr.mxu0 0.0
    %1135 = vmatpush1.msra.mxu0 0.0
    %1136 = vmatprep.subr.mxu0 0.0
    %1137 = vmatpush1.msra.mxu0 0.0
    %1138 = vmatprep.subr.mxu0 0.0
    %1139 = vmatpush1.msra.mxu0 0.0
    %1140 = vmatprep.subr.mxu0 0.0
    %1141 = vmatpush1.msra.mxu0 0.0
    %1142 = vmatprep.subr.mxu0 0.0
    %1143 = vmatpush1.msra.mxu0 0.0
    %1144 = vmatprep.subr.mxu0 0.0
    %1145 = vmatpush1.msra.mxu0 0.0
    %1146 = vmatprep.subr.mxu0 0.0
    %1147 = vmatpush1.msra.mxu0 0.0
    %1148 = vmatprep.subr.mxu0 0.0
    %1149 = vmatpush1.msra.mxu0 0.0
    %1150 = vmatprep.subr.mxu0 0.0
    %1151 = vmatpush1.msra.mxu0 0.0
    %1152 = vmatprep.mubr.f32.mxu0 0.0
    %1153 = vmatmul.mubr.f32.gmra.mrb[0].mxu0 %v1083
    %v1154 = vpop.f32.mrb[0].mxu0
    %v1155 = vadd.f32 0.0, %v1154
    %v1156 = vpop.f32.mrb[0].mxu0
    %1157 = vmatprep.mubr.f32.mxu0 0.0
    %1158 = vmatmul.mubr.f32.gmra.mrb[0].mxu0 %v1086
    %v1159 = vpop.f32.mrb[0].mxu0
    %v1160 = vadd.f32 0.0, %v1159
    %v1161 = vpop.f32.mrb[0].mxu0
    %1162 = vdwg.mxu0
    %v1164 = vsel %vm431, %v615, 0
    %v1167 = vsel %vm431, %v620, 0
    %1169 = vmatprep.subr.mxu0 0.0
    %1170 = vmatpush1.msra.mxu0 %v623
    %1171 = vmatprep.subr.mxu0 0.0
    %1172 = vmatpush1.msra.mxu0 0.0
    %1173 = vmatprep.subr.mxu0 0.0
    %1174 = vmatpush1.msra.mxu0 0.0
    %1175 = vmatprep.subr.mxu0 0.0
    %1176 = vmatpush1.msra.mxu0 0.0
    %1177 = vmatprep.subr.mxu0 0.0
    %1178 = vmatpush1.msra.mxu0 0.0
    %1179 = vmatprep.subr.mxu0 0.0
    %1180 = vmatpush1.msra.mxu0 0.0
    %1181 = vmatprep.subr.mxu0 0.0
    %1182 = vmatpush1.msra.mxu0 0.0
    %1183 = vmatprep.subr.mxu0 0.0
    %1184 = vmatpush1.msra.mxu0 0.0
    %1185 = vmatprep.subr.mxu0 0.0
    %1186 = vmatpush1.msra.mxu0 0.0
    %1187 = vmatprep.subr.mxu0 0.0
    %1188 = vmatpush1.msra.mxu0 0.0
    %1189 = vmatprep.subr.mxu0 0.0
    %1190 = vmatpush1.msra.mxu0 0.0
    %1191 = vmatprep.subr.mxu0 0.0
    %1192 = vmatpush1.msra.mxu0 0.0
    %1193 = vmatprep.subr.mxu0 0.0
    %1194 = vmatpush1.msra.mxu0 0.0
    %1195 = vmatprep.subr.mxu0 0.0
    %1196 = vmatpush1.msra.mxu0 0.0
    %1197 = vmatprep.subr.mxu0 0.0
    %1198 = vmatpush1.msra.mxu0 0.0
    %1199 = vmatprep.subr.mxu0 0.0
    %1200 = vmatpush1.msra.mxu0 0.0
    %1201 = vmatprep.subr.mxu0 0.0
    %1202 = vmatpush1.msra.mxu0 0.0
    %1203 = vmatprep.subr.mxu0 0.0
    %1204 = vmatpush1.msra.mxu0 0.0
    %1205 = vmatprep.subr.mxu0 0.0
    %1206 = vmatpush1.msra.mxu0 0.0
    %1207 = vmatprep.subr.mxu0 0.0
    %1208 = vmatpush1.msra.mxu0 0.0
    %1209 = vmatprep.subr.mxu0 0.0
    %1210 = vmatpush1.msra.mxu0 0.0
    %1211 = vmatprep.subr.mxu0 0.0
    %1212 = vmatpush1.msra.mxu0 0.0
    %1213 = vmatprep.subr.mxu0 0.0
    %1214 = vmatpush1.msra.mxu0 0.0
    %1215 = vmatprep.subr.mxu0 0.0
    %1216 = vmatpush1.msra.mxu0 0.0
    %1217 = vmatprep.subr.mxu0 0.0
    %1218 = vmatpush1.msra.mxu0 0.0
    %1219 = vmatprep.subr.mxu0 0.0
    %1220 = vmatpush1.msra.mxu0 0.0
    %1221 = vmatprep.subr.mxu0 0.0
    %1222 = vmatpush1.msra.mxu0 0.0
    %1223 = vmatprep.subr.mxu0 0.0
    %1224 = vmatpush1.msra.mxu0 0.0
    %1225 = vmatprep.subr.mxu0 0.0
    %1226 = vmatpush1.msra.mxu0 0.0
    %1227 = vmatprep.subr.mxu0 0.0
    %1228 = vmatpush1.msra.mxu0 0.0
    %1229 = vmatprep.subr.mxu0 0.0
    %1230 = vmatpush1.msra.mxu0 0.0
    %1231 = vmatprep.subr.mxu0 0.0
    %1232 = vmatpush1.msra.mxu0 0.0
    %1233 = vmatprep.mubr.f32.mxu0 0.0
    %1234 = vmatmul.mubr.f32.gmra.mrb[0].mxu0 %v1164
    %v1235 = vpop.f32.mrb[0].mxu0
    %v1236 = vadd.f32 %v1155, %v1235
    %v1237 = vpop.f32.mrb[0].mxu0
    %1238 = vmatprep.mubr.f32.mxu0 0.0
    %1239 = vmatmul.mubr.f32.gmra.mrb[0].mxu0 %v1167
    %v1240 = vpop.f32.mrb[0].mxu0
    %v1241 = vadd.f32 %v1160, %v1240
    %v1242 = vpop.f32.mrb[0].mxu0
    %1243 = vdwg.mxu0
    %s1244 = scalar_lea.vmem %s6, 64
    %v1245 = vld [vmem:[%s1244] sm:$0xff]
    %v1246 = vld [vmem:[%s1244 + $0x8] sm:$0xff]
    %v1247 = vld [vmem:[%s1244 + $0x10] sm:$0xff]
    %v1248 = vld [vmem:[%s1244 + $0x18] sm:$0xff]
    %s1249 = scalar_lea.vmem %s7, 2
    %v1250 = vld [vmem:[%s1249] sm:$0x1]
    %v1252 = vlaneseq
    %v1253 = vshrl.u32 %v1252, 7
    %v1254 = vsub.s32 0, %v1253
    %v1255 = vrot.slane %v1250, %v1254
    %1257 = vmatprep.subr.mxu0 0.0
    %1258 = vmatpush1.msra.mxu0 %v1245
    %1259 = vmatprep.subr.mxu0 0.0
    %1260 = vmatpush1.msra.mxu0 %v1246
    %1261 = vmatprep.subr.mxu0 0.0
    %1262 = vmatpush1.msra.mxu0 %v1247
    %1263 = vmatprep.subr.mxu0 0.0
    %1264 = vmatpush1.msra.mxu0 %v1248
    %1265 = vmatprep.subr.mxu0 0.0
    %1266 = vmatpush1.msra.mxu0 0.0
    %1267 = vmatprep.subr.mxu0 0.0
    %1268 = vmatpush1.msra.mxu0 0.0
    %1269 = vmatprep.subr.mxu0 0.0
    %1270 = vmatpush1.msra.mxu0 0.0
    %1271 = vmatprep.subr.mxu0 0.0
    %1272 = vmatpush1.msra.mxu0 0.0
    %1273 = vmatprep.subr.mxu0 0.0
    %1274 = vmatpush1.msra.mxu0 0.0
    %1275 = vmatprep.subr.mxu0 0.0
    %1276 = vmatpush1.msra.mxu0 0.0
    %1277 = vmatprep.subr.mxu0 0.0
    %1278 = vmatpush1.msra.mxu0 0.0
    %1279 = vmatprep.subr.mxu0 0.0
    %1280 = vmatpush1.msra.mxu0 0.0
    %1281 = vmatprep.subr.mxu0 0.0
    %1282 = vmatpush1.msra.mxu0 0.0
    %1283 = vmatprep.subr.mxu0 0.0
    %1284 = vmatpush1.msra.mxu0 0.0
    %1285 = vmatprep.subr.mxu0 0.0
    %1286 = vmatpush1.msra.mxu0 0.0
    %1287 = vmatprep.subr.mxu0 0.0
    %1288 = vmatpush1.msra.mxu0 0.0
    %1289 = vmatprep.subr.mxu0 0.0
    %1290 = vmatpush1.msra.mxu0 0.0
    %1291 = vmatprep.subr.mxu0 0.0
    %1292 = vmatpush1.msra.mxu0 0.0
    %1293 = vmatprep.subr.mxu0 0.0
    %1294 = vmatpush1.msra.mxu0 0.0
    %1295 = vmatprep.subr.mxu0 0.0
    %1296 = vmatpush1.msra.mxu0 0.0
    %1297 = vmatprep.subr.mxu0 0.0
    %1298 = vmatpush1.msra.mxu0 0.0
    %1299 = vmatprep.subr.mxu0 0.0
    %1300 = vmatpush1.msra.mxu0 0.0
    %1301 = vmatprep.subr.mxu0 0.0
    %1302 = vmatpush1.msra.mxu0 0.0
    %1303 = vmatprep.subr.mxu0 0.0
    %1304 = vmatpush1.msra.mxu0 0.0
    %1305 = vmatprep.subr.mxu0 0.0
    %1306 = vmatpush1.msra.mxu0 0.0
    %1307 = vmatprep.subr.mxu0 0.0
    %1308 = vmatpush1.msra.mxu0 0.0
    %1309 = vmatprep.subr.mxu0 0.0
    %1310 = vmatpush1.msra.mxu0 0.0
    %1311 = vmatprep.subr.mxu0 0.0
    %1312 = vmatpush1.msra.mxu0 0.0
    %1313 = vmatprep.subr.mxu0 0.0
    %1314 = vmatpush1.msra.mxu0 0.0
    %1315 = vmatprep.subr.mxu0 0.0
    %1316 = vmatpush1.msra.mxu0 0.0
    %1317 = vmatprep.subr.mxu0 0.0
    %1318 = vmatpush1.msra.mxu0 0.0
    %1319 = vmatprep.subr.mxu0 0.0
    %1320 = vmatpush1.msra.mxu0 0.0
    %1321 = vmatprep.mubr.f32.mxu0 0.0
    %1322 = vmatmul.mubr.f32.gmra.mrb[0].mxu0 %v177
    %v1323 = vpop.f32.mrb[0].mxu0
    %v1324 = vadd.f32 %v1255, %v1323
    %v1325 = vpop.f32.mrb[0].mxu0
    %1326 = vmatprep.mubr.f32.mxu0 0.0
    %1327 = vmatmul.mubr.f32.gmra.mrb[0].mxu0 %v180
    %v1328 = vpop.f32.mrb[0].mxu0
    %v1329 = vadd.f32 %v1255, %v1328
    %v1330 = vpop.f32.mrb[0].mxu0
    %1331 = vdwg.mxu0
    %v1332 = vmul.f32 %v1324, 0.35355338
    %v1333 = vmul.f32 %v1329, 0.35355338
    %s1334 = scalar_lea.vmem %s8, 64
    %v1335 = vld [vmem:[%s1334] sm:$0xff]
    %v1336 = vld [vmem:[%s1334 + $0x8] sm:$0xff]
    %v1337 = vld [vmem:[%s1334 + $0x10] sm:$0xff]
    %v1338 = vld [vmem:[%s1334 + $0x18] sm:$0xff]
    %s1339 = scalar_lea.vmem %s9, 2
    %v1340 = vld [vmem:[%s1339] sm:$0x1]
    %v1342 = vlaneseq
    %v1343 = vshrl.u32 %v1342, 7
    %v1344 = vsub.s32 0, %v1343
    %v1345 = vrot.slane %v1340, %v1344
    %1347 = vmatprep.subr.mxu0 0.0
    %1348 = vmatpush1.msra.mxu0 %v1335
    %1349 = vmatprep.subr.mxu0 0.0
    %1350 = vmatpush1.msra.mxu0 %v1336
    %1351 = vmatprep.subr.mxu0 0.0
    %1352 = vmatpush1.msra.mxu0 %v1337
    %1353 = vmatprep.subr.mxu0 0.0
    %1354 = vmatpush1.msra.mxu0 %v1338
    %1355 = vmatprep.subr.mxu0 0.0
    %1356 = vmatpush1.msra.mxu0 0.0
    %1357 = vmatprep.subr.mxu0 0.0
    %1358 = vmatpush1.msra.mxu0 0.0
    %1359 = vmatprep.subr.mxu0 0.0
    %1360 = vmatpush1.msra.mxu0 0.0
    %1361 = vmatprep.subr.mxu0 0.0
    %1362 = vmatpush1.msra.mxu0 0.0
    %1363 = vmatprep.subr.mxu0 0.0
    %1364 = vmatpush1.msra.mxu0 0.0
    %1365 = vmatprep.subr.mxu0 0.0
    %1366 = vmatpush1.msra.mxu0 0.0
    %1367 = vmatprep.subr.mxu0 0.0
    %1368 = vmatpush1.msra.mxu0 0.0
    %1369 = vmatprep.subr.mxu0 0.0
    %1370 = vmatpush1.msra.mxu0 0.0
    %1371 = vmatprep.subr.mxu0 0.0
    %1372 = vmatpush1.msra.mxu0 0.0
    %1373 = vmatprep.subr.mxu0 0.0
    %1374 = vmatpush1.msra.mxu0 0.0
    %1375 = vmatprep.subr.mxu0 0.0
    %1376 = vmatpush1.msra.mxu0 0.0
    %1377 = vmatprep.subr.mxu0 0.0
    %1378 = vmatpush1.msra.mxu0 0.0
    %1379 = vmatprep.subr.mxu0 0.0
    %1380 = vmatpush1.msra.mxu0 0.0
    %1381 = vmatprep.subr.mxu0 0.0
    %1382 = vmatpush1.msra.mxu0 0.0
    %1383 = vmatprep.subr.mxu0 0.0
    %1384 = vmatpush1.msra.mxu0 0.0
    %1385 = vmatprep.subr.mxu0 0.0
    %1386 = vmatpush1.msra.mxu0 0.0
    %1387 = vmatprep.subr.mxu0 0.0
    %1388 = vmatpush1.msra.mxu0 0.0
    %1389 = vmatprep.subr.mxu0 0.0
    %1390 = vmatpush1.msra.mxu0 0.0
    %1391 = vmatprep.subr.mxu0 0.0
    %1392 = vmatpush1.msra.mxu0 0.0
    %1393 = vmatprep.subr.mxu0 0.0
    %1394 = vmatpush1.msra.mxu0 0.0
    %1395 = vmatprep.subr.mxu0 0.0
    %1396 = vmatpush1.msra.mxu0 0.0
    %1397 = vmatprep.subr.mxu0 0.0
    %1398 = vmatpush1.msra.mxu0 0.0
    %1399 = vmatprep.subr.mxu0 0.0
    %1400 = vmatpush1.msra.mxu0 0.0
    %1401 = vmatprep.subr.mxu0 0.0
    %1402 = vmatpush1.msra.mxu0 0.0
    %1403 = vmatprep.subr.mxu0 0.0
    %1404 = vmatpush1.msra.mxu0 0.0
    %1405 = vmatprep.subr.mxu0 0.0
    %1406 = vmatpush1.msra.mxu0 0.0
    %1407 = vmatprep.subr.mxu0 0.0
    %1408 = vmatpush1.msra.mxu0 0.0
    %1409 = vmatprep.subr.mxu0 0.0
    %1410 = vmatpush1.msra.mxu0 0.0
    %1411 = vmatprep.mubr.f32.mxu0 0.0
    %1412 = vmatmul.mubr.f32.gmra.mrb[0].mxu0 %v177
    %v1413 = vpop.f32.mrb[0].mxu0
    %v1414 = vadd.f32 %v1345, %v1413
    %v1415 = vpop.f32.mrb[0].mxu0
    %1416 = vmatprep.mubr.f32.mxu0 0.0
    %1417 = vmatmul.mubr.f32.gmra.mrb[0].mxu0 %v180
    %v1418 = vpop.f32.mrb[0].mxu0
    %v1419 = vadd.f32 %v1345, %v1418
    %v1420 = vpop.f32.mrb[0].mxu0
    %1421 = vdwg.mxu0
    %s1422 = scalar_lea.vmem %s10, 64
    %v1423 = vld [vmem:[%s1422] sm:$0xff]
    %v1424 = vld [vmem:[%s1422 + $0x8] sm:$0xff]
    %v1425 = vld [vmem:[%s1422 + $0x10] sm:$0xff]
    %v1426 = vld [vmem:[%s1422 + $0x18] sm:$0xff]
    %s1427 = scalar_lea.vmem %s11, 2
    %v1428 = vld [vmem:[%s1427] sm:$0x1]
    %v1430 = vlaneseq
    %v1431 = vshrl.u32 %v1430, 7
    %v1432 = vsub.s32 0, %v1431
    %v1433 = vrot.slane %v1428, %v1432
    %1435 = vmatprep.subr.mxu0 0.0
    %1436 = vmatpush1.msra.mxu0 %v1423
    %1437 = vmatprep.subr.mxu0 0.0
    %1438 = vmatpush1.msra.mxu0 %v1424
    %1439 = vmatprep.subr.mxu0 0.0
    %1440 = vmatpush1.msra.mxu0 %v1425
    %1441 = vmatprep.subr.mxu0 0.0
    %1442 = vmatpush1.msra.mxu0 %v1426
    %1443 = vmatprep.subr.mxu0 0.0
    %1444 = vmatpush1.msra.mxu0 0.0
    %1445 = vmatprep.subr.mxu0 0.0
    %1446 = vmatpush1.msra.mxu0 0.0
    %1447 = vmatprep.subr.mxu0 0.0
    %1448 = vmatpush1.msra.mxu0 0.0
    %1449 = vmatprep.subr.mxu0 0.0
    %1450 = vmatpush1.msra.mxu0 0.0
    %1451 = vmatprep.subr.mxu0 0.0
    %1452 = vmatpush1.msra.mxu0 0.0
    %1453 = vmatprep.subr.mxu0 0.0
    %1454 = vmatpush1.msra.mxu0 0.0
    %1455 = vmatprep.subr.mxu0 0.0
    %1456 = vmatpush1.msra.mxu0 0.0
    %1457 = vmatprep.subr.mxu0 0.0
    %1458 = vmatpush1.msra.mxu0 0.0
    %1459 = vmatprep.subr.mxu0 0.0
    %1460 = vmatpush1.msra.mxu0 0.0
    %1461 = vmatprep.subr.mxu0 0.0
    %1462 = vmatpush1.msra.mxu0 0.0
    %1463 = vmatprep.subr.mxu0 0.0
    %1464 = vmatpush1.msra.mxu0 0.0
    %1465 = vmatprep.subr.mxu0 0.0
    %1466 = vmatpush1.msra.mxu0 0.0
    %1467 = vmatprep.subr.mxu0 0.0
    %1468 = vmatpush1.msra.mxu0 0.0
    %1469 = vmatprep.subr.mxu0 0.0
    %1470 = vmatpush1.msra.mxu0 0.0
    %1471 = vmatprep.subr.mxu0 0.0
    %1472 = vmatpush1.msra.mxu0 0.0
    %1473 = vmatprep.subr.mxu0 0.0
    %1474 = vmatpush1.msra.mxu0 0.0
    %1475 = vmatprep.subr.mxu0 0.0
    %1476 = vmatpush1.msra.mxu0 0.0
    %1477 = vmatprep.subr.mxu0 0.0
    %1478 = vmatpush1.msra.mxu0 0.0
    %1479 = vmatprep.subr.mxu0 0.0
    %1480 = vmatpush1.msra.mxu0 0.0
    %1481 = vmatprep.subr.mxu0 0.0
    %1482 = vmatpush1.msra.mxu0 0.0
    %1483 = vmatprep.subr.mxu0 0.0
    %1484 = vmatpush1.msra.mxu0 0.0
    %1485 = vmatprep.subr.mxu0 0.0
    %1486 = vmatpush1.msra.mxu0 0.0
    %1487 = vmatprep.subr.mxu0 0.0
    %1488 = vmatpush1.msra.mxu0 0.0
    %1489 = vmatprep.subr.mxu0 0.0
    %1490 = vmatpush1.msra.mxu0 0.0
    %1491 = vmatprep.subr.mxu0 0.0
    %1492 = vmatpush1.msra.mxu0 0.0
    %1493 = vmatprep.subr.mxu0 0.0
    %1494 = vmatpush1.msra.mxu0 0.0
    %1495 = vmatprep.subr.mxu0 0.0
    %1496 = vmatpush1.msra.mxu0 0.0
    %1497 = vmatprep.subr.mxu0 0.0
    %1498 = vmatpush1.msra.mxu0 0.0
    %1499 = vmatprep.mubr.f32.mxu0 0.0
    %1500 = vmatmul.mubr.f32.gmra.mrb[0].mxu0 %v177
    %v1501 = vpop.f32.mrb[0].mxu0
    %v1502 = vadd.f32 %v1433, %v1501
    %v1503 = vpop.f32.mrb[0].mxu0
    %1504 = vmatprep.mubr.f32.mxu0 0.0
    %1505 = vmatmul.mubr.f32.gmra.mrb[0].mxu0 %v180
    %v1506 = vpop.f32.mrb[0].mxu0
    %v1507 = vadd.f32 %v1433, %v1506
    %v1508 = vpop.f32.mrb[0].mxu0
    %1509 = vdwg.mxu0
    %v1511 = vsel %vm431, %v1332, 0
    %v1514 = vsel %vm431, %v1333, 0
    %v1517 = vsel %vm431, %v1414, 0
    %v1520 = vsel %vm431, %v1419, 0
    %1522 = vmatprep.subr.mxu0 0.0
    %1523 = vmatpush1.xpose.msra.mxu0 %v1517
    %1524 = vmatprep.subr.mxu0 0.0
    %1525 = vmatpush1.xpose.msra.mxu0 %v1520
    %1526 = vmatprep.subr.mxu0 0.0
    %1527 = vmatpush1.xpose.msra.mxu0 0.0
    %1528 = vmatprep.subr.mxu0 0.0
    %1529 = vmatpush1.xpose.msra.mxu0 0.0
    %1530 = vmatprep.subr.mxu0 0.0
    %1531 = vmatpush1.xpose.msra.mxu0 0.0
    %1532 = vmatprep.subr.mxu0 0.0
    %1533 = vmatpush1.xpose.msra.mxu0 0.0
    %1534 = vmatprep.subr.mxu0 0.0
    %1535 = vmatpush1.xpose.msra.mxu0 0.0
    %1536 = vmatprep.subr.mxu0 0.0
    %1537 = vmatpush1.xpose.msra.mxu0 0.0
    %1538 = vmatprep.subr.mxu0 0.0
    %1539 = vmatpush1.xpose.msra.mxu0 0.0
    %1540 = vmatprep.subr.mxu0 0.0
    %1541 = vmatpush1.xpose.msra.mxu0 0.0
    %1542 = vmatprep.subr.mxu0 0.0
    %1543 = vmatpush1.xpose.msra.mxu0 0.0
    %1544 = vmatprep.subr.mxu0 0.0
    %1545 = vmatpush1.xpose.msra.mxu0 0.0
    %1546 = vmatprep.subr.mxu0 0.0
    %1547 = vmatpush1.xpose.msra.mxu0 0.0
    %1548 = vmatprep.subr.mxu0 0.0
    %1549 = vmatpush1.xpose.msra.mxu0 0.0
    %1550 = vmatprep.subr.mxu0 0.0
    %1551 = vmatpush1.xpose.msra.mxu0 0.0
    %1552 = vmatprep.subr.mxu0 0.0
    %1553 = vmatpush1.xpose.msra.mxu0 0.0
    %1554 = vmatprep.subr.mxu0 0.0
    %1555 = vmatpush1.xpose.msra.mxu0 0.0
    %1556 = vmatprep.subr.mxu0 0.0
    %1557 = vmatpush1.xpose.msra.mxu0 0.0
    %1558 = vmatprep.subr.mxu0 0.0
    %1559 = vmatpush1.xpose.msra.mxu0 0.0
    %1560 = vmatprep.subr.mxu0 0.0
    %1561 = vmatpush1.xpose.msra.mxu0 0.0
    %1562 = vmatprep.subr.mxu0 0.0
    %1563 = vmatpush1.xpose.msra.mxu0 0.0
    %1564 = vmatprep.subr.mxu0 0.0
    %1565 = vmatpush1.xpose.msra.mxu0 0.0
    %1566 = vmatprep.subr.mxu0 0.0
    %1567 = vmatpush1.xpose.msra.mxu0 0.0
    %1568 = vmatprep.subr.mxu0 0.0
    %1569 = vmatpush1.xpose.msra.mxu0 0.0
    %1570 = vmatprep.subr.mxu0 0.0
    %1571 = vmatpush1.xpose.msra.mxu0 0.0
    %1572 = vmatprep.subr.mxu0 0.0
    %1573 = vmatpush1.xpose.msra.mxu0 0.0
    %1574 = vmatprep.subr.mxu0 0.0
    %1575 = vmatpush1.xpose.msra.mxu0 0.0
    %1576 = vmatprep.subr.mxu0 0.0
    %1577 = vmatpush1.xpose.msra.mxu0 0.0
    %1578 = vmatprep.subr.mxu0 0.0
    %1579 = vmatpush1.xpose.msra.mxu0 0.0
    %1580 = vmatprep.subr.mxu0 0.0
    %1581 = vmatpush1.xpose.msra.mxu0 0.0
    %1582 = vmatprep.subr.mxu0 0.0
    %1583 = vmatpush1.xpose.msra.mxu0 0.0
    %1584 = vmatprep.subr.mxu0 0.0
    %1585 = vmatpush1.xpose.msra.mxu0 0.0
    %1586 = vmatprep.mubr.f32.mxu0 0.0
    %1587 = vmatmul.mubr.f32.gmra.mrb[0].mxu0 %v1511
    %v1588 = vpop.f32.mrb[0].mxu0
    %v1589 = vadd.f32 %v163, %v1588
    %v1590 = vpop.f32.mrb[0].mxu0
    %1591 = vmatprep.mubr.f32.mxu0 0.0
    %1592 = vmatmul.mubr.f32.gmra.mrb[0].mxu0 %v1514
    %v1593 = vpop.f32.mrb[0].mxu0
    %v1594 = vadd.f32 %v164, %v1593
    %v1595 = vpop.f32.mrb[0].mxu0
    %1596 = vdwg.mxu0
    %v1597 = vsel %vm519, %v1589, -inf
    %1598 = vmax.xlane.f32.xlu0 %v1597
    %v1599 = vpop.xlane.xlu0 %1598
    %v1600 = vsel %vm519, %v1594, -inf
    %1601 = vmax.xlane.f32.xlu0 %v1600
    %v1602 = vpop.xlane.xlu0 %1601
    %v1603 = vsub.f32 %v1589, %v1599
    %v1604 = vsub.f32 %v1594, %v1602
    %v1605 = vmul.f32 %v1603, 1.442695
    %v1606 = vpow.pop %v1605
    %v1607 = vmul.f32 %v1604, 1.442695
    %v1608 = vpow.pop %v1607
    %v1609 = vsel %vm519, %v1606, 0.0
    %1610 = vadd.xlane.f32.xlu0 %v1609
    %v1611 = vpop.xlane.xlu0 %1610
    %v1612 = vsel %vm519, %v1608, 0.0
    %1613 = vadd.xlane.f32.xlu0 %v1612
    %v1614 = vpop.xlane.xlu0 %1613
    %v1615 = vrcp.pop %v1611
    %v1616 = vrcp.pop %v1614
    %v1617 = vmul.f32 %v1606, %v1615
    %v1618 = vmul.f32 %v1608, %v1616
    %v1620 = vsel %vm519, %v1617, 0
    %v1623 = vsel %vm519, %v1618, 0
    %1625 = vmatprep.subr.mxu0 0.0
    %1626 = vmatpush1.msra.mxu0 %v1502
    %1627 = vmatprep.subr.mxu0 0.0
    %1628 = vmatpush1.msra.mxu0 %v1507
    %1629 = vmatprep.subr.mxu0 0.0
    %1630 = vmatpush1.msra.mxu0 0.0
    %1631 = vmatprep.subr.mxu0 0.0
    %1632 = vmatpush1.msra.mxu0 0.0
    %1633 = vmatprep.subr.mxu0 0.0
    %1634 = vmatpush1.msra.mxu0 0.0
    %1635 = vmatprep.subr.mxu0 0.0
    %1636 = vmatpush1.msra.mxu0 0.0
    %1637 = vmatprep.subr.mxu0 0.0
    %1638 = vmatpush1.msra.mxu0 0.0
    %1639 = vmatprep.subr.mxu0 0.0
    %1640 = vmatpush1.msra.mxu0 0.0
    %1641 = vmatprep.subr.mxu0 0.0
    %1642 = vmatpush1.msra.mxu0 0.0
    %1643 = vmatprep.subr.mxu0 0.0
    %1644 = vmatpush1.msra.mxu0 0.0
    %1645 = vmatprep.subr.mxu0 0.0
    %1646 = vmatpush1.msra.mxu0 0.0
    %1647 = vmatprep.subr.mxu0 0.0
    %1648 = vmatpush1.msra.mxu0 0.0
    %1649 = vmatprep.subr.mxu0 0.0
    %1650 = vmatpush1.msra.mxu0 0.0
    %1651 = vmatprep.subr.mxu0 0.0
    %1652 = vmatpush1.msra.mxu0 0.0
    %1653 = vmatprep.subr.mxu0 0.0
    %1654 = vmatpush1.msra.mxu0 0.0
    %1655 = vmatprep.subr.mxu0 0.0
    %1656 = vmatpush1.msra.mxu0 0.0
    %1657 = vmatprep.subr.mxu0 0.0
    %1658 = vmatpush1.msra.mxu0 0.0
    %1659 = vmatprep.subr.mxu0 0.0
    %1660 = vmatpush1.msra.mxu0 0.0
    %1661 = vmatprep.subr.mxu0 0.0
    %1662 = vmatpush1.msra.mxu0 0.0
    %1663 = vmatprep.subr.mxu0 0.0
    %1664 = vmatpush1.msra.mxu0 0.0
    %1665 = vmatprep.subr.mxu0 0.0
    %1666 = vmatpush1.msra.mxu0 0.0
    %1667 = vmatprep.subr.mxu0 0.0
    %1668 = vmatpush1.msra.mxu0 0.0
    %1669 = vmatprep.subr.mxu0 0.0
    %1670 = vmatpush1.msra.mxu0 0.0
    %1671 = vmatprep.subr.mxu0 0.0
    %1672 = vmatpush1.msra.mxu0 0.0
    %1673 = vmatprep.subr.mxu0 0.0
    %1674 = vmatpush1.msra.mxu0 0.0
    %1675 = vmatprep.subr.mxu0 0.0
    %1676 = vmatpush1.msra.mxu0 0.0
    %1677 = vmatprep.subr.mxu0 0.0
    %1678 = vmatpush1.msra.mxu0 0.0
    %1679 = vmatprep.subr.mxu0 0.0
    %1680 = vmatpush1.msra.mxu0 0.0
    %1681 = vmatprep.subr.mxu0 0.0
    %1682 = vmatpush1.msra.mxu0 0.0
    %1683 = vmatprep.subr.mxu0 0.0
    %1684 = vmatpush1.msra.mxu0 0.0
    %1685 = vmatprep.subr.mxu0 0.0
    %1686 = vmatpush1.msra.mxu0 0.0
    %1687 = vmatprep.subr.mxu0 0.0
    %1688 = vmatpush1.msra.mxu0 0.0
    %1689 = vmatprep.mubr.f32.mxu0 0.0
    %1690 = vmatmul.mubr.f32.gmra.mrb[0].mxu0 %v1620
    %v1691 = vpop.f32.mrb[0].mxu0
    %v1692 = vadd.f32 0.0, %v1691
    %v1693 = vpop.f32.mrb[0].mxu0
    %1694 = vmatprep.mubr.f32.mxu0 0.0
    %1695 = vmatmul.mubr.f32.gmra.mrb[0].mxu0 %v1623
    %v1696 = vpop.f32.mrb[0].mxu0
    %v1697 = vadd.f32 0.0, %v1696
    %v1698 = vpop.f32.mrb[0].mxu0
    %1699 = vdwg.mxu0
    %s1700 = scalar_lea.vmem %s12, 16
    %v1701 = vld [vmem:[%s1700] sm:$0xff]
    %v1703 = vsel %vm431, %v1692, 0
    %v1706 = vsel %vm431, %v1697, 0
    %1708 = vmatprep.subr.mxu0 0.0
    %1709 = vmatpush1.msra.mxu0 %v1701
    %1710 = vmatprep.subr.mxu0 0.0
    %1711 = vmatpush1.msra.mxu0 0.0
    %1712 = vmatprep.subr.mxu0 0.0
    %1713 = vmatpush1.msra.mxu0 0.0
    %1714 = vmatprep.subr.mxu0 0.0
    %1715 = vmatpush1.msra.mxu0 0.0
    %1716 = vmatprep.subr.mxu0 0.0
    %1717 = vmatpush1.msra.mxu0 0.0
    %1718 = vmatprep.subr.mxu0 0.0
    %1719 = vmatpush1.msra.mxu0 0.0
    %1720 = vmatprep.subr.mxu0 0.0
    %1721 = vmatpush1.msra.mxu0 0.0
    %1722 = vmatprep.subr.mxu0 0.0
    %1723 = vmatpush1.msra.mxu0 0.0
    %1724 = vmatprep.subr.mxu0 0.0
    %1725 = vmatpush1.msra.mxu0 0.0
    %1726 = vmatprep.subr.mxu0 0.0
    %1727 = vmatpush1.msra.mxu0 0.0
    %1728 = vmatprep.subr.mxu0 0.0
    %1729 = vmatpush1.msra.mxu0 0.0
    %1730 = vmatprep.subr.mxu0 0.0
    %1731 = vmatpush1.msra.mxu0 0.0
    %1732 = vmatprep.subr.mxu0 0.0
    %1733 = vmatpush1.msra.mxu0 0.0
    %1734 = vmatprep.subr.mxu0 0.0
    %1735 = vmatpush1.msra.mxu0 0.0
    %1736 = vmatprep.subr.mxu0 0.0
    %1737 = vmatpush1.msra.mxu0 0.0
    %1738 = vmatprep.subr.mxu0 0.0
    %1739 = vmatpush1.msra.mxu0 0.0
    %1740 = vmatprep.subr.mxu0 0.0
    %1741 = vmatpush1.msra.mxu0 0.0
    %1742 = vmatprep.subr.mxu0 0.0
    %1743 = vmatpush1.msra.mxu0 0.0
    %1744 = vmatprep.subr.mxu0 0.0
    %1745 = vmatpush1.msra.mxu0 0.0
    %1746 = vmatprep.subr.mxu0 0.0
    %1747 = vmatpush1.msra.mxu0 0.0
    %1748 = vmatprep.subr.mxu0 0.0
    %1749 = vmatpush1.msra.mxu0 0.0
    %1750 = vmatprep.subr.mxu0 0.0
    %1751 = vmatpush1.msra.mxu0 0.0
    %1752 = vmatprep.subr.mxu0 0.0
    %1753 = vmatpush1.msra.mxu0 0.0
    %1754 = vmatprep.subr.mxu0 0.0
    %1755 = vmatpush1.msra.mxu0 0.0
    %1756 = vmatprep.subr.mxu0 0.0
    %1757 = vmatpush1.msra.mxu0 0.0
    %1758 = vmatprep.subr.mxu0 0.0
    %1759 = vmatpush1.msra.mxu0 0.0
    %1760 = vmatprep.subr.mxu0 0.0
    %1761 = vmatpush1.msra.mxu0 0.0
    %1762 = vmatprep.subr.mxu0 0.0
    %1763 = vmatpush1.msra.mxu0 0.0
    %1764 = vmatprep.subr.mxu0 0.0
    %1765 = vmatpush1.msra.mxu0 0.0
    %1766 = vmatprep.subr.mxu0 0.0
    %1767 = vmatpush1.msra.mxu0 0.0
    %1768 = vmatprep.subr.mxu0 0.0
    %1769 = vmatpush1.msra.mxu0 0.0
    %1770 = vmatprep.subr.mxu0 0.0
    %1771 = vmatpush1.msra.mxu0 0.0
    %1772 = vmatprep.mubr.f32.mxu0 0.0
    %1773 = vmatmul.mubr.f32.gmra.mrb[0].mxu0 %v1703
    %v1774 = vpop.f32.mrb[0].mxu0
    %v1775 = vadd.f32 0.0, %v1774
    %v1776 = vpop.f32.mrb[0].mxu0
    %1777 = vmatprep.mubr.f32.mxu0 0.0
    %1778 = vmatmul.mubr.f32.gmra.mrb[0].mxu0 %v1706
    %v1779 = vpop.f32.mrb[0].mxu0
    %v1780 = vadd.f32 0.0, %v1779
    %v1781 = vpop.f32.mrb[0].mxu0
    %1782 = vdwg.mxu0
    %v1783 = vadd.f32 %v1236, %v1775
    %v1784 = vadd.f32 %v1241, %v1780
    %s1785 = scalar_lea.vmem %s6, 96
    %v1786 = vld [vmem:[%s1785] sm:$0xff]
    %v1787 = vld [vmem:[%s1785 + $0x8] sm:$0xff]
    %v1788 = vld [vmem:[%s1785 + $0x10] sm:$0xff]
    %v1789 = vld [vmem:[%s1785 + $0x18] sm:$0xff]
    %s1790 = scalar_lea.vmem %s7, 3
    %v1791 = vld [vmem:[%s1790] sm:$0x1]
    %v1793 = vlaneseq
    %v1794 = vshrl.u32 %v1793, 7
    %v1795 = vsub.s32 0, %v1794
    %v1796 = vrot.slane %v1791, %v1795
    %1798 = vmatprep.subr.mxu0 0.0
    %1799 = vmatpush1.msra.mxu0 %v1786
    %1800 = vmatprep.subr.mxu0 0.0
    %1801 = vmatpush1.msra.mxu0 %v1787
    %1802 = vmatprep.subr.mxu0 0.0
    %1803 = vmatpush1.msra.mxu0 %v1788
    %1804 = vmatprep.subr.mxu0 0.0
    %1805 = vmatpush1.msra.mxu0 %v1789
    %1806 = vmatprep.subr.mxu0 0.0
    %1807 = vmatpush1.msra.mxu0 0.0
    %1808 = vmatprep.subr.mxu0 0.0
    %1809 = vmatpush1.msra.mxu0 0.0
    %1810 = vmatprep.subr.mxu0 0.0
    %1811 = vmatpush1.msra.mxu0 0.0
    %1812 = vmatprep.subr.mxu0 0.0
    %1813 = vmatpush1.msra.mxu0 0.0
    %1814 = vmatprep.subr.mxu0 0.0
    %1815 = vmatpush1.msra.mxu0 0.0
    %1816 = vmatprep.subr.mxu0 0.0
    %1817 = vmatpush1.msra.mxu0 0.0
    %1818 = vmatprep.subr.mxu0 0.0
    %1819 = vmatpush1.msra.mxu0 0.0
    %1820 = vmatprep.subr.mxu0 0.0
    %1821 = vmatpush1.msra.mxu0 0.0
    %1822 = vmatprep.subr.mxu0 0.0
    %1823 = vmatpush1.msra.mxu0 0.0
    %1824 = vmatprep.subr.mxu0 0.0
    %1825 = vmatpush1.msra.mxu0 0.0
    %1826 = vmatprep.subr.mxu0 0.0
    %1827 = vmatpush1.msra.mxu0 0.0
    %1828 = vmatprep.subr.mxu0 0.0
    %1829 = vmatpush1.msra.mxu0 0.0
    %1830 = vmatprep.subr.mxu0 0.0
    %1831 = vmatpush1.msra.mxu0 0.0
    %1832 = vmatprep.subr.mxu0 0.0
    %1833 = vmatpush1.msra.mxu0 0.0
    %1834 = vmatprep.subr.mxu0 0.0
    %1835 = vmatpush1.msra.mxu0 0.0
    %1836 = vmatprep.subr.mxu0 0.0
    %1837 = vmatpush1.msra.mxu0 0.0
    %1838 = vmatprep.subr.mxu0 0.0
    %1839 = vmatpush1.msra.mxu0 0.0
    %1840 = vmatprep.subr.mxu0 0.0
    %1841 = vmatpush1.msra.mxu0 0.0
    %1842 = vmatprep.subr.mxu0 0.0
    %1843 = vmatpush1.msra.mxu0 0.0
    %1844 = vmatprep.subr.mxu0 0.0
    %1845 = vmatpush1.msra.mxu0 0.0
    %1846 = vmatprep.subr.mxu0 0.0
    %1847 = vmatpush1.msra.mxu0 0.0
    %1848 = vmatprep.subr.mxu0 0.0
    %1849 = vmatpush1.msra.mxu0 0.0
    %1850 = vmatprep.subr.mxu0 0.0
    %1851 = vmatpush1.msra.mxu0 0.0
    %1852 = vmatprep.subr.mxu0 0.0
    %1853 = vmatpush1.msra.mxu0 0.0
    %1854 = vmatprep.subr.mxu0 0.0
    %1855 = vmatpush1.msra.mxu0 0.0
    %1856 = vmatprep.subr.mxu0 0.0
    %1857 = vmatpush1.msra.mxu0 0.0
    %1858 = vmatprep.subr.mxu0 0.0
    %1859 = vmatpush1.msra.mxu0 0.0
    %1860 = vmatprep.subr.mxu0 0.0
    %1861 = vmatpush1.msra.mxu0 0.0
    %1862 = vmatprep.mubr.f32.mxu0 0.0
    %1863 = vmatmul.mubr.f32.gmra.mrb[0].mxu0 %v177
    %v1864 = vpop.f32.mrb[0].mxu0
    %v1865 = vadd.f32 %v1796, %v1864
    %v1866 = vpop.f32.mrb[0].mxu0
    %1867 = vmatprep.mubr.f32.mxu0 0.0
    %1868 = vmatmul.mubr.f32.gmra.mrb[0].mxu0 %v180
    %v1869 = vpop.f32.mrb[0].mxu0
    %v1870 = vadd.f32 %v1796, %v1869
    %v1871 = vpop.f32.mrb[0].mxu0
    %1872 = vdwg.mxu0
    %v1873 = vmul.f32 %v1865, 0.35355338
    %v1874 = vmul.f32 %v1870, 0.35355338
    %s1875 = scalar_lea.vmem %s8, 96
    %v1876 = vld [vmem:[%s1875] sm:$0xff]
    %v1877 = vld [vmem:[%s1875 + $0x8] sm:$0xff]
    %v1878 = vld [vmem:[%s1875 + $0x10] sm:$0xff]
    %v1879 = vld [vmem:[%s1875 + $0x18] sm:$0xff]
    %s1880 = scalar_lea.vmem %s9, 3
    %v1881 = vld [vmem:[%s1880] sm:$0x1]
    %v1883 = vlaneseq
    %v1884 = vshrl.u32 %v1883, 7
    %v1885 = vsub.s32 0, %v1884
    %v1886 = vrot.slane %v1881, %v1885
    %1888 = vmatprep.subr.mxu0 0.0
    %1889 = vmatpush1.msra.mxu0 %v1876
    %1890 = vmatprep.subr.mxu0 0.0
    %1891 = vmatpush1.msra.mxu0 %v1877
    %1892 = vmatprep.subr.mxu0 0.0
    %1893 = vmatpush1.msra.mxu0 %v1878
    %1894 = vmatprep.subr.mxu0 0.0
    %1895 = vmatpush1.msra.mxu0 %v1879
    %1896 = vmatprep.subr.mxu0 0.0
    %1897 = vmatpush1.msra.mxu0 0.0
    %1898 = vmatprep.subr.mxu0 0.0
    %1899 = vmatpush1.msra.mxu0 0.0
    %1900 = vmatprep.subr.mxu0 0.0
    %1901 = vmatpush1.msra.mxu0 0.0
    %1902 = vmatprep.subr.mxu0 0.0
    %1903 = vmatpush1.msra.mxu0 0.0
    %1904 = vmatprep.subr.mxu0 0.0
    %1905 = vmatpush1.msra.mxu0 0.0
    %1906 = vmatprep.subr.mxu0 0.0
    %1907 = vmatpush1.msra.mxu0 0.0
    %1908 = vmatprep.subr.mxu0 0.0
    %1909 = vmatpush1.msra.mxu0 0.0
    %1910 = vmatprep.subr.mxu0 0.0
    %1911 = vmatpush1.msra.mxu0 0.0
    %1912 = vmatprep.subr.mxu0 0.0
    %1913 = vmatpush1.msra.mxu0 0.0
    %1914 = vmatprep.subr.mxu0 0.0
    %1915 = vmatpush1.msra.mxu0 0.0
    %1916 = vmatprep.subr.mxu0 0.0
    %1917 = vmatpush1.msra.mxu0 0.0
    %1918 = vmatprep.subr.mxu0 0.0
    %1919 = vmatpush1.msra.mxu0 0.0
    %1920 = vmatprep.subr.mxu0 0.0
    %1921 = vmatpush1.msra.mxu0 0.0
    %1922 = vmatprep.subr.mxu0 0.0
    %1923 = vmatpush1.msra.mxu0 0.0
    %1924 = vmatprep.subr.mxu0 0.0
    %1925 = vmatpush1.msra.mxu0 0.0
    %1926 = vmatprep.subr.mxu0 0.0
    %1927 = vmatpush1.msra.mxu0 0.0
    %1928 = vmatprep.subr.mxu0 0.0
    %1929 = vmatpush1.msra.mxu0 0.0
    %1930 = vmatprep.subr.mxu0 0.0
    %1931 = vmatpush1.msra.mxu0 0.0
    %1932 = vmatprep.subr.mxu0 0.0
    %1933 = vmatpush1.msra.mxu0 0.0
    %1934 = vmatprep.subr.mxu0 0.0
    %1935 = vmatpush1.msra.mxu0 0.0
    %1936 = vmatprep.subr.mxu0 0.0
    %1937 = vmatpush1.msra.mxu0 0.0
    %1938 = vmatprep.subr.mxu0 0.0
    %1939 = vmatpush1.msra.mxu0 0.0
    %1940 = vmatprep.subr.mxu0 0.0
    %1941 = vmatpush1.msra.mxu0 0.0
    %1942 = vmatprep.subr.mxu0 0.0
    %1943 = vmatpush1.msra.mxu0 0.0
    %1944 = vmatprep.subr.mxu0 0.0
    %1945 = vmatpush1.msra.mxu0 0.0
    %1946 = vmatprep.subr.mxu0 0.0
    %1947 = vmatpush1.msra.mxu0 0.0
    %1948 = vmatprep.subr.mxu0 0.0
    %1949 = vmatpush1.msra.mxu0 0.0
    %1950 = vmatprep.subr.mxu0 0.0
    %1951 = vmatpush1.msra.mxu0 0.0
    %1952 = vmatprep.mubr.f32.mxu0 0.0
    %1953 = vmatmul.mubr.f32.gmra.mrb[0].mxu0 %v177
    %v1954 = vpop.f32.mrb[0].mxu0
    %v1955 = vadd.f32 %v1886, %v1954
    %v1956 = vpop.f32.mrb[0].mxu0
    %1957 = vmatprep.mubr.f32.mxu0 0.0
    %1958 = vmatmul.mubr.f32.gmra.mrb[0].mxu0 %v180
    %v1959 = vpop.f32.mrb[0].mxu0
    %v1960 = vadd.f32 %v1886, %v1959
    %v1961 = vpop.f32.mrb[0].mxu0
    %1962 = vdwg.mxu0
    %s1963 = scalar_lea.vmem %s10, 96
    %v1964 = vld [vmem:[%s1963] sm:$0xff]
    %v1965 = vld [vmem:[%s1963 + $0x8] sm:$0xff]
    %v1966 = vld [vmem:[%s1963 + $0x10] sm:$0xff]
    %v1967 = vld [vmem:[%s1963 + $0x18] sm:$0xff]
    %s1968 = scalar_lea.vmem %s11, 3
    %v1969 = vld [vmem:[%s1968] sm:$0x1]
    %v1971 = vlaneseq
    %v1972 = vshrl.u32 %v1971, 7
    %v1973 = vsub.s32 0, %v1972
    %v1974 = vrot.slane %v1969, %v1973
    %1976 = vmatprep.subr.mxu0 0.0
    %1977 = vmatpush1.msra.mxu0 %v1964
    %1978 = vmatprep.subr.mxu0 0.0
    %1979 = vmatpush1.msra.mxu0 %v1965
    %1980 = vmatprep.subr.mxu0 0.0
    %1981 = vmatpush1.msra.mxu0 %v1966
    %1982 = vmatprep.subr.mxu0 0.0
    %1983 = vmatpush1.msra.mxu0 %v1967
    %1984 = vmatprep.subr.mxu0 0.0
    %1985 = vmatpush1.msra.mxu0 0.0
    %1986 = vmatprep.subr.mxu0 0.0
    %1987 = vmatpush1.msra.mxu0 0.0
    %1988 = vmatprep.subr.mxu0 0.0
    %1989 = vmatpush1.msra.mxu0 0.0
    %1990 = vmatprep.subr.mxu0 0.0
    %1991 = vmatpush1.msra.mxu0 0.0
    %1992 = vmatprep.subr.mxu0 0.0
    %1993 = vmatpush1.msra.mxu0 0.0
    %1994 = vmatprep.subr.mxu0 0.0
    %1995 = vmatpush1.msra.mxu0 0.0
    %1996 = vmatprep.subr.mxu0 0.0
    %1997 = vmatpush1.msra.mxu0 0.0
    %1998 = vmatprep.subr.mxu0 0.0
    %1999 = vmatpush1.msra.mxu0 0.0
    %2000 = vmatprep.subr.mxu0 0.0
    %2001 = vmatpush1.msra.mxu0 0.0
    %2002 = vmatprep.subr.mxu0 0.0
    %2003 = vmatpush1.msra.mxu0 0.0
    %2004 = vmatprep.subr.mxu0 0.0
    %2005 = vmatpush1.msra.mxu0 0.0
    %2006 = vmatprep.subr.mxu0 0.0
    %2007 = vmatpush1.msra.mxu0 0.0
    %2008 = vmatprep.subr.mxu0 0.0
    %2009 = vmatpush1.msra.mxu0 0.0
    %2010 = vmatprep.subr.mxu0 0.0
    %2011 = vmatpush1.msra.mxu0 0.0
    %2012 = vmatprep.subr.mxu0 0.0
    %2013 = vmatpush1.msra.mxu0 0.0
    %2014 = vmatprep.subr.mxu0 0.0
    %2015 = vmatpush1.msra.mxu0 0.0
    %2016 = vmatprep.subr.mxu0 0.0
    %2017 = vmatpush1.msra.mxu0 0.0
    %2018 = vmatprep.subr.mxu0 0.0
    %2019 = vmatpush1.msra.mxu0 0.0
    %2020 = vmatprep.subr.mxu0 0.0
    %2021 = vmatpush1.msra.mxu0 0.0
    %2022 = vmatprep.subr.mxu0 0.0
    %2023 = vmatpush1.msra.mxu0 0.0
    %2024 = vmatprep.subr.mxu0 0.0
    %2025 = vmatpush1.msra.mxu0 0.0
    %2026 = vmatprep.subr.mxu0 0.0
    %2027 = vmatpush1.msra.mxu0 0.0
    %2028 = vmatprep.subr.mxu0 0.0
    %2029 = vmatpush1.msra.mxu0 0.0
    %2030 = vmatprep.subr.mxu0 0.0
    %2031 = vmatpush1.msra.mxu0 0.0
    %2032 = vmatprep.subr.mxu0 0.0
    %2033 = vmatpush1.msra.mxu0 0.0
    %2034 = vmatprep.subr.mxu0 0.0
    %2035 = vmatpush1.msra.mxu0 0.0
    %2036 = vmatprep.subr.mxu0 0.0
    %2037 = vmatpush1.msra.mxu0 0.0
    %2038 = vmatprep.subr.mxu0 0.0
    %2039 = vmatpush1.msra.mxu0 0.0
    %2040 = vmatprep.mubr.f32.mxu0 0.0
    %2041 = vmatmul.mubr.f32.gmra.mrb[0].mxu0 %v177
    %v2042 = vpop.f32.mrb[0].mxu0
    %v2043 = vadd.f32 %v1974, %v2042
    %v2044 = vpop.f32.mrb[0].mxu0
    %2045 = vmatprep.mubr.f32.mxu0 0.0
    %2046 = vmatmul.mubr.f32.gmra.mrb[0].mxu0 %v180
    %v2047 = vpop.f32.mrb[0].mxu0
    %v2048 = vadd.f32 %v1974, %v2047
    %v2049 = vpop.f32.mrb[0].mxu0
    %2050 = vdwg.mxu0
    %v2052 = vsel %vm431, %v1873, 0
    %v2055 = vsel %vm431, %v1874, 0
    %v2058 = vsel %vm431, %v1955, 0
    %v2061 = vsel %vm431, %v1960, 0
    %2063 = vmatprep.subr.mxu0 0.0
    %2064 = vmatpush1.xpose.msra.mxu0 %v2058
    %2065 = vmatprep.subr.mxu0 0.0
    %2066 = vmatpush1.xpose.msra.mxu0 %v2061
    %2067 = vmatprep.subr.mxu0 0.0
    %2068 = vmatpush1.xpose.msra.mxu0 0.0
    %2069 = vmatprep.subr.mxu0 0.0
    %2070 = vmatpush1.xpose.msra.mxu0 0.0
    %2071 = vmatprep.subr.mxu0 0.0
    %2072 = vmatpush1.xpose.msra.mxu0 0.0
    %2073 = vmatprep.subr.mxu0 0.0
    %2074 = vmatpush1.xpose.msra.mxu0 0.0
    %2075 = vmatprep.subr.mxu0 0.0
    %2076 = vmatpush1.xpose.msra.mxu0 0.0
    %2077 = vmatprep.subr.mxu0 0.0
    %2078 = vmatpush1.xpose.msra.mxu0 0.0
    %2079 = vmatprep.subr.mxu0 0.0
    %2080 = vmatpush1.xpose.msra.mxu0 0.0
    %2081 = vmatprep.subr.mxu0 0.0
    %2082 = vmatpush1.xpose.msra.mxu0 0.0
    %2083 = vmatprep.subr.mxu0 0.0
    %2084 = vmatpush1.xpose.msra.mxu0 0.0
    %2085 = vmatprep.subr.mxu0 0.0
    %2086 = vmatpush1.xpose.msra.mxu0 0.0
    %2087 = vmatprep.subr.mxu0 0.0
    %2088 = vmatpush1.xpose.msra.mxu0 0.0
    %2089 = vmatprep.subr.mxu0 0.0
    %2090 = vmatpush1.xpose.msra.mxu0 0.0
    %2091 = vmatprep.subr.mxu0 0.0
    %2092 = vmatpush1.xpose.msra.mxu0 0.0
    %2093 = vmatprep.subr.mxu0 0.0
    %2094 = vmatpush1.xpose.msra.mxu0 0.0
    %2095 = vmatprep.subr.mxu0 0.0
    %2096 = vmatpush1.xpose.msra.mxu0 0.0
    %2097 = vmatprep.subr.mxu0 0.0
    %2098 = vmatpush1.xpose.msra.mxu0 0.0
    %2099 = vmatprep.subr.mxu0 0.0
    %2100 = vmatpush1.xpose.msra.mxu0 0.0
    %2101 = vmatprep.subr.mxu0 0.0
    %2102 = vmatpush1.xpose.msra.mxu0 0.0
    %2103 = vmatprep.subr.mxu0 0.0
    %2104 = vmatpush1.xpose.msra.mxu0 0.0
    %2105 = vmatprep.subr.mxu0 0.0
    %2106 = vmatpush1.xpose.msra.mxu0 0.0
    %2107 = vmatprep.subr.mxu0 0.0
    %2108 = vmatpush1.xpose.msra.mxu0 0.0
    %2109 = vmatprep.subr.mxu0 0.0
    %2110 = vmatpush1.xpose.msra.mxu0 0.0
    %2111 = vmatprep.subr.mxu0 0.0
    %2112 = vmatpush1.xpose.msra.mxu0 0.0
    %2113 = vmatprep.subr.mxu0 0.0
    %2114 = vmatpush1.xpose.msra.mxu0 0.0
    %2115 = vmatprep.subr.mxu0 0.0
    %2116 = vmatpush1.xpose.msra.mxu0 0.0
    %2117 = vmatprep.subr.mxu0 0.0
    %2118 = vmatpush1.xpose.msra.mxu0 0.0
    %2119 = vmatprep.subr.mxu0 0.0
    %2120 = vmatpush1.xpose.msra.mxu0 0.0
    %2121 = vmatprep.subr.mxu0 0.0
    %2122 = vmatpush1.xpose.msra.mxu0 0.0
    %2123 = vmatprep.subr.mxu0 0.0
    %2124 = vmatpush1.xpose.msra.mxu0 0.0
    %2125 = vmatprep.subr.mxu0 0.0
    %2126 = vmatpush1.xpose.msra.mxu0 0.0
    %2127 = vmatprep.mubr.f32.mxu0 0.0
    %2128 = vmatmul.mubr.f32.gmra.mrb[0].mxu0 %v2052
    %v2129 = vpop.f32.mrb[0].mxu0
    %v2130 = vadd.f32 %v163, %v2129
    %v2131 = vpop.f32.mrb[0].mxu0
    %2132 = vmatprep.mubr.f32.mxu0 0.0
    %2133 = vmatmul.mubr.f32.gmra.mrb[0].mxu0 %v2055
    %v2134 = vpop.f32.mrb[0].mxu0
    %v2135 = vadd.f32 %v164, %v2134
    %v2136 = vpop.f32.mrb[0].mxu0
    %2137 = vdwg.mxu0
    %v2138 = vsel %vm519, %v2130, -inf
    %2139 = vmax.xlane.f32.xlu0 %v2138
    %v2140 = vpop.xlane.xlu0 %2139
    %v2141 = vsel %vm519, %v2135, -inf
    %2142 = vmax.xlane.f32.xlu0 %v2141
    %v2143 = vpop.xlane.xlu0 %2142
    %v2144 = vsub.f32 %v2130, %v2140
    %v2145 = vsub.f32 %v2135, %v2143
    %v2146 = vmul.f32 %v2144, 1.442695
    %v2147 = vpow.pop %v2146
    %v2148 = vmul.f32 %v2145, 1.442695
    %v2149 = vpow.pop %v2148
    %v2150 = vsel %vm519, %v2147, 0.0
    %2151 = vadd.xlane.f32.xlu0 %v2150
    %v2152 = vpop.xlane.xlu0 %2151
    %v2153 = vsel %vm519, %v2149, 0.0
    %2154 = vadd.xlane.f32.xlu0 %v2153
    %v2155 = vpop.xlane.xlu0 %2154
    %v2156 = vrcp.pop %v2152
    %v2157 = vrcp.pop %v2155
    %v2158 = vmul.f32 %v2147, %v2156
    %v2159 = vmul.f32 %v2149, %v2157
    %v2161 = vsel %vm519, %v2158, 0
    %v2164 = vsel %vm519, %v2159, 0
    %2166 = vmatprep.subr.mxu0 0.0
    %2167 = vmatpush1.msra.mxu0 %v2043
    %2168 = vmatprep.subr.mxu0 0.0
    %2169 = vmatpush1.msra.mxu0 %v2048
    %2170 = vmatprep.subr.mxu0 0.0
    %2171 = vmatpush1.msra.mxu0 0.0
    %2172 = vmatprep.subr.mxu0 0.0
    %2173 = vmatpush1.msra.mxu0 0.0
    %2174 = vmatprep.subr.mxu0 0.0
    %2175 = vmatpush1.msra.mxu0 0.0
    %2176 = vmatprep.subr.mxu0 0.0
    %2177 = vmatpush1.msra.mxu0 0.0
    %2178 = vmatprep.subr.mxu0 0.0
    %2179 = vmatpush1.msra.mxu0 0.0
    %2180 = vmatprep.subr.mxu0 0.0
    %2181 = vmatpush1.msra.mxu0 0.0
    %2182 = vmatprep.subr.mxu0 0.0
    %2183 = vmatpush1.msra.mxu0 0.0
    %2184 = vmatprep.subr.mxu0 0.0
    %2185 = vmatpush1.msra.mxu0 0.0
    %2186 = vmatprep.subr.mxu0 0.0
    %2187 = vmatpush1.msra.mxu0 0.0
    %2188 = vmatprep.subr.mxu0 0.0
    %2189 = vmatpush1.msra.mxu0 0.0
    %2190 = vmatprep.subr.mxu0 0.0
    %2191 = vmatpush1.msra.mxu0 0.0
    %2192 = vmatprep.subr.mxu0 0.0
    %2193 = vmatpush1.msra.mxu0 0.0
    %2194 = vmatprep.subr.mxu0 0.0
    %2195 = vmatpush1.msra.mxu0 0.0
    %2196 = vmatprep.subr.mxu0 0.0
    %2197 = vmatpush1.msra.mxu0 0.0
    %2198 = vmatprep.subr.mxu0 0.0
    %2199 = vmatpush1.msra.mxu0 0.0
    %2200 = vmatprep.subr.mxu0 0.0
    %2201 = vmatpush1.msra.mxu0 0.0
    %2202 = vmatprep.subr.mxu0 0.0
    %2203 = vmatpush1.msra.mxu0 0.0
    %2204 = vmatprep.subr.mxu0 0.0
    %2205 = vmatpush1.msra.mxu0 0.0
    %2206 = vmatprep.subr.mxu0 0.0
    %2207 = vmatpush1.msra.mxu0 0.0
    %2208 = vmatprep.subr.mxu0 0.0
    %2209 = vmatpush1.msra.mxu0 0.0
    %2210 = vmatprep.subr.mxu0 0.0
    %2211 = vmatpush1.msra.mxu0 0.0
    %2212 = vmatprep.subr.mxu0 0.0
    %2213 = vmatpush1.msra.mxu0 0.0
    %2214 = vmatprep.subr.mxu0 0.0
    %2215 = vmatpush1.msra.mxu0 0.0
    %2216 = vmatprep.subr.mxu0 0.0
    %2217 = vmatpush1.msra.mxu0 0.0
    %2218 = vmatprep.subr.mxu0 0.0
    %2219 = vmatpush1.msra.mxu0 0.0
    %2220 = vmatprep.subr.mxu0 0.0
    %2221 = vmatpush1.msra.mxu0 0.0
    %2222 = vmatprep.subr.mxu0 0.0
    %2223 = vmatpush1.msra.mxu0 0.0
    %2224 = vmatprep.subr.mxu0 0.0
    %2225 = vmatpush1.msra.mxu0 0.0
    %2226 = vmatprep.subr.mxu0 0.0
    %2227 = vmatpush1.msra.mxu0 0.0
    %2228 = vmatprep.subr.mxu0 0.0
    %2229 = vmatpush1.msra.mxu0 0.0
    %2230 = vmatprep.mubr.f32.mxu0 0.0
    %2231 = vmatmul.mubr.f32.gmra.mrb[0].mxu0 %v2161
    %v2232 = vpop.f32.mrb[0].mxu0
    %v2233 = vadd.f32 0.0, %v2232
    %v2234 = vpop.f32.mrb[0].mxu0
    %2235 = vmatprep.mubr.f32.mxu0 0.0
    %2236 = vmatmul.mubr.f32.gmra.mrb[0].mxu0 %v2164
    %v2237 = vpop.f32.mrb[0].mxu0
    %v2238 = vadd.f32 0.0, %v2237
    %v2239 = vpop.f32.mrb[0].mxu0
    %2240 = vdwg.mxu0
    %s2241 = scalar_lea.vmem %s12, 24
    %v2242 = vld [vmem:[%s2241] sm:$0xff]
    %v2244 = vsel %vm431, %v2233, 0
    %v2247 = vsel %vm431, %v2238, 0
    %2249 = vmatprep.subr.mxu0 0.0
    %2250 = vmatpush1.msra.mxu0 %v2242
    %2251 = vmatprep.subr.mxu0 0.0
    %2252 = vmatpush1.msra.mxu0 0.0
    %2253 = vmatprep.subr.mxu0 0.0
    %2254 = vmatpush1.msra.mxu0 0.0
    %2255 = vmatprep.subr.mxu0 0.0
    %2256 = vmatpush1.msra.mxu0 0.0
    %2257 = vmatprep.subr.mxu0 0.0
    %2258 = vmatpush1.msra.mxu0 0.0
    %2259 = vmatprep.subr.mxu0 0.0
    %2260 = vmatpush1.msra.mxu0 0.0
    %2261 = vmatprep.subr.mxu0 0.0
    %2262 = vmatpush1.msra.mxu0 0.0
    %2263 = vmatprep.subr.mxu0 0.0
    %2264 = vmatpush1.msra.mxu0 0.0
    %2265 = vmatprep.subr.mxu0 0.0
    %2266 = vmatpush1.msra.mxu0 0.0
    %2267 = vmatprep.subr.mxu0 0.0
    %2268 = vmatpush1.msra.mxu0 0.0
    %2269 = vmatprep.subr.mxu0 0.0
    %2270 = vmatpush1.msra.mxu0 0.0
    %2271 = vmatprep.subr.mxu0 0.0
    %2272 = vmatpush1.msra.mxu0 0.0
    %2273 = vmatprep.subr.mxu0 0.0
    %2274 = vmatpush1.msra.mxu0 0.0
    %2275 = vmatprep.subr.mxu0 0.0
    %2276 = vmatpush1.msra.mxu0 0.0
    %2277 = vmatprep.subr.mxu0 0.0
    %2278 = vmatpush1.msra.mxu0 0.0
    %2279 = vmatprep.subr.mxu0 0.0
    %2280 = vmatpush1.msra.mxu0 0.0
    %2281 = vmatprep.subr.mxu0 0.0
    %2282 = vmatpush1.msra.mxu0 0.0
    %2283 = vmatprep.subr.mxu0 0.0
    %2284 = vmatpush1.msra.mxu0 0.0
    %2285 = vmatprep.subr.mxu0 0.0
    %2286 = vmatpush1.msra.mxu0 0.0
    %2287 = vmatprep.subr.mxu0 0.0
    %2288 = vmatpush1.msra.mxu0 0.0
    %2289 = vmatprep.subr.mxu0 0.0
    %2290 = vmatpush1.msra.mxu0 0.0
    %2291 = vmatprep.subr.mxu0 0.0
    %2292 = vmatpush1.msra.mxu0 0.0
    %2293 = vmatprep.subr.mxu0 0.0
    %2294 = vmatpush1.msra.mxu0 0.0
    %2295 = vmatprep.subr.mxu0 0.0
    %2296 = vmatpush1.msra.mxu0 0.0
    %2297 = vmatprep.subr.mxu0 0.0
    %2298 = vmatpush1.msra.mxu0 0.0
    %2299 = vmatprep.subr.mxu0 0.0
    %2300 = vmatpush1.msra.mxu0 0.0
    %2301 = vmatprep.subr.mxu0 0.0
    %2302 = vmatpush1.msra.mxu0 0.0
    %2303 = vmatprep.subr.mxu0 0.0
    %2304 = vmatpush1.msra.mxu0 0.0
    %2305 = vmatprep.subr.mxu0 0.0
    %2306 = vmatpush1.msra.mxu0 0.0
    %2307 = vmatprep.subr.mxu0 0.0
    %2308 = vmatpush1.msra.mxu0 0.0
    %2309 = vmatprep.subr.mxu0 0.0
    %2310 = vmatpush1.msra.mxu0 0.0
    %2311 = vmatprep.subr.mxu0 0.0
    %2312 = vmatpush1.msra.mxu0 0.0
    %2313 = vmatprep.mubr.f32.mxu0 0.0
    %2314 = vmatmul.mubr.f32.gmra.mrb[0].mxu0 %v2244
    %v2315 = vpop.f32.mrb[0].mxu0
    %v2316 = vadd.f32 0.0, %v2315
    %v2317 = vpop.f32.mrb[0].mxu0
    %2318 = vmatprep.mubr.f32.mxu0 0.0
    %2319 = vmatmul.mubr.f32.gmra.mrb[0].mxu0 %v2247
    %v2320 = vpop.f32.mrb[0].mxu0
    %v2321 = vadd.f32 0.0, %v2320
    %v2322 = vpop.f32.mrb[0].mxu0
    %2323 = vdwg.mxu0
    %v2324 = vadd.f32 %v1783, %v2316
    %v2325 = vadd.f32 %v1784, %v2321
    %v2326 = vld [vmem:[%s13] sm:$0x1]
    %v2328 = vlaneseq
    %v2329 = vshrl.u32 %v2328, 7
    %v2330 = vsub.s32 0, %v2329
    %v2331 = vrot.slane %v2326, %v2330
    %v2333 = vadd.f32 %v2324, %v2331
    %v2334 = vadd.f32 %v2325, %v2331
    %v2335 = vadd.f32 %v2333, %v130
    %v2336 = vadd.f32 %v2334, %v131
    %v2337 = vld [vmem:[%s14] sm:$0x1]
    %v2338 = vld [vmem:[%s15] sm:$0x1]
    %v2339 = vsel %vm88, %v2335, 0.0
    %2340 = vadd.xlane.f32.xlu0 %v2339
    %v2341 = vpop.xlane.xlu0 %2340
    %v2342 = vsel %vm88, %v2336, 0.0
    %2343 = vadd.xlane.f32.xlu0 %v2342
    %v2344 = vpop.xlane.xlu0 %2343
    %v2345 = vmul.f32 %v2341, %v95
    %v2346 = vmul.f32 %v2344, %v95
    %v2347 = vsub.f32 %v2335, %v2345
    %v2348 = vsub.f32 %v2336, %v2346
    %v2349 = vmul.f32 %v2347, %v2347
    %v2350 = vmul.f32 %v2348, %v2348
    %v2351 = vsel %vm88, %v2349, 0.0
    %2352 = vadd.xlane.f32.xlu0 %v2351
    %v2353 = vpop.xlane.xlu0 %2352
    %v2354 = vsel %vm88, %v2350, 0.0
    %2355 = vadd.xlane.f32.xlu0 %v2354
    %v2356 = vpop.xlane.xlu0 %2355
    %v2357 = vmul.f32 %v2353, %v95
    %v2358 = vmul.f32 %v2356, %v95
    %v2359 = vadd.f32 %v2357, 1e-12
    %v2360 = vadd.f32 %v2358, 1e-12
    %v2361 = vrsqrt.pop %v2359
    %v2362 = vrsqrt.pop %v2360
    %v2363 = vmul.f32 %v2347, %v2361
    %v2364 = vmul.f32 %v2348, %v2362
    %v2366 = vlaneseq
    %v2367 = vshrl.u32 %v2366, 7
    %v2368 = vsub.s32 0, %v2367
    %v2369 = vrot.slane %v2337, %v2368
    %v2371 = vmul.f32 %v2363, %v2369
    %v2372 = vmul.f32 %v2364, %v2369
    %v2374 = vlaneseq
    %v2375 = vshrl.u32 %v2374, 7
    %v2376 = vsub.s32 0, %v2375
    %v2377 = vrot.slane %v2338, %v2376
    %v2379 = vadd.f32 %v2371, %v2377
    %v2380 = vadd.f32 %v2372, %v2377
    %v2381 = vld [vmem:[%s16] sm:$0xff]
    %v2382 = vld [vmem:[%s16 + $0x8] sm:$0xff]
    %v2383 = vld [vmem:[%s16 + $0x10] sm:$0xff]
    %v2384 = vld [vmem:[%s16 + $0x18] sm:$0xff]
    %v2385 = vld [vmem:[%s17] sm:$0x1]
    %v2387 = vlaneseq
    %v2388 = vshrl.u32 %v2387, 7
    %v2389 = vsub.s32 0, %v2388
    %v2390 = vrot.slane %v2385, %v2389
    %v2393 = vsel %vm88, %v2379, 0
    %v2396 = vsel %vm88, %v2380, 0
    %2398 = vmatprep.subr.mxu0 0.0
    %2399 = vmatpush1.msra.mxu0 %v2381
    %2400 = vmatprep.subr.mxu0 0.0
    %2401 = vmatpush1.msra.mxu0 %v2382
    %2402 = vmatprep.subr.mxu0 0.0
    %2403 = vmatpush1.msra.mxu0 %v2383
    %2404 = vmatprep.subr.mxu0 0.0
    %2405 = vmatpush1.msra.mxu0 %v2384
    %2406 = vmatprep.subr.mxu0 0.0
    %2407 = vmatpush1.msra.mxu0 0.0
    %2408 = vmatprep.subr.mxu0 0.0
    %2409 = vmatpush1.msra.mxu0 0.0
    %2410 = vmatprep.subr.mxu0 0.0
    %2411 = vmatpush1.msra.mxu0 0.0
    %2412 = vmatprep.subr.mxu0 0.0
    %2413 = vmatpush1.msra.mxu0 0.0
    %2414 = vmatprep.subr.mxu0 0.0
    %2415 = vmatpush1.msra.mxu0 0.0
    %2416 = vmatprep.subr.mxu0 0.0
    %2417 = vmatpush1.msra.mxu0 0.0
    %2418 = vmatprep.subr.mxu0 0.0
    %2419 = vmatpush1.msra.mxu0 0.0
    %2420 = vmatprep.subr.mxu0 0.0
    %2421 = vmatpush1.msra.mxu0 0.0
    %2422 = vmatprep.subr.mxu0 0.0
    %2423 = vmatpush1.msra.mxu0 0.0
    %2424 = vmatprep.subr.mxu0 0.0
    %2425 = vmatpush1.msra.mxu0 0.0
    %2426 = vmatprep.subr.mxu0 0.0
    %2427 = vmatpush1.msra.mxu0 0.0
    %2428 = vmatprep.subr.mxu0 0.0
    %2429 = vmatpush1.msra.mxu0 0.0
    %2430 = vmatprep.subr.mxu0 0.0
    %2431 = vmatpush1.msra.mxu0 0.0
    %2432 = vmatprep.subr.mxu0 0.0
    %2433 = vmatpush1.msra.mxu0 0.0
    %2434 = vmatprep.subr.mxu0 0.0
    %2435 = vmatpush1.msra.mxu0 0.0
    %2436 = vmatprep.subr.mxu0 0.0
    %2437 = vmatpush1.msra.mxu0 0.0
    %2438 = vmatprep.subr.mxu0 0.0
    %2439 = vmatpush1.msra.mxu0 0.0
    %2440 = vmatprep.subr.mxu0 0.0
    %2441 = vmatpush1.msra.mxu0 0.0
    %2442 = vmatprep.subr.mxu0 0.0
    %2443 = vmatpush1.msra.mxu0 0.0
    %2444 = vmatprep.subr.mxu0 0.0
    %2445 = vmatpush1.msra.mxu0 0.0
    %2446 = vmatprep.subr.mxu0 0.0
    %2447 = vmatpush1.msra.mxu0 0.0
    %2448 = vmatprep.subr.mxu0 0.0
    %2449 = vmatpush1.msra.mxu0 0.0
    %2450 = vmatprep.subr.mxu0 0.0
    %2451 = vmatpush1.msra.mxu0 0.0
    %2452 = vmatprep.subr.mxu0 0.0
    %2453 = vmatpush1.msra.mxu0 0.0
    %2454 = vmatprep.subr.mxu0 0.0
    %2455 = vmatpush1.msra.mxu0 0.0
    %2456 = vmatprep.subr.mxu0 0.0
    %2457 = vmatpush1.msra.mxu0 0.0
    %2458 = vmatprep.subr.mxu0 0.0
    %2459 = vmatpush1.msra.mxu0 0.0
    %2460 = vmatprep.subr.mxu0 0.0
    %2461 = vmatpush1.msra.mxu0 0.0
    %2462 = vmatprep.mubr.f32.mxu0 0.0
    %2463 = vmatmul.mubr.f32.gmra.mrb[0].mxu0 %v2393
    %v2464 = vpop.f32.mrb[0].mxu0
    %v2465 = vadd.f32 %v2390, %v2464
    %v2466 = vpop.f32.mrb[0].mxu0
    %2467 = vmatprep.mubr.f32.mxu0 0.0
    %2468 = vmatmul.mubr.f32.gmra.mrb[0].mxu0 %v2396
    %v2469 = vpop.f32.mrb[0].mxu0
    %v2470 = vadd.f32 %v2390, %v2469
    %v2471 = vpop.f32.mrb[0].mxu0
    %2472 = vdwg.mxu0
    %v2473 = vmul.f32 %v2465, 0.5
    %v2474 = vmul.f32 %v2470, 0.5
    %v2475 = vmul.f32 %v2465, 0.044715
    %v2476 = vmul.f32 %v2470, 0.044715
    %v2477 = vmul.f32 %v2475, %v2465
    %v2478 = vmul.f32 %v2476, %v2470
    %v2479 = vmul.f32 %v2477, %v2465
    %v2480 = vmul.f32 %v2478, %v2470
    %v2481 = vadd.f32 %v2465, %v2479
    %v2482 = vadd.f32 %v2470, %v2480
    %v2483 = vmul.f32 %v2481, 0.7978846
    %v2484 = vmul.f32 %v2482, 0.7978846
    %v2485 = vtanh.pop %v2483
    %v2486 = vtanh.pop %v2484
    %v2487 = vadd.f32 %v2485, 1.0
    %v2488 = vadd.f32 %v2486, 1.0
    %v2489 = vmul.f32 %v2473, %v2487
    %v2490 = vmul.f32 %v2474, %v2488
    %v2491 = vld [vmem:[%s18] sm:$0xff]
    %v2492 = vld [vmem:[%s18 + $0x8] sm:$0xff]
    %v2493 = vld [vmem:[%s18 + $0x10] sm:$0xff]
    %v2494 = vld [vmem:[%s18 + $0x18] sm:$0xff]
    %v2495 = vld [vmem:[%s18 + $0x20] sm:$0xff]
    %v2496 = vld [vmem:[%s18 + $0x28] sm:$0xff]
    %v2497 = vld [vmem:[%s18 + $0x30] sm:$0xff]
    %v2498 = vld [vmem:[%s18 + $0x38] sm:$0xff]
    %v2499 = vld [vmem:[%s19] sm:$0x1]
    %v2501 = vlaneseq
    %v2502 = vshrl.u32 %v2501, 7
    %v2503 = vsub.s32 0, %v2502
    %v2504 = vrot.slane %v2499, %v2503
    %vm2506 = vcmask 523264
    %v2508 = vsel %vm2506, %v2489, 0
    %v2511 = vsel %vm2506, %v2490, 0
    %2513 = vmatprep.subr.mxu0 0.0
    %2514 = vmatpush1.msra.mxu0 %v2491
    %2515 = vmatprep.subr.mxu0 0.0
    %2516 = vmatpush1.msra.mxu0 %v2492
    %2517 = vmatprep.subr.mxu0 0.0
    %2518 = vmatpush1.msra.mxu0 %v2493
    %2519 = vmatprep.subr.mxu0 0.0
    %2520 = vmatpush1.msra.mxu0 %v2494
    %2521 = vmatprep.subr.mxu0 0.0
    %2522 = vmatpush1.msra.mxu0 %v2495
    %2523 = vmatprep.subr.mxu0 0.0
    %2524 = vmatpush1.msra.mxu0 %v2496
    %2525 = vmatprep.subr.mxu0 0.0
    %2526 = vmatpush1.msra.mxu0 %v2497
    %2527 = vmatprep.subr.mxu0 0.0
    %2528 = vmatpush1.msra.mxu0 %v2498
    %2529 = vmatprep.subr.mxu0 0.0
    %2530 = vmatpush1.msra.mxu0 0.0
    %2531 = vmatprep.subr.mxu0 0.0
    %2532 = vmatpush1.msra.mxu0 0.0
    %2533 = vmatprep.subr.mxu0 0.0
    %2534 = vmatpush1.msra.mxu0 0.0
    %2535 = vmatprep.subr.mxu0 0.0
    %2536 = vmatpush1.msra.mxu0 0.0
    %2537 = vmatprep.subr.mxu0 0.0
    %2538 = vmatpush1.msra.mxu0 0.0
    %2539 = vmatprep.subr.mxu0 0.0
    %2540 = vmatpush1.msra.mxu0 0.0
    %2541 = vmatprep.subr.mxu0 0.0
    %2542 = vmatpush1.msra.mxu0 0.0
    %2543 = vmatprep.subr.mxu0 0.0
    %2544 = vmatpush1.msra.mxu0 0.0
    %2545 = vmatprep.subr.mxu0 0.0
    %2546 = vmatpush1.msra.mxu0 0.0
    %2547 = vmatprep.subr.mxu0 0.0
    %2548 = vmatpush1.msra.mxu0 0.0
    %2549 = vmatprep.subr.mxu0 0.0
    %2550 = vmatpush1.msra.mxu0 0.0
    %2551 = vmatprep.subr.mxu0 0.0
    %2552 = vmatpush1.msra.mxu0 0.0
    %2553 = vmatprep.subr.mxu0 0.0
    %2554 = vmatpush1.msra.mxu0 0.0
    %2555 = vmatprep.subr.mxu0 0.0
    %2556 = vmatpush1.msra.mxu0 0.0
    %2557 = vmatprep.subr.mxu0 0.0
    %2558 = vmatpush1.msra.mxu0 0.0
    %2559 = vmatprep.subr.mxu0 0.0
    %2560 = vmatpush1.msra.mxu0 0.0
    %2561 = vmatprep.subr.mxu0 0.0
    %2562 = vmatpush1.msra.mxu0 0.0
    %2563 = vmatprep.subr.mxu0 0.0
    %2564 = vmatpush1.msra.mxu0 0.0
    %2565 = vmatprep.subr.mxu0 0.0
    %2566 = vmatpush1.msra.mxu0 0.0
    %2567 = vmatprep.subr.mxu0 0.0
    %2568 = vmatpush1.msra.mxu0 0.0
    %2569 = vmatprep.subr.mxu0 0.0
    %2570 = vmatpush1.msra.mxu0 0.0
    %2571 = vmatprep.subr.mxu0 0.0
    %2572 = vmatpush1.msra.mxu0 0.0
    %2573 = vmatprep.subr.mxu0 0.0
    %2574 = vmatpush1.msra.mxu0 0.0
    %2575 = vmatprep.subr.mxu0 0.0
    %2576 = vmatpush1.msra.mxu0 0.0
    %2577 = vmatprep.mubr.f32.mxu0 0.0
    %2578 = vmatmul.mubr.f32.gmra.mrb[0].mxu0 %v2508
    %v2579 = vpop.f32.mrb[0].mxu0
    %v2580 = vadd.f32 %v2504, %v2579
    %v2581 = vpop.f32.mrb[0].mxu0
    %2582 = vmatprep.mubr.f32.mxu0 0.0
    %2583 = vmatmul.mubr.f32.gmra.mrb[0].mxu0 %v2511
    %v2584 = vpop.f32.mrb[0].mxu0
    %v2585 = vadd.f32 %v2504, %v2584
    %v2586 = vpop.f32.mrb[0].mxu0
    %2587 = vdwg.mxu0
    %v2588 = vadd.f32 %v2580, %v2379
    %v2589 = vadd.f32 %v2585, %v2380
    %v2590 = vld [vmem:[%s20] sm:$0x1]
    %v2591 = vld [vmem:[%s21] sm:$0x1]
    %v2592 = vsel %vm88, %v2588, 0.0
    %2593 = vadd.xlane.f32.xlu0 %v2592
    %v2594 = vpop.xlane.xlu0 %2593
    %v2595 = vsel %vm88, %v2589, 0.0
    %2596 = vadd.xlane.f32.xlu0 %v2595
    %v2597 = vpop.xlane.xlu0 %2596
    %v2598 = vmul.f32 %v2594, %v95
    %v2599 = vmul.f32 %v2597, %v95
    %v2600 = vsub.f32 %v2588, %v2598
    %v2601 = vsub.f32 %v2589, %v2599
    %v2602 = vmul.f32 %v2600, %v2600
    %v2603 = vmul.f32 %v2601, %v2601
    %v2604 = vsel %vm88, %v2602, 0.0
    %2605 = vadd.xlane.f32.xlu0 %v2604
    %v2606 = vpop.xlane.xlu0 %2605
    %v2607 = vsel %vm88, %v2603, 0.0
    %2608 = vadd.xlane.f32.xlu0 %v2607
    %v2609 = vpop.xlane.xlu0 %2608
    %v2610 = vmul.f32 %v2606, %v95
    %v2611 = vmul.f32 %v2609, %v95
    %v2612 = vadd.f32 %v2610, 1e-12
    %v2613 = vadd.f32 %v2611, 1e-12
    %v2614 = vrsqrt.pop %v2612
    %v2615 = vrsqrt.pop %v2613
    %v2616 = vmul.f32 %v2600, %v2614
    %v2617 = vmul.f32 %v2601, %v2615
    %v2619 = vlaneseq
    %v2620 = vshrl.u32 %v2619, 7
    %v2621 = vsub.s32 0, %v2620
    %v2622 = vrot.slane %v2590, %v2621
    %v2624 = vmul.f32 %v2616, %v2622
    %v2625 = vmul.f32 %v2617, %v2622
    %v2627 = vlaneseq
    %v2628 = vshrl.u32 %v2627, 7
    %v2629 = vsub.s32 0, %v2628
    %v2630 = vrot.slane %v2591, %v2629
    %v2632 = vadd.f32 %v2624, %v2630
    %v2633 = vadd.f32 %v2625, %v2630
    %s2634 = scalar_lea.vmem %s6, 128
    %v2635 = vld [vmem:[%s2634] sm:$0xff]
    %v2636 = vld [vmem:[%s2634 + $0x8] sm:$0xff]
    %v2637 = vld [vmem:[%s2634 + $0x10] sm:$0xff]
    %v2638 = vld [vmem:[%s2634 + $0x18] sm:$0xff]
    %s2639 = scalar_lea.vmem %s7, 4
    %v2640 = vld [vmem:[%s2639] sm:$0x1]
    %v2642 = vlaneseq
    %v2643 = vshrl.u32 %v2642, 7
    %v2644 = vsub.s32 0, %v2643
    %v2645 = vrot.slane %v2640, %v2644
    %v2648 = vsel %vm88, %v2632, 0
    %v2651 = vsel %vm88, %v2633, 0
    %2653 = vmatprep.subr.mxu0 0.0
    %2654 = vmatpush1.msra.mxu0 %v2635
    %2655 = vmatprep.subr.mxu0 0.0
    %2656 = vmatpush1.msra.mxu0 %v2636
    %2657 = vmatprep.subr.mxu0 0.0
    %2658 = vmatpush1.msra.mxu0 %v2637
    %2659 = vmatprep.subr.mxu0 0.0
    %2660 = vmatpush1.msra.mxu0 %v2638
    %2661 = vmatprep.subr.mxu0 0.0
    %2662 = vmatpush1.msra.mxu0 0.0
    %2663 = vmatprep.subr.mxu0 0.0
    %2664 = vmatpush1.msra.mxu0 0.0
    %2665 = vmatprep.subr.mxu0 0.0
    %2666 = vmatpush1.msra.mxu0 0.0
    %2667 = vmatprep.subr.mxu0 0.0
    %2668 = vmatpush1.msra.mxu0 0.0
    %2669 = vmatprep.subr.mxu0 0.0
    %2670 = vmatpush1.msra.mxu0 0.0
    %2671 = vmatprep.subr.mxu0 0.0
    %2672 = vmatpush1.msra.mxu0 0.0
    %2673 = vmatprep.subr.mxu0 0.0
    %2674 = vmatpush1.msra.mxu0 0.0
    %2675 = vmatprep.subr.mxu0 0.0
    %2676 = vmatpush1.msra.mxu0 0.0
    %2677 = vmatprep.subr.mxu0 0.0
    %2678 = vmatpush1.msra.mxu0 0.0
    %2679 = vmatprep.subr.mxu0 0.0
    %2680 = vmatpush1.msra.mxu0 0.0
    %2681 = vmatprep.subr.mxu0 0.0
    %2682 = vmatpush1.msra.mxu0 0.0
    %2683 = vmatprep.subr.mxu0 0.0
    %2684 = vmatpush1.msra.mxu0 0.0
    %2685 = vmatprep.subr.mxu0 0.0
    %2686 = vmatpush1.msra.mxu0 0.0
    %2687 = vmatprep.subr.mxu0 0.0
    %2688 = vmatpush1.msra.mxu0 0.0
    %2689 = vmatprep.subr.mxu0 0.0
    %2690 = vmatpush1.msra.mxu0 0.0
    %2691 = vmatprep.subr.mxu0 0.0
    %2692 = vmatpush1.msra.mxu0 0.0
    %2693 = vmatprep.subr.mxu0 0.0
    %2694 = vmatpush1.msra.mxu0 0.0
    %2695 = vmatprep.subr.mxu0 0.0
    %2696 = vmatpush1.msra.mxu0 0.0
    %2697 = vmatprep.subr.mxu0 0.0
    %2698 = vmatpush1.msra.mxu0 0.0
    %2699 = vmatprep.subr.mxu0 0.0
    %2700 = vmatpush1.msra.mxu0 0.0
    %2701 = vmatprep.subr.mxu0 0.0
    %2702 = vmatpush1.msra.mxu0 0.0
    %2703 = vmatprep.subr.mxu0 0.0
    %2704 = vmatpush1.msra.mxu0 0.0
    %2705 = vmatprep.subr.mxu0 0.0
    %2706 = vmatpush1.msra.mxu0 0.0
    %2707 = vmatprep.subr.mxu0 0.0
    %2708 = vmatpush1.msra.mxu0 0.0
    %2709 = vmatprep.subr.mxu0 0.0
    %2710 = vmatpush1.msra.mxu0 0.0
    %2711 = vmatprep.subr.mxu0 0.0
    %2712 = vmatpush1.msra.mxu0 0.0
    %2713 = vmatprep.subr.mxu0 0.0
    %2714 = vmatpush1.msra.mxu0 0.0
    %2715 = vmatprep.subr.mxu0 0.0
    %2716 = vmatpush1.msra.mxu0 0.0
    %2717 = vmatprep.mubr.f32.mxu0 0.0
    %2718 = vmatmul.mubr.f32.gmra.mrb[0].mxu0 %v2648
    %v2719 = vpop.f32.mrb[0].mxu0
    %v2720 = vadd.f32 %v2645, %v2719
    %v2721 = vpop.f32.mrb[0].mxu0
    %2722 = vmatprep.mubr.f32.mxu0 0.0
    %2723 = vmatmul.mubr.f32.gmra.mrb[0].mxu0 %v2651
    %v2724 = vpop.f32.mrb[0].mxu0
    %v2725 = vadd.f32 %v2645, %v2724
    %v2726 = vpop.f32.mrb[0].mxu0
    %2727 = vdwg.mxu0
    %v2728 = vmul.f32 %v2720, 0.35355338
    %v2729 = vmul.f32 %v2725, 0.35355338
    %s2730 = scalar_lea.vmem %s8, 128
    %v2731 = vld [vmem:[%s2730] sm:$0xff]
    %v2732 = vld [vmem:[%s2730 + $0x8] sm:$0xff]
    %v2733 = vld [vmem:[%s2730 + $0x10] sm:$0xff]
    %v2734 = vld [vmem:[%s2730 + $0x18] sm:$0xff]
    %s2735 = scalar_lea.vmem %s9, 4
    %v2736 = vld [vmem:[%s2735] sm:$0x1]
    %v2738 = vlaneseq
    %v2739 = vshrl.u32 %v2738, 7
    %v2740 = vsub.s32 0, %v2739
    %v2741 = vrot.slane %v2736, %v2740
    %2743 = vmatprep.subr.mxu0 0.0
    %2744 = vmatpush1.msra.mxu0 %v2731
    %2745 = vmatprep.subr.mxu0 0.0
    %2746 = vmatpush1.msra.mxu0 %v2732
    %2747 = vmatprep.subr.mxu0 0.0
    %2748 = vmatpush1.msra.mxu0 %v2733
    %2749 = vmatprep.subr.mxu0 0.0
    %2750 = vmatpush1.msra.mxu0 %v2734
    %2751 = vmatprep.subr.mxu0 0.0
    %2752 = vmatpush1.msra.mxu0 0.0
    %2753 = vmatprep.subr.mxu0 0.0
    %2754 = vmatpush1.msra.mxu0 0.0
    %2755 = vmatprep.subr.mxu0 0.0
    %2756 = vmatpush1.msra.mxu0 0.0
    %2757 = vmatprep.subr.mxu0 0.0
    %2758 = vmatpush1.msra.mxu0 0.0
    %2759 = vmatprep.subr.mxu0 0.0
    %2760 = vmatpush1.msra.mxu0 0.0
    %2761 = vmatprep.subr.mxu0 0.0
    %2762 = vmatpush1.msra.mxu0 0.0
    %2763 = vmatprep.subr.mxu0 0.0
    %2764 = vmatpush1.msra.mxu0 0.0
    %2765 = vmatprep.subr.mxu0 0.0
    %2766 = vmatpush1.msra.mxu0 0.0
    %2767 = vmatprep.subr.mxu0 0.0
    %2768 = vmatpush1.msra.mxu0 0.0
    %2769 = vmatprep.subr.mxu0 0.0
    %2770 = vmatpush1.msra.mxu0 0.0
    %2771 = vmatprep.subr.mxu0 0.0
    %2772 = vmatpush1.msra.mxu0 0.0
    %2773 = vmatprep.subr.mxu0 0.0
    %2774 = vmatpush1.msra.mxu0 0.0
    %2775 = vmatprep.subr.mxu0 0.0
    %2776 = vmatpush1.msra.mxu0 0.0
    %2777 = vmatprep.subr.mxu0 0.0
    %2778 = vmatpush1.msra.mxu0 0.0
    %2779 = vmatprep.subr.mxu0 0.0
    %2780 = vmatpush1.msra.mxu0 0.0
    %2781 = vmatprep.subr.mxu0 0.0
    %2782 = vmatpush1.msra.mxu0 0.0
    %2783 = vmatprep.subr.mxu0 0.0
    %2784 = vmatpush1.msra.mxu0 0.0
    %2785 = vmatprep.subr.mxu0 0.0
    %2786 = vmatpush1.msra.mxu0 0.0
    %2787 = vmatprep.subr.mxu0 0.0
    %2788 = vmatpush1.msra.mxu0 0.0
    %2789 = vmatprep.subr.mxu0 0.0
    %2790 = vmatpush1.msra.mxu0 0.0
    %2791 = vmatprep.subr.mxu0 0.0
    %2792 = vmatpush1.msra.mxu0 0.0
    %2793 = vmatprep.subr.mxu0 0.0
    %2794 = vmatpush1.msra.mxu0 0.0
    %2795 = vmatprep.subr.mxu0 0.0
    %2796 = vmatpush1.msra.mxu0 0.0
    %2797 = vmatprep.subr.mxu0 0.0
    %2798 = vmatpush1.msra.mxu0 0.0
    %2799 = vmatprep.subr.mxu0 0.0
    %2800 = vmatpush1.msra.mxu0 0.0
    %2801 = vmatprep.subr.mxu0 0.0
    %2802 = vmatpush1.msra.mxu0 0.0
    %2803 = vmatprep.subr.mxu0 0.0
    %2804 = vmatpush1.msra.mxu0 0.0
    %2805 = vmatprep.subr.mxu0 0.0
    %2806 = vmatpush1.msra.mxu0 0.0
    %2807 = vmatprep.mubr.f32.mxu0 0.0
    %2808 = vmatmul.mubr.f32.gmra.mrb[0].mxu0 %v2648
    %v2809 = vpop.f32.mrb[0].mxu0
    %v2810 = vadd.f32 %v2741, %v2809
    %v2811 = vpop.f32.mrb[0].mxu0
    %2812 = vmatprep.mubr.f32.mxu0 0.0
    %2813 = vmatmul.mubr.f32.gmra.mrb[0].mxu0 %v2651
    %v2814 = vpop.f32.mrb[0].mxu0
    %v2815 = vadd.f32 %v2741, %v2814
    %v2816 = vpop.f32.mrb[0].mxu0
    %2817 = vdwg.mxu0
    %s2818 = scalar_lea.vmem %s10, 128
    %v2819 = vld [vmem:[%s2818] sm:$0xff]
    %v2820 = vld [vmem:[%s2818 + $0x8] sm:$0xff]
    %v2821 = vld [vmem:[%s2818 + $0x10] sm:$0xff]
    %v2822 = vld [vmem:[%s2818 + $0x18] sm:$0xff]
    %s2823 = scalar_lea.vmem %s11, 4
    %v2824 = vld [vmem:[%s2823] sm:$0x1]
    %v2826 = vlaneseq
    %v2827 = vshrl.u32 %v2826, 7
    %v2828 = vsub.s32 0, %v2827
    %v2829 = vrot.slane %v2824, %v2828
    %2831 = vmatprep.subr.mxu0 0.0
    %2832 = vmatpush1.msra.mxu0 %v2819
    %2833 = vmatprep.subr.mxu0 0.0
    %2834 = vmatpush1.msra.mxu0 %v2820
    %2835 = vmatprep.subr.mxu0 0.0
    %2836 = vmatpush1.msra.mxu0 %v2821
    %2837 = vmatprep.subr.mxu0 0.0
    %2838 = vmatpush1.msra.mxu0 %v2822
    %2839 = vmatprep.subr.mxu0 0.0
    %2840 = vmatpush1.msra.mxu0 0.0
    %2841 = vmatprep.subr.mxu0 0.0
    %2842 = vmatpush1.msra.mxu0 0.0
    %2843 = vmatprep.subr.mxu0 0.0
    %2844 = vmatpush1.msra.mxu0 0.0
    %2845 = vmatprep.subr.mxu0 0.0
    %2846 = vmatpush1.msra.mxu0 0.0
    %2847 = vmatprep.subr.mxu0 0.0
    %2848 = vmatpush1.msra.mxu0 0.0
    %2849 = vmatprep.subr.mxu0 0.0
    %2850 = vmatpush1.msra.mxu0 0.0
    %2851 = vmatprep.subr.mxu0 0.0
    %2852 = vmatpush1.msra.mxu0 0.0
    %2853 = vmatprep.subr.mxu0 0.0
    %2854 = vmatpush1.msra.mxu0 0.0
    %2855 = vmatprep.subr.mxu0 0.0
    %2856 = vmatpush1.msra.mxu0 0.0
    %2857 = vmatprep.subr.mxu0 0.0
    %2858 = vmatpush1.msra.mxu0 0.0
    %2859 = vmatprep.subr.mxu0 0.0
    %2860 = vmatpush1.msra.mxu0 0.0
    %2861 = vmatprep.subr.mxu0 0.0
    %2862 = vmatpush1.msra.mxu0 0.0
    %2863 = vmatprep.subr.mxu0 0.0
    %2864 = vmatpush1.msra.mxu0 0.0
    %2865 = vmatprep.subr.mxu0 0.0
    %2866 = vmatpush1.msra.mxu0 0.0
    %2867 = vmatprep.subr.mxu0 0.0
    %2868 = vmatpush1.msra.mxu0 0.0
    %2869 = vmatprep.subr.mxu0 0.0
    %2870 = vmatpush1.msra.mxu0 0.0
    %2871 = vmatprep.subr.mxu0 0.0
    %2872 = vmatpush1.msra.mxu0 0.0
    %2873 = vmatprep.subr.mxu0 0.0
    %2874 = vmatpush1.msra.mxu0 0.0
    %2875 = vmatprep.subr.mxu0 0.0
    %2876 = vmatpush1.msra.mxu0 0.0
    %2877 = vmatprep.subr.mxu0 0.0
    %2878 = vmatpush1.msra.mxu0 0.0
    %2879 = vmatprep.subr.mxu0 0.0
    %2880 = vmatpush1.msra.mxu0 0.0
    %2881 = vmatprep.subr.mxu0 0.0
    %2882 = vmatpush1.msra.mxu0 0.0
    %2883 = vmatprep.subr.mxu0 0.0
    %2884 = vmatpush1.msra.mxu0 0.0
    %2885 = vmatprep.subr.mxu0 0.0
    %2886 = vmatpush1.msra.mxu0 0.0
    %2887 = vmatprep.subr.mxu0 0.0
    %2888 = vmatpush1.msra.mxu0 0.0
    %2889 = vmatprep.subr.mxu0 0.0
    %2890 = vmatpush1.msra.mxu0 0.0
    %2891 = vmatprep.subr.mxu0 0.0
    %2892 = vmatpush1.msra.mxu0 0.0
    %2893 = vmatprep.subr.mxu0 0.0
    %2894 = vmatpush1.msra.mxu0 0.0
    %2895 = vmatprep.mubr.f32.mxu0 0.0
    %2896 = vmatmul.mubr.f32.gmra.mrb[0].mxu0 %v2648
    %v2897 = vpop.f32.mrb[0].mxu0
    %v2898 = vadd.f32 %v2829, %v2897
    %v2899 = vpop.f32.mrb[0].mxu0
    %2900 = vmatprep.mubr.f32.mxu0 0.0
    %2901 = vmatmul.mubr.f32.gmra.mrb[0].mxu0 %v2651
    %v2902 = vpop.f32.mrb[0].mxu0
    %v2903 = vadd.f32 %v2829, %v2902
    %v2904 = vpop.f32.mrb[0].mxu0
    %2905 = vdwg.mxu0
    %v2907 = vsel %vm431, %v2728, 0
    %v2910 = vsel %vm431, %v2729, 0
    %v2913 = vsel %vm431, %v2810, 0
    %v2916 = vsel %vm431, %v2815, 0
    %2918 = vmatprep.subr.mxu0 0.0
    %2919 = vmatpush1.xpose.msra.mxu0 %v2913
    %2920 = vmatprep.subr.mxu0 0.0
    %2921 = vmatpush1.xpose.msra.mxu0 %v2916
    %2922 = vmatprep.subr.mxu0 0.0
    %2923 = vmatpush1.xpose.msra.mxu0 0.0
    %2924 = vmatprep.subr.mxu0 0.0
    %2925 = vmatpush1.xpose.msra.mxu0 0.0
    %2926 = vmatprep.subr.mxu0 0.0
    %2927 = vmatpush1.xpose.msra.mxu0 0.0
    %2928 = vmatprep.subr.mxu0 0.0
    %2929 = vmatpush1.xpose.msra.mxu0 0.0
    %2930 = vmatprep.subr.mxu0 0.0
    %2931 = vmatpush1.xpose.msra.mxu0 0.0
    %2932 = vmatprep.subr.mxu0 0.0
    %2933 = vmatpush1.xpose.msra.mxu0 0.0
    %2934 = vmatprep.subr.mxu0 0.0
    %2935 = vmatpush1.xpose.msra.mxu0 0.0
    %2936 = vmatprep.subr.mxu0 0.0
    %2937 = vmatpush1.xpose.msra.mxu0 0.0
    %2938 = vmatprep.subr.mxu0 0.0
    %2939 = vmatpush1.xpose.msra.mxu0 0.0
    %2940 = vmatprep.subr.mxu0 0.0
    %2941 = vmatpush1.xpose.msra.mxu0 0.0
    %2942 = vmatprep.subr.mxu0 0.0
    %2943 = vmatpush1.xpose.msra.mxu0 0.0
    %2944 = vmatprep.subr.mxu0 0.0
    %2945 = vmatpush1.xpose.msra.mxu0 0.0
    %2946 = vmatprep.subr.mxu0 0.0
    %2947 = vmatpush1.xpose.msra.mxu0 0.0
    %2948 = vmatprep.subr.mxu0 0.0
    %2949 = vmatpush1.xpose.msra.mxu0 0.0
    %2950 = vmatprep.subr.mxu0 0.0
    %2951 = vmatpush1.xpose.msra.mxu0 0.0
    %2952 = vmatprep.subr.mxu0 0.0
    %2953 = vmatpush1.xpose.msra.mxu0 0.0
    %2954 = vmatprep.subr.mxu0 0.0
    %2955 = vmatpush1.xpose.msra.mxu0 0.0
    %2956 = vmatprep.subr.mxu0 0.0
    %2957 = vmatpush1.xpose.msra.mxu0 0.0
    %2958 = vmatprep.subr.mxu0 0.0
    %2959 = vmatpush1.xpose.msra.mxu0 0.0
    %2960 = vmatprep.subr.mxu0 0.0
    %2961 = vmatpush1.xpose.msra.mxu0 0.0
    %2962 = vmatprep.subr.mxu0 0.0
    %2963 = vmatpush1.xpose.msra.mxu0 0.0
    %2964 = vmatprep.subr.mxu0 0.0
    %2965 = vmatpush1.xpose.msra.mxu0 0.0
    %2966 = vmatprep.subr.mxu0 0.0
    %2967 = vmatpush1.xpose.msra.mxu0 0.0
    %2968 = vmatprep.subr.mxu0 0.0
    %2969 = vmatpush1.xpose.msra.mxu0 0.0
    %2970 = vmatprep.subr.mxu0 0.0
    %2971 = vmatpush1.xpose.msra.mxu0 0.0
    %2972 = vmatprep.subr.mxu0 0.0
    %2973 = vmatpush1.xpose.msra.mxu0 0.0
    %2974 = vmatprep.subr.mxu0 0.0
    %2975 = vmatpush1.xpose.msra.mxu0 0.0
    %2976 = vmatprep.subr.mxu0 0.0
    %2977 = vmatpush1.xpose.msra.mxu0 0.0
    %2978 = vmatprep.subr.mxu0 0.0
    %2979 = vmatpush1.xpose.msra.mxu0 0.0
    %2980 = vmatprep.subr.mxu0 0.0
    %2981 = vmatpush1.xpose.msra.mxu0 0.0
    %2982 = vmatprep.mubr.f32.mxu0 0.0
    %2983 = vmatmul.mubr.f32.gmra.mrb[0].mxu0 %v2907
    %v2984 = vpop.f32.mrb[0].mxu0
    %v2985 = vadd.f32 %v163, %v2984
    %v2986 = vpop.f32.mrb[0].mxu0
    %2987 = vmatprep.mubr.f32.mxu0 0.0
    %2988 = vmatmul.mubr.f32.gmra.mrb[0].mxu0 %v2910
    %v2989 = vpop.f32.mrb[0].mxu0
    %v2990 = vadd.f32 %v164, %v2989
    %v2991 = vpop.f32.mrb[0].mxu0
    %2992 = vdwg.mxu0
    %v2993 = vsel %vm519, %v2985, -inf
    %2994 = vmax.xlane.f32.xlu0 %v2993
    %v2995 = vpop.xlane.xlu0 %2994
    %v2996 = vsel %vm519, %v2990, -inf
    %2997 = vmax.xlane.f32.xlu0 %v2996
    %v2998 = vpop.xlane.xlu0 %2997
    %v2999 = vsub.f32 %v2985, %v2995
    %v3000 = vsub.f32 %v2990, %v2998
    %v3001 = vmul.f32 %v2999, 1.442695
    %v3002 = vpow.pop %v3001
    %v3003 = vmul.f32 %v3000, 1.442695
    %v3004 = vpow.pop %v3003
    %v3005 = vsel %vm519, %v3002, 0.0
    %3006 = vadd.xlane.f32.xlu0 %v3005
    %v3007 = vpop.xlane.xlu0 %3006
    %v3008 = vsel %vm519, %v3004, 0.0
    %3009 = vadd.xlane.f32.xlu0 %v3008
    %v3010 = vpop.xlane.xlu0 %3009
    %v3011 = vrcp.pop %v3007
    %v3012 = vrcp.pop %v3010
    %v3013 = vmul.f32 %v3002, %v3011
    %v3014 = vmul.f32 %v3004, %v3012
    %v3016 = vsel %vm519, %v3013, 0
    %v3019 = vsel %vm519, %v3014, 0
    %3021 = vmatprep.subr.mxu0 0.0
    %3022 = vmatpush1.msra.mxu0 %v2898
    %3023 = vmatprep.subr.mxu0 0.0
    %3024 = vmatpush1.msra.mxu0 %v2903
    %3025 = vmatprep.subr.mxu0 0.0
    %3026 = vmatpush1.msra.mxu0 0.0
    %3027 = vmatprep.subr.mxu0 0.0
    %3028 = vmatpush1.msra.mxu0 0.0
    %3029 = vmatprep.subr.mxu0 0.0
    %3030 = vmatpush1.msra.mxu0 0.0
    %3031 = vmatprep.subr.mxu0 0.0
    %3032 = vmatpush1.msra.mxu0 0.0
    %3033 = vmatprep.subr.mxu0 0.0
    %3034 = vmatpush1.msra.mxu0 0.0
    %3035 = vmatprep.subr.mxu0 0.0
    %3036 = vmatpush1.msra.mxu0 0.0
    %3037 = vmatprep.subr.mxu0 0.0
    %3038 = vmatpush1.msra.mxu0 0.0
    %3039 = vmatprep.subr.mxu0 0.0
    %3040 = vmatpush1.msra.mxu0 0.0
    %3041 = vmatprep.subr.mxu0 0.0
    %3042 = vmatpush1.msra.mxu0 0.0
    %3043 = vmatprep.subr.mxu0 0.0
    %3044 = vmatpush1.msra.mxu0 0.0
    %3045 = vmatprep.subr.mxu0 0.0
    %3046 = vmatpush1.msra.mxu0 0.0
    %3047 = vmatprep.subr.mxu0 0.0
    %3048 = vmatpush1.msra.mxu0 0.0
    %3049 = vmatprep.subr.mxu0 0.0
    %3050 = vmatpush1.msra.mxu0 0.0
    %3051 = vmatprep.subr.mxu0 0.0
    %3052 = vmatpush1.msra.mxu0 0.0
    %3053 = vmatprep.subr.mxu0 0.0
    %3054 = vmatpush1.msra.mxu0 0.0
    %3055 = vmatprep.subr.mxu0 0.0
    %3056 = vmatpush1.msra.mxu0 0.0
    %3057 = vmatprep.subr.mxu0 0.0
    %3058 = vmatpush1.msra.mxu0 0.0
    %3059 = vmatprep.subr.mxu0 0.0
    %3060 = vmatpush1.msra.mxu0 0.0
    %3061 = vmatprep.subr.mxu0 0.0
    %3062 = vmatpush1.msra.mxu0 0.0
    %3063 = vmatprep.subr.mxu0 0.0
    %3064 = vmatpush1.msra.mxu0 0.0
    %3065 = vmatprep.subr.mxu0 0.0
    %3066 = vmatpush1.msra.mxu0 0.0
    %3067 = vmatprep.subr.mxu0 0.0
    %3068 = vmatpush1.msra.mxu0 0.0
    %3069 = vmatprep.subr.mxu0 0.0
    %3070 = vmatpush1.msra.mxu0 0.0
    %3071 = vmatprep.subr.mxu0 0.0
    %3072 = vmatpush1.msra.mxu0 0.0
    %3073 = vmatprep.subr.mxu0 0.0
    %3074 = vmatpush1.msra.mxu0 0.0
    %3075 = vmatprep.subr.mxu0 0.0
    %3076 = vmatpush1.msra.mxu0 0.0
    %3077 = vmatprep.subr.mxu0 0.0
    %3078 = vmatpush1.msra.mxu0 0.0
    %3079 = vmatprep.subr.mxu0 0.0
    %3080 = vmatpush1.msra.mxu0 0.0
    %3081 = vmatprep.subr.mxu0 0.0
    %3082 = vmatpush1.msra.mxu0 0.0
    %3083 = vmatprep.subr.mxu0 0.0
    %3084 = vmatpush1.msra.mxu0 0.0
    %3085 = vmatprep.mubr.f32.mxu0 0.0
    %3086 = vmatmul.mubr.f32.gmra.mrb[0].mxu0 %v3016
    %v3087 = vpop.f32.mrb[0].mxu0
    %v3088 = vadd.f32 0.0, %v3087
    %v3089 = vpop.f32.mrb[0].mxu0
    %3090 = vmatprep.mubr.f32.mxu0 0.0
    %3091 = vmatmul.mubr.f32.gmra.mrb[0].mxu0 %v3019
    %v3092 = vpop.f32.mrb[0].mxu0
    %v3093 = vadd.f32 0.0, %v3092
    %v3094 = vpop.f32.mrb[0].mxu0
    %3095 = vdwg.mxu0
    %s3096 = scalar_lea.vmem %s12, 32
    %v3097 = vld [vmem:[%s3096] sm:$0xff]
    %s3098 = scalar_lea.vmem %s6, 160
    %v3099 = vld [vmem:[%s3098] sm:$0xff]
    %v3100 = vld [vmem:[%s3098 + $0x8] sm:$0xff]
    %v3101 = vld [vmem:[%s3098 + $0x10] sm:$0xff]
    %v3102 = vld [vmem:[%s3098 + $0x18] sm:$0xff]
    %s3103 = scalar_lea.vmem %s7, 5
    %v3104 = vld [vmem:[%s3103] sm:$0x1]
    %v3106 = vlaneseq
    %v3107 = vshrl.u32 %v3106, 7
    %v3108 = vsub.s32 0, %v3107
    %v3109 = vrot.slane %v3104, %v3108
    %3111 = vmatprep.subr.mxu0 0.0
    %3112 = vmatpush1.msra.mxu0 %v3099
    %3113 = vmatprep.subr.mxu0 0.0
    %3114 = vmatpush1.msra.mxu0 %v3100
    %3115 = vmatprep.subr.mxu0 0.0
    %3116 = vmatpush1.msra.mxu0 %v3101
    %3117 = vmatprep.subr.mxu0 0.0
    %3118 = vmatpush1.msra.mxu0 %v3102
    %3119 = vmatprep.subr.mxu0 0.0
    %3120 = vmatpush1.msra.mxu0 0.0
    %3121 = vmatprep.subr.mxu0 0.0
    %3122 = vmatpush1.msra.mxu0 0.0
    %3123 = vmatprep.subr.mxu0 0.0
    %3124 = vmatpush1.msra.mxu0 0.0
    %3125 = vmatprep.subr.mxu0 0.0
    %3126 = vmatpush1.msra.mxu0 0.0
    %3127 = vmatprep.subr.mxu0 0.0
    %3128 = vmatpush1.msra.mxu0 0.0
    %3129 = vmatprep.subr.mxu0 0.0
    %3130 = vmatpush1.msra.mxu0 0.0
    %3131 = vmatprep.subr.mxu0 0.0
    %3132 = vmatpush1.msra.mxu0 0.0
    %3133 = vmatprep.subr.mxu0 0.0
    %3134 = vmatpush1.msra.mxu0 0.0
    %3135 = vmatprep.subr.mxu0 0.0
    %3136 = vmatpush1.msra.mxu0 0.0
    %3137 = vmatprep.subr.mxu0 0.0
    %3138 = vmatpush1.msra.mxu0 0.0
    %3139 = vmatprep.subr.mxu0 0.0
    %3140 = vmatpush1.msra.mxu0 0.0
    %3141 = vmatprep.subr.mxu0 0.0
    %3142 = vmatpush1.msra.mxu0 0.0
    %3143 = vmatprep.subr.mxu0 0.0
    %3144 = vmatpush1.msra.mxu0 0.0
    %3145 = vmatprep.subr.mxu0 0.0
    %3146 = vmatpush1.msra.mxu0 0.0
    %3147 = vmatprep.subr.mxu0 0.0
    %3148 = vmatpush1.msra.mxu0 0.0
    %3149 = vmatprep.subr.mxu0 0.0
    %3150 = vmatpush1.msra.mxu0 0.0
    %3151 = vmatprep.subr.mxu0 0.0
    %3152 = vmatpush1.msra.mxu0 0.0
    %3153 = vmatprep.subr.mxu0 0.0
    %3154 = vmatpush1.msra.mxu0 0.0
    %3155 = vmatprep.subr.mxu0 0.0
    %3156 = vmatpush1.msra.mxu0 0.0
    %3157 = vmatprep.subr.mxu0 0.0
    %3158 = vmatpush1.msra.mxu0 0.0
    %3159 = vmatprep.subr.mxu0 0.0
    %3160 = vmatpush1.msra.mxu0 0.0
    %3161 = vmatprep.subr.mxu0 0.0
    %3162 = vmatpush1.msra.mxu0 0.0
    %3163 = vmatprep.subr.mxu0 0.0
    %3164 = vmatpush1.msra.mxu0 0.0
    %3165 = vmatprep.subr.mxu0 0.0
    %3166 = vmatpush1.msra.mxu0 0.0
    %3167 = vmatprep.subr.mxu0 0.0
    %3168 = vmatpush1.msra.mxu0 0.0
    %3169 = vmatprep.subr.mxu0 0.0
    %3170 = vmatpush1.msra.mxu0 0.0
    %3171 = vmatprep.subr.mxu0 0.0
    %3172 = vmatpush1.msra.mxu0 0.0
    %3173 = vmatprep.subr.mxu0 0.0
    %3174 = vmatpush1.msra.mxu0 0.0
    %3175 = vmatprep.mubr.f32.mxu0 0.0
    %3176 = vmatmul.mubr.f32.gmra.mrb[0].mxu0 %v2648
    %v3177 = vpop.f32.mrb[0].mxu0
    %v3178 = vadd.f32 %v3109, %v3177
    %v3179 = vpop.f32.mrb[0].mxu0
    %3180 = vmatprep.mubr.f32.mxu0 0.0
    %3181 = vmatmul.mubr.f32.gmra.mrb[0].mxu0 %v2651
    %v3182 = vpop.f32.mrb[0].mxu0
    %v3183 = vadd.f32 %v3109, %v3182
    %v3184 = vpop.f32.mrb[0].mxu0
    %3185 = vdwg.mxu0
    %v3186 = vmul.f32 %v3178, 0.35355338
    %v3187 = vmul.f32 %v3183, 0.35355338
    %s3188 = scalar_lea.vmem %s8, 160
    %v3189 = vld [vmem:[%s3188] sm:$0xff]
    %v3190 = vld [vmem:[%s3188 + $0x8] sm:$0xff]
    %v3191 = vld [vmem:[%s3188 + $0x10] sm:$0xff]
    %v3192 = vld [vmem:[%s3188 + $0x18] sm:$0xff]
    %s3193 = scalar_lea.vmem %s9, 5
    %v3194 = vld [vmem:[%s3193] sm:$0x1]
    %v3196 = vlaneseq
    %v3197 = vshrl.u32 %v3196, 7
    %v3198 = vsub.s32 0, %v3197
    %v3199 = vrot.slane %v3194, %v3198
    %3201 = vmatprep.subr.mxu0 0.0
    %3202 = vmatpush1.msra.mxu0 %v3189
    %3203 = vmatprep.subr.mxu0 0.0
    %3204 = vmatpush1.msra.mxu0 %v3190
    %3205 = vmatprep.subr.mxu0 0.0
    %3206 = vmatpush1.msra.mxu0 %v3191
    %3207 = vmatprep.subr.mxu0 0.0
    %3208 = vmatpush1.msra.mxu0 %v3192
    %3209 = vmatprep.subr.mxu0 0.0
    %3210 = vmatpush1.msra.mxu0 0.0
    %3211 = vmatprep.subr.mxu0 0.0
    %3212 = vmatpush1.msra.mxu0 0.0
    %3213 = vmatprep.subr.mxu0 0.0
    %3214 = vmatpush1.msra.mxu0 0.0
    %3215 = vmatprep.subr.mxu0 0.0
    %3216 = vmatpush1.msra.mxu0 0.0
    %3217 = vmatprep.subr.mxu0 0.0
    %3218 = vmatpush1.msra.mxu0 0.0
    %3219 = vmatprep.subr.mxu0 0.0
    %3220 = vmatpush1.msra.mxu0 0.0
    %3221 = vmatprep.subr.mxu0 0.0
    %3222 = vmatpush1.msra.mxu0 0.0
    %3223 = vmatprep.subr.mxu0 0.0
    %3224 = vmatpush1.msra.mxu0 0.0
    %3225 = vmatprep.subr.mxu0 0.0
    %3226 = vmatpush1.msra.mxu0 0.0
    %3227 = vmatprep.subr.mxu0 0.0
    %3228 = vmatpush1.msra.mxu0 0.0
    %3229 = vmatprep.subr.mxu0 0.0
    %3230 = vmatpush1.msra.mxu0 0.0
    %3231 = vmatprep.subr.mxu0 0.0
    %3232 = vmatpush1.msra.mxu0 0.0
    %3233 = vmatprep.subr.mxu0 0.0
    %3234 = vmatpush1.msra.mxu0 0.0
    %3235 = vmatprep.subr.mxu0 0.0
    %3236 = vmatpush1.msra.mxu0 0.0
    %3237 = vmatprep.subr.mxu0 0.0
    %3238 = vmatpush1.msra.mxu0 0.0
    %3239 = vmatprep.subr.mxu0 0.0
    %3240 = vmatpush1.msra.mxu0 0.0
    %3241 = vmatprep.subr.mxu0 0.0
    %3242 = vmatpush1.msra.mxu0 0.0
    %3243 = vmatprep.subr.mxu0 0.0
    %3244 = vmatpush1.msra.mxu0 0.0
    %3245 = vmatprep.subr.mxu0 0.0
    %3246 = vmatpush1.msra.mxu0 0.0
    %3247 = vmatprep.subr.mxu0 0.0
    %3248 = vmatpush1.msra.mxu0 0.0
    %3249 = vmatprep.subr.mxu0 0.0
    %3250 = vmatpush1.msra.mxu0 0.0
    %3251 = vmatprep.subr.mxu0 0.0
    %3252 = vmatpush1.msra.mxu0 0.0
    %3253 = vmatprep.subr.mxu0 0.0
    %3254 = vmatpush1.msra.mxu0 0.0
    %3255 = vmatprep.subr.mxu0 0.0
    %3256 = vmatpush1.msra.mxu0 0.0
    %3257 = vmatprep.subr.mxu0 0.0
    %3258 = vmatpush1.msra.mxu0 0.0
    %3259 = vmatprep.subr.mxu0 0.0
    %3260 = vmatpush1.msra.mxu0 0.0
    %3261 = vmatprep.subr.mxu0 0.0
    %3262 = vmatpush1.msra.mxu0 0.0
    %3263 = vmatprep.subr.mxu0 0.0
    %3264 = vmatpush1.msra.mxu0 0.0
    %3265 = vmatprep.mubr.f32.mxu0 0.0
    %3266 = vmatmul.mubr.f32.gmra.mrb[0].mxu0 %v2648
    %v3267 = vpop.f32.mrb[0].mxu0
    %v3268 = vadd.f32 %v3199, %v3267
    %v3269 = vpop.f32.mrb[0].mxu0
    %3270 = vmatprep.mubr.f32.mxu0 0.0
    %3271 = vmatmul.mubr.f32.gmra.mrb[0].mxu0 %v2651
    %v3272 = vpop.f32.mrb[0].mxu0
    %v3273 = vadd.f32 %v3199, %v3272
    %v3274 = vpop.f32.mrb[0].mxu0
    %3275 = vdwg.mxu0
    %s3276 = scalar_lea.vmem %s10, 160
    %v3277 = vld [vmem:[%s3276] sm:$0xff]
    %v3278 = vld [vmem:[%s3276 + $0x8] sm:$0xff]
    %v3279 = vld [vmem:[%s3276 + $0x10] sm:$0xff]
    %v3280 = vld [vmem:[%s3276 + $0x18] sm:$0xff]
    %s3281 = scalar_lea.vmem %s11, 5
    %v3282 = vld [vmem:[%s3281] sm:$0x1]
    %v3284 = vlaneseq
    %v3285 = vshrl.u32 %v3284, 7
    %v3286 = vsub.s32 0, %v3285
    %v3287 = vrot.slane %v3282, %v3286
    %3289 = vmatprep.subr.mxu0 0.0
    %3290 = vmatpush1.msra.mxu0 %v3277
    %3291 = vmatprep.subr.mxu0 0.0
    %3292 = vmatpush1.msra.mxu0 %v3278
    %3293 = vmatprep.subr.mxu0 0.0
    %3294 = vmatpush1.msra.mxu0 %v3279
    %3295 = vmatprep.subr.mxu0 0.0
    %3296 = vmatpush1.msra.mxu0 %v3280
    %3297 = vmatprep.subr.mxu0 0.0
    %3298 = vmatpush1.msra.mxu0 0.0
    %3299 = vmatprep.subr.mxu0 0.0
    %3300 = vmatpush1.msra.mxu0 0.0
    %3301 = vmatprep.subr.mxu0 0.0
    %3302 = vmatpush1.msra.mxu0 0.0
    %3303 = vmatprep.subr.mxu0 0.0
    %3304 = vmatpush1.msra.mxu0 0.0
    %3305 = vmatprep.subr.mxu0 0.0
    %3306 = vmatpush1.msra.mxu0 0.0
    %3307 = vmatprep.subr.mxu0 0.0
    %3308 = vmatpush1.msra.mxu0 0.0
    %3309 = vmatprep.subr.mxu0 0.0
    %3310 = vmatpush1.msra.mxu0 0.0
    %3311 = vmatprep.subr.mxu0 0.0
    %3312 = vmatpush1.msra.mxu0 0.0
    %3313 = vmatprep.subr.mxu0 0.0
    %3314 = vmatpush1.msra.mxu0 0.0
    %3315 = vmatprep.subr.mxu0 0.0
    %3316 = vmatpush1.msra.mxu0 0.0
    %3317 = vmatprep.subr.mxu0 0.0
    %3318 = vmatpush1.msra.mxu0 0.0
    %3319 = vmatprep.subr.mxu0 0.0
    %3320 = vmatpush1.msra.mxu0 0.0
    %3321 = vmatprep.subr.mxu0 0.0
    %3322 = vmatpush1.msra.mxu0 0.0
    %3323 = vmatprep.subr.mxu0 0.0
    %3324 = vmatpush1.msra.mxu0 0.0
    %3325 = vmatprep.subr.mxu0 0.0
    %3326 = vmatpush1.msra.mxu0 0.0
    %3327 = vmatprep.subr.mxu0 0.0
    %3328 = vmatpush1.msra.mxu0 0.0
    %3329 = vmatprep.subr.mxu0 0.0
    %3330 = vmatpush1.msra.mxu0 0.0
    %3331 = vmatprep.subr.mxu0 0.0
    %3332 = vmatpush1.msra.mxu0 0.0
    %3333 = vmatprep.subr.mxu0 0.0
    %3334 = vmatpush1.msra.mxu0 0.0
    %3335 = vmatprep.subr.mxu0 0.0
    %3336 = vmatpush1.msra.mxu0 0.0
    %3337 = vmatprep.subr.mxu0 0.0
    %3338 = vmatpush1.msra.mxu0 0.0
    %3339 = vmatprep.subr.mxu0 0.0
    %3340 = vmatpush1.msra.mxu0 0.0
    %3341 = vmatprep.subr.mxu0 0.0
    %3342 = vmatpush1.msra.mxu0 0.0
    %3343 = vmatprep.subr.mxu0 0.0
    %3344 = vmatpush1.msra.mxu0 0.0
    %3345 = vmatprep.subr.mxu0 0.0
    %3346 = vmatpush1.msra.mxu0 0.0
    %3347 = vmatprep.subr.mxu0 0.0
    %3348 = vmatpush1.msra.mxu0 0.0
    %3349 = vmatprep.subr.mxu0 0.0
    %3350 = vmatpush1.msra.mxu0 0.0
    %3351 = vmatprep.subr.mxu0 0.0
    %3352 = vmatpush1.msra.mxu0 0.0
    %3353 = vmatprep.mubr.f32.mxu0 0.0
    %3354 = vmatmul.mubr.f32.gmra.mrb[0].mxu0 %v2648
    %v3355 = vpop.f32.mrb[0].mxu0
    %v3356 = vadd.f32 %v3287, %v3355
    %v3357 = vpop.f32.mrb[0].mxu0
    %3358 = vmatprep.mubr.f32.mxu0 0.0
    %3359 = vmatmul.mubr.f32.gmra.mrb[0].mxu0 %v2651
    %v3360 = vpop.f32.mrb[0].mxu0
    %v3361 = vadd.f32 %v3287, %v3360
    %v3362 = vpop.f32.mrb[0].mxu0
    %3363 = vdwg.mxu0
    %v3365 = vsel %vm431, %v3186, 0
    %v3368 = vsel %vm431, %v3187, 0
    %v3371 = vsel %vm431, %v3268, 0
    %v3374 = vsel %vm431, %v3273, 0
    %3376 = vmatprep.subr.mxu0 0.0
    %3377 = vmatpush1.xpose.msra.mxu0 %v3371
    %3378 = vmatprep.subr.mxu0 0.0
    %3379 = vmatpush1.xpose.msra.mxu0 %v3374
    %3380 = vmatprep.subr.mxu0 0.0
    %3381 = vmatpush1.xpose.msra.mxu0 0.0
    %3382 = vmatprep.subr.mxu0 0.0
    %3383 = vmatpush1.xpose.msra.mxu0 0.0
    %3384 = vmatprep.subr.mxu0 0.0
    %3385 = vmatpush1.xpose.msra.mxu0 0.0
    %3386 = vmatprep.subr.mxu0 0.0
    %3387 = vmatpush1.xpose.msra.mxu0 0.0
    %3388 = vmatprep.subr.mxu0 0.0
    %3389 = vmatpush1.xpose.msra.mxu0 0.0
    %3390 = vmatprep.subr.mxu0 0.0
    %3391 = vmatpush1.xpose.msra.mxu0 0.0
    %3392 = vmatprep.subr.mxu0 0.0
    %3393 = vmatpush1.xpose.msra.mxu0 0.0
    %3394 = vmatprep.subr.mxu0 0.0
    %3395 = vmatpush1.xpose.msra.mxu0 0.0
    %3396 = vmatprep.subr.mxu0 0.0
    %3397 = vmatpush1.xpose.msra.mxu0 0.0
    %3398 = vmatprep.subr.mxu0 0.0
    %3399 = vmatpush1.xpose.msra.mxu0 0.0
    %3400 = vmatprep.subr.mxu0 0.0
    %3401 = vmatpush1.xpose.msra.mxu0 0.0
    %3402 = vmatprep.subr.mxu0 0.0
    %3403 = vmatpush1.xpose.msra.mxu0 0.0
    %3404 = vmatprep.subr.mxu0 0.0
    %3405 = vmatpush1.xpose.msra.mxu0 0.0
    %3406 = vmatprep.subr.mxu0 0.0
    %3407 = vmatpush1.xpose.msra.mxu0 0.0
    %3408 = vmatprep.subr.mxu0 0.0
    %3409 = vmatpush1.xpose.msra.mxu0 0.0
    %3410 = vmatprep.subr.mxu0 0.0
    %3411 = vmatpush1.xpose.msra.mxu0 0.0
    %3412 = vmatprep.subr.mxu0 0.0
    %3413 = vmatpush1.xpose.msra.mxu0 0.0
    %3414 = vmatprep.subr.mxu0 0.0
    %3415 = vmatpush1.xpose.msra.mxu0 0.0
    %3416 = vmatprep.subr.mxu0 0.0
    %3417 = vmatpush1.xpose.msra.mxu0 0.0
    %3418 = vmatprep.subr.mxu0 0.0
    %3419 = vmatpush1.xpose.msra.mxu0 0.0
    %3420 = vmatprep.subr.mxu0 0.0
    %3421 = vmatpush1.xpose.msra.mxu0 0.0
    %3422 = vmatprep.subr.mxu0 0.0
    %3423 = vmatpush1.xpose.msra.mxu0 0.0
    %3424 = vmatprep.subr.mxu0 0.0
    %3425 = vmatpush1.xpose.msra.mxu0 0.0
    %3426 = vmatprep.subr.mxu0 0.0
    %3427 = vmatpush1.xpose.msra.mxu0 0.0
    %3428 = vmatprep.subr.mxu0 0.0
    %3429 = vmatpush1.xpose.msra.mxu0 0.0
    %3430 = vmatprep.subr.mxu0 0.0
    %3431 = vmatpush1.xpose.msra.mxu0 0.0
    %3432 = vmatprep.subr.mxu0 0.0
    %3433 = vmatpush1.xpose.msra.mxu0 0.0
    %3434 = vmatprep.subr.mxu0 0.0
    %3435 = vmatpush1.xpose.msra.mxu0 0.0
    %3436 = vmatprep.subr.mxu0 0.0
    %3437 = vmatpush1.xpose.msra.mxu0 0.0
    %3438 = vmatprep.subr.mxu0 0.0
    %3439 = vmatpush1.xpose.msra.mxu0 0.0
    %3440 = vmatprep.mubr.f32.mxu0 0.0
    %3441 = vmatmul.mubr.f32.gmra.mrb[0].mxu0 %v3365
    %v3442 = vpop.f32.mrb[0].mxu0
    %v3443 = vadd.f32 %v163, %v3442
    %v3444 = vpop.f32.mrb[0].mxu0
    %3445 = vmatprep.mubr.f32.mxu0 0.0
    %3446 = vmatmul.mubr.f32.gmra.mrb[0].mxu0 %v3368
    %v3447 = vpop.f32.mrb[0].mxu0
    %v3448 = vadd.f32 %v164, %v3447
    %v3449 = vpop.f32.mrb[0].mxu0
    %3450 = vdwg.mxu0
    %v3451 = vsel %vm519, %v3443, -inf
    %3452 = vmax.xlane.f32.xlu0 %v3451
    %v3453 = vpop.xlane.xlu0 %3452
    %v3454 = vsel %vm519, %v3448, -inf
    %3455 = vmax.xlane.f32.xlu0 %v3454
    %v3456 = vpop.xlane.xlu0 %3455
    %v3457 = vsub.f32 %v3443, %v3453
    %v3458 = vsub.f32 %v3448, %v3456
    %v3459 = vmul.f32 %v3457, 1.442695
    %v3460 = vpow.pop %v3459
    %v3461 = vmul.f32 %v3458, 1.442695
    %v3462 = vpow.pop %v3461
    %v3463 = vsel %vm519, %v3460, 0.0
    %3464 = vadd.xlane.f32.xlu0 %v3463
    %v3465 = vpop.xlane.xlu0 %3464
    %v3466 = vsel %vm519, %v3462, 0.0
    %3467 = vadd.xlane.f32.xlu0 %v3466
    %v3468 = vpop.xlane.xlu0 %3467
    %v3469 = vrcp.pop %v3465
    %v3470 = vrcp.pop %v3468
    %v3471 = vmul.f32 %v3460, %v3469
    %v3472 = vmul.f32 %v3462, %v3470
    %v3474 = vsel %vm519, %v3471, 0
    %v3477 = vsel %vm519, %v3472, 0
    %3479 = vmatprep.subr.mxu0 0.0
    %3480 = vmatpush1.msra.mxu0 %v3356
    %3481 = vmatprep.subr.mxu0 0.0
    %3482 = vmatpush1.msra.mxu0 %v3361
    %3483 = vmatprep.subr.mxu0 0.0
    %3484 = vmatpush1.msra.mxu0 0.0
    %3485 = vmatprep.subr.mxu0 0.0
    %3486 = vmatpush1.msra.mxu0 0.0
    %3487 = vmatprep.subr.mxu0 0.0
    %3488 = vmatpush1.msra.mxu0 0.0
    %3489 = vmatprep.subr.mxu0 0.0
    %3490 = vmatpush1.msra.mxu0 0.0
    %3491 = vmatprep.subr.mxu0 0.0
    %3492 = vmatpush1.msra.mxu0 0.0
    %3493 = vmatprep.subr.mxu0 0.0
    %3494 = vmatpush1.msra.mxu0 0.0
    %3495 = vmatprep.subr.mxu0 0.0
    %3496 = vmatpush1.msra.mxu0 0.0
    %3497 = vmatprep.subr.mxu0 0.0
    %3498 = vmatpush1.msra.mxu0 0.0
    %3499 = vmatprep.subr.mxu0 0.0
    %3500 = vmatpush1.msra.mxu0 0.0
    %3501 = vmatprep.subr.mxu0 0.0
    %3502 = vmatpush1.msra.mxu0 0.0
    %3503 = vmatprep.subr.mxu0 0.0
    %3504 = vmatpush1.msra.mxu0 0.0
    %3505 = vmatprep.subr.mxu0 0.0
    %3506 = vmatpush1.msra.mxu0 0.0
    %3507 = vmatprep.subr.mxu0 0.0
    %3508 = vmatpush1.msra.mxu0 0.0
    %3509 = vmatprep.subr.mxu0 0.0
    %3510 = vmatpush1.msra.mxu0 0.0
    %3511 = vmatprep.subr.mxu0 0.0
    %3512 = vmatpush1.msra.mxu0 0.0
    %3513 = vmatprep.subr.mxu0 0.0
    %3514 = vmatpush1.msra.mxu0 0.0
    %3515 = vmatprep.subr.mxu0 0.0
    %3516 = vmatpush1.msra.mxu0 0.0
    %3517 = vmatprep.subr.mxu0 0.0
    %3518 = vmatpush1.msra.mxu0 0.0
    %3519 = vmatprep.subr.mxu0 0.0
    %3520 = vmatpush1.msra.mxu0 0.0
    %3521 = vmatprep.subr.mxu0 0.0
    %3522 = vmatpush1.msra.mxu0 0.0
    %3523 = vmatprep.subr.mxu0 0.0
    %3524 = vmatpush1.msra.mxu0 0.0
    %3525 = vmatprep.subr.mxu0 0.0
    %3526 = vmatpush1.msra.mxu0 0.0
    %3527 = vmatprep.subr.mxu0 0.0
    %3528 = vmatpush1.msra.mxu0 0.0
    %3529 = vmatprep.subr.mxu0 0.0
    %3530 = vmatpush1.msra.mxu0 0.0
    %3531 = vmatprep.subr.mxu0 0.0
    %3532 = vmatpush1.msra.mxu0 0.0
    %3533 = vmatprep.subr.mxu0 0.0
    %3534 = vmatpush1.msra.mxu0 0.0
    %3535 = vmatprep.subr.mxu0 0.0
    %3536 = vmatpush1.msra.mxu0 0.0
    %3537 = vmatprep.subr.mxu0 0.0
    %3538 = vmatpush1.msra.mxu0 0.0
    %3539 = vmatprep.subr.mxu0 0.0
    %3540 = vmatpush1.msra.mxu0 0.0
    %3541 = vmatprep.subr.mxu0 0.0
    %3542 = vmatpush1.msra.mxu0 0.0
    %3543 = vmatprep.mubr.f32.mxu0 0.0
    %3544 = vmatmul.mubr.f32.gmra.mrb[0].mxu0 %v3474
    %v3545 = vpop.f32.mrb[0].mxu0
    %v3546 = vadd.f32 0.0, %v3545
    %v3547 = vpop.f32.mrb[0].mxu0
    %3548 = vmatprep.mubr.f32.mxu0 0.0
    %3549 = vmatmul.mubr.f32.gmra.mrb[0].mxu0 %v3477
    %v3550 = vpop.f32.mrb[0].mxu0
    %v3551 = vadd.f32 0.0, %v3550
    %v3552 = vpop.f32.mrb[0].mxu0
    %3553 = vdwg.mxu0
    %s3554 = scalar_lea.vmem %s12, 40
    %v3555 = vld [vmem:[%s3554] sm:$0xff]
    %v3557 = vsel %vm431, %v3546, 0
    %v3560 = vsel %vm431, %v3551, 0
    %3562 = vmatprep.subr.mxu0 0.0
    %3563 = vmatpush1.msra.mxu0 %v3555
    %3564 = vmatprep.subr.mxu0 0.0
    %3565 = vmatpush1.msra.mxu0 0.0
    %3566 = vmatprep.subr.mxu0 0.0
    %3567 = vmatpush1.msra.mxu0 0.0
    %3568 = vmatprep.subr.mxu0 0.0
    %3569 = vmatpush1.msra.mxu0 0.0
    %3570 = vmatprep.subr.mxu0 0.0
    %3571 = vmatpush1.msra.mxu0 0.0
    %3572 = vmatprep.subr.mxu0 0.0
    %3573 = vmatpush1.msra.mxu0 0.0
    %3574 = vmatprep.subr.mxu0 0.0
    %3575 = vmatpush1.msra.mxu0 0.0
    %3576 = vmatprep.subr.mxu0 0.0
    %3577 = vmatpush1.msra.mxu0 0.0
    %3578 = vmatprep.subr.mxu0 0.0
    %3579 = vmatpush1.msra.mxu0 0.0
    %3580 = vmatprep.subr.mxu0 0.0
    %3581 = vmatpush1.msra.mxu0 0.0
    %3582 = vmatprep.subr.mxu0 0.0
    %3583 = vmatpush1.msra.mxu0 0.0
    %3584 = vmatprep.subr.mxu0 0.0
    %3585 = vmatpush1.msra.mxu0 0.0
    %3586 = vmatprep.subr.mxu0 0.0
    %3587 = vmatpush1.msra.mxu0 0.0
    %3588 = vmatprep.subr.mxu0 0.0
    %3589 = vmatpush1.msra.mxu0 0.0
    %3590 = vmatprep.subr.mxu0 0.0
    %3591 = vmatpush1.msra.mxu0 0.0
    %3592 = vmatprep.subr.mxu0 0.0
    %3593 = vmatpush1.msra.mxu0 0.0
    %3594 = vmatprep.subr.mxu0 0.0
    %3595 = vmatpush1.msra.mxu0 0.0
    %3596 = vmatprep.subr.mxu0 0.0
    %3597 = vmatpush1.msra.mxu0 0.0
    %3598 = vmatprep.subr.mxu0 0.0
    %3599 = vmatpush1.msra.mxu0 0.0
    %3600 = vmatprep.subr.mxu0 0.0
    %3601 = vmatpush1.msra.mxu0 0.0
    %3602 = vmatprep.subr.mxu0 0.0
    %3603 = vmatpush1.msra.mxu0 0.0
    %3604 = vmatprep.subr.mxu0 0.0
    %3605 = vmatpush1.msra.mxu0 0.0
    %3606 = vmatprep.subr.mxu0 0.0
    %3607 = vmatpush1.msra.mxu0 0.0
    %3608 = vmatprep.subr.mxu0 0.0
    %3609 = vmatpush1.msra.mxu0 0.0
    %3610 = vmatprep.subr.mxu0 0.0
    %3611 = vmatpush1.msra.mxu0 0.0
    %3612 = vmatprep.subr.mxu0 0.0
    %3613 = vmatpush1.msra.mxu0 0.0
    %3614 = vmatprep.subr.mxu0 0.0
    %3615 = vmatpush1.msra.mxu0 0.0
    %3616 = vmatprep.subr.mxu0 0.0
    %3617 = vmatpush1.msra.mxu0 0.0
    %3618 = vmatprep.subr.mxu0 0.0
    %3619 = vmatpush1.msra.mxu0 0.0
    %3620 = vmatprep.subr.mxu0 0.0
    %3621 = vmatpush1.msra.mxu0 0.0
    %3622 = vmatprep.subr.mxu0 0.0
    %3623 = vmatpush1.msra.mxu0 0.0
    %3624 = vmatprep.subr.mxu0 0.0
    %3625 = vmatpush1.msra.mxu0 0.0
    %3626 = vmatprep.mubr.f32.mxu0 0.0
    %3627 = vmatmul.mubr.f32.gmra.mrb[0].mxu0 %v3557
    %v3628 = vpop.f32.mrb[0].mxu0
    %v3629 = vadd.f32 0.0, %v3628
    %v3630 = vpop.f32.mrb[0].mxu0
    %3631 = vmatprep.mubr.f32.mxu0 0.0
    %3632 = vmatmul.mubr.f32.gmra.mrb[0].mxu0 %v3560
    %v3633 = vpop.f32.mrb[0].mxu0
    %v3634 = vadd.f32 0.0, %v3633
    %v3635 = vpop.f32.mrb[0].mxu0
    %3636 = vdwg.mxu0
    %v3638 = vsel %vm431, %v3088, 0
    %v3641 = vsel %vm431, %v3093, 0
    %3643 = vmatprep.subr.mxu0 0.0
    %3644 = vmatpush1.msra.mxu0 %v3097
    %3645 = vmatprep.subr.mxu0 0.0
    %3646 = vmatpush1.msra.mxu0 0.0
    %3647 = vmatprep.subr.mxu0 0.0
    %3648 = vmatpush1.msra.mxu0 0.0
    %3649 = vmatprep.subr.mxu0 0.0
    %3650 = vmatpush1.msra.mxu0 0.0
    %3651 = vmatprep.subr.mxu0 0.0
    %3652 = vmatpush1.msra.mxu0 0.0
    %3653 = vmatprep.subr.mxu0 0.0
    %3654 = vmatpush1.msra.mxu0 0.0
    %3655 = vmatprep.subr.mxu0 0.0
    %3656 = vmatpush1.msra.mxu0 0.0
    %3657 = vmatprep.subr.mxu0 0.0
    %3658 = vmatpush1.msra.mxu0 0.0
    %3659 = vmatprep.subr.mxu0 0.0
    %3660 = vmatpush1.msra.mxu0 0.0
    %3661 = vmatprep.subr.mxu0 0.0
    %3662 = vmatpush1.msra.mxu0 0.0
    %3663 = vmatprep.subr.mxu0 0.0
    %3664 = vmatpush1.msra.mxu0 0.0
    %3665 = vmatprep.subr.mxu0 0.0
    %3666 = vmatpush1.msra.mxu0 0.0
    %3667 = vmatprep.subr.mxu0 0.0
    %3668 = vmatpush1.msra.mxu0 0.0
    %3669 = vmatprep.subr.mxu0 0.0
    %3670 = vmatpush1.msra.mxu0 0.0
    %3671 = vmatprep.subr.mxu0 0.0
    %3672 = vmatpush1.msra.mxu0 0.0
    %3673 = vmatprep.subr.mxu0 0.0
    %3674 = vmatpush1.msra.mxu0 0.0
    %3675 = vmatprep.subr.mxu0 0.0
    %3676 = vmatpush1.msra.mxu0 0.0
    %3677 = vmatprep.subr.mxu0 0.0
    %3678 = vmatpush1.msra.mxu0 0.0
    %3679 = vmatprep.subr.mxu0 0.0
    %3680 = vmatpush1.msra.mxu0 0.0
    %3681 = vmatprep.subr.mxu0 0.0
    %3682 = vmatpush1.msra.mxu0 0.0
    %3683 = vmatprep.subr.mxu0 0.0
    %3684 = vmatpush1.msra.mxu0 0.0
    %3685 = vmatprep.subr.mxu0 0.0
    %3686 = vmatpush1.msra.mxu0 0.0
    %3687 = vmatprep.subr.mxu0 0.0
    %3688 = vmatpush1.msra.mxu0 0.0
    %3689 = vmatprep.subr.mxu0 0.0
    %3690 = vmatpush1.msra.mxu0 0.0
    %3691 = vmatprep.subr.mxu0 0.0
    %3692 = vmatpush1.msra.mxu0 0.0
    %3693 = vmatprep.subr.mxu0 0.0
    %3694 = vmatpush1.msra.mxu0 0.0
    %3695 = vmatprep.subr.mxu0 0.0
    %3696 = vmatpush1.msra.mxu0 0.0
    %3697 = vmatprep.subr.mxu0 0.0
    %3698 = vmatpush1.msra.mxu0 0.0
    %3699 = vmatprep.subr.mxu0 0.0
    %3700 = vmatpush1.msra.mxu0 0.0
    %3701 = vmatprep.subr.mxu0 0.0
    %3702 = vmatpush1.msra.mxu0 0.0
    %3703 = vmatprep.subr.mxu0 0.0
    %3704 = vmatpush1.msra.mxu0 0.0
    %3705 = vmatprep.subr.mxu0 0.0
    %3706 = vmatpush1.msra.mxu0 0.0
    %3707 = vmatprep.mubr.f32.mxu0 0.0
    %3708 = vmatmul.mubr.f32.gmra.mrb[0].mxu0 %v3638
    %v3709 = vpop.f32.mrb[0].mxu0
    %v3710 = vadd.f32 %v3629, %v3709
    %v3711 = vpop.f32.mrb[0].mxu0
    %3712 = vmatprep.mubr.f32.mxu0 0.0
    %3713 = vmatmul.mubr.f32.gmra.mrb[0].mxu0 %v3641
    %v3714 = vpop.f32.mrb[0].mxu0
    %v3715 = vadd.f32 %v3634, %v3714
    %v3716 = vpop.f32.mrb[0].mxu0
    %3717 = vdwg.mxu0
    %s3718 = scalar_lea.vmem %s6, 192
    %v3719 = vld [vmem:[%s3718] sm:$0xff]
    %v3720 = vld [vmem:[%s3718 + $0x8] sm:$0xff]
    %v3721 = vld [vmem:[%s3718 + $0x10] sm:$0xff]
    %v3722 = vld [vmem:[%s3718 + $0x18] sm:$0xff]
    %s3723 = scalar_lea.vmem %s7, 6
    %v3724 = vld [vmem:[%s3723] sm:$0x1]
    %v3726 = vlaneseq
    %v3727 = vshrl.u32 %v3726, 7
    %v3728 = vsub.s32 0, %v3727
    %v3729 = vrot.slane %v3724, %v3728
    %3731 = vmatprep.subr.mxu0 0.0
    %3732 = vmatpush1.msra.mxu0 %v3719
    %3733 = vmatprep.subr.mxu0 0.0
    %3734 = vmatpush1.msra.mxu0 %v3720
    %3735 = vmatprep.subr.mxu0 0.0
    %3736 = vmatpush1.msra.mxu0 %v3721
    %3737 = vmatprep.subr.mxu0 0.0
    %3738 = vmatpush1.msra.mxu0 %v3722
    %3739 = vmatprep.subr.mxu0 0.0
    %3740 = vmatpush1.msra.mxu0 0.0
    %3741 = vmatprep.subr.mxu0 0.0
    %3742 = vmatpush1.msra.mxu0 0.0
    %3743 = vmatprep.subr.mxu0 0.0
    %3744 = vmatpush1.msra.mxu0 0.0
    %3745 = vmatprep.subr.mxu0 0.0
    %3746 = vmatpush1.msra.mxu0 0.0
    %3747 = vmatprep.subr.mxu0 0.0
    %3748 = vmatpush1.msra.mxu0 0.0
    %3749 = vmatprep.subr.mxu0 0.0
    %3750 = vmatpush1.msra.mxu0 0.0
    %3751 = vmatprep.subr.mxu0 0.0
    %3752 = vmatpush1.msra.mxu0 0.0
    %3753 = vmatprep.subr.mxu0 0.0
    %3754 = vmatpush1.msra.mxu0 0.0
    %3755 = vmatprep.subr.mxu0 0.0
    %3756 = vmatpush1.msra.mxu0 0.0
    %3757 = vmatprep.subr.mxu0 0.0
    %3758 = vmatpush1.msra.mxu0 0.0
    %3759 = vmatprep.subr.mxu0 0.0
    %3760 = vmatpush1.msra.mxu0 0.0
    %3761 = vmatprep.subr.mxu0 0.0
    %3762 = vmatpush1.msra.mxu0 0.0
    %3763 = vmatprep.subr.mxu0 0.0
    %3764 = vmatpush1.msra.mxu0 0.0
    %3765 = vmatprep.subr.mxu0 0.0
    %3766 = vmatpush1.msra.mxu0 0.0
    %3767 = vmatprep.subr.mxu0 0.0
    %3768 = vmatpush1.msra.mxu0 0.0
    %3769 = vmatprep.subr.mxu0 0.0
    %3770 = vmatpush1.msra.mxu0 0.0
    %3771 = vmatprep.subr.mxu0 0.0
    %3772 = vmatpush1.msra.mxu0 0.0
    %3773 = vmatprep.subr.mxu0 0.0
    %3774 = vmatpush1.msra.mxu0 0.0
    %3775 = vmatprep.subr.mxu0 0.0
    %3776 = vmatpush1.msra.mxu0 0.0
    %3777 = vmatprep.subr.mxu0 0.0
    %3778 = vmatpush1.msra.mxu0 0.0
    %3779 = vmatprep.subr.mxu0 0.0
    %3780 = vmatpush1.msra.mxu0 0.0
    %3781 = vmatprep.subr.mxu0 0.0
    %3782 = vmatpush1.msra.mxu0 0.0
    %3783 = vmatprep.subr.mxu0 0.0
    %3784 = vmatpush1.msra.mxu0 0.0
    %3785 = vmatprep.subr.mxu0 0.0
    %3786 = vmatpush1.msra.mxu0 0.0
    %3787 = vmatprep.subr.mxu0 0.0
    %3788 = vmatpush1.msra.mxu0 0.0
    %3789 = vmatprep.subr.mxu0 0.0
    %3790 = vmatpush1.msra.mxu0 0.0
    %3791 = vmatprep.subr.mxu0 0.0
    %3792 = vmatpush1.msra.mxu0 0.0
    %3793 = vmatprep.subr.mxu0 0.0
    %3794 = vmatpush1.msra.mxu0 0.0
    %3795 = vmatprep.mubr.f32.mxu0 0.0
    %3796 = vmatmul.mubr.f32.gmra.mrb[0].mxu0 %v2648
    %v3797 = vpop.f32.mrb[0].mxu0
    %v3798 = vadd.f32 %v3729, %v3797
    %v3799 = vpop.f32.mrb[0].mxu0
    %3800 = vmatprep.mubr.f32.mxu0 0.0
    %3801 = vmatmul.mubr.f32.gmra.mrb[0].mxu0 %v2651
    %v3802 = vpop.f32.mrb[0].mxu0
    %v3803 = vadd.f32 %v3729, %v3802
    %v3804 = vpop.f32.mrb[0].mxu0
    %3805 = vdwg.mxu0
    %v3806 = vmul.f32 %v3798, 0.35355338
    %v3807 = vmul.f32 %v3803, 0.35355338
    %s3808 = scalar_lea.vmem %s8, 192
    %v3809 = vld [vmem:[%s3808] sm:$0xff]
    %v3810 = vld [vmem:[%s3808 + $0x8] sm:$0xff]
    %v3811 = vld [vmem:[%s3808 + $0x10] sm:$0xff]
    %v3812 = vld [vmem:[%s3808 + $0x18] sm:$0xff]
    %s3813 = scalar_lea.vmem %s9, 6
    %v3814 = vld [vmem:[%s3813] sm:$0x1]
    %v3816 = vlaneseq
    %v3817 = vshrl.u32 %v3816, 7
    %v3818 = vsub.s32 0, %v3817
    %v3819 = vrot.slane %v3814, %v3818
    %3821 = vmatprep.subr.mxu0 0.0
    %3822 = vmatpush1.msra.mxu0 %v3809
    %3823 = vmatprep.subr.mxu0 0.0
    %3824 = vmatpush1.msra.mxu0 %v3810
    %3825 = vmatprep.subr.mxu0 0.0
    %3826 = vmatpush1.msra.mxu0 %v3811
    %3827 = vmatprep.subr.mxu0 0.0
    %3828 = vmatpush1.msra.mxu0 %v3812
    %3829 = vmatprep.subr.mxu0 0.0
    %3830 = vmatpush1.msra.mxu0 0.0
    %3831 = vmatprep.subr.mxu0 0.0
    %3832 = vmatpush1.msra.mxu0 0.0
    %3833 = vmatprep.subr.mxu0 0.0
    %3834 = vmatpush1.msra.mxu0 0.0
    %3835 = vmatprep.subr.mxu0 0.0
    %3836 = vmatpush1.msra.mxu0 0.0
    %3837 = vmatprep.subr.mxu0 0.0
    %3838 = vmatpush1.msra.mxu0 0.0
    %3839 = vmatprep.subr.mxu0 0.0
    %3840 = vmatpush1.msra.mxu0 0.0
    %3841 = vmatprep.subr.mxu0 0.0
    %3842 = vmatpush1.msra.mxu0 0.0
    %3843 = vmatprep.subr.mxu0 0.0
    %3844 = vmatpush1.msra.mxu0 0.0
    %3845 = vmatprep.subr.mxu0 0.0
    %3846 = vmatpush1.msra.mxu0 0.0
    %3847 = vmatprep.subr.mxu0 0.0
    %3848 = vmatpush1.msra.mxu0 0.0
    %3849 = vmatprep.subr.mxu0 0.0
    %3850 = vmatpush1.msra.mxu0 0.0
    %3851 = vmatprep.subr.mxu0 0.0
    %3852 = vmatpush1.msra.mxu0 0.0
    %3853 = vmatprep.subr.mxu0 0.0
    %3854 = vmatpush1.msra.mxu0 0.0
    %3855 = vmatprep.subr.mxu0 0.0
    %3856 = vmatpush1.msra.mxu0 0.0
    %3857 = vmatprep.subr.mxu0 0.0
    %3858 = vmatpush1.msra.mxu0 0.0
    %3859 = vmatprep.subr.mxu0 0.0
    %3860 = vmatpush1.msra.mxu0 0.0
    %3861 = vmatprep.subr.mxu0 0.0
    %3862 = vmatpush1.msra.mxu0 0.0
    %3863 = vmatprep.subr.mxu0 0.0
    %3864 = vmatpush1.msra.mxu0 0.0
    %3865 = vmatprep.subr.mxu0 0.0
    %3866 = vmatpush1.msra.mxu0 0.0
    %3867 = vmatprep.subr.mxu0 0.0
    %3868 = vmatpush1.msra.mxu0 0.0
    %3869 = vmatprep.subr.mxu0 0.0
    %3870 = vmatpush1.msra.mxu0 0.0
    %3871 = vmatprep.subr.mxu0 0.0
    %3872 = vmatpush1.msra.mxu0 0.0
    %3873 = vmatprep.subr.mxu0 0.0
    %3874 = vmatpush1.msra.mxu0 0.0
    %3875 = vmatprep.subr.mxu0 0.0
    %3876 = vmatpush1.msra.mxu0 0.0
    %3877 = vmatprep.subr.mxu0 0.0
    %3878 = vmatpush1.msra.mxu0 0.0
    %3879 = vmatprep.subr.mxu0 0.0
    %3880 = vmatpush1.msra.mxu0 0.0
    %3881 = vmatprep.subr.mxu0 0.0
    %3882 = vmatpush1.msra.mxu0 0.0
    %3883 = vmatprep.subr.mxu0 0.0
    %3884 = vmatpush1.msra.mxu0 0.0
    %3885 = vmatprep.mubr.f32.mxu0 0.0
    %3886 = vmatmul.mubr.f32.gmra.mrb[0].mxu0 %v2648
    %v3887 = vpop.f32.mrb[0].mxu0
    %v3888 = vadd.f32 %v3819, %v3887
    %v3889 = vpop.f32.mrb[0].mxu0
    %3890 = vmatprep.mubr.f32.mxu0 0.0
    %3891 = vmatmul.mubr.f32.gmra.mrb[0].mxu0 %v2651
    %v3892 = vpop.f32.mrb[0].mxu0
    %v3893 = vadd.f32 %v3819, %v3892
    %v3894 = vpop.f32.mrb[0].mxu0
    %3895 = vdwg.mxu0
    %s3896 = scalar_lea.vmem %s10, 192
    %v3897 = vld [vmem:[%s3896] sm:$0xff]
    %v3898 = vld [vmem:[%s3896 + $0x8] sm:$0xff]
    %v3899 = vld [vmem:[%s3896 + $0x10] sm:$0xff]
    %v3900 = vld [vmem:[%s3896 + $0x18] sm:$0xff]
    %s3901 = scalar_lea.vmem %s11, 6
    %v3902 = vld [vmem:[%s3901] sm:$0x1]
    %v3904 = vlaneseq
    %v3905 = vshrl.u32 %v3904, 7
    %v3906 = vsub.s32 0, %v3905
    %v3907 = vrot.slane %v3902, %v3906
    %3909 = vmatprep.subr.mxu0 0.0
    %3910 = vmatpush1.msra.mxu0 %v3897
    %3911 = vmatprep.subr.mxu0 0.0
    %3912 = vmatpush1.msra.mxu0 %v3898
    %3913 = vmatprep.subr.mxu0 0.0
    %3914 = vmatpush1.msra.mxu0 %v3899
    %3915 = vmatprep.subr.mxu0 0.0
    %3916 = vmatpush1.msra.mxu0 %v3900
    %3917 = vmatprep.subr.mxu0 0.0
    %3918 = vmatpush1.msra.mxu0 0.0
    %3919 = vmatprep.subr.mxu0 0.0
    %3920 = vmatpush1.msra.mxu0 0.0
    %3921 = vmatprep.subr.mxu0 0.0
    %3922 = vmatpush1.msra.mxu0 0.0
    %3923 = vmatprep.subr.mxu0 0.0
    %3924 = vmatpush1.msra.mxu0 0.0
    %3925 = vmatprep.subr.mxu0 0.0
    %3926 = vmatpush1.msra.mxu0 0.0
    %3927 = vmatprep.subr.mxu0 0.0
    %3928 = vmatpush1.msra.mxu0 0.0
    %3929 = vmatprep.subr.mxu0 0.0
    %3930 = vmatpush1.msra.mxu0 0.0
    %3931 = vmatprep.subr.mxu0 0.0
    %3932 = vmatpush1.msra.mxu0 0.0
    %3933 = vmatprep.subr.mxu0 0.0
    %3934 = vmatpush1.msra.mxu0 0.0
    %3935 = vmatprep.subr.mxu0 0.0
    %3936 = vmatpush1.msra.mxu0 0.0
    %3937 = vmatprep.subr.mxu0 0.0
    %3938 = vmatpush1.msra.mxu0 0.0
    %3939 = vmatprep.subr.mxu0 0.0
    %3940 = vmatpush1.msra.mxu0 0.0
    %3941 = vmatprep.subr.mxu0 0.0
    %3942 = vmatpush1.msra.mxu0 0.0
    %3943 = vmatprep.subr.mxu0 0.0
    %3944 = vmatpush1.msra.mxu0 0.0
    %3945 = vmatprep.subr.mxu0 0.0
    %3946 = vmatpush1.msra.mxu0 0.0
    %3947 = vmatprep.subr.mxu0 0.0
    %3948 = vmatpush1.msra.mxu0 0.0
    %3949 = vmatprep.subr.mxu0 0.0
    %3950 = vmatpush1.msra.mxu0 0.0
    %3951 = vmatprep.subr.mxu0 0.0
    %3952 = vmatpush1.msra.mxu0 0.0
    %3953 = vmatprep.subr.mxu0 0.0
    %3954 = vmatpush1.msra.mxu0 0.0
    %3955 = vmatprep.subr.mxu0 0.0
    %3956 = vmatpush1.msra.mxu0 0.0
    %3957 = vmatprep.subr.mxu0 0.0
    %3958 = vmatpush1.msra.mxu0 0.0
    %3959 = vmatprep.subr.mxu0 0.0
    %3960 = vmatpush1.msra.mxu0 0.0
    %3961 = vmatprep.subr.mxu0 0.0
    %3962 = vmatpush1.msra.mxu0 0.0
    %3963 = vmatprep.subr.mxu0 0.0
    %3964 = vmatpush1.msra.mxu0 0.0
    %3965 = vmatprep.subr.mxu0 0.0
    %3966 = vmatpush1.msra.mxu0 0.0
    %3967 = vmatprep.subr.mxu0 0.0
    %3968 = vmatpush1.msra.mxu0 0.0
    %3969 = vmatprep.subr.mxu0 0.0
    %3970 = vmatpush1.msra.mxu0 0.0
    %3971 = vmatprep.subr.mxu0 0.0
    %3972 = vmatpush1.msra.mxu0 0.0
    %3973 = vmatprep.mubr.f32.mxu0 0.0
    %3974 = vmatmul.mubr.f32.gmra.mrb[0].mxu0 %v2648
    %v3975 = vpop.f32.mrb[0].mxu0
    %v3976 = vadd.f32 %v3907, %v3975
    %v3977 = vpop.f32.mrb[0].mxu0
    %3978 = vmatprep.mubr.f32.mxu0 0.0
    %3979 = vmatmul.mubr.f32.gmra.mrb[0].mxu0 %v2651
    %v3980 = vpop.f32.mrb[0].mxu0
    %v3981 = vadd.f32 %v3907, %v3980
    %v3982 = vpop.f32.mrb[0].mxu0
    %3983 = vdwg.mxu0
    %v3985 = vsel %vm431, %v3806, 0
    %v3988 = vsel %vm431, %v3807, 0
    %v3991 = vsel %vm431, %v3888, 0
    %v3994 = vsel %vm431, %v3893, 0
    %3996 = vmatprep.subr.mxu0 0.0
    %3997 = vmatpush1.xpose.msra.mxu0 %v3991
    %3998 = vmatprep.subr.mxu0 0.0
    %3999 = vmatpush1.xpose.msra.mxu0 %v3994
    %4000 = vmatprep.subr.mxu0 0.0
    %4001 = vmatpush1.xpose.msra.mxu0 0.0
    %4002 = vmatprep.subr.mxu0 0.0
    %4003 = vmatpush1.xpose.msra.mxu0 0.0
    %4004 = vmatprep.subr.mxu0 0.0
    %4005 = vmatpush1.xpose.msra.mxu0 0.0
    %4006 = vmatprep.subr.mxu0 0.0
    %4007 = vmatpush1.xpose.msra.mxu0 0.0
    %4008 = vmatprep.subr.mxu0 0.0
    %4009 = vmatpush1.xpose.msra.mxu0 0.0
    %4010 = vmatprep.subr.mxu0 0.0
    %4011 = vmatpush1.xpose.msra.mxu0 0.0
    %4012 = vmatprep.subr.mxu0 0.0
    %4013 = vmatpush1.xpose.msra.mxu0 0.0
    %4014 = vmatprep.subr.mxu0 0.0
    %4015 = vmatpush1.xpose.msra.mxu0 0.0
    %4016 = vmatprep.subr.mxu0 0.0
    %4017 = vmatpush1.xpose.msra.mxu0 0.0
    %4018 = vmatprep.subr.mxu0 0.0
    %4019 = vmatpush1.xpose.msra.mxu0 0.0
    %4020 = vmatprep.subr.mxu0 0.0
    %4021 = vmatpush1.xpose.msra.mxu0 0.0
    %4022 = vmatprep.subr.mxu0 0.0
    %4023 = vmatpush1.xpose.msra.mxu0 0.0
    %4024 = vmatprep.subr.mxu0 0.0
    %4025 = vmatpush1.xpose.msra.mxu0 0.0
    %4026 = vmatprep.subr.mxu0 0.0
    %4027 = vmatpush1.xpose.msra.mxu0 0.0
    %4028 = vmatprep.subr.mxu0 0.0
    %4029 = vmatpush1.xpose.msra.mxu0 0.0
    %4030 = vmatprep.subr.mxu0 0.0
    %4031 = vmatpush1.xpose.msra.mxu0 0.0
    %4032 = vmatprep.subr.mxu0 0.0
    %4033 = vmatpush1.xpose.msra.mxu0 0.0
    %4034 = vmatprep.subr.mxu0 0.0
    %4035 = vmatpush1.xpose.msra.mxu0 0.0
    %4036 = vmatprep.subr.mxu0 0.0
    %4037 = vmatpush1.xpose.msra.mxu0 0.0
    %4038 = vmatprep.subr.mxu0 0.0
    %4039 = vmatpush1.xpose.msra.mxu0 0.0
    %4040 = vmatprep.subr.mxu0 0.0
    %4041 = vmatpush1.xpose.msra.mxu0 0.0
    %4042 = vmatprep.subr.mxu0 0.0
    %4043 = vmatpush1.xpose.msra.mxu0 0.0
    %4044 = vmatprep.subr.mxu0 0.0
    %4045 = vmatpush1.xpose.msra.mxu0 0.0
    %4046 = vmatprep.subr.mxu0 0.0
    %4047 = vmatpush1.xpose.msra.mxu0 0.0
    %4048 = vmatprep.subr.mxu0 0.0
    %4049 = vmatpush1.xpose.msra.mxu0 0.0
    %4050 = vmatprep.subr.mxu0 0.0
    %4051 = vmatpush1.xpose.msra.mxu0 0.0
    %4052 = vmatprep.subr.mxu0 0.0
    %4053 = vmatpush1.xpose.msra.mxu0 0.0
    %4054 = vmatprep.subr.mxu0 0.0
    %4055 = vmatpush1.xpose.msra.mxu0 0.0
    %4056 = vmatprep.subr.mxu0 0.0
    %4057 = vmatpush1.xpose.msra.mxu0 0.0
    %4058 = vmatprep.subr.mxu0 0.0
    %4059 = vmatpush1.xpose.msra.mxu0 0.0
    %4060 = vmatprep.mubr.f32.mxu0 0.0
    %4061 = vmatmul.mubr.f32.gmra.mrb[0].mxu0 %v3985
    %v4062 = vpop.f32.mrb[0].mxu0
    %v4063 = vadd.f32 %v163, %v4062
    %v4064 = vpop.f32.mrb[0].mxu0
    %4065 = vmatprep.mubr.f32.mxu0 0.0
    %4066 = vmatmul.mubr.f32.gmra.mrb[0].mxu0 %v3988
    %v4067 = vpop.f32.mrb[0].mxu0
    %v4068 = vadd.f32 %v164, %v4067
    %v4069 = vpop.f32.mrb[0].mxu0
    %4070 = vdwg.mxu0
    %v4071 = vsel %vm519, %v4063, -inf
    %4072 = vmax.xlane.f32.xlu0 %v4071
    %v4073 = vpop.xlane.xlu0 %4072
    %v4074 = vsel %vm519, %v4068, -inf
    %4075 = vmax.xlane.f32.xlu0 %v4074
    %v4076 = vpop.xlane.xlu0 %4075
    %v4077 = vsub.f32 %v4063, %v4073
    %v4078 = vsub.f32 %v4068, %v4076
    %v4079 = vmul.f32 %v4077, 1.442695
    %v4080 = vpow.pop %v4079
    %v4081 = vmul.f32 %v4078, 1.442695
    %v4082 = vpow.pop %v4081
    %v4083 = vsel %vm519, %v4080, 0.0
    %4084 = vadd.xlane.f32.xlu0 %v4083
    %v4085 = vpop.xlane.xlu0 %4084
    %v4086 = vsel %vm519, %v4082, 0.0
    %4087 = vadd.xlane.f32.xlu0 %v4086
    %v4088 = vpop.xlane.xlu0 %4087
    %v4089 = vrcp.pop %v4085
    %v4090 = vrcp.pop %v4088
    %v4091 = vmul.f32 %v4080, %v4089
    %v4092 = vmul.f32 %v4082, %v4090
    %v4094 = vsel %vm519, %v4091, 0
    %v4097 = vsel %vm519, %v4092, 0
    %4099 = vmatprep.subr.mxu0 0.0
    %4100 = vmatpush1.msra.mxu0 %v3976
    %4101 = vmatprep.subr.mxu0 0.0
    %4102 = vmatpush1.msra.mxu0 %v3981
    %4103 = vmatprep.subr.mxu0 0.0
    %4104 = vmatpush1.msra.mxu0 0.0
    %4105 = vmatprep.subr.mxu0 0.0
    %4106 = vmatpush1.msra.mxu0 0.0
    %4107 = vmatprep.subr.mxu0 0.0
    %4108 = vmatpush1.msra.mxu0 0.0
    %4109 = vmatprep.subr.mxu0 0.0
    %4110 = vmatpush1.msra.mxu0 0.0
    %4111 = vmatprep.subr.mxu0 0.0
    %4112 = vmatpush1.msra.mxu0 0.0
    %4113 = vmatprep.subr.mxu0 0.0
    %4114 = vmatpush1.msra.mxu0 0.0
    %4115 = vmatprep.subr.mxu0 0.0
    %4116 = vmatpush1.msra.mxu0 0.0
    %4117 = vmatprep.subr.mxu0 0.0
    %4118 = vmatpush1.msra.mxu0 0.0
    %4119 = vmatprep.subr.mxu0 0.0
    %4120 = vmatpush1.msra.mxu0 0.0
    %4121 = vmatprep.subr.mxu0 0.0
    %4122 = vmatpush1.msra.mxu0 0.0
    %4123 = vmatprep.subr.mxu0 0.0
    %4124 = vmatpush1.msra.mxu0 0.0
    %4125 = vmatprep.subr.mxu0 0.0
    %4126 = vmatpush1.msra.mxu0 0.0
    %4127 = vmatprep.subr.mxu0 0.0
    %4128 = vmatpush1.msra.mxu0 0.0
    %4129 = vmatprep.subr.mxu0 0.0
    %4130 = vmatpush1.msra.mxu0 0.0
    %4131 = vmatprep.subr.mxu0 0.0
    %4132 = vmatpush1.msra.mxu0 0.0
    %4133 = vmatprep.subr.mxu0 0.0
    %4134 = vmatpush1.msra.mxu0 0.0
    %4135 = vmatprep.subr.mxu0 0.0
    %4136 = vmatpush1.msra.mxu0 0.0
    %4137 = vmatprep.subr.mxu0 0.0
    %4138 = vmatpush1.msra.mxu0 0.0
    %4139 = vmatprep.subr.mxu0 0.0
    %4140 = vmatpush1.msra.mxu0 0.0
    %4141 = vmatprep.subr.mxu0 0.0
    %4142 = vmatpush1.msra.mxu0 0.0
    %4143 = vmatprep.subr.mxu0 0.0
    %4144 = vmatpush1.msra.mxu0 0.0
    %4145 = vmatprep.subr.mxu0 0.0
    %4146 = vmatpush1.msra.mxu0 0.0
    %4147 = vmatprep.subr.mxu0 0.0
    %4148 = vmatpush1.msra.mxu0 0.0
    %4149 = vmatprep.subr.mxu0 0.0
    %4150 = vmatpush1.msra.mxu0 0.0
    %4151 = vmatprep.subr.mxu0 0.0
    %4152 = vmatpush1.msra.mxu0 0.0
    %4153 = vmatprep.subr.mxu0 0.0
    %4154 = vmatpush1.msra.mxu0 0.0
    %4155 = vmatprep.subr.mxu0 0.0
    %4156 = vmatpush1.msra.mxu0 0.0
    %4157 = vmatprep.subr.mxu0 0.0
    %4158 = vmatpush1.msra.mxu0 0.0
    %4159 = vmatprep.subr.mxu0 0.0
    %4160 = vmatpush1.msra.mxu0 0.0
    %4161 = vmatprep.subr.mxu0 0.0
    %4162 = vmatpush1.msra.mxu0 0.0
    %4163 = vmatprep.mubr.f32.mxu0 0.0
    %4164 = vmatmul.mubr.f32.gmra.mrb[0].mxu0 %v4094
    %v4165 = vpop.f32.mrb[0].mxu0
    %v4166 = vadd.f32 0.0, %v4165
    %v4167 = vpop.f32.mrb[0].mxu0
    %4168 = vmatprep.mubr.f32.mxu0 0.0
    %4169 = vmatmul.mubr.f32.gmra.mrb[0].mxu0 %v4097
    %v4170 = vpop.f32.mrb[0].mxu0
    %v4171 = vadd.f32 0.0, %v4170
    %v4172 = vpop.f32.mrb[0].mxu0
    %4173 = vdwg.mxu0
    %s4174 = scalar_lea.vmem %s12, 48
    %v4175 = vld [vmem:[%s4174] sm:$0xff]
    %v4177 = vsel %vm431, %v4166, 0
    %v4180 = vsel %vm431, %v4171, 0
    %4182 = vmatprep.subr.mxu0 0.0
    %4183 = vmatpush1.msra.mxu0 %v4175
    %4184 = vmatprep.subr.mxu0 0.0
    %4185 = vmatpush1.msra.mxu0 0.0
    %4186 = vmatprep.subr.mxu0 0.0
    %4187 = vmatpush1.msra.mxu0 0.0
    %4188 = vmatprep.subr.mxu0 0.0
    %4189 = vmatpush1.msra.mxu0 0.0
    %4190 = vmatprep.subr.mxu0 0.0
    %4191 = vmatpush1.msra.mxu0 0.0
    %4192 = vmatprep.subr.mxu0 0.0
    %4193 = vmatpush1.msra.mxu0 0.0
    %4194 = vmatprep.subr.mxu0 0.0
    %4195 = vmatpush1.msra.mxu0 0.0
    %4196 = vmatprep.subr.mxu0 0.0
    %4197 = vmatpush1.msra.mxu0 0.0
    %4198 = vmatprep.subr.mxu0 0.0
    %4199 = vmatpush1.msra.mxu0 0.0
    %4200 = vmatprep.subr.mxu0 0.0
    %4201 = vmatpush1.msra.mxu0 0.0
    %4202 = vmatprep.subr.mxu0 0.0
    %4203 = vmatpush1.msra.mxu0 0.0
    %4204 = vmatprep.subr.mxu0 0.0
    %4205 = vmatpush1.msra.mxu0 0.0
    %4206 = vmatprep.subr.mxu0 0.0
    %4207 = vmatpush1.msra.mxu0 0.0
    %4208 = vmatprep.subr.mxu0 0.0
    %4209 = vmatpush1.msra.mxu0 0.0
    %4210 = vmatprep.subr.mxu0 0.0
    %4211 = vmatpush1.msra.mxu0 0.0
    %4212 = vmatprep.subr.mxu0 0.0
    %4213 = vmatpush1.msra.mxu0 0.0
    %4214 = vmatprep.subr.mxu0 0.0
    %4215 = vmatpush1.msra.mxu0 0.0
    %4216 = vmatprep.subr.mxu0 0.0
    %4217 = vmatpush1.msra.mxu0 0.0
    %4218 = vmatprep.subr.mxu0 0.0
    %4219 = vmatpush1.msra.mxu0 0.0
    %4220 = vmatprep.subr.mxu0 0.0
    %4221 = vmatpush1.msra.mxu0 0.0
    %4222 = vmatprep.subr.mxu0 0.0
    %4223 = vmatpush1.msra.mxu0 0.0
    %4224 = vmatprep.subr.mxu0 0.0
    %4225 = vmatpush1.msra.mxu0 0.0
    %4226 = vmatprep.subr.mxu0 0.0
    %4227 = vmatpush1.msra.mxu0 0.0
    %4228 = vmatprep.subr.mxu0 0.0
    %4229 = vmatpush1.msra.mxu0 0.0
    %4230 = vmatprep.subr.mxu0 0.0
    %4231 = vmatpush1.msra.mxu0 0.0
    %4232 = vmatprep.subr.mxu0 0.0
    %4233 = vmatpush1.msra.mxu0 0.0
    %4234 = vmatprep.subr.mxu0 0.0
    %4235 = vmatpush1.msra.mxu0 0.0
    %4236 = vmatprep.subr.mxu0 0.0
    %4237 = vmatpush1.msra.mxu0 0.0
    %4238 = vmatprep.subr.mxu0 0.0
    %4239 = vmatpush1.msra.mxu0 0.0
    %4240 = vmatprep.subr.mxu0 0.0
    %4241 = vmatpush1.msra.mxu0 0.0
    %4242 = vmatprep.subr.mxu0 0.0
    %4243 = vmatpush1.msra.mxu0 0.0
    %4244 = vmatprep.subr.mxu0 0.0
    %4245 = vmatpush1.msra.mxu0 0.0
    %4246 = vmatprep.mubr.f32.mxu0 0.0
    %4247 = vmatmul.mubr.f32.gmra.mrb[0].mxu0 %v4177
    %v4248 = vpop.f32.mrb[0].mxu0
    %v4249 = vadd.f32 0.0, %v4248
    %v4250 = vpop.f32.mrb[0].mxu0
    %4251 = vmatprep.mubr.f32.mxu0 0.0
    %4252 = vmatmul.mubr.f32.gmra.mrb[0].mxu0 %v4180
    %v4253 = vpop.f32.mrb[0].mxu0
    %v4254 = vadd.f32 0.0, %v4253
    %v4255 = vpop.f32.mrb[0].mxu0
    %4256 = vdwg.mxu0
    %v4257 = vadd.f32 %v3710, %v4249
    %v4258 = vadd.f32 %v3715, %v4254
    %s4259 = scalar_lea.vmem %s6, 224
    %v4260 = vld [vmem:[%s4259] sm:$0xff]
    %v4261 = vld [vmem:[%s4259 + $0x8] sm:$0xff]
    %v4262 = vld [vmem:[%s4259 + $0x10] sm:$0xff]
    %v4263 = vld [vmem:[%s4259 + $0x18] sm:$0xff]
    %s4264 = scalar_lea.vmem %s7, 7
    %v4265 = vld [vmem:[%s4264] sm:$0x1]
    %v4267 = vlaneseq
    %v4268 = vshrl.u32 %v4267, 7
    %v4269 = vsub.s32 0, %v4268
    %v4270 = vrot.slane %v4265, %v4269
    %4272 = vmatprep.subr.mxu0 0.0
    %4273 = vmatpush1.msra.mxu0 %v4260
    %4274 = vmatprep.subr.mxu0 0.0
    %4275 = vmatpush1.msra.mxu0 %v4261
    %4276 = vmatprep.subr.mxu0 0.0
    %4277 = vmatpush1.msra.mxu0 %v4262
    %4278 = vmatprep.subr.mxu0 0.0
    %4279 = vmatpush1.msra.mxu0 %v4263
    %4280 = vmatprep.subr.mxu0 0.0
    %4281 = vmatpush1.msra.mxu0 0.0
    %4282 = vmatprep.subr.mxu0 0.0
    %4283 = vmatpush1.msra.mxu0 0.0
    %4284 = vmatprep.subr.mxu0 0.0
    %4285 = vmatpush1.msra.mxu0 0.0
    %4286 = vmatprep.subr.mxu0 0.0
    %4287 = vmatpush1.msra.mxu0 0.0
    %4288 = vmatprep.subr.mxu0 0.0
    %4289 = vmatpush1.msra.mxu0 0.0
    %4290 = vmatprep.subr.mxu0 0.0
    %4291 = vmatpush1.msra.mxu0 0.0
    %4292 = vmatprep.subr.mxu0 0.0
    %4293 = vmatpush1.msra.mxu0 0.0
    %4294 = vmatprep.subr.mxu0 0.0
    %4295 = vmatpush1.msra.mxu0 0.0
    %4296 = vmatprep.subr.mxu0 0.0
    %4297 = vmatpush1.msra.mxu0 0.0
    %4298 = vmatprep.subr.mxu0 0.0
    %4299 = vmatpush1.msra.mxu0 0.0
    %4300 = vmatprep.subr.mxu0 0.0
    %4301 = vmatpush1.msra.mxu0 0.0
    %4302 = vmatprep.subr.mxu0 0.0
    %4303 = vmatpush1.msra.mxu0 0.0
    %4304 = vmatprep.subr.mxu0 0.0
    %4305 = vmatpush1.msra.mxu0 0.0
    %4306 = vmatprep.subr.mxu0 0.0
    %4307 = vmatpush1.msra.mxu0 0.0
    %4308 = vmatprep.subr.mxu0 0.0
    %4309 = vmatpush1.msra.mxu0 0.0
    %4310 = vmatprep.subr.mxu0 0.0
    %4311 = vmatpush1.msra.mxu0 0.0
    %4312 = vmatprep.subr.mxu0 0.0
    %4313 = vmatpush1.msra.mxu0 0.0
    %4314 = vmatprep.subr.mxu0 0.0
    %4315 = vmatpush1.msra.mxu0 0.0
    %4316 = vmatprep.subr.mxu0 0.0
    %4317 = vmatpush1.msra.mxu0 0.0
    %4318 = vmatprep.subr.mxu0 0.0
    %4319 = vmatpush1.msra.mxu0 0.0
    %4320 = vmatprep.subr.mxu0 0.0
    %4321 = vmatpush1.msra.mxu0 0.0
    %4322 = vmatprep.subr.mxu0 0.0
    %4323 = vmatpush1.msra.mxu0 0.0
    %4324 = vmatprep.subr.mxu0 0.0
    %4325 = vmatpush1.msra.mxu0 0.0
    %4326 = vmatprep.subr.mxu0 0.0
    %4327 = vmatpush1.msra.mxu0 0.0
    %4328 = vmatprep.subr.mxu0 0.0
    %4329 = vmatpush1.msra.mxu0 0.0
    %4330 = vmatprep.subr.mxu0 0.0
    %4331 = vmatpush1.msra.mxu0 0.0
    %4332 = vmatprep.subr.mxu0 0.0
    %4333 = vmatpush1.msra.mxu0 0.0
    %4334 = vmatprep.subr.mxu0 0.0
    %4335 = vmatpush1.msra.mxu0 0.0
    %4336 = vmatprep.mubr.f32.mxu0 0.0
    %4337 = vmatmul.mubr.f32.gmra.mrb[0].mxu0 %v2648
    %v4338 = vpop.f32.mrb[0].mxu0
    %v4339 = vadd.f32 %v4270, %v4338
    %v4340 = vpop.f32.mrb[0].mxu0
    %4341 = vmatprep.mubr.f32.mxu0 0.0
    %4342 = vmatmul.mubr.f32.gmra.mrb[0].mxu0 %v2651
    %v4343 = vpop.f32.mrb[0].mxu0
    %v4344 = vadd.f32 %v4270, %v4343
    %v4345 = vpop.f32.mrb[0].mxu0
    %4346 = vdwg.mxu0
    %v4347 = vmul.f32 %v4339, 0.35355338
    %v4348 = vmul.f32 %v4344, 0.35355338
    %s4349 = scalar_lea.vmem %s8, 224
    %v4350 = vld [vmem:[%s4349] sm:$0xff]
    %v4351 = vld [vmem:[%s4349 + $0x8] sm:$0xff]
    %v4352 = vld [vmem:[%s4349 + $0x10] sm:$0xff]
    %v4353 = vld [vmem:[%s4349 + $0x18] sm:$0xff]
    %s4354 = scalar_lea.vmem %s9, 7
    %v4355 = vld [vmem:[%s4354] sm:$0x1]
    %v4357 = vlaneseq
    %v4358 = vshrl.u32 %v4357, 7
    %v4359 = vsub.s32 0, %v4358
    %v4360 = vrot.slane %v4355, %v4359
    %4362 = vmatprep.subr.mxu0 0.0
    %4363 = vmatpush1.msra.mxu0 %v4350
    %4364 = vmatprep.subr.mxu0 0.0
    %4365 = vmatpush1.msra.mxu0 %v4351
    %4366 = vmatprep.subr.mxu0 0.0
    %4367 = vmatpush1.msra.mxu0 %v4352
    %4368 = vmatprep.subr.mxu0 0.0
    %4369 = vmatpush1.msra.mxu0 %v4353
    %4370 = vmatprep.subr.mxu0 0.0
    %4371 = vmatpush1.msra.mxu0 0.0
    %4372 = vmatprep.subr.mxu0 0.0
    %4373 = vmatpush1.msra.mxu0 0.0
    %4374 = vmatprep.subr.mxu0 0.0
    %4375 = vmatpush1.msra.mxu0 0.0
    %4376 = vmatprep.subr.mxu0 0.0
    %4377 = vmatpush1.msra.mxu0 0.0
    %4378 = vmatprep.subr.mxu0 0.0
    %4379 = vmatpush1.msra.mxu0 0.0
    %4380 = vmatprep.subr.mxu0 0.0
    %4381 = vmatpush1.msra.mxu0 0.0
    %4382 = vmatprep.subr.mxu0 0.0
    %4383 = vmatpush1.msra.mxu0 0.0
    %4384 = vmatprep.subr.mxu0 0.0
    %4385 = vmatpush1.msra.mxu0 0.0
    %4386 = vmatprep.subr.mxu0 0.0
    %4387 = vmatpush1.msra.mxu0 0.0
    %4388 = vmatprep.subr.mxu0 0.0
    %4389 = vmatpush1.msra.mxu0 0.0
    %4390 = vmatprep.subr.mxu0 0.0
    %4391 = vmatpush1.msra.mxu0 0.0
    %4392 = vmatprep.subr.mxu0 0.0
    %4393 = vmatpush1.msra.mxu0 0.0
    %4394 = vmatprep.subr.mxu0 0.0
    %4395 = vmatpush1.msra.mxu0 0.0
    %4396 = vmatprep.subr.mxu0 0.0
    %4397 = vmatpush1.msra.mxu0 0.0
    %4398 = vmatprep.subr.mxu0 0.0
    %4399 = vmatpush1.msra.mxu0 0.0
    %4400 = vmatprep.subr.mxu0 0.0
    %4401 = vmatpush1.msra.mxu0 0.0
    %4402 = vmatprep.subr.mxu0 0.0
    %4403 = vmatpush1.msra.mxu0 0.0
    %4404 = vmatprep.subr.mxu0 0.0
    %4405 = vmatpush1.msra.mxu0 0.0
    %4406 = vmatprep.subr.mxu0 0.0
    %4407 = vmatpush1.msra.mxu0 0.0
    %4408 = vmatprep.subr.mxu0 0.0
    %4409 = vmatpush1.msra.mxu0 0.0
    %4410 = vmatprep.subr.mxu0 0.0
    %4411 = vmatpush1.msra.mxu0 0.0
    %4412 = vmatprep.subr.mxu0 0.0
    %4413 = vmatpush1.msra.mxu0 0.0
    %4414 = vmatprep.subr.mxu0 0.0
    %4415 = vmatpush1.msra.mxu0 0.0
    %4416 = vmatprep.subr.mxu0 0.0
    %4417 = vmatpush1.msra.mxu0 0.0
    %4418 = vmatprep.subr.mxu0 0.0
    %4419 = vmatpush1.msra.mxu0 0.0
    %4420 = vmatprep.subr.mxu0 0.0
    %4421 = vmatpush1.msra.mxu0 0.0
    %4422 = vmatprep.subr.mxu0 0.0
    %4423 = vmatpush1.msra.mxu0 0.0
    %4424 = vmatprep.subr.mxu0 0.0
    %4425 = vmatpush1.msra.mxu0 0.0
    %4426 = vmatprep.mubr.f32.mxu0 0.0
    %4427 = vmatmul.mubr.f32.gmra.mrb[0].mxu0 %v2648
    %v4428 = vpop.f32.mrb[0].mxu0
    %v4429 = vadd.f32 %v4360, %v4428
    %v4430 = vpop.f32.mrb[0].mxu0
    %4431 = vmatprep.mubr.f32.mxu0 0.0
    %4432 = vmatmul.mubr.f32.gmra.mrb[0].mxu0 %v2651
    %v4433 = vpop.f32.mrb[0].mxu0
    %v4434 = vadd.f32 %v4360, %v4433
    %v4435 = vpop.f32.mrb[0].mxu0
    %4436 = vdwg.mxu0
    %s4437 = scalar_lea.vmem %s10, 224
    %v4438 = vld [vmem:[%s4437] sm:$0xff]
    %v4439 = vld [vmem:[%s4437 + $0x8] sm:$0xff]
    %v4440 = vld [vmem:[%s4437 + $0x10] sm:$0xff]
    %v4441 = vld [vmem:[%s4437 + $0x18] sm:$0xff]
    %s4442 = scalar_lea.vmem %s11, 7
    %v4443 = vld [vmem:[%s4442] sm:$0x1]
    %v4445 = vlaneseq
    %v4446 = vshrl.u32 %v4445, 7
    %v4447 = vsub.s32 0, %v4446
    %v4448 = vrot.slane %v4443, %v4447
    %4450 = vmatprep.subr.mxu0 0.0
    %4451 = vmatpush1.msra.mxu0 %v4438
    %4452 = vmatprep.subr.mxu0 0.0
    %4453 = vmatpush1.msra.mxu0 %v4439
    %4454 = vmatprep.subr.mxu0 0.0
    %4455 = vmatpush1.msra.mxu0 %v4440
    %4456 = vmatprep.subr.mxu0 0.0
    %4457 = vmatpush1.msra.mxu0 %v4441
    %4458 = vmatprep.subr.mxu0 0.0
    %4459 = vmatpush1.msra.mxu0 0.0
    %4460 = vmatprep.subr.mxu0 0.0
    %4461 = vmatpush1.msra.mxu0 0.0
    %4462 = vmatprep.subr.mxu0 0.0
    %4463 = vmatpush1.msra.mxu0 0.0
    %4464 = vmatprep.subr.mxu0 0.0
    %4465 = vmatpush1.msra.mxu0 0.0
    %4466 = vmatprep.subr.mxu0 0.0
    %4467 = vmatpush1.msra.mxu0 0.0
    %4468 = vmatprep.subr.mxu0 0.0
    %4469 = vmatpush1.msra.mxu0 0.0
    %4470 = vmatprep.subr.mxu0 0.0
    %4471 = vmatpush1.msra.mxu0 0.0
    %4472 = vmatprep.subr.mxu0 0.0
    %4473 = vmatpush1.msra.mxu0 0.0
    %4474 = vmatprep.subr.mxu0 0.0
    %4475 = vmatpush1.msra.mxu0 0.0
    %4476 = vmatprep.subr.mxu0 0.0
    %4477 = vmatpush1.msra.mxu0 0.0
    %4478 = vmatprep.subr.mxu0 0.0
    %4479 = vmatpush1.msra.mxu0 0.0
    %4480 = vmatprep.subr.mxu0 0.0
    %4481 = vmatpush1.msra.mxu0 0.0
    %4482 = vmatprep.subr.mxu0 0.0
    %4483 = vmatpush1.msra.mxu0 0.0
    %4484 = vmatprep.subr.mxu0 0.0
    %4485 = vmatpush1.msra.mxu0 0.0
    %4486 = vmatprep.subr.mxu0 0.0
    %4487 = vmatpush1.msra.mxu0 0.0
    %4488 = vmatprep.subr.mxu0 0.0
    %4489 = vmatpush1.msra.mxu0 0.0
    %4490 = vmatprep.subr.mxu0 0.0
    %4491 = vmatpush1.msra.mxu0 0.0
    %4492 = vmatprep.subr.mxu0 0.0
    %4493 = vmatpush1.msra.mxu0 0.0
    %4494 = vmatprep.subr.mxu0 0.0
    %4495 = vmatpush1.msra.mxu0 0.0
    %4496 = vmatprep.subr.mxu0 0.0
    %4497 = vmatpush1.msra.mxu0 0.0
    %4498 = vmatprep.subr.mxu0 0.0
    %4499 = vmatpush1.msra.mxu0 0.0
    %4500 = vmatprep.subr.mxu0 0.0
    %4501 = vmatpush1.msra.mxu0 0.0
    %4502 = vmatprep.subr.mxu0 0.0
    %4503 = vmatpush1.msra.mxu0 0.0
    %4504 = vmatprep.subr.mxu0 0.0
    %4505 = vmatpush1.msra.mxu0 0.0
    %4506 = vmatprep.subr.mxu0 0.0
    %4507 = vmatpush1.msra.mxu0 0.0
    %4508 = vmatprep.subr.mxu0 0.0
    %4509 = vmatpush1.msra.mxu0 0.0
    %4510 = vmatprep.subr.mxu0 0.0
    %4511 = vmatpush1.msra.mxu0 0.0
    %4512 = vmatprep.subr.mxu0 0.0
    %4513 = vmatpush1.msra.mxu0 0.0
    %4514 = vmatprep.mubr.f32.mxu0 0.0
    %4515 = vmatmul.mubr.f32.gmra.mrb[0].mxu0 %v2648
    %v4516 = vpop.f32.mrb[0].mxu0
    %v4517 = vadd.f32 %v4448, %v4516
    %v4518 = vpop.f32.mrb[0].mxu0
    %4519 = vmatprep.mubr.f32.mxu0 0.0
    %4520 = vmatmul.mubr.f32.gmra.mrb[0].mxu0 %v2651
    %v4521 = vpop.f32.mrb[0].mxu0
    %v4522 = vadd.f32 %v4448, %v4521
    %v4523 = vpop.f32.mrb[0].mxu0
    %4524 = vdwg.mxu0
    %v4526 = vsel %vm431, %v4347, 0
    %v4529 = vsel %vm431, %v4348, 0
    %v4532 = vsel %vm431, %v4429, 0
    %v4535 = vsel %vm431, %v4434, 0
    %4537 = vmatprep.subr.mxu0 0.0
    %4538 = vmatpush1.xpose.msra.mxu0 %v4532
    %4539 = vmatprep.subr.mxu0 0.0
    %4540 = vmatpush1.xpose.msra.mxu0 %v4535
    %4541 = vmatprep.subr.mxu0 0.0
    %4542 = vmatpush1.xpose.msra.mxu0 0.0
    %4543 = vmatprep.subr.mxu0 0.0
    %4544 = vmatpush1.xpose.msra.mxu0 0.0
    %4545 = vmatprep.subr.mxu0 0.0
    %4546 = vmatpush1.xpose.msra.mxu0 0.0
    %4547 = vmatprep.subr.mxu0 0.0
    %4548 = vmatpush1.xpose.msra.mxu0 0.0
    %4549 = vmatprep.subr.mxu0 0.0
    %4550 = vmatpush1.xpose.msra.mxu0 0.0
    %4551 = vmatprep.subr.mxu0 0.0
    %4552 = vmatpush1.xpose.msra.mxu0 0.0
    %4553 = vmatprep.subr.mxu0 0.0
    %4554 = vmatpush1.xpose.msra.mxu0 0.0
    %4555 = vmatprep.subr.mxu0 0.0
    %4556 = vmatpush1.xpose.msra.mxu0 0.0
    %4557 = vmatprep.subr.mxu0 0.0
    %4558 = vmatpush1.xpose.msra.mxu0 0.0
    %4559 = vmatprep.subr.mxu0 0.0
    %4560 = vmatpush1.xpose.msra.mxu0 0.0
    %4561 = vmatprep.subr.mxu0 0.0
    %4562 = vmatpush1.xpose.msra.mxu0 0.0
    %4563 = vmatprep.subr.mxu0 0.0
    %4564 = vmatpush1.xpose.msra.mxu0 0.0
    %4565 = vmatprep.subr.mxu0 0.0
    %4566 = vmatpush1.xpose.msra.mxu0 0.0
    %4567 = vmatprep.subr.mxu0 0.0
    %4568 = vmatpush1.xpose.msra.mxu0 0.0
    %4569 = vmatprep.subr.mxu0 0.0
    %4570 = vmatpush1.xpose.msra.mxu0 0.0
    %4571 = vmatprep.subr.mxu0 0.0
    %4572 = vmatpush1.xpose.msra.mxu0 0.0
    %4573 = vmatprep.subr.mxu0 0.0
    %4574 = vmatpush1.xpose.msra.mxu0 0.0
    %4575 = vmatprep.subr.mxu0 0.0
    %4576 = vmatpush1.xpose.msra.mxu0 0.0
    %4577 = vmatprep.subr.mxu0 0.0
    %4578 = vmatpush1.xpose.msra.mxu0 0.0
    %4579 = vmatprep.subr.mxu0 0.0
    %4580 = vmatpush1.xpose.msra.mxu0 0.0
    %4581 = vmatprep.subr.mxu0 0.0
    %4582 = vmatpush1.xpose.msra.mxu0 0.0
    %4583 = vmatprep.subr.mxu0 0.0
    %4584 = vmatpush1.xpose.msra.mxu0 0.0
    %4585 = vmatprep.subr.mxu0 0.0
    %4586 = vmatpush1.xpose.msra.mxu0 0.0
    %4587 = vmatprep.subr.mxu0 0.0
    %4588 = vmatpush1.xpose.msra.mxu0 0.0
    %4589 = vmatprep.subr.mxu0 0.0
    %4590 = vmatpush1.xpose.msra.mxu0 0.0
    %4591 = vmatprep.subr.mxu0 0.0
    %4592 = vmatpush1.xpose.msra.mxu0 0.0
    %4593 = vmatprep.subr.mxu0 0.0
    %4594 = vmatpush1.xpose.msra.mxu0 0.0
    %4595 = vmatprep.subr.mxu0 0.0
    %4596 = vmatpush1.xpose.msra.mxu0 0.0
    %4597 = vmatprep.subr.mxu0 0.0
    %4598 = vmatpush1.xpose.msra.mxu0 0.0
    %4599 = vmatprep.subr.mxu0 0.0
    %4600 = vmatpush1.xpose.msra.mxu0 0.0
    %4601 = vmatprep.mubr.f32.mxu0 0.0
    %4602 = vmatmul.mubr.f32.gmra.mrb[0].mxu0 %v4526
    %v4603 = vpop.f32.mrb[0].mxu0
    %v4604 = vadd.f32 %v163, %v4603
    %v4605 = vpop.f32.mrb[0].mxu0
    %4606 = vmatprep.mubr.f32.mxu0 0.0
    %4607 = vmatmul.mubr.f32.gmra.mrb[0].mxu0 %v4529
    %v4608 = vpop.f32.mrb[0].mxu0
    %v4609 = vadd.f32 %v164, %v4608
    %v4610 = vpop.f32.mrb[0].mxu0
    %4611 = vdwg.mxu0
    %v4612 = vsel %vm519, %v4604, -inf
    %4613 = vmax.xlane.f32.xlu0 %v4612
    %v4614 = vpop.xlane.xlu0 %4613
    %v4615 = vsel %vm519, %v4609, -inf
    %4616 = vmax.xlane.f32.xlu0 %v4615
    %v4617 = vpop.xlane.xlu0 %4616
    %v4618 = vsub.f32 %v4604, %v4614
    %v4619 = vsub.f32 %v4609, %v4617
    %v4620 = vmul.f32 %v4618, 1.442695
    %v4621 = vpow.pop %v4620
    %v4622 = vmul.f32 %v4619, 1.442695
    %v4623 = vpow.pop %v4622
    %v4624 = vsel %vm519, %v4621, 0.0
    %4625 = vadd.xlane.f32.xlu0 %v4624
    %v4626 = vpop.xlane.xlu0 %4625
    %v4627 = vsel %vm519, %v4623, 0.0
    %4628 = vadd.xlane.f32.xlu0 %v4627
    %v4629 = vpop.xlane.xlu0 %4628
    %v4630 = vrcp.pop %v4626
    %v4631 = vrcp.pop %v4629
    %v4632 = vmul.f32 %v4621, %v4630
    %v4633 = vmul.f32 %v4623, %v4631
    %v4635 = vsel %vm519, %v4632, 0
    %v4638 = vsel %vm519, %v4633, 0
    %4640 = vmatprep.subr.mxu0 0.0
    %4641 = vmatpush1.msra.mxu0 %v4517
    %4642 = vmatprep.subr.mxu0 0.0
    %4643 = vmatpush1.msra.mxu0 %v4522
    %4644 = vmatprep.subr.mxu0 0.0
    %4645 = vmatpush1.msra.mxu0 0.0
    %4646 = vmatprep.subr.mxu0 0.0
    %4647 = vmatpush1.msra.mxu0 0.0
    %4648 = vmatprep.subr.mxu0 0.0
    %4649 = vmatpush1.msra.mxu0 0.0
    %4650 = vmatprep.subr.mxu0 0.0
    %4651 = vmatpush1.msra.mxu0 0.0
    %4652 = vmatprep.subr.mxu0 0.0
    %4653 = vmatpush1.msra.mxu0 0.0
    %4654 = vmatprep.subr.mxu0 0.0
    %4655 = vmatpush1.msra.mxu0 0.0
    %4656 = vmatprep.subr.mxu0 0.0
    %4657 = vmatpush1.msra.mxu0 0.0
    %4658 = vmatprep.subr.mxu0 0.0
    %4659 = vmatpush1.msra.mxu0 0.0
    %4660 = vmatprep.subr.mxu0 0.0
    %4661 = vmatpush1.msra.mxu0 0.0
    %4662 = vmatprep.subr.mxu0 0.0
    %4663 = vmatpush1.msra.mxu0 0.0
    %4664 = vmatprep.subr.mxu0 0.0
    %4665 = vmatpush1.msra.mxu0 0.0
    %4666 = vmatprep.subr.mxu0 0.0
    %4667 = vmatpush1.msra.mxu0 0.0
    %4668 = vmatprep.subr.mxu0 0.0
    %4669 = vmatpush1.msra.mxu0 0.0
    %4670 = vmatprep.subr.mxu0 0.0
    %4671 = vmatpush1.msra.mxu0 0.0
    %4672 = vmatprep.subr.mxu0 0.0
    %4673 = vmatpush1.msra.mxu0 0.0
    %4674 = vmatprep.subr.mxu0 0.0
    %4675 = vmatpush1.msra.mxu0 0.0
    %4676 = vmatprep.subr.mxu0 0.0
    %4677 = vmatpush1.msra.mxu0 0.0
    %4678 = vmatprep.subr.mxu0 0.0
    %4679 = vmatpush1.msra.mxu0 0.0
    %4680 = vmatprep.subr.mxu0 0.0
    %4681 = vmatpush1.msra.mxu0 0.0
    %4682 = vmatprep.subr.mxu0 0.0
    %4683 = vmatpush1.msra.mxu0 0.0
    %4684 = vmatprep.subr.mxu0 0.0
    %4685 = vmatpush1.msra.mxu0 0.0
    %4686 = vmatprep.subr.mxu0 0.0
    %4687 = vmatpush1.msra.mxu0 0.0
    %4688 = vmatprep.subr.mxu0 0.0
    %4689 = vmatpush1.msra.mxu0 0.0
    %4690 = vmatprep.subr.mxu0 0.0
    %4691 = vmatpush1.msra.mxu0 0.0
    %4692 = vmatprep.subr.mxu0 0.0
    %4693 = vmatpush1.msra.mxu0 0.0
    %4694 = vmatprep.subr.mxu0 0.0
    %4695 = vmatpush1.msra.mxu0 0.0
    %4696 = vmatprep.subr.mxu0 0.0
    %4697 = vmatpush1.msra.mxu0 0.0
    %4698 = vmatprep.subr.mxu0 0.0
    %4699 = vmatpush1.msra.mxu0 0.0
    %4700 = vmatprep.subr.mxu0 0.0
    %4701 = vmatpush1.msra.mxu0 0.0
    %4702 = vmatprep.subr.mxu0 0.0
    %4703 = vmatpush1.msra.mxu0 0.0
    %4704 = vmatprep.mubr.f32.mxu0 0.0
    %4705 = vmatmul.mubr.f32.gmra.mrb[0].mxu0 %v4635
    %v4706 = vpop.f32.mrb[0].mxu0
    %v4707 = vadd.f32 0.0, %v4706
    %v4708 = vpop.f32.mrb[0].mxu0
    %4709 = vmatprep.mubr.f32.mxu0 0.0
    %4710 = vmatmul.mubr.f32.gmra.mrb[0].mxu0 %v4638
    %v4711 = vpop.f32.mrb[0].mxu0
    %v4712 = vadd.f32 0.0, %v4711
    %v4713 = vpop.f32.mrb[0].mxu0
    %4714 = vdwg.mxu0
    %s4715 = scalar_lea.vmem %s12, 56
    %v4716 = vld [vmem:[%s4715] sm:$0xff]
    %v4718 = vsel %vm431, %v4707, 0
    %v4721 = vsel %vm431, %v4712, 0
    %4723 = vmatprep.subr.mxu0 0.0
    %4724 = vmatpush1.msra.mxu0 %v4716
    %4725 = vmatprep.subr.mxu0 0.0
    %4726 = vmatpush1.msra.mxu0 0.0
    %4727 = vmatprep.subr.mxu0 0.0
    %4728 = vmatpush1.msra.mxu0 0.0
    %4729 = vmatprep.subr.mxu0 0.0
    %4730 = vmatpush1.msra.mxu0 0.0
    %4731 = vmatprep.subr.mxu0 0.0
    %4732 = vmatpush1.msra.mxu0 0.0
    %4733 = vmatprep.subr.mxu0 0.0
    %4734 = vmatpush1.msra.mxu0 0.0
    %4735 = vmatprep.subr.mxu0 0.0
    %4736 = vmatpush1.msra.mxu0 0.0
    %4737 = vmatprep.subr.mxu0 0.0
    %4738 = vmatpush1.msra.mxu0 0.0
    %4739 = vmatprep.subr.mxu0 0.0
    %4740 = vmatpush1.msra.mxu0 0.0
    %4741 = vmatprep.subr.mxu0 0.0
    %4742 = vmatpush1.msra.mxu0 0.0
    %4743 = vmatprep.subr.mxu0 0.0
    %4744 = vmatpush1.msra.mxu0 0.0
    %4745 = vmatprep.subr.mxu0 0.0
    %4746 = vmatpush1.msra.mxu0 0.0
    %4747 = vmatprep.subr.mxu0 0.0
    %4748 = vmatpush1.msra.mxu0 0.0
    %4749 = vmatprep.subr.mxu0 0.0
    %4750 = vmatpush1.msra.mxu0 0.0
    %4751 = vmatprep.subr.mxu0 0.0
    %4752 = vmatpush1.msra.mxu0 0.0
    %4753 = vmatprep.subr.mxu0 0.0
    %4754 = vmatpush1.msra.mxu0 0.0
    %4755 = vmatprep.subr.mxu0 0.0
    %4756 = vmatpush1.msra.mxu0 0.0
    %4757 = vmatprep.subr.mxu0 0.0
    %4758 = vmatpush1.msra.mxu0 0.0
    %4759 = vmatprep.subr.mxu0 0.0
    %4760 = vmatpush1.msra.mxu0 0.0
    %4761 = vmatprep.subr.mxu0 0.0
    %4762 = vmatpush1.msra.mxu0 0.0
    %4763 = vmatprep.subr.mxu0 0.0
    %4764 = vmatpush1.msra.mxu0 0.0
    %4765 = vmatprep.subr.mxu0 0.0
    %4766 = vmatpush1.msra.mxu0 0.0
    %4767 = vmatprep.subr.mxu0 0.0
    %4768 = vmatpush1.msra.mxu0 0.0
    %4769 = vmatprep.subr.mxu0 0.0
    %4770 = vmatpush1.msra.mxu0 0.0
    %4771 = vmatprep.subr.mxu0 0.0
    %4772 = vmatpush1.msra.mxu0 0.0
    %4773 = vmatprep.subr.mxu0 0.0
    %4774 = vmatpush1.msra.mxu0 0.0
    %4775 = vmatprep.subr.mxu0 0.0
    %4776 = vmatpush1.msra.mxu0 0.0
    %4777 = vmatprep.subr.mxu0 0.0
    %4778 = vmatpush1.msra.mxu0 0.0
    %4779 = vmatprep.subr.mxu0 0.0
    %4780 = vmatpush1.msra.mxu0 0.0
    %4781 = vmatprep.subr.mxu0 0.0
    %4782 = vmatpush1.msra.mxu0 0.0
    %4783 = vmatprep.subr.mxu0 0.0
    %4784 = vmatpush1.msra.mxu0 0.0
    %4785 = vmatprep.subr.mxu0 0.0
    %4786 = vmatpush1.msra.mxu0 0.0
    %4787 = vmatprep.mubr.f32.mxu0 0.0
    %4788 = vmatmul.mubr.f32.gmra.mrb[0].mxu0 %v4718
    %v4789 = vpop.f32.mrb[0].mxu0
    %v4790 = vadd.f32 0.0, %v4789
    %v4791 = vpop.f32.mrb[0].mxu0
    %4792 = vmatprep.mubr.f32.mxu0 0.0
    %4793 = vmatmul.mubr.f32.gmra.mrb[0].mxu0 %v4721
    %v4794 = vpop.f32.mrb[0].mxu0
    %v4795 = vadd.f32 0.0, %v4794
    %v4796 = vpop.f32.mrb[0].mxu0
    %4797 = vdwg.mxu0
    %v4798 = vadd.f32 %v4257, %v4790
    %v4799 = vadd.f32 %v4258, %v4795
    %s4800 = scalar_lea.vmem %s13, 1
    %v4801 = vld [vmem:[%s4800] sm:$0x1]
    %v4803 = vlaneseq
    %v4804 = vshrl.u32 %v4803, 7
    %v4805 = vsub.s32 0, %v4804
    %v4806 = vrot.slane %v4801, %v4805
    %v4808 = vadd.f32 %v4798, %v4806
    %v4809 = vadd.f32 %v4799, %v4806
    %v4810 = vadd.f32 %v4808, %v2632
    %v4811 = vadd.f32 %v4809, %v2633
    %s4812 = scalar_lea.vmem %s14, 1
    %v4813 = vld [vmem:[%s4812] sm:$0x1]
    %s4814 = scalar_lea.vmem %s15, 1
    %v4815 = vld [vmem:[%s4814] sm:$0x1]
    %v4816 = vsel %vm88, %v4810, 0.0
    %4817 = vadd.xlane.f32.xlu0 %v4816
    %v4818 = vpop.xlane.xlu0 %4817
    %v4819 = vsel %vm88, %v4811, 0.0
    %4820 = vadd.xlane.f32.xlu0 %v4819
    %v4821 = vpop.xlane.xlu0 %4820
    %v4822 = vmul.f32 %v4818, %v95
    %v4823 = vmul.f32 %v4821, %v95
    %v4824 = vsub.f32 %v4810, %v4822
    %v4825 = vsub.f32 %v4811, %v4823
    %v4826 = vmul.f32 %v4824, %v4824
    %v4827 = vmul.f32 %v4825, %v4825
    %v4828 = vsel %vm88, %v4826, 0.0
    %4829 = vadd.xlane.f32.xlu0 %v4828
    %v4830 = vpop.xlane.xlu0 %4829
    %v4831 = vsel %vm88, %v4827, 0.0
    %4832 = vadd.xlane.f32.xlu0 %v4831
    %v4833 = vpop.xlane.xlu0 %4832
    %v4834 = vmul.f32 %v4830, %v95
    %v4835 = vmul.f32 %v4833, %v95
    %v4836 = vadd.f32 %v4834, 1e-12
    %v4837 = vadd.f32 %v4835, 1e-12
    %v4838 = vrsqrt.pop %v4836
    %v4839 = vrsqrt.pop %v4837
    %v4840 = vmul.f32 %v4824, %v4838
    %v4841 = vmul.f32 %v4825, %v4839
    %v4843 = vlaneseq
    %v4844 = vshrl.u32 %v4843, 7
    %v4845 = vsub.s32 0, %v4844
    %v4846 = vrot.slane %v4813, %v4845
    %v4848 = vmul.f32 %v4840, %v4846
    %v4849 = vmul.f32 %v4841, %v4846
    %v4851 = vlaneseq
    %v4852 = vshrl.u32 %v4851, 7
    %v4853 = vsub.s32 0, %v4852
    %v4854 = vrot.slane %v4815, %v4853
    %v4856 = vadd.f32 %v4848, %v4854
    %v4857 = vadd.f32 %v4849, %v4854
    %s4858 = scalar_lea.vmem %s16, 32
    %v4859 = vld [vmem:[%s4858] sm:$0xff]
    %v4860 = vld [vmem:[%s4858 + $0x8] sm:$0xff]
    %v4861 = vld [vmem:[%s4858 + $0x10] sm:$0xff]
    %v4862 = vld [vmem:[%s4858 + $0x18] sm:$0xff]
    %s4863 = scalar_lea.vmem %s17, 1
    %v4864 = vld [vmem:[%s4863] sm:$0x1]
    %v4866 = vlaneseq
    %v4867 = vshrl.u32 %v4866, 7
    %v4868 = vsub.s32 0, %v4867
    %v4869 = vrot.slane %v4864, %v4868
    %v4872 = vsel %vm88, %v4856, 0
    %v4875 = vsel %vm88, %v4857, 0
    %4877 = vmatprep.subr.mxu0 0.0
    %4878 = vmatpush1.msra.mxu0 %v4859
    %4879 = vmatprep.subr.mxu0 0.0
    %4880 = vmatpush1.msra.mxu0 %v4860
    %4881 = vmatprep.subr.mxu0 0.0
    %4882 = vmatpush1.msra.mxu0 %v4861
    %4883 = vmatprep.subr.mxu0 0.0
    %4884 = vmatpush1.msra.mxu0 %v4862
    %4885 = vmatprep.subr.mxu0 0.0
    %4886 = vmatpush1.msra.mxu0 0.0
    %4887 = vmatprep.subr.mxu0 0.0
    %4888 = vmatpush1.msra.mxu0 0.0
    %4889 = vmatprep.subr.mxu0 0.0
    %4890 = vmatpush1.msra.mxu0 0.0
    %4891 = vmatprep.subr.mxu0 0.0
    %4892 = vmatpush1.msra.mxu0 0.0
    %4893 = vmatprep.subr.mxu0 0.0
    %4894 = vmatpush1.msra.mxu0 0.0
    %4895 = vmatprep.subr.mxu0 0.0
    %4896 = vmatpush1.msra.mxu0 0.0
    %4897 = vmatprep.subr.mxu0 0.0
    %4898 = vmatpush1.msra.mxu0 0.0
    %4899 = vmatprep.subr.mxu0 0.0
    %4900 = vmatpush1.msra.mxu0 0.0
    %4901 = vmatprep.subr.mxu0 0.0
    %4902 = vmatpush1.msra.mxu0 0.0
    %4903 = vmatprep.subr.mxu0 0.0
    %4904 = vmatpush1.msra.mxu0 0.0
    %4905 = vmatprep.subr.mxu0 0.0
    %4906 = vmatpush1.msra.mxu0 0.0
    %4907 = vmatprep.subr.mxu0 0.0
    %4908 = vmatpush1.msra.mxu0 0.0
    %4909 = vmatprep.subr.mxu0 0.0
    %4910 = vmatpush1.msra.mxu0 0.0
    %4911 = vmatprep.subr.mxu0 0.0
    %4912 = vmatpush1.msra.mxu0 0.0
    %4913 = vmatprep.subr.mxu0 0.0
    %4914 = vmatpush1.msra.mxu0 0.0
    %4915 = vmatprep.subr.mxu0 0.0
    %4916 = vmatpush1.msra.mxu0 0.0
    %4917 = vmatprep.subr.mxu0 0.0
    %4918 = vmatpush1.msra.mxu0 0.0
    %4919 = vmatprep.subr.mxu0 0.0
    %4920 = vmatpush1.msra.mxu0 0.0
    %4921 = vmatprep.subr.mxu0 0.0
    %4922 = vmatpush1.msra.mxu0 0.0
    %4923 = vmatprep.subr.mxu0 0.0
    %4924 = vmatpush1.msra.mxu0 0.0
    %4925 = vmatprep.subr.mxu0 0.0
    %4926 = vmatpush1.msra.mxu0 0.0
    %4927 = vmatprep.subr.mxu0 0.0
    %4928 = vmatpush1.msra.mxu0 0.0
    %4929 = vmatprep.subr.mxu0 0.0
    %4930 = vmatpush1.msra.mxu0 0.0
    %4931 = vmatprep.subr.mxu0 0.0
    %4932 = vmatpush1.msra.mxu0 0.0
    %4933 = vmatprep.subr.mxu0 0.0
    %4934 = vmatpush1.msra.mxu0 0.0
    %4935 = vmatprep.subr.mxu0 0.0
    %4936 = vmatpush1.msra.mxu0 0.0
    %4937 = vmatprep.subr.mxu0 0.0
    %4938 = vmatpush1.msra.mxu0 0.0
    %4939 = vmatprep.subr.mxu0 0.0
    %4940 = vmatpush1.msra.mxu0 0.0
    %4941 = vmatprep.mubr.f32.mxu0 0.0
    %4942 = vmatmul.mubr.f32.gmra.mrb[0].mxu0 %v4872
    %v4943 = vpop.f32.mrb[0].mxu0
    %v4944 = vadd.f32 %v4869, %v4943
    %v4945 = vpop.f32.mrb[0].mxu0
    %4946 = vmatprep.mubr.f32.mxu0 0.0
    %4947 = vmatmul.mubr.f32.gmra.mrb[0].mxu0 %v4875
    %v4948 = vpop.f32.mrb[0].mxu0
    %v4949 = vadd.f32 %v4869, %v4948
    %v4950 = vpop.f32.mrb[0].mxu0
    %4951 = vdwg.mxu0
    %v4952 = vmul.f32 %v4944, 0.5
    %v4953 = vmul.f32 %v4949, 0.5
    %v4954 = vmul.f32 %v4944, 0.044715
    %v4955 = vmul.f32 %v4949, 0.044715
    %v4956 = vmul.f32 %v4954, %v4944
    %v4957 = vmul.f32 %v4955, %v4949
    %v4958 = vmul.f32 %v4956, %v4944
    %v4959 = vmul.f32 %v4957, %v4949
    %v4960 = vadd.f32 %v4944, %v4958
    %v4961 = vadd.f32 %v4949, %v4959
    %v4962 = vmul.f32 %v4960, 0.7978846
    %v4963 = vmul.f32 %v4961, 0.7978846
    %v4964 = vtanh.pop %v4962
    %v4965 = vtanh.pop %v4963
    %v4966 = vadd.f32 %v4964, 1.0
    %v4967 = vadd.f32 %v4965, 1.0
    %v4968 = vmul.f32 %v4952, %v4966
    %v4969 = vmul.f32 %v4953, %v4967
    %s4970 = scalar_lea.vmem %s18, 64
    %v4971 = vld [vmem:[%s4970] sm:$0xff]
    %v4972 = vld [vmem:[%s4970 + $0x8] sm:$0xff]
    %v4973 = vld [vmem:[%s4970 + $0x10] sm:$0xff]
    %v4974 = vld [vmem:[%s4970 + $0x18] sm:$0xff]
    %v4975 = vld [vmem:[%s4970 + $0x20] sm:$0xff]
    %v4976 = vld [vmem:[%s4970 + $0x28] sm:$0xff]
    %v4977 = vld [vmem:[%s4970 + $0x30] sm:$0xff]
    %v4978 = vld [vmem:[%s4970 + $0x38] sm:$0xff]
    %s4979 = scalar_lea.vmem %s19, 1
    %v4980 = vld [vmem:[%s4979] sm:$0x1]
    %v4982 = vlaneseq
    %v4983 = vshrl.u32 %v4982, 7
    %v4984 = vsub.s32 0, %v4983
    %v4985 = vrot.slane %v4980, %v4984
    %v4988 = vsel %vm2506, %v4968, 0
    %v4991 = vsel %vm2506, %v4969, 0
    %4993 = vmatprep.subr.mxu0 0.0
    %4994 = vmatpush1.msra.mxu0 %v4971
    %4995 = vmatprep.subr.mxu0 0.0
    %4996 = vmatpush1.msra.mxu0 %v4972
    %4997 = vmatprep.subr.mxu0 0.0
    %4998 = vmatpush1.msra.mxu0 %v4973
    %4999 = vmatprep.subr.mxu0 0.0
    %5000 = vmatpush1.msra.mxu0 %v4974
    %5001 = vmatprep.subr.mxu0 0.0
    %5002 = vmatpush1.msra.mxu0 %v4975
    %5003 = vmatprep.subr.mxu0 0.0
    %5004 = vmatpush1.msra.mxu0 %v4976
    %5005 = vmatprep.subr.mxu0 0.0
    %5006 = vmatpush1.msra.mxu0 %v4977
    %5007 = vmatprep.subr.mxu0 0.0
    %5008 = vmatpush1.msra.mxu0 %v4978
    %5009 = vmatprep.subr.mxu0 0.0
    %5010 = vmatpush1.msra.mxu0 0.0
    %5011 = vmatprep.subr.mxu0 0.0
    %5012 = vmatpush1.msra.mxu0 0.0
    %5013 = vmatprep.subr.mxu0 0.0
    %5014 = vmatpush1.msra.mxu0 0.0
    %5015 = vmatprep.subr.mxu0 0.0
    %5016 = vmatpush1.msra.mxu0 0.0
    %5017 = vmatprep.subr.mxu0 0.0
    %5018 = vmatpush1.msra.mxu0 0.0
    %5019 = vmatprep.subr.mxu0 0.0
    %5020 = vmatpush1.msra.mxu0 0.0
    %5021 = vmatprep.subr.mxu0 0.0
    %5022 = vmatpush1.msra.mxu0 0.0
    %5023 = vmatprep.subr.mxu0 0.0
    %5024 = vmatpush1.msra.mxu0 0.0
    %5025 = vmatprep.subr.mxu0 0.0
    %5026 = vmatpush1.msra.mxu0 0.0
    %5027 = vmatprep.subr.mxu0 0.0
    %5028 = vmatpush1.msra.mxu0 0.0
    %5029 = vmatprep.subr.mxu0 0.0
    %5030 = vmatpush1.msra.mxu0 0.0
    %5031 = vmatprep.subr.mxu0 0.0
    %5032 = vmatpush1.msra.mxu0 0.0
    %5033 = vmatprep.subr.mxu0 0.0
    %5034 = vmatpush1.msra.mxu0 0.0
    %5035 = vmatprep.subr.mxu0 0.0
    %5036 = vmatpush1.msra.mxu0 0.0
    %5037 = vmatprep.subr.mxu0 0.0
    %5038 = vmatpush1.msra.mxu0 0.0
    %5039 = vmatprep.subr.mxu0 0.0
    %5040 = vmatpush1.msra.mxu0 0.0
    %5041 = vmatprep.subr.mxu0 0.0
    %5042 = vmatpush1.msra.mxu0 0.0
    %5043 = vmatprep.subr.mxu0 0.0
    %5044 = vmatpush1.msra.mxu0 0.0
    %5045 = vmatprep.subr.mxu0 0.0
    %5046 = vmatpush1.msra.mxu0 0.0
    %5047 = vmatprep.subr.mxu0 0.0
    %5048 = vmatpush1.msra.mxu0 0.0
    %5049 = vmatprep.subr.mxu0 0.0
    %5050 = vmatpush1.msra.mxu0 0.0
    %5051 = vmatprep.subr.mxu0 0.0
    %5052 = vmatpush1.msra.mxu0 0.0
    %5053 = vmatprep.subr.mxu0 0.0
    %5054 = vmatpush1.msra.mxu0 0.0
    %5055 = vmatprep.subr.mxu0 0.0
    %5056 = vmatpush1.msra.mxu0 0.0
    %5057 = vmatprep.mubr.f32.mxu0 0.0
    %5058 = vmatmul.mubr.f32.gmra.mrb[0].mxu0 %v4988
    %v5059 = vpop.f32.mrb[0].mxu0
    %v5060 = vadd.f32 %v4985, %v5059
    %v5061 = vpop.f32.mrb[0].mxu0
    %5062 = vmatprep.mubr.f32.mxu0 0.0
    %5063 = vmatmul.mubr.f32.gmra.mrb[0].mxu0 %v4991
    %v5064 = vpop.f32.mrb[0].mxu0
    %v5065 = vadd.f32 %v4985, %v5064
    %v5066 = vpop.f32.mrb[0].mxu0
    %5067 = vdwg.mxu0
    %v5068 = vadd.f32 %v5060, %v4856
    %v5069 = vadd.f32 %v5065, %v4857
    %s5070 = scalar_lea.vmem %s20, 1
    %v5071 = vld [vmem:[%s5070] sm:$0x1]
    %s5072 = scalar_lea.vmem %s21, 1
    %v5073 = vld [vmem:[%s5072] sm:$0x1]
    %v5074 = vsel %vm88, %v5068, 0.0
    %5075 = vadd.xlane.f32.xlu0 %v5074
    %v5076 = vpop.xlane.xlu0 %5075
    %v5077 = vsel %vm88, %v5069, 0.0
    %5078 = vadd.xlane.f32.xlu0 %v5077
    %v5079 = vpop.xlane.xlu0 %5078
    %v5080 = vmul.f32 %v5076, %v95
    %v5081 = vmul.f32 %v5079, %v95
    %v5082 = vsub.f32 %v5068, %v5080
    %v5083 = vsub.f32 %v5069, %v5081
    %v5084 = vmul.f32 %v5082, %v5082
    %v5085 = vmul.f32 %v5083, %v5083
    %v5086 = vsel %vm88, %v5084, 0.0
    %5087 = vadd.xlane.f32.xlu0 %v5086
    %v5088 = vpop.xlane.xlu0 %5087
    %v5089 = vsel %vm88, %v5085, 0.0
    %5090 = vadd.xlane.f32.xlu0 %v5089
    %v5091 = vpop.xlane.xlu0 %5090
    %v5092 = vmul.f32 %v5088, %v95
    %v5093 = vmul.f32 %v5091, %v95
    %v5094 = vadd.f32 %v5092, 1e-12
    %v5095 = vadd.f32 %v5093, 1e-12
    %v5096 = vrsqrt.pop %v5094
    %v5097 = vrsqrt.pop %v5095
    %v5098 = vmul.f32 %v5082, %v5096
    %v5099 = vmul.f32 %v5083, %v5097
    %v5101 = vlaneseq
    %v5102 = vshrl.u32 %v5101, 7
    %v5103 = vsub.s32 0, %v5102
    %v5104 = vrot.slane %v5071, %v5103
    %v5106 = vmul.f32 %v5098, %v5104
    %v5107 = vmul.f32 %v5099, %v5104
    %v5109 = vlaneseq
    %v5110 = vshrl.u32 %v5109, 7
    %v5111 = vsub.s32 0, %v5110
    %v5112 = vrot.slane %v5073, %v5111
    %v5114 = vadd.f32 %v5106, %v5112
    %v5115 = vadd.f32 %v5107, %v5112
    %5116 = vst.msk [vmem:[#allocation2] sm:$0xff] %vm88, %v5114
    %5117 = vst.msk [vmem:[#allocation2 + $0x8] sm:$0xff] %vm88, %v5115
    %v5118 = vld [vmem:[%s22] sm:$0x3]
    %v5120 = vsel %vm519, %v5118, 0
    %5122 = vmatprep.subr.mxu0 0.0
    %5123 = vmatpush1.msra.mxu0 %v5114
    %5124 = vmatprep.subr.mxu0 0.0
    %5125 = vmatpush1.msra.mxu0 %v5115
    %5126 = vmatprep.subr.mxu0 0.0
    %5127 = vmatpush1.msra.mxu0 0.0
    %5128 = vmatprep.subr.mxu0 0.0
    %5129 = vmatpush1.msra.mxu0 0.0
    %5130 = vmatprep.subr.mxu0 0.0
    %5131 = vmatpush1.msra.mxu0 0.0
    %5132 = vmatprep.subr.mxu0 0.0
    %5133 = vmatpush1.msra.mxu0 0.0
    %5134 = vmatprep.subr.mxu0 0.0
    %5135 = vmatpush1.msra.mxu0 0.0
    %5136 = vmatprep.subr.mxu0 0.0
    %5137 = vmatpush1.msra.mxu0 0.0
    %5138 = vmatprep.subr.mxu0 0.0
    %5139 = vmatpush1.msra.mxu0 0.0
    %5140 = vmatprep.subr.mxu0 0.0
    %5141 = vmatpush1.msra.mxu0 0.0
    %5142 = vmatprep.subr.mxu0 0.0
    %5143 = vmatpush1.msra.mxu0 0.0
    %5144 = vmatprep.subr.mxu0 0.0
    %5145 = vmatpush1.msra.mxu0 0.0
    %5146 = vmatprep.subr.mxu0 0.0
    %5147 = vmatpush1.msra.mxu0 0.0
    %5148 = vmatprep.subr.mxu0 0.0
    %5149 = vmatpush1.msra.mxu0 0.0
    %5150 = vmatprep.subr.mxu0 0.0
    %5151 = vmatpush1.msra.mxu0 0.0
    %5152 = vmatprep.subr.mxu0 0.0
    %5153 = vmatpush1.msra.mxu0 0.0
    %5154 = vmatprep.subr.mxu0 0.0
    %5155 = vmatpush1.msra.mxu0 0.0
    %5156 = vmatprep.subr.mxu0 0.0
    %5157 = vmatpush1.msra.mxu0 0.0
    %5158 = vmatprep.subr.mxu0 0.0
    %5159 = vmatpush1.msra.mxu0 0.0
    %5160 = vmatprep.subr.mxu0 0.0
    %5161 = vmatpush1.msra.mxu0 0.0
    %5162 = vmatprep.subr.mxu0 0.0
    %5163 = vmatpush1.msra.mxu0 0.0
    %5164 = vmatprep.subr.mxu0 0.0
    %5165 = vmatpush1.msra.mxu0 0.0
    %5166 = vmatprep.subr.mxu0 0.0
    %5167 = vmatpush1.msra.mxu0 0.0
    %5168 = vmatprep.subr.mxu0 0.0
    %5169 = vmatpush1.msra.mxu0 0.0
    %5170 = vmatprep.subr.mxu0 0.0
    %5171 = vmatpush1.msra.mxu0 0.0
    %5172 = vmatprep.subr.mxu0 0.0
    %5173 = vmatpush1.msra.mxu0 0.0
    %5174 = vmatprep.subr.mxu0 0.0
    %5175 = vmatpush1.msra.mxu0 0.0
    %5176 = vmatprep.subr.mxu0 0.0
    %5177 = vmatpush1.msra.mxu0 0.0
    %5178 = vmatprep.subr.mxu0 0.0
    %5179 = vmatpush1.msra.mxu0 0.0
    %5180 = vmatprep.subr.mxu0 0.0
    %5181 = vmatpush1.msra.mxu0 0.0
    %5182 = vmatprep.subr.mxu0 0.0
    %5183 = vmatpush1.msra.mxu0 0.0
    %5184 = vmatprep.subr.mxu0 0.0
    %5185 = vmatpush1.msra.mxu0 0.0
    %5186 = vmatprep.mubr.f32.mxu0 0.0
    %5187 = vmatmul.mubr.f32.gmra.mrb[0].mxu0 %v5120
    %v5188 = vpop.f32.mrb[0].mxu0
    %v5189 = vadd.f32 0.0, %v5188
    %v5190 = vpop.f32.mrb[0].mxu0
    %5191 = vdwg.mxu0
    %v5192 = vld [vmem:[%s23] sm:$0xff]
    %v5193 = vld [vmem:[%s23 + $0x8] sm:$0xff]
    %v5194 = vld [vmem:[%s23 + $0x10] sm:$0xff]
    %v5195 = vld [vmem:[%s23 + $0x18] sm:$0xff]
    %v5196 = vld [vmem:[%s24] sm:$0x1]
    %v5198 = vlaneseq
    %v5199 = vshrl.u32 %v5198, 7
    %v5200 = vsub.s32 0, %v5199
    %v5201 = vrot.slane %v5196, %v5200
    %v5204 = vsel %vm88, %v5189, 0
    %5206 = vmatprep.subr.mxu0 0.0
    %5207 = vmatpush1.msra.mxu0 %v5192
    %5208 = vmatprep.subr.mxu0 0.0
    %5209 = vmatpush1.msra.mxu0 %v5193
    %5210 = vmatprep.subr.mxu0 0.0
    %5211 = vmatpush1.msra.mxu0 %v5194
    %5212 = vmatprep.subr.mxu0 0.0
    %5213 = vmatpush1.msra.mxu0 %v5195
    %5214 = vmatprep.subr.mxu0 0.0
    %5215 = vmatpush1.msra.mxu0 0.0
    %5216 = vmatprep.subr.mxu0 0.0
    %5217 = vmatpush1.msra.mxu0 0.0
    %5218 = vmatprep.subr.mxu0 0.0
    %5219 = vmatpush1.msra.mxu0 0.0
    %5220 = vmatprep.subr.mxu0 0.0
    %5221 = vmatpush1.msra.mxu0 0.0
    %5222 = vmatprep.subr.mxu0 0.0
    %5223 = vmatpush1.msra.mxu0 0.0
    %5224 = vmatprep.subr.mxu0 0.0
    %5225 = vmatpush1.msra.mxu0 0.0
    %5226 = vmatprep.subr.mxu0 0.0
    %5227 = vmatpush1.msra.mxu0 0.0
    %5228 = vmatprep.subr.mxu0 0.0
    %5229 = vmatpush1.msra.mxu0 0.0
    %5230 = vmatprep.subr.mxu0 0.0
    %5231 = vmatpush1.msra.mxu0 0.0
    %5232 = vmatprep.subr.mxu0 0.0
    %5233 = vmatpush1.msra.mxu0 0.0
    %5234 = vmatprep.subr.mxu0 0.0
    %5235 = vmatpush1.msra.mxu0 0.0
    %5236 = vmatprep.subr.mxu0 0.0
    %5237 = vmatpush1.msra.mxu0 0.0
    %5238 = vmatprep.subr.mxu0 0.0
    %5239 = vmatpush1.msra.mxu0 0.0
    %5240 = vmatprep.subr.mxu0 0.0
    %5241 = vmatpush1.msra.mxu0 0.0
    %5242 = vmatprep.subr.mxu0 0.0
    %5243 = vmatpush1.msra.mxu0 0.0
    %5244 = vmatprep.subr.mxu0 0.0
    %5245 = vmatpush1.msra.mxu0 0.0
    %5246 = vmatprep.subr.mxu0 0.0
    %5247 = vmatpush1.msra.mxu0 0.0
    %5248 = vmatprep.subr.mxu0 0.0
    %5249 = vmatpush1.msra.mxu0 0.0
    %5250 = vmatprep.subr.mxu0 0.0
    %5251 = vmatpush1.msra.mxu0 0.0
    %5252 = vmatprep.subr.mxu0 0.0
    %5253 = vmatpush1.msra.mxu0 0.0
    %5254 = vmatprep.subr.mxu0 0.0
    %5255 = vmatpush1.msra.mxu0 0.0
    %5256 = vmatprep.subr.mxu0 0.0
    %5257 = vmatpush1.msra.mxu0 0.0
    %5258 = vmatprep.subr.mxu0 0.0
    %5259 = vmatpush1.msra.mxu0 0.0
    %5260 = vmatprep.subr.mxu0 0.0
    %5261 = vmatpush1.msra.mxu0 0.0
    %5262 = vmatprep.subr.mxu0 0.0
    %5263 = vmatpush1.msra.mxu0 0.0
    %5264 = vmatprep.subr.mxu0 0.0
    %5265 = vmatpush1.msra.mxu0 0.0
    %5266 = vmatprep.subr.mxu0 0.0
    %5267 = vmatpush1.msra.mxu0 0.0
    %5268 = vmatprep.subr.mxu0 0.0
    %5269 = vmatpush1.msra.mxu0 0.0
    %5270 = vmatprep.mubr.f32.mxu0 0.0
    %5271 = vmatmul.mubr.f32.gmra.mrb[0].mxu0 %v5204
    %v5272 = vpop.f32.mrb[0].mxu0
    %v5273 = vadd.f32 %v5201, %v5272
    %v5274 = vpop.f32.mrb[0].mxu0
    %5275 = vdwg.mxu0
    %v5276 = vtanh.pop %v5273
    %vm5277 = vcmask 254976
    %5278 = vst.msk [vmem:[#allocation4] sm:$0x3] %vm5277, %v5276
    // Predicated region
    $region102: #{nerd_model_forward.1} parent=1 // pred_check
      _
    $region103: #{nerd_model_forward.1} parent=1 // pred_check_branch
      %5280 = sbr.rel (0) target = $region105
    $region104: #{nerd_model_forward.1} parent=1 // pred_region
      %s5282 = ssub.s32 256, 256
      %5283 = vsyncadd [#allocation3], %s5282
      %s5284 = sshll.u32 [#allocation2], 4
      %s5285 = int_to_ptr.vmem [resolvable:$true] %s5284
      %5290 = dma.vmem_to_hbm [thread:$0]  %s5285, 256, %s25, [#allocation3], 128, 128, 8
    $region105: #{nerd_model_forward.1} parent=1 // pred_fallthru
      _
    // Predicated region
    $region106: #{nerd_model_forward.1} parent=1 // pred_check
      _
    $region107: #{nerd_model_forward.1} parent=1 // pred_check_branch
      %5292 = sbr.rel (0) target = $region109
    $region108: #{nerd_model_forward.1} parent=1 // pred_region
      %s5294 = ssub.s32 32, 32
      %5295 = vsyncadd [#allocation5], %s5294
      %s5297 = sshll.u32 [#allocation4], 4
      %s5298 = int_to_ptr.vmem [resolvable:$true] %s5297
      %5300 = dma.vmem_to_hbm [thread:$0]  %s5298, 32, %s26, [#allocation5]
    $region109: #{nerd_model_forward.1} parent=1 // pred_fallthru
      _
    // Predicated region
    $region110: #{nerd_model_forward.1} parent=1 // pred_check
      _
    $region111: #{nerd_model_forward.1} parent=1 // pred_check_branch
      %5302 = sbr.rel (0) target = $region113
    $region112: #{nerd_model_forward.1} parent=1 // pred_region
      %5303 = dma.done [#allocation3], 256
    $region113: #{nerd_model_forward.1} parent=1 // pred_fallthru
      _
    // Predicated region
    $region114: #{nerd_model_forward.1} parent=1 // pred_check
      _
    $region115: #{nerd_model_forward.1} parent=1 // pred_check_branch
      %5305 = sbr.rel (0) target = $region117
    $region116: #{nerd_model_forward.1} parent=1 // pred_region
      %5306 = dma.done [#allocation5], 32
    $region117: #{nerd_model_forward.1} parent=1 // pred_fallthru
      _
    %5307 = vsyncpa [#allocation3], 1
    %5308 = vsyncpa [#allocation5], 1

</llo_original>
